<compile_context>
chip_gen: v7x
topology: tpu7x:2x2x1
jax: 0.10.0
libtpu: 0.0.40
codegen_flags: <defaults>
</compile_context>

<pallas_src>
import jax
import jax.numpy as jnp
from jax.experimental import pallas as pl
from jax.experimental.pallas import tpu as pltpu

Z_DIM = 64
IMG_DIM = 784                     # 28*28 MNIST-style image, flattened
IMG_PAD = 896                     # 7 * 128, lane-aligned padded output width
HIDDEN = (256, 512, 1024)
LRELU_SLOPE = 0.2
BN_EPS = 1e-5


def _lrelu(h):
    return jnp.where(h > 0, h, LRELU_SLOPE * h)


def _batchnorm_train(h, inv_b):
    # One-pass training-mode BatchNorm1d: biased variance via E[h^2] - mu^2,
    # gamma=1, beta=0.  inv_b = 1/B is a trace-time constant.
    s = jnp.sum(h, axis=0, keepdims=True)
    ss = jnp.sum(h * h, axis=0, keepdims=True)
    mu = s * inv_b
    var = jnp.maximum(ss * inv_b - mu * mu, 0.0)
    return (h - mu) * jax.lax.rsqrt(var + BN_EPS)


def generator_kernel(x_ref,
                     w1_ref, b1_ref,
                     w2_ref, b2_ref,
                     w3_ref, b3_ref,
                     w4_ref, b4_ref,
                     o_ref):
    inv_b = 1.0 / x_ref.shape[0]

    # MXU operands in bf16, accumulate + elementwise in f32.
    x = x_ref[...].astype(jnp.bfloat16)

    h = jnp.dot(x, w1_ref[...], preferred_element_type=jnp.float32) + b1_ref[...]
    h = _batchnorm_train(_lrelu(h), inv_b)

    h = jnp.dot(h.astype(jnp.bfloat16), w2_ref[...],
                preferred_element_type=jnp.float32) + b2_ref[...]
    h = _batchnorm_train(_lrelu(h), inv_b)

    h = jnp.dot(h.astype(jnp.bfloat16), w3_ref[...],
                preferred_element_type=jnp.float32) + b3_ref[...]
    h = _batchnorm_train(_lrelu(h), inv_b)

    h = jnp.dot(h.astype(jnp.bfloat16), w4_ref[...],
                preferred_element_type=jnp.float32) + b4_ref[...]
    o_ref[...] = jnp.tanh(h)


def _vmem_limit_bytes(B):
    # bf16 weights + f32 biases + f32 I/O + headroom for f32 intermediates.
    w_bytes = 2 * (Z_DIM * HIDDEN[0] + HIDDEN[0] * HIDDEN[1]
                   + HIDDEN[1] * HIDDEN[2] + HIDDEN[2] * IMG_PAD)
    b_bytes = 4 * (HIDDEN[0] + HIDDEN[1] + HIDDEN[2] + IMG_PAD)
    io_bytes = 4 * B * (Z_DIM + IMG_PAD)
    act_bytes = 4 * B * max(HIDDEN) * 4          # live f32 temporaries headroom
    total = w_bytes + b_bytes + io_bytes + act_bytes + (4 << 20)
    return min(total, 48 << 20)                  # stays well inside v7x's 64 MiB


def generator_forward(x, params):
    # NOTE: single grid-less block (weights small enough to sit in VMEM).
    # A batch grid axis + per-core partial BN sums would engage v7x's second
    # TensorCore, but batch statistics couple all rows; only worth it for very
    # large B.
    B = x.shape[0]
    vmem_spec = pl.BlockSpec(memory_space=pltpu.MemorySpace.VMEM)
    n_args = 1 + len(params)
    out_pad = pl.pallas_call(
        generator_kernel,
        out_shape=jax.ShapeDtypeStruct((B, IMG_PAD), jnp.float32),
        in_specs=[vmem_spec] * n_args,
        out_specs=vmem_spec,
        compiler_params=pltpu.CompilerParams(
            vmem_limit_bytes=_vmem_limit_bytes(B)),
    )(x, *params)
    return out_pad[:, :IMG_DIM]


def init_params(key):
    """Deterministic init matching nn.Linear shapes (weights stored transposed:
    (in, out)). U(-1/sqrt(in), 1/sqrt(in)) like PyTorch's default.  Weights are
    stored in bf16 (MXU-native, half the HBM traffic); biases stay f32.  The
    last layer is zero-padded from 784 to 896 output lanes."""
    dims = (Z_DIM,) + HIDDEN + (IMG_DIM,)
    params = []
    for i in range(len(dims) - 1):
        fan_in, fan_out = dims[i], dims[i + 1]
        key, kw, kb = jax.random.split(key, 3)
        bound = 1.0 / jnp.sqrt(fan_in)
        w = jax.random.uniform(kw, (fan_in, fan_out), jnp.float32, -bound, bound)
        b = jax.random.uniform(kb, (1, fan_out), jnp.float32, -bound, bound)
        if fan_out == IMG_DIM:
            pad = IMG_PAD - IMG_DIM
            w = jnp.pad(w, ((0, 0), (0, pad)))
            b = jnp.pad(b, ((0, 0), (0, pad)))
        params += [w.astype(jnp.bfloat16), b.astype(jnp.float32)]
    return params


if __name__ == "__main__":
    key = jax.random.PRNGKey(0)
    key, kx = jax.random.split(key)

    # Batch large enough to amortize the ~3 MB bf16 weight DMA over real MXU
    # work (>1 required anyway for training-mode BatchNorm semantics).
    B = 128
    x = jax.random.normal(kx, (B, Z_DIM), dtype=jnp.float32)
    params = init_params(key)

    out = generator_forward(x, params)
    out = jax.block_until_ready(out)

    assert out.shape == (B, IMG_DIM)
    assert out.dtype == jnp.float32
    assert bool(jnp.all(jnp.isfinite(out)))
    assert bool(jnp.all(jnp.abs(out) <= 1.0))  # tanh range

    print("KERNEL_OK")
</pallas_src>

<mosaic_0001>
module attributes {stable_mosaic.version = 11 : i64} {
  func.func @generator_kernel(%arg0: memref<128x64xf32, #tpu.memory_space<vmem>>, %arg1: memref<64x256xbf16, #tpu.memory_space<vmem>>, %arg2: memref<1x256xf32, #tpu.memory_space<vmem>>, %arg3: memref<256x512xbf16, #tpu.memory_space<vmem>>, %arg4: memref<1x512xf32, #tpu.memory_space<vmem>>, %arg5: memref<512x1024xbf16, #tpu.memory_space<vmem>>, %arg6: memref<1x1024xf32, #tpu.memory_space<vmem>>, %arg7: memref<1024x896xbf16, #tpu.memory_space<vmem>>, %arg8: memref<1x896xf32, #tpu.memory_space<vmem>>, %arg9: memref<128x896xf32, #tpu.memory_space<vmem>>) attributes {dimension_semantics = [], scalar_prefetch = 0 : i64, scratch_operands = 0 : i64, tpu.core_type = #tpu.core_type<tc>} {
    %c0 = arith.constant 0 : index
    %c0_0 = arith.constant 0 : index
    %0 = vector.load %arg0[%c0, %c0_0] : memref<128x64xf32, #tpu.memory_space<vmem>>, vector<128x64xf32>
    %1 = arith.truncf %0 : vector<128x64xf32> to vector<128x64xbf16>
    %c0_1 = arith.constant 0 : index
    %c0_2 = arith.constant 0 : index
    %2 = vector.load %arg1[%c0_1, %c0_2] : memref<64x256xbf16, #tpu.memory_space<vmem>>, vector<64x256xbf16>
    %cst = arith.constant dense<0.000000e+00> : vector<128x256xf32>
    %3 = tpu.matmul %1, %2, %cst {dimension_numbers = #tpu.dot_dimension_numbers<[1], [0], [0], [1], [0, 0, 1, 1], [], []>} : vector<128x64xbf16>, vector<64x256xbf16>, vector<128x256xf32> -> vector<128x256xf32>
    %c0_3 = arith.constant 0 : index
    %c0_4 = arith.constant 0 : index
    %4 = vector.load %arg2[%c0_3, %c0_4] : memref<1x256xf32, #tpu.memory_space<vmem>>, vector<1x256xf32>
    %5 = vector.broadcast %4 : vector<1x256xf32> to vector<128x256xf32>
    %6 = arith.addf %3, %5 : vector<128x256xf32>
    %cst_5 = arith.constant 0.000000e+00 : f32
    %7 = vector.broadcast %cst_5 : f32 to vector<128x256xf32>
    %8 = arith.cmpf ogt, %6, %7 : vector<128x256xf32>
    %cst_6 = arith.constant 2.000000e-01 : f32
    %9 = vector.broadcast %cst_6 : f32 to vector<128x256xf32>
    %10 = arith.mulf %9, %6 : vector<128x256xf32>
    %11 = arith.select %8, %6, %10 : vector<128x256xi1>, vector<128x256xf32>
    %cst_7 = arith.constant dense<0.000000e+00> : vector<256xf32>
    %12 = vector.multi_reduction <add>, %11, %cst_7 [0] : vector<128x256xf32> to vector<256xf32>
    %13 = vector.shape_cast %12 : vector<256xf32> to vector<1x256xf32>
    %14 = arith.mulf %11, %11 : vector<128x256xf32>
    %cst_8 = arith.constant dense<0.000000e+00> : vector<256xf32>
    %15 = vector.multi_reduction <add>, %14, %cst_8 [0] : vector<128x256xf32> to vector<256xf32>
    %16 = vector.shape_cast %15 : vector<256xf32> to vector<1x256xf32>
    %cst_9 = arith.constant 7.812500e-03 : f32
    %17 = vector.broadcast %cst_9 : f32 to vector<1x256xf32>
    %18 = arith.mulf %13, %17 : vector<1x256xf32>
    %cst_10 = arith.constant 7.812500e-03 : f32
    %19 = vector.broadcast %cst_10 : f32 to vector<1x256xf32>
    %20 = arith.mulf %16, %19 : vector<1x256xf32>
    %21 = arith.mulf %18, %18 : vector<1x256xf32>
    %22 = arith.subf %20, %21 : vector<1x256xf32>
    %cst_11 = arith.constant 0.000000e+00 : f32
    %23 = vector.broadcast %cst_11 : f32 to vector<1x256xf32>
    %24 = arith.maximumf %22, %23 : vector<1x256xf32>
    %25 = vector.broadcast %18 : vector<1x256xf32> to vector<128x256xf32>
    %26 = arith.subf %11, %25 : vector<128x256xf32>
    %cst_12 = arith.constant 9.99999974E-6 : f32
    %27 = vector.broadcast %cst_12 : f32 to vector<1x256xf32>
    %28 = arith.addf %24, %27 : vector<1x256xf32>
    %29 = math.rsqrt %28 : vector<1x256xf32>
    %30 = vector.broadcast %29 : vector<1x256xf32> to vector<128x256xf32>
    %31 = arith.mulf %26, %30 : vector<128x256xf32>
    %32 = arith.truncf %31 : vector<128x256xf32> to vector<128x256xbf16>
    %c0_13 = arith.constant 0 : index
    %c0_14 = arith.constant 0 : index
    %33 = vector.load %arg3[%c0_13, %c0_14] : memref<256x512xbf16, #tpu.memory_space<vmem>>, vector<256x512xbf16>
    %cst_15 = arith.constant dense<0.000000e+00> : vector<128x512xf32>
    %34 = tpu.matmul %32, %33, %cst_15 {dimension_numbers = #tpu.dot_dimension_numbers<[1], [0], [0], [1], [0, 0, 1, 1], [], []>} : vector<128x256xbf16>, vector<256x512xbf16>, vector<128x512xf32> -> vector<128x512xf32>
    %c0_16 = arith.constant 0 : index
    %c0_17 = arith.constant 0 : index
    %35 = vector.load %arg4[%c0_16, %c0_17] : memref<1x512xf32, #tpu.memory_space<vmem>>, vector<1x512xf32>
    %36 = vector.broadcast %35 : vector<1x512xf32> to vector<128x512xf32>
    %37 = arith.addf %34, %36 : vector<128x512xf32>
    %cst_18 = arith.constant 0.000000e+00 : f32
    %38 = vector.broadcast %cst_18 : f32 to vector<128x512xf32>
    %39 = arith.cmpf ogt, %37, %38 : vector<128x512xf32>
    %cst_19 = arith.constant 2.000000e-01 : f32
    %40 = vector.broadcast %cst_19 : f32 to vector<128x512xf32>
    %41 = arith.mulf %40, %37 : vector<128x512xf32>
    %42 = arith.select %39, %37, %41 : vector<128x512xi1>, vector<128x512xf32>
    %cst_20 = arith.constant dense<0.000000e+00> : vector<512xf32>
    %43 = vector.multi_reduction <add>, %42, %cst_20 [0] : vector<128x512xf32> to vector<512xf32>
    %44 = vector.shape_cast %43 : vector<512xf32> to vector<1x512xf32>
    %45 = arith.mulf %42, %42 : vector<128x512xf32>
    %cst_21 = arith.constant dense<0.000000e+00> : vector<512xf32>
    %46 = vector.multi_reduction <add>, %45, %cst_21 [0] : vector<128x512xf32> to vector<512xf32>
    %47 = vector.shape_cast %46 : vector<512xf32> to vector<1x512xf32>
    %cst_22 = arith.constant 7.812500e-03 : f32
    %48 = vector.broadcast %cst_22 : f32 to vector<1x512xf32>
    %49 = arith.mulf %44, %48 : vector<1x512xf32>
    %cst_23 = arith.constant 7.812500e-03 : f32
    %50 = vector.broadcast %cst_23 : f32 to vector<1x512xf32>
    %51 = arith.mulf %47, %50 : vector<1x512xf32>
    %52 = arith.mulf %49, %49 : vector<1x512xf32>
    %53 = arith.subf %51, %52 : vector<1x512xf32>
    %cst_24 = arith.constant 0.000000e+00 : f32
    %54 = vector.broadcast %cst_24 : f32 to vector<1x512xf32>
    %55 = arith.maximumf %53, %54 : vector<1x512xf32>
    %56 = vector.broadcast %49 : vector<1x512xf32> to vector<128x512xf32>
    %57 = arith.subf %42, %56 : vector<128x512xf32>
    %cst_25 = arith.constant 9.99999974E-6 : f32
    %58 = vector.broadcast %cst_25 : f32 to vector<1x512xf32>
    %59 = arith.addf %55, %58 : vector<1x512xf32>
    %60 = math.rsqrt %59 : vector<1x512xf32>
    %61 = vector.broadcast %60 : vector<1x512xf32> to vector<128x512xf32>
    %62 = arith.mulf %57, %61 : vector<128x512xf32>
    %63 = arith.truncf %62 : vector<128x512xf32> to vector<128x512xbf16>
    %c0_26 = arith.constant 0 : index
    %c0_27 = arith.constant 0 : index
    %64 = vector.load %arg5[%c0_26, %c0_27] : memref<512x1024xbf16, #tpu.memory_space<vmem>>, vector<512x1024xbf16>
    %cst_28 = arith.constant dense<0.000000e+00> : vector<128x1024xf32>
    %65 = tpu.matmul %63, %64, %cst_28 {dimension_numbers = #tpu.dot_dimension_numbers<[1], [0], [0], [1], [0, 0, 1, 1], [], []>} : vector<128x512xbf16>, vector<512x1024xbf16>, vector<128x1024xf32> -> vector<128x1024xf32>
    %c0_29 = arith.constant 0 : index
    %c0_30 = arith.constant 0 : index
    %66 = vector.load %arg6[%c0_29, %c0_30] : memref<1x1024xf32, #tpu.memory_space<vmem>>, vector<1x1024xf32>
    %67 = vector.broadcast %66 : vector<1x1024xf32> to vector<128x1024xf32>
    %68 = arith.addf %65, %67 : vector<128x1024xf32>
    %cst_31 = arith.constant 0.000000e+00 : f32
    %69 = vector.broadcast %cst_31 : f32 to vector<128x1024xf32>
    %70 = arith.cmpf ogt, %68, %69 : vector<128x1024xf32>
    %cst_32 = arith.constant 2.000000e-01 : f32
    %71 = vector.broadcast %cst_32 : f32 to vector<128x1024xf32>
    %72 = arith.mulf %71, %68 : vector<128x1024xf32>
    %73 = arith.select %70, %68, %72 : vector<128x1024xi1>, vector<128x1024xf32>
    %cst_33 = arith.constant dense<0.000000e+00> : vector<1024xf32>
    %74 = vector.multi_reduction <add>, %73, %cst_33 [0] : vector<128x1024xf32> to vector<1024xf32>
    %75 = vector.shape_cast %74 : vector<1024xf32> to vector<1x1024xf32>
    %76 = arith.mulf %73, %73 : vector<128x1024xf32>
    %cst_34 = arith.constant dense<0.000000e+00> : vector<1024xf32>
    %77 = vector.multi_reduction <add>, %76, %cst_34 [0] : vector<128x1024xf32> to vector<1024xf32>
    %78 = vector.shape_cast %77 : vector<1024xf32> to vector<1x1024xf32>
    %cst_35 = arith.constant 7.812500e-03 : f32
    %79 = vector.broadcast %cst_35 : f32 to vector<1x1024xf32>
    %80 = arith.mulf %75, %79 : vector<1x1024xf32>
    %cst_36 = arith.constant 7.812500e-03 : f32
    %81 = vector.broadcast %cst_36 : f32 to vector<1x1024xf32>
    %82 = arith.mulf %78, %81 : vector<1x1024xf32>
    %83 = arith.mulf %80, %80 : vector<1x1024xf32>
    %84 = arith.subf %82, %83 : vector<1x1024xf32>
    %cst_37 = arith.constant 0.000000e+00 : f32
    %85 = vector.broadcast %cst_37 : f32 to vector<1x1024xf32>
    %86 = arith.maximumf %84, %85 : vector<1x1024xf32>
    %87 = vector.broadcast %80 : vector<1x1024xf32> to vector<128x1024xf32>
    %88 = arith.subf %73, %87 : vector<128x1024xf32>
    %cst_38 = arith.constant 9.99999974E-6 : f32
    %89 = vector.broadcast %cst_38 : f32 to vector<1x1024xf32>
    %90 = arith.addf %86, %89 : vector<1x1024xf32>
    %91 = math.rsqrt %90 : vector<1x1024xf32>
    %92 = vector.broadcast %91 : vector<1x1024xf32> to vector<128x1024xf32>
    %93 = arith.mulf %88, %92 : vector<128x1024xf32>
    %94 = arith.truncf %93 : vector<128x1024xf32> to vector<128x1024xbf16>
    %c0_39 = arith.constant 0 : index
    %c0_40 = arith.constant 0 : index
    %95 = vector.load %arg7[%c0_39, %c0_40] : memref<1024x896xbf16, #tpu.memory_space<vmem>>, vector<1024x896xbf16>
    %cst_41 = arith.constant dense<0.000000e+00> : vector<128x896xf32>
    %96 = tpu.matmul %94, %95, %cst_41 {dimension_numbers = #tpu.dot_dimension_numbers<[1], [0], [0], [1], [0, 0, 1, 1], [], []>} : vector<128x1024xbf16>, vector<1024x896xbf16>, vector<128x896xf32> -> vector<128x896xf32>
    %c0_42 = arith.constant 0 : index
    %c0_43 = arith.constant 0 : index
    %97 = vector.load %arg8[%c0_42, %c0_43] : memref<1x896xf32, #tpu.memory_space<vmem>>, vector<1x896xf32>
    %98 = vector.broadcast %97 : vector<1x896xf32> to vector<128x896xf32>
    %99 = arith.addf %96, %98 : vector<128x896xf32>
    %100 = math.tanh %99 : vector<128x896xf32>
    %c0_44 = arith.constant 0 : index
    %c0_45 = arith.constant 0 : index
    %101 = vector.load %arg9[%c0_44, %c0_45] : memref<128x896xf32, #tpu.memory_space<vmem>>, vector<128x896xf32>
    tpu.vector_store %arg9[%c0_44, %c0_45], %100 {strides = array<i32>} : memref<128x896xf32, #tpu.memory_space<vmem>>, vector<128x896xf32>,
    return
  }
}

</mosaic_0001>

<llo_original>
// kernel: tpu_custom_call.1
$region0: #{tpu_custom_call.1}
  #allocation0 [shape = 'u32[]', space=smem, size = 0x4, offset = 0x4, fixed_abs, tag = 'smem constant byte address 0x4 - core index']
  #allocation1 [shape = 'u32[144,128]{1,0:T(1,128)}', space=vmem, size = 0x12000, scoped, tag = 'internal scratch']
  %s0 = inlined_call_operand.vmem [shape: f32[128,64], index: 0, kind: input, shape index: {}]
  %s1 = inlined_call_operand.hbm [shape: bf16[64,256], index: 1, kind: input, shape index: {}]
  %s2 = inlined_call_operand.hbm [shape: f32[1,256], index: 2, kind: input, shape index: {}]
  %s3 = inlined_call_operand.hbm [shape: bf16[256,512], index: 3, kind: input, shape index: {}]
  %s4 = inlined_call_operand.hbm [shape: f32[1,512], index: 4, kind: input, shape index: {}]
  %s5 = inlined_call_operand.hbm [shape: bf16[512,1024], index: 5, kind: input, shape index: {}]
  %s6 = inlined_call_operand.hbm [shape: f32[1,1024], index: 6, kind: input, shape index: {}]
  %s7 = inlined_call_operand.hbm [shape: bf16[1024,896], index: 7, kind: input, shape index: {}]
  %s8 = inlined_call_operand.hbm [shape: f32[1,896], index: 8, kind: input, shape index: {}]
  %s9 = inlined_call_operand.hbm [shape: f32[128,896], index: 9, kind: output, shape index: {}]
  %s10 = sld [smem:[#allocation0]]
  $region78: #{tpu_custom_call.1} parent=0
    _
  %s12 = ssub.s32 1, %s10
  %s13 = scalar_select 0, %s12, %s10
  $region1: #{tpu_custom_call.1} parent=0
    #allocation2 [shape = 'u8[32768]{0}', space=vmem, size = 0x8000, scoped, tag = 'input window, operand 1, single buffered']
    #allocation3 [shape = 's32[1]{0}', space=sflag, size = 0x4, scoped, tag = 'scoped memory for tpu_custom_call.1']
    #allocation4 [shape = 's32[1]{0}', space=sflag, size = 0x4, scoped, tag = 'scoped memory for tpu_custom_call.1']
    #allocation5 [shape = 'u8[1024]{0}', space=vmem, size = 0x400, scoped, tag = 'input window, operand 2, single buffered']
    #allocation6 [shape = 's32[1]{0}', space=sflag, size = 0x4, scoped, tag = 'scoped memory for tpu_custom_call.1']
    #allocation7 [shape = 'u8[262144]{0}', space=vmem, size = 0x40000, scoped, tag = 'input window, operand 3, single buffered']
    #allocation8 [shape = 'u8[2048]{0}', space=vmem, size = 0x800, scoped, tag = 'input window, operand 4, single buffered']
    #allocation9 [shape = 's32[1]{0}', space=sflag, size = 0x4, scoped, tag = 'scoped memory for tpu_custom_call.1']
    #allocation10 [shape = 'u8[1048576]{0}', space=vmem, size = 0x100000, scoped, tag = 'input window, operand 5, single buffered']
    #allocation11 [shape = 'u8[4096]{0}', space=vmem, size = 0x1000, scoped, tag = 'input window, operand 6, single buffered']
    #allocation12 [shape = 's32[1]{0}', space=sflag, size = 0x4, scoped, tag = 'scoped memory for tpu_custom_call.1']
    #allocation13 [shape = 'u8[1835008]{0}', space=vmem, size = 0x1c0000, scoped, tag = 'input window, operand 7, single buffered']
    #allocation14 [shape = 'u8[3584]{0}', space=vmem, size = 0x1000, scoped, tag = 'input window, operand 8, single buffered']
    #allocation15 [shape = 's32[1]{0}', space=sflag, size = 0x4, scoped, tag = 'scoped memory for tpu_custom_call.1']
    #allocation16 [shape = 'u8[458752]{0}', space=vmem, size = 0x70000, scoped, tag = 'output window, operand 0, single buffered']
    %14 = vsyncpa [#allocation3], 0
    %15 = vsyncpa [#allocation6], 0
    %16 = vsyncpa [#allocation9], 0
    %17 = vsyncpa [#allocation12], 0
    %18 = vsyncpa [#allocation15], 0
    %19 = vsyncpa [#allocation4], 0
    // Predicated region
    $region2: #{tpu_custom_call.1} parent=1 // pred_check
      _
    $region3: #{tpu_custom_call.1} parent=1 // pred_check_branch
      %21 = sbr.rel (0) target = $region5
    $region4: #{tpu_custom_call.1} parent=1 // pred_region
      _
    $region5: #{tpu_custom_call.1} parent=1 // pred_fallthru
      _
    // Predicated region
    $region6: #{tpu_custom_call.1} parent=1 // pred_check
      _
    $region7: #{tpu_custom_call.1} parent=1 // pred_check_branch
      %23 = sbr.rel (0) target = $region9
    $region8: #{tpu_custom_call.1} parent=1 // pred_region
      %s25 = ssub.s32 1024, 1024
      %26 = vsyncadd [#allocation3], %s25
      %s27 = sshll.u32 [#allocation2], 4
      %s28 = int_to_ptr.vmem [resolvable:$true] %s27
      %33 = dma.hbm_to_vmem [thread:$0]  %s1, 1024, %s28, [#allocation3], 128, 128, 8
    $region9: #{tpu_custom_call.1} parent=1 // pred_fallthru
      _
    // Predicated region
    $region10: #{tpu_custom_call.1} parent=1 // pred_check
      _
    $region11: #{tpu_custom_call.1} parent=1 // pred_check_branch
      %35 = sbr.rel (0) target = $region13
    $region12: #{tpu_custom_call.1} parent=1 // pred_region
      %s37 = ssub.s32 32, 32
      %38 = vsyncadd [#allocation6], %s37
      %s40 = sshll.u32 [#allocation5], 4
      %s41 = int_to_ptr.vmem [resolvable:$true] %s40
      %43 = dma.hbm_to_vmem [thread:$0]  %s2, 32, %s41, [#allocation6]
    $region13: #{tpu_custom_call.1} parent=1 // pred_fallthru
      _
    // Predicated region
    $region14: #{tpu_custom_call.1} parent=1 // pred_check
      _
    $region15: #{tpu_custom_call.1} parent=1 // pred_check_branch
      %45 = sbr.rel (0) target = $region17
    $region16: #{tpu_custom_call.1} parent=1 // pred_region
      %s47 = ssub.s32 8192, 8192
      %48 = vsyncadd [#allocation6], %s47
      %s49 = sshll.u32 [#allocation7], 4
      %s50 = int_to_ptr.vmem [resolvable:$true] %s49
      %55 = dma.hbm_to_vmem [thread:$0]  %s3, 8192, %s50, [#allocation6], 256, 256, 16
    $region17: #{tpu_custom_call.1} parent=1 // pred_fallthru
      _
    // Predicated region
    $region18: #{tpu_custom_call.1} parent=1 // pred_check
      _
    $region19: #{tpu_custom_call.1} parent=1 // pred_check_branch
      %57 = sbr.rel (0) target = $region21
    $region20: #{tpu_custom_call.1} parent=1 // pred_region
      %s59 = ssub.s32 64, 64
      %60 = vsyncadd [#allocation9], %s59
      %s62 = sshll.u32 [#allocation8], 4
      %s63 = int_to_ptr.vmem [resolvable:$true] %s62
      %65 = dma.hbm_to_vmem [thread:$0]  %s4, 64, %s63, [#allocation9]
    $region21: #{tpu_custom_call.1} parent=1 // pred_fallthru
      _
    // Predicated region
    $region22: #{tpu_custom_call.1} parent=1 // pred_check
      _
    $region23: #{tpu_custom_call.1} parent=1 // pred_check_branch
      %67 = sbr.rel (0) target = $region25
    $region24: #{tpu_custom_call.1} parent=1 // pred_region
      %s69 = ssub.s32 32768, 32768
      %70 = vsyncadd [#allocation9], %s69
      %s71 = sshll.u32 [#allocation10], 4
      %s72 = int_to_ptr.vmem [resolvable:$true] %s71
      %77 = dma.hbm_to_vmem [thread:$0]  %s5, 32768, %s72, [#allocation9], 512, 512, 32
    $region25: #{tpu_custom_call.1} parent=1 // pred_fallthru
      _
    // Predicated region
    $region26: #{tpu_custom_call.1} parent=1 // pred_check
      _
    $region27: #{tpu_custom_call.1} parent=1 // pred_check_branch
      %79 = sbr.rel (0) target = $region29
    $region28: #{tpu_custom_call.1} parent=1 // pred_region
      %s81 = ssub.s32 128, 128
      %82 = vsyncadd [#allocation12], %s81
      %s84 = sshll.u32 [#allocation11], 4
      %s85 = int_to_ptr.vmem [resolvable:$true] %s84
      %87 = dma.hbm_to_vmem [thread:$0]  %s6, 128, %s85, [#allocation12]
    $region29: #{tpu_custom_call.1} parent=1 // pred_fallthru
      _
    // Predicated region
    $region30: #{tpu_custom_call.1} parent=1 // pred_check
      _
    $region31: #{tpu_custom_call.1} parent=1 // pred_check_branch
      %89 = sbr.rel (0) target = $region33
    $region32: #{tpu_custom_call.1} parent=1 // pred_region
      %s91 = ssub.s32 57344, 57344
      %92 = vsyncadd [#allocation12], %s91
      %s93 = sshll.u32 [#allocation13], 4
      %s94 = int_to_ptr.vmem [resolvable:$true] %s93
      %99 = dma.hbm_to_vmem [thread:$0]  %s7, 57344, %s94, [#allocation12], 448, 448, 28
    $region33: #{tpu_custom_call.1} parent=1 // pred_fallthru
      _
    // Predicated region
    $region34: #{tpu_custom_call.1} parent=1 // pred_check
      _
    $region35: #{tpu_custom_call.1} parent=1 // pred_check_branch
      %101 = sbr.rel (0) target = $region37
    $region36: #{tpu_custom_call.1} parent=1 // pred_region
      %s103 = ssub.s32 112, 112
      %104 = vsyncadd [#allocation15], %s103
      %s106 = sshll.u32 [#allocation14], 4
      %s107 = int_to_ptr.vmem [resolvable:$true] %s106
      %109 = dma.hbm_to_vmem [thread:$0]  %s8, 112, %s107, [#allocation15]
    $region37: #{tpu_custom_call.1} parent=1 // pred_fallthru
      _
    // Predicated region
    $region38: #{tpu_custom_call.1} parent=1 // pred_check
      _
    $region39: #{tpu_custom_call.1} parent=1 // pred_check_branch
      %111 = sbr.rel (0) target = $region41
    $region40: #{tpu_custom_call.1} parent=1 // pred_region
      %112 = dma.done [#allocation3], 1024
    $region41: #{tpu_custom_call.1} parent=1 // pred_fallthru
      _
    // Predicated region
    $region42: #{tpu_custom_call.1} parent=1 // pred_check
      _
    $region43: #{tpu_custom_call.1} parent=1 // pred_check_branch
      %114 = sbr.rel (0) target = $region45
    $region44: #{tpu_custom_call.1} parent=1 // pred_region
      %115 = dma.done [#allocation6], 32
    $region45: #{tpu_custom_call.1} parent=1 // pred_fallthru
      _
    // Predicated region
    $region46: #{tpu_custom_call.1} parent=1 // pred_check
      _
    $region47: #{tpu_custom_call.1} parent=1 // pred_check_branch
      %117 = sbr.rel (0) target = $region49
    $region48: #{tpu_custom_call.1} parent=1 // pred_region
      %118 = dma.done [#allocation6], 8192
    $region49: #{tpu_custom_call.1} parent=1 // pred_fallthru
      _
    // Predicated region
    $region50: #{tpu_custom_call.1} parent=1 // pred_check
      _
    $region51: #{tpu_custom_call.1} parent=1 // pred_check_branch
      %120 = sbr.rel (0) target = $region53
    $region52: #{tpu_custom_call.1} parent=1 // pred_region
      %121 = dma.done [#allocation9], 64
    $region53: #{tpu_custom_call.1} parent=1 // pred_fallthru
      _
    // Predicated region
    $region54: #{tpu_custom_call.1} parent=1 // pred_check
      _
    $region55: #{tpu_custom_call.1} parent=1 // pred_check_branch
      %123 = sbr.rel (0) target = $region57
    $region56: #{tpu_custom_call.1} parent=1 // pred_region
      %124 = dma.done [#allocation9], 32768
    $region57: #{tpu_custom_call.1} parent=1 // pred_fallthru
      _
    // Predicated region
    $region58: #{tpu_custom_call.1} parent=1 // pred_check
      _
    $region59: #{tpu_custom_call.1} parent=1 // pred_check_branch
      %126 = sbr.rel (0) target = $region61
    $region60: #{tpu_custom_call.1} parent=1 // pred_region
      %127 = dma.done [#allocation12], 128
    $region61: #{tpu_custom_call.1} parent=1 // pred_fallthru
      _
    // Predicated region
    $region62: #{tpu_custom_call.1} parent=1 // pred_check
      _
    $region63: #{tpu_custom_call.1} parent=1 // pred_check_branch
      %129 = sbr.rel (0) target = $region65
    $region64: #{tpu_custom_call.1} parent=1 // pred_region
      %130 = dma.done [#allocation12], 57344
    $region65: #{tpu_custom_call.1} parent=1 // pred_fallthru
      _
    // Predicated region
    $region66: #{tpu_custom_call.1} parent=1 // pred_check
      _
    $region67: #{tpu_custom_call.1} parent=1 // pred_check_branch
      %132 = sbr.rel (0) target = $region69
    $region68: #{tpu_custom_call.1} parent=1 // pred_region
      %133 = dma.done [#allocation15], 112
    $region69: #{tpu_custom_call.1} parent=1 // pred_fallthru
      _
    %v135 = vld [vmem:[%s0] sm:$0xff]
    %v136 = vld [vmem:[%s0 + $0x8] sm:$0xff]
    %v137 = vld [vmem:[%s0 + $0x10] sm:$0xff]
    %v138 = vld [vmem:[%s0 + $0x18] sm:$0xff]
    %v139 = vld [vmem:[%s0 + $0x20] sm:$0xff]
    %v140 = vld [vmem:[%s0 + $0x28] sm:$0xff]
    %v141 = vld [vmem:[%s0 + $0x30] sm:$0xff]
    %v142 = vld [vmem:[%s0 + $0x38] sm:$0xff]
    %v143 = vld [vmem:[%s0 + $0x40] sm:$0xff]
    %v144 = vld [vmem:[%s0 + $0x48] sm:$0xff]
    %v145 = vld [vmem:[%s0 + $0x50] sm:$0xff]
    %v146 = vld [vmem:[%s0 + $0x58] sm:$0xff]
    %v147 = vld [vmem:[%s0 + $0x60] sm:$0xff]
    %v148 = vld [vmem:[%s0 + $0x68] sm:$0xff]
    %v149 = vld [vmem:[%s0 + $0x70] sm:$0xff]
    %v150 = vld [vmem:[%s0 + $0x78] sm:$0xff]
    %v151 = vpack.c.bf16 %v136, %v135
    %v152 = vpack.c.bf16 %v138, %v137
    %v153 = vpack.c.bf16 %v140, %v139
    %v154 = vpack.c.bf16 %v142, %v141
    %v155 = vpack.c.bf16 %v144, %v143
    %v156 = vpack.c.bf16 %v146, %v145
    %v157 = vpack.c.bf16 %v148, %v147
    %v158 = vpack.c.bf16 %v150, %v149
    %v159 = vld [vmem:[#allocation2] sm:$0xff]
    %v160 = vld [vmem:[#allocation2 + $0x8] sm:$0xff]
    %v161 = vld [vmem:[#allocation2 + $0x10] sm:$0xff]
    %v162 = vld [vmem:[#allocation2 + $0x18] sm:$0xff]
    %v163 = vld [vmem:[#allocation2 + $0x20] sm:$0xff]
    %v164 = vld [vmem:[#allocation2 + $0x28] sm:$0xff]
    %v165 = vld [vmem:[#allocation2 + $0x30] sm:$0xff]
    %v166 = vld [vmem:[#allocation2 + $0x38] sm:$0xff]
    %v167 = vld [vmem:[#allocation5] sm:$0x3]
    %v169 = vlaneseq
    %v170 = vshrl.u32 %v169, 7
    %v171 = vsub.s32 0, %v170
    %v172 = vrot.slane %v167, %v171
    %v173 = vlaneseq
    %v174 = vshrl.u32 %v173, 7
    %v175 = vsub.s32 1, %v174
    %v176 = vrot.slane %v167, %v175
    %v187 = vunpack.c.l.b16 %v159
    %v188 = vunpack.c.h.b16 %v159
    %v189 = vunpack.c.l.b16 %v160
    %v190 = vunpack.c.h.b16 %v160
    %v191 = vunpack.c.l.b16 %v161
    %v192 = vunpack.c.h.b16 %v161
    %v193 = vunpack.c.l.b16 %v162
    %v194 = vunpack.c.h.b16 %v162
    %v195 = vunpack.c.l.b16 %v163
    %v196 = vunpack.c.h.b16 %v163
    %v197 = vunpack.c.l.b16 %v164
    %v198 = vunpack.c.h.b16 %v164
    %v199 = vunpack.c.l.b16 %v165
    %v200 = vunpack.c.h.b16 %v165
    %v201 = vunpack.c.l.b16 %v166
    %v202 = vunpack.c.h.b16 %v166
    %v203 = vpack.c.b16 %v189, %v187
    %v204 = vpack.c.b16 %v190, %v188
    %v205 = vpack.c.b16 %v193, %v191
    %v206 = vpack.c.b16 %v194, %v192
    %v207 = vpack.c.b16 %v197, %v195
    %v208 = vpack.c.b16 %v198, %v196
    %v209 = vpack.c.b16 %v201, %v199
    %v210 = vpack.c.b16 %v202, %v200
    %vm219 = vcmask 523264
    %v221 = vsel %vm219, %v151, 0
    %v224 = vsel %vm219, %v152, 0
    %v227 = vsel %vm219, %v153, 0
    %v230 = vsel %vm219, %v154, 0
    %v233 = vsel %vm219, %v155, 0
    %v236 = vsel %vm219, %v156, 0
    %v239 = vsel %vm219, %v157, 0
    %v242 = vsel %vm219, %v158, 0
    %244 = vmatprep.subr.bf16.mxu0 %v204
    %245 = vmatpush1.bf16.msra.mxu0 %v203
    %246 = vmatprep.subr.bf16.mxu0 %v206
    %247 = vmatpush1.bf16.msra.mxu0 %v205
    %248 = vmatprep.subr.bf16.mxu0 %v208
    %249 = vmatpush1.bf16.msra.mxu0 %v207
    %250 = vmatprep.subr.bf16.mxu0 %v210
    %251 = vmatpush1.bf16.msra.mxu0 %v209
    %252 = vmatprep.subr.bf16.mxu0 0
    %253 = vmatpush1.bf16.msra.mxu0 0
    %254 = vmatprep.subr.bf16.mxu0 0
    %255 = vmatpush1.bf16.msra.mxu0 0
    %256 = vmatprep.subr.bf16.mxu0 0
    %257 = vmatpush1.bf16.msra.mxu0 0
    %258 = vmatprep.subr.bf16.mxu0 0
    %259 = vmatpush1.bf16.msra.mxu0 0
    %260 = vmatprep.subr.bf16.mxu0 0
    %261 = vmatpush1.bf16.msra.mxu0 0
    %262 = vmatprep.subr.bf16.mxu0 0
    %263 = vmatpush1.bf16.msra.mxu0 0
    %264 = vmatprep.subr.bf16.mxu0 0
    %265 = vmatpush1.bf16.msra.mxu0 0
    %266 = vmatprep.subr.bf16.mxu0 0
    %267 = vmatpush1.bf16.msra.mxu0 0
    %268 = vmatprep.subr.bf16.mxu0 0
    %269 = vmatpush1.bf16.msra.mxu0 0
    %270 = vmatprep.subr.bf16.mxu0 0
    %271 = vmatpush1.bf16.msra.mxu0 0
    %272 = vmatprep.subr.bf16.mxu0 0
    %273 = vmatpush1.bf16.msra.mxu0 0
    %274 = vmatprep.subr.bf16.mxu0 0
    %275 = vmatpush1.bf16.msra.mxu0 0
    %276 = vmatprep.mubr.bf16.mxu0 0
    %277 = vmatmul.mubr.bf16.gmra.mrb[0].mxu0 %v221
    %v278 = vpop.f32.mrb[0].mxu0
    %v279 = vadd.f32 %v172, %v278
    %v280 = vpop.f32.mrb[0].mxu0
    %v281 = vadd.f32 %v176, %v280
    %v282 = vpop.f32.mrb[0].mxu0
    %v283 = vadd.f32 %v172, %v282
    %v284 = vpop.f32.mrb[0].mxu0
    %v285 = vadd.f32 %v176, %v284
    %286 = vmatprep.mubr.bf16.mxu0 0
    %287 = vmatmul.mubr.bf16.gmra.mrb[0].mxu0 %v224
    %v288 = vpop.f32.mrb[0].mxu0
    %v289 = vadd.f32 %v172, %v288
    %v290 = vpop.f32.mrb[0].mxu0
    %v291 = vadd.f32 %v176, %v290
    %v292 = vpop.f32.mrb[0].mxu0
    %v293 = vadd.f32 %v172, %v292
    %v294 = vpop.f32.mrb[0].mxu0
    %v295 = vadd.f32 %v176, %v294
    %296 = vmatprep.mubr.bf16.mxu0 0
    %297 = vmatmul.mubr.bf16.gmra.mrb[0].mxu0 %v227
    %v298 = vpop.f32.mrb[0].mxu0
    %v299 = vadd.f32 %v172, %v298
    %v300 = vpop.f32.mrb[0].mxu0
    %v301 = vadd.f32 %v176, %v300
    %v302 = vpop.f32.mrb[0].mxu0
    %v303 = vadd.f32 %v172, %v302
    %v304 = vpop.f32.mrb[0].mxu0
    %v305 = vadd.f32 %v176, %v304
    %306 = vmatprep.mubr.bf16.mxu0 0
    %307 = vmatmul.mubr.bf16.gmra.mrb[0].mxu0 %v230
    %v308 = vpop.f32.mrb[0].mxu0
    %v309 = vadd.f32 %v172, %v308
    %v310 = vpop.f32.mrb[0].mxu0
    %v311 = vadd.f32 %v176, %v310
    %v312 = vpop.f32.mrb[0].mxu0
    %v313 = vadd.f32 %v172, %v312
    %v314 = vpop.f32.mrb[0].mxu0
    %v315 = vadd.f32 %v176, %v314
    %316 = vmatprep.mubr.bf16.mxu0 0
    %317 = vmatmul.mubr.bf16.gmra.mrb[0].mxu0 %v233
    %v318 = vpop.f32.mrb[0].mxu0
    %v319 = vadd.f32 %v172, %v318
    %v320 = vpop.f32.mrb[0].mxu0
    %v321 = vadd.f32 %v176, %v320
    %v322 = vpop.f32.mrb[0].mxu0
    %v323 = vadd.f32 %v172, %v322
    %v324 = vpop.f32.mrb[0].mxu0
    %v325 = vadd.f32 %v176, %v324
    %326 = vmatprep.mubr.bf16.mxu0 0
    %327 = vmatmul.mubr.bf16.gmra.mrb[0].mxu0 %v236
    %v328 = vpop.f32.mrb[0].mxu0
    %v329 = vadd.f32 %v172, %v328
    %v330 = vpop.f32.mrb[0].mxu0
    %v331 = vadd.f32 %v176, %v330
    %v332 = vpop.f32.mrb[0].mxu0
    %v333 = vadd.f32 %v172, %v332
    %v334 = vpop.f32.mrb[0].mxu0
    %v335 = vadd.f32 %v176, %v334
    %336 = vmatprep.mubr.bf16.mxu0 0
    %337 = vmatmul.mubr.bf16.gmra.mrb[0].mxu0 %v239
    %v338 = vpop.f32.mrb[0].mxu0
    %v339 = vadd.f32 %v172, %v338
    %v340 = vpop.f32.mrb[0].mxu0
    %v341 = vadd.f32 %v176, %v340
    %v342 = vpop.f32.mrb[0].mxu0
    %v343 = vadd.f32 %v172, %v342
    %v344 = vpop.f32.mrb[0].mxu0
    %v345 = vadd.f32 %v176, %v344
    %346 = vmatprep.mubr.bf16.mxu0 0
    %347 = vmatmul.mubr.bf16.gmra.mrb[0].mxu0 %v242
    %v348 = vpop.f32.mrb[0].mxu0
    %v349 = vadd.f32 %v172, %v348
    %v350 = vpop.f32.mrb[0].mxu0
    %v351 = vadd.f32 %v176, %v350
    %v352 = vpop.f32.mrb[0].mxu0
    %v353 = vadd.f32 %v172, %v352
    %v354 = vpop.f32.mrb[0].mxu0
    %v355 = vadd.f32 %v176, %v354
    %356 = vdwg.mxu0
    %vm357 = vcmp.gt.f32.partialorder %v279, 0.0
    %vm358 = vcmp.gt.f32.partialorder %v281, 0.0
    %vm359 = vcmp.gt.f32.partialorder %v283, 0.0
    %vm360 = vcmp.gt.f32.partialorder %v285, 0.0
    %vm361 = vcmp.gt.f32.partialorder %v289, 0.0
    %vm362 = vcmp.gt.f32.partialorder %v291, 0.0
    %vm363 = vcmp.gt.f32.partialorder %v293, 0.0
    %vm364 = vcmp.gt.f32.partialorder %v295, 0.0
    %vm365 = vcmp.gt.f32.partialorder %v299, 0.0
    %vm366 = vcmp.gt.f32.partialorder %v301, 0.0
    %vm367 = vcmp.gt.f32.partialorder %v303, 0.0
    %vm368 = vcmp.gt.f32.partialorder %v305, 0.0
    %vm369 = vcmp.gt.f32.partialorder %v309, 0.0
    %vm370 = vcmp.gt.f32.partialorder %v311, 0.0
    %vm371 = vcmp.gt.f32.partialorder %v313, 0.0
    %vm372 = vcmp.gt.f32.partialorder %v315, 0.0
    %vm373 = vcmp.gt.f32.partialorder %v319, 0.0
    %vm374 = vcmp.gt.f32.partialorder %v321, 0.0
    %vm375 = vcmp.gt.f32.partialorder %v323, 0.0
    %vm376 = vcmp.gt.f32.partialorder %v325, 0.0
    %vm377 = vcmp.gt.f32.partialorder %v329, 0.0
    %vm378 = vcmp.gt.f32.partialorder %v331, 0.0
    %vm379 = vcmp.gt.f32.partialorder %v333, 0.0
    %vm380 = vcmp.gt.f32.partialorder %v335, 0.0
    %vm381 = vcmp.gt.f32.partialorder %v339, 0.0
    %vm382 = vcmp.gt.f32.partialorder %v341, 0.0
    %vm383 = vcmp.gt.f32.partialorder %v343, 0.0
    %vm384 = vcmp.gt.f32.partialorder %v345, 0.0
    %vm385 = vcmp.gt.f32.partialorder %v349, 0.0
    %vm386 = vcmp.gt.f32.partialorder %v351, 0.0
    %vm387 = vcmp.gt.f32.partialorder %v353, 0.0
    %vm388 = vcmp.gt.f32.partialorder %v355, 0.0
    %v389 = vmul.f32 %v279, 0.2
    %v390 = vmul.f32 %v281, 0.2
    %v391 = vmul.f32 %v283, 0.2
    %v392 = vmul.f32 %v285, 0.2
    %v393 = vmul.f32 %v289, 0.2
    %v394 = vmul.f32 %v291, 0.2
    %v395 = vmul.f32 %v293, 0.2
    %v396 = vmul.f32 %v295, 0.2
    %v397 = vmul.f32 %v299, 0.2
    %v398 = vmul.f32 %v301, 0.2
    %v399 = vmul.f32 %v303, 0.2
    %v400 = vmul.f32 %v305, 0.2
    %v401 = vmul.f32 %v309, 0.2
    %v402 = vmul.f32 %v311, 0.2
    %v403 = vmul.f32 %v313, 0.2
    %v404 = vmul.f32 %v315, 0.2
    %v405 = vmul.f32 %v319, 0.2
    %v406 = vmul.f32 %v321, 0.2
    %v407 = vmul.f32 %v323, 0.2
    %v408 = vmul.f32 %v325, 0.2
    %v409 = vmul.f32 %v329, 0.2
    %v410 = vmul.f32 %v331, 0.2
    %v411 = vmul.f32 %v333, 0.2
    %v412 = vmul.f32 %v335, 0.2
    %v413 = vmul.f32 %v339, 0.2
    %v414 = vmul.f32 %v341, 0.2
    %v415 = vmul.f32 %v343, 0.2
    %v416 = vmul.f32 %v345, 0.2
    %v417 = vmul.f32 %v349, 0.2
    %v418 = vmul.f32 %v351, 0.2
    %v419 = vmul.f32 %v353, 0.2
    %v420 = vmul.f32 %v355, 0.2
    %v421 = vsel %vm357, %v279, %v389
    %v422 = vsel %vm358, %v281, %v390
    %v423 = vsel %vm359, %v283, %v391
    %v424 = vsel %vm360, %v285, %v392
    %v425 = vsel %vm361, %v289, %v393
    %v426 = vsel %vm362, %v291, %v394
    %v427 = vsel %vm363, %v293, %v395
    %v428 = vsel %vm364, %v295, %v396
    %v429 = vsel %vm365, %v299, %v397
    %v430 = vsel %vm366, %v301, %v398
    %v431 = vsel %vm367, %v303, %v399
    %v432 = vsel %vm368, %v305, %v400
    %v433 = vsel %vm369, %v309, %v401
    %v434 = vsel %vm370, %v311, %v402
    %v435 = vsel %vm371, %v313, %v403
    %v436 = vsel %vm372, %v315, %v404
    %v437 = vsel %vm373, %v319, %v405
    %v438 = vsel %vm374, %v321, %v406
    %v439 = vsel %vm375, %v323, %v407
    %v440 = vsel %vm376, %v325, %v408
    %v441 = vsel %vm377, %v329, %v409
    %v442 = vsel %vm378, %v331, %v410
    %v443 = vsel %vm379, %v333, %v411
    %v444 = vsel %vm380, %v335, %v412
    %v445 = vsel %vm381, %v339, %v413
    %v446 = vsel %vm382, %v341, %v414
    %v447 = vsel %vm383, %v343, %v415
    %v448 = vsel %vm384, %v345, %v416
    %v449 = vsel %vm385, %v349, %v417
    %v450 = vsel %vm386, %v351, %v418
    %v451 = vsel %vm387, %v353, %v419
    %v452 = vsel %vm388, %v355, %v420
    %v453 = vadd.f32 %v421, %v423
    %v454 = vadd.f32 %v453, %v425
    %v455 = vadd.f32 %v454, %v427
    %v456 = vadd.f32 %v455, %v429
    %v457 = vadd.f32 %v456, %v431
    %v458 = vadd.f32 %v457, %v433
    %v459 = vadd.f32 %v458, %v435
    %v460 = vadd.f32 %v459, %v437
    %v461 = vadd.f32 %v460, %v439
    %v462 = vadd.f32 %v461, %v441
    %v463 = vadd.f32 %v462, %v443
    %v464 = vadd.f32 %v463, %v445
    %v465 = vadd.f32 %v464, %v447
    %v466 = vadd.f32 %v465, %v449
    %v467 = vadd.f32 %v466, %v451
    %v468 = vrot.slane %v467, 4
    %v469 = vadd.f32 %v467, %v468
    %v470 = vrot.slane %v469, 2
    %v471 = vadd.f32 %v469, %v470
    %v472 = vrot.slane %v471, 1
    %v473 = vadd.f32 %v471, %v472
    %v474 = vadd.f32 %v422, %v424
    %v475 = vadd.f32 %v474, %v426
    %v476 = vadd.f32 %v475, %v428
    %v477 = vadd.f32 %v476, %v430
    %v478 = vadd.f32 %v477, %v432
    %v479 = vadd.f32 %v478, %v434
    %v480 = vadd.f32 %v479, %v436
    %v481 = vadd.f32 %v480, %v438
    %v482 = vadd.f32 %v481, %v440
    %v483 = vadd.f32 %v482, %v442
    %v484 = vadd.f32 %v483, %v444
    %v485 = vadd.f32 %v484, %v446
    %v486 = vadd.f32 %v485, %v448
    %v487 = vadd.f32 %v486, %v450
    %v488 = vadd.f32 %v487, %v452
    %v489 = vrot.slane %v488, 4
    %v490 = vadd.f32 %v488, %v489
    %v491 = vrot.slane %v490, 2
    %v492 = vadd.f32 %v490, %v491
    %v493 = vrot.slane %v492, 1
    %v494 = vadd.f32 %v492, %v493
    %v495 = vmul.f32 %v421, %v421
    %v496 = vmul.f32 %v422, %v422
    %v497 = vmul.f32 %v423, %v423
    %v498 = vmul.f32 %v424, %v424
    %v499 = vmul.f32 %v425, %v425
    %v500 = vmul.f32 %v426, %v426
    %v501 = vmul.f32 %v427, %v427
    %v502 = vmul.f32 %v428, %v428
    %v503 = vmul.f32 %v429, %v429
    %v504 = vmul.f32 %v430, %v430
    %v505 = vmul.f32 %v431, %v431
    %v506 = vmul.f32 %v432, %v432
    %v507 = vmul.f32 %v433, %v433
    %v508 = vmul.f32 %v434, %v434
    %v509 = vmul.f32 %v435, %v435
    %v510 = vmul.f32 %v436, %v436
    %v511 = vmul.f32 %v437, %v437
    %v512 = vmul.f32 %v438, %v438
    %v513 = vmul.f32 %v439, %v439
    %v514 = vmul.f32 %v440, %v440
    %v515 = vmul.f32 %v441, %v441
    %v516 = vmul.f32 %v442, %v442
    %v517 = vmul.f32 %v443, %v443
    %v518 = vmul.f32 %v444, %v444
    %v519 = vmul.f32 %v445, %v445
    %v520 = vmul.f32 %v446, %v446
    %v521 = vmul.f32 %v447, %v447
    %v522 = vmul.f32 %v448, %v448
    %v523 = vmul.f32 %v449, %v449
    %v524 = vmul.f32 %v450, %v450
    %v525 = vmul.f32 %v451, %v451
    %v526 = vmul.f32 %v452, %v452
    %v527 = vadd.f32 %v495, %v497
    %v528 = vadd.f32 %v527, %v499
    %v529 = vadd.f32 %v528, %v501
    %v530 = vadd.f32 %v529, %v503
    %v531 = vadd.f32 %v530, %v505
    %v532 = vadd.f32 %v531, %v507
    %v533 = vadd.f32 %v532, %v509
    %v534 = vadd.f32 %v533, %v511
    %v535 = vadd.f32 %v534, %v513
    %v536 = vadd.f32 %v535, %v515
    %v537 = vadd.f32 %v536, %v517
    %v538 = vadd.f32 %v537, %v519
    %v539 = vadd.f32 %v538, %v521
    %v540 = vadd.f32 %v539, %v523
    %v541 = vadd.f32 %v540, %v525
    %v542 = vrot.slane %v541, 4
    %v543 = vadd.f32 %v541, %v542
    %v544 = vrot.slane %v543, 2
    %v545 = vadd.f32 %v543, %v544
    %v546 = vrot.slane %v545, 1
    %v547 = vadd.f32 %v545, %v546
    %v548 = vadd.f32 %v496, %v498
    %v549 = vadd.f32 %v548, %v500
    %v550 = vadd.f32 %v549, %v502
    %v551 = vadd.f32 %v550, %v504
    %v552 = vadd.f32 %v551, %v506
    %v553 = vadd.f32 %v552, %v508
    %v554 = vadd.f32 %v553, %v510
    %v555 = vadd.f32 %v554, %v512
    %v556 = vadd.f32 %v555, %v514
    %v557 = vadd.f32 %v556, %v516
    %v558 = vadd.f32 %v557, %v518
    %v559 = vadd.f32 %v558, %v520
    %v560 = vadd.f32 %v559, %v522
    %v561 = vadd.f32 %v560, %v524
    %v562 = vadd.f32 %v561, %v526
    %v563 = vrot.slane %v562, 4
    %v564 = vadd.f32 %v562, %v563
    %v565 = vrot.slane %v564, 2
    %v566 = vadd.f32 %v564, %v565
    %v567 = vrot.slane %v566, 1
    %v568 = vadd.f32 %v566, %v567
    %v569 = vmul.f32 %v473, 0.0078125
    %v570 = vmul.f32 %v494, 0.0078125
    %v571 = vmul.f32 %v547, 0.0078125
    %v572 = vmul.f32 %v568, 0.0078125
    %v573 = vmul.f32 %v569, %v569
    %v574 = vmul.f32 %v570, %v570
    %v575 = vsub.f32 %v571, %v573
    %v576 = vsub.f32 %v572, %v574
    %v577 = vmax.f32 %v575, 0.0
    %v578 = vmax.f32 %v576, 0.0
    %v579 = vsub.f32 %v421, %v569
    %v580 = vsub.f32 %v422, %v570
    %v581 = vsub.f32 %v423, %v569
    %v582 = vsub.f32 %v424, %v570
    %v583 = vsub.f32 %v425, %v569
    %v584 = vsub.f32 %v426, %v570
    %v585 = vsub.f32 %v427, %v569
    %v586 = vsub.f32 %v428, %v570
    %v587 = vsub.f32 %v429, %v569
    %v588 = vsub.f32 %v430, %v570
    %v589 = vsub.f32 %v431, %v569
    %v590 = vsub.f32 %v432, %v570
    %v591 = vsub.f32 %v433, %v569
    %v592 = vsub.f32 %v434, %v570
    %v593 = vsub.f32 %v435, %v569
    %v594 = vsub.f32 %v436, %v570
    %v595 = vsub.f32 %v437, %v569
    %v596 = vsub.f32 %v438, %v570
    %v597 = vsub.f32 %v439, %v569
    %v598 = vsub.f32 %v440, %v570
    %v599 = vsub.f32 %v441, %v569
    %v600 = vsub.f32 %v442, %v570
    %v601 = vsub.f32 %v443, %v569
    %v602 = vsub.f32 %v444, %v570
    %v603 = vsub.f32 %v445, %v569
    %v604 = vsub.f32 %v446, %v570
    %v605 = vsub.f32 %v447, %v569
    %v606 = vsub.f32 %v448, %v570
    %v607 = vsub.f32 %v449, %v569
    %v608 = vsub.f32 %v450, %v570
    %v609 = vsub.f32 %v451, %v569
    %v610 = vsub.f32 %v452, %v570
    %v611 = vadd.f32 %v577, 1e-05
    %v612 = vadd.f32 %v578, 1e-05
    %v613 = vrsqrt.pop %v611
    %v614 = vrsqrt.pop %v612
    %v615 = vmul.f32 %v579, %v613
    %v616 = vmul.f32 %v580, %v614
    %v617 = vmul.f32 %v581, %v613
    %v618 = vmul.f32 %v582, %v614
    %v619 = vmul.f32 %v583, %v613
    %v620 = vmul.f32 %v584, %v614
    %v621 = vmul.f32 %v585, %v613
    %v622 = vmul.f32 %v586, %v614
    %v623 = vmul.f32 %v587, %v613
    %v624 = vmul.f32 %v588, %v614
    %v625 = vmul.f32 %v589, %v613
    %v626 = vmul.f32 %v590, %v614
    %v627 = vmul.f32 %v591, %v613
    %v628 = vmul.f32 %v592, %v614
    %v629 = vmul.f32 %v593, %v613
    %v630 = vmul.f32 %v594, %v614
    %v631 = vmul.f32 %v595, %v613
    %v632 = vmul.f32 %v596, %v614
    %v633 = vmul.f32 %v597, %v613
    %v634 = vmul.f32 %v598, %v614
    %v635 = vmul.f32 %v599, %v613
    %v636 = vmul.f32 %v600, %v614
    %v637 = vmul.f32 %v601, %v613
    %v638 = vmul.f32 %v602, %v614
    %v639 = vmul.f32 %v603, %v613
    %v640 = vmul.f32 %v604, %v614
    %v641 = vmul.f32 %v605, %v613
    %v642 = vmul.f32 %v606, %v614
    %v643 = vmul.f32 %v607, %v613
    %v644 = vmul.f32 %v608, %v614
    %v645 = vmul.f32 %v609, %v613
    %v646 = vmul.f32 %v610, %v614
    %v647 = vpack.c.bf16 %v617, %v615
    %v648 = vpack.c.bf16 %v618, %v616
    %v649 = vpack.c.bf16 %v621, %v619
    %v650 = vpack.c.bf16 %v622, %v620
    %v651 = vpack.c.bf16 %v625, %v623
    %v652 = vpack.c.bf16 %v626, %v624
    %v653 = vpack.c.bf16 %v629, %v627
    %v654 = vpack.c.bf16 %v630, %v628
    %v655 = vpack.c.bf16 %v633, %v631
    %v656 = vpack.c.bf16 %v634, %v632
    %v657 = vpack.c.bf16 %v637, %v635
    %v658 = vpack.c.bf16 %v638, %v636
    %v659 = vpack.c.bf16 %v641, %v639
    %v660 = vpack.c.bf16 %v642, %v640
    %v661 = vpack.c.bf16 %v645, %v643
    %v662 = vpack.c.bf16 %v646, %v644
    %v663 = vld [vmem:[#allocation7] sm:$0xff]
    %v664 = vld [vmem:[#allocation7 + $0x8] sm:$0xff]
    %v665 = vld [vmem:[#allocation7 + $0x10] sm:$0xff]
    %v666 = vld [vmem:[#allocation7 + $0x18] sm:$0xff]
    %v667 = vld [vmem:[#allocation7 + $0x20] sm:$0xff]
    %v668 = vld [vmem:[#allocation7 + $0x28] sm:$0xff]
    %v669 = vld [vmem:[#allocation7 + $0x30] sm:$0xff]
    %v670 = vld [vmem:[#allocation7 + $0x38] sm:$0xff]
    %v671 = vld [vmem:[#allocation7 + $0x40] sm:$0xff]
    %v672 = vld [vmem:[#allocation7 + $0x48] sm:$0xff]
    %v673 = vld [vmem:[#allocation7 + $0x50] sm:$0xff]
    %v674 = vld [vmem:[#allocation7 + $0x58] sm:$0xff]
    %v675 = vld [vmem:[#allocation7 + $0x60] sm:$0xff]
    %v676 = vld [vmem:[#allocation7 + $0x68] sm:$0xff]
    %v677 = vld [vmem:[#allocation7 + $0x70] sm:$0xff]
    %v678 = vld [vmem:[#allocation7 + $0x78] sm:$0xff]
    %v679 = vld [vmem:[#allocation7 + $0x80] sm:$0xff]
    %v680 = vld [vmem:[#allocation7 + $0x88] sm:$0xff]
    %v681 = vld [vmem:[#allocation7 + $0x90] sm:$0xff]
    %v682 = vld [vmem:[#allocation7 + $0x98] sm:$0xff]
    %v683 = vld [vmem:[#allocation7 + $0xa0] sm:$0xff]
    %v684 = vld [vmem:[#allocation7 + $0xa8] sm:$0xff]
    %v685 = vld [vmem:[#allocation7 + $0xb0] sm:$0xff]
    %v686 = vld [vmem:[#allocation7 + $0xb8] sm:$0xff]
    %v687 = vld [vmem:[#allocation7 + $0xc0] sm:$0xff]
    %v688 = vld [vmem:[#allocation7 + $0xc8] sm:$0xff]
    %v689 = vld [vmem:[#allocation7 + $0xd0] sm:$0xff]
    %v690 = vld [vmem:[#allocation7 + $0xd8] sm:$0xff]
    %v691 = vld [vmem:[#allocation7 + $0xe0] sm:$0xff]
    %v692 = vld [vmem:[#allocation7 + $0xe8] sm:$0xff]
    %v693 = vld [vmem:[#allocation7 + $0xf0] sm:$0xff]
    %v694 = vld [vmem:[#allocation7 + $0xf8] sm:$0xff]
    %v695 = vld [vmem:[#allocation7 + $0x100] sm:$0xff]
    %v696 = vld [vmem:[#allocation7 + $0x108] sm:$0xff]
    %v697 = vld [vmem:[#allocation7 + $0x110] sm:$0xff]
    %v698 = vld [vmem:[#allocation7 + $0x118] sm:$0xff]
    %v699 = vld [vmem:[#allocation7 + $0x120] sm:$0xff]
    %v700 = vld [vmem:[#allocation7 + $0x128] sm:$0xff]
    %v701 = vld [vmem:[#allocation7 + $0x130] sm:$0xff]
    %v702 = vld [vmem:[#allocation7 + $0x138] sm:$0xff]
    %v703 = vld [vmem:[#allocation7 + $0x140] sm:$0xff]
    %v704 = vld [vmem:[#allocation7 + $0x148] sm:$0xff]
    %v705 = vld [vmem:[#allocation7 + $0x150] sm:$0xff]
    %v706 = vld [vmem:[#allocation7 + $0x158] sm:$0xff]
    %v707 = vld [vmem:[#allocation7 + $0x160] sm:$0xff]
    %v708 = vld [vmem:[#allocation7 + $0x168] sm:$0xff]
    %v709 = vld [vmem:[#allocation7 + $0x170] sm:$0xff]
    %v710 = vld [vmem:[#allocation7 + $0x178] sm:$0xff]
    %v711 = vld [vmem:[#allocation7 + $0x180] sm:$0xff]
    %v712 = vld [vmem:[#allocation7 + $0x188] sm:$0xff]
    %v713 = vld [vmem:[#allocation7 + $0x190] sm:$0xff]
    %v714 = vld [vmem:[#allocation7 + $0x198] sm:$0xff]
    %v715 = vld [vmem:[#allocation7 + $0x1a0] sm:$0xff]
    %v716 = vld [vmem:[#allocation7 + $0x1a8] sm:$0xff]
    %v717 = vld [vmem:[#allocation7 + $0x1b0] sm:$0xff]
    %v718 = vld [vmem:[#allocation7 + $0x1b8] sm:$0xff]
    %v719 = vld [vmem:[#allocation7 + $0x1c0] sm:$0xff]
    %v720 = vld [vmem:[#allocation7 + $0x1c8] sm:$0xff]
    %v721 = vld [vmem:[#allocation7 + $0x1d0] sm:$0xff]
    %v722 = vld [vmem:[#allocation7 + $0x1d8] sm:$0xff]
    %v723 = vld [vmem:[#allocation7 + $0x1e0] sm:$0xff]
    %v724 = vld [vmem:[#allocation7 + $0x1e8] sm:$0xff]
    %v725 = vld [vmem:[#allocation7 + $0x1f0] sm:$0xff]
    %v726 = vld [vmem:[#allocation7 + $0x1f8] sm:$0xff]
    %v727 = vld [vmem:[#allocation8] sm:$0xf]
    %v729 = vlaneseq
    %v730 = vshrl.u32 %v729, 7
    %v731 = vsub.s32 0, %v730
    %v732 = vrot.slane %v727, %v731
    %v733 = vlaneseq
    %v734 = vshrl.u32 %v733, 7
    %v735 = vsub.s32 1, %v734
    %v736 = vrot.slane %v727, %v735
    %v737 = vlaneseq
    %v738 = vshrl.u32 %v737, 7
    %v739 = vsub.s32 2, %v738
    %v740 = vrot.slane %v727, %v739
    %v741 = vlaneseq
    %v742 = vshrl.u32 %v741, 7
    %v743 = vsub.s32 3, %v742
    %v744 = vrot.slane %v727, %v743
    %v813 = vunpack.c.l.b16 %v663
    %v814 = vunpack.c.h.b16 %v663
    %v815 = vunpack.c.l.b16 %v664
    %v816 = vunpack.c.h.b16 %v664
    %v817 = vunpack.c.l.b16 %v665
    %v818 = vunpack.c.h.b16 %v665
    %v819 = vunpack.c.l.b16 %v666
    %v820 = vunpack.c.h.b16 %v666
    %v821 = vunpack.c.l.b16 %v667
    %v822 = vunpack.c.h.b16 %v667
    %v823 = vunpack.c.l.b16 %v668
    %v824 = vunpack.c.h.b16 %v668
    %v825 = vunpack.c.l.b16 %v669
    %v826 = vunpack.c.h.b16 %v669
    %v827 = vunpack.c.l.b16 %v670
    %v828 = vunpack.c.h.b16 %v670
    %v829 = vunpack.c.l.b16 %v671
    %v830 = vunpack.c.h.b16 %v671
    %v831 = vunpack.c.l.b16 %v672
    %v832 = vunpack.c.h.b16 %v672
    %v833 = vunpack.c.l.b16 %v673
    %v834 = vunpack.c.h.b16 %v673
    %v835 = vunpack.c.l.b16 %v674
    %v836 = vunpack.c.h.b16 %v674
    %v837 = vunpack.c.l.b16 %v675
    %v838 = vunpack.c.h.b16 %v675
    %v839 = vunpack.c.l.b16 %v676
    %v840 = vunpack.c.h.b16 %v676
    %v841 = vunpack.c.l.b16 %v677
    %v842 = vunpack.c.h.b16 %v677
    %v843 = vunpack.c.l.b16 %v678
    %v844 = vunpack.c.h.b16 %v678
    %v845 = vunpack.c.l.b16 %v679
    %v846 = vunpack.c.h.b16 %v679
    %v847 = vunpack.c.l.b16 %v680
    %v848 = vunpack.c.h.b16 %v680
    %v849 = vunpack.c.l.b16 %v681
    %v850 = vunpack.c.h.b16 %v681
    %v851 = vunpack.c.l.b16 %v682
    %v852 = vunpack.c.h.b16 %v682
    %v853 = vunpack.c.l.b16 %v683
    %v854 = vunpack.c.h.b16 %v683
    %v855 = vunpack.c.l.b16 %v684
    %v856 = vunpack.c.h.b16 %v684
    %v857 = vunpack.c.l.b16 %v685
    %v858 = vunpack.c.h.b16 %v685
    %v859 = vunpack.c.l.b16 %v686
    %v860 = vunpack.c.h.b16 %v686
    %v861 = vunpack.c.l.b16 %v687
    %v862 = vunpack.c.h.b16 %v687
    %v863 = vunpack.c.l.b16 %v688
    %v864 = vunpack.c.h.b16 %v688
    %v865 = vunpack.c.l.b16 %v689
    %v866 = vunpack.c.h.b16 %v689
    %v867 = vunpack.c.l.b16 %v690
    %v868 = vunpack.c.h.b16 %v690
    %v869 = vunpack.c.l.b16 %v691
    %v870 = vunpack.c.h.b16 %v691
    %v871 = vunpack.c.l.b16 %v692
    %v872 = vunpack.c.h.b16 %v692
    %v873 = vunpack.c.l.b16 %v693
    %v874 = vunpack.c.h.b16 %v693
    %v875 = vunpack.c.l.b16 %v694
    %v876 = vunpack.c.h.b16 %v694
    %v877 = vunpack.c.l.b16 %v695
    %v878 = vunpack.c.h.b16 %v695
    %v879 = vunpack.c.l.b16 %v696
    %v880 = vunpack.c.h.b16 %v696
    %v881 = vunpack.c.l.b16 %v697
    %v882 = vunpack.c.h.b16 %v697
    %v883 = vunpack.c.l.b16 %v698
    %v884 = vunpack.c.h.b16 %v698
    %v885 = vunpack.c.l.b16 %v699
    %v886 = vunpack.c.h.b16 %v699
    %v887 = vunpack.c.l.b16 %v700
    %v888 = vunpack.c.h.b16 %v700
    %v889 = vunpack.c.l.b16 %v701
    %v890 = vunpack.c.h.b16 %v701
    %v891 = vunpack.c.l.b16 %v702
    %v892 = vunpack.c.h.b16 %v702
    %v893 = vunpack.c.l.b16 %v703
    %v894 = vunpack.c.h.b16 %v703
    %v895 = vunpack.c.l.b16 %v704
    %v896 = vunpack.c.h.b16 %v704
    %v897 = vunpack.c.l.b16 %v705
    %v898 = vunpack.c.h.b16 %v705
    %v899 = vunpack.c.l.b16 %v706
    %v900 = vunpack.c.h.b16 %v706
    %v901 = vunpack.c.l.b16 %v707
    %v902 = vunpack.c.h.b16 %v707
    %v903 = vunpack.c.l.b16 %v708
    %v904 = vunpack.c.h.b16 %v708
    %v905 = vunpack.c.l.b16 %v709
    %v906 = vunpack.c.h.b16 %v709
    %v907 = vunpack.c.l.b16 %v710
    %v908 = vunpack.c.h.b16 %v710
    %v909 = vunpack.c.l.b16 %v711
    %v910 = vunpack.c.h.b16 %v711
    %v911 = vunpack.c.l.b16 %v712
    %v912 = vunpack.c.h.b16 %v712
    %v913 = vunpack.c.l.b16 %v713
    %v914 = vunpack.c.h.b16 %v713
    %v915 = vunpack.c.l.b16 %v714
    %v916 = vunpack.c.h.b16 %v714
    %v917 = vunpack.c.l.b16 %v715
    %v918 = vunpack.c.h.b16 %v715
    %v919 = vunpack.c.l.b16 %v716
    %v920 = vunpack.c.h.b16 %v716
    %v921 = vunpack.c.l.b16 %v717
    %v922 = vunpack.c.h.b16 %v717
    %v923 = vunpack.c.l.b16 %v718
    %v924 = vunpack.c.h.b16 %v718
    %v925 = vunpack.c.l.b16 %v719
    %v926 = vunpack.c.h.b16 %v719
    %v927 = vunpack.c.l.b16 %v720
    %v928 = vunpack.c.h.b16 %v720
    %v929 = vunpack.c.l.b16 %v721
    %v930 = vunpack.c.h.b16 %v721
    %v931 = vunpack.c.l.b16 %v722
    %v932 = vunpack.c.h.b16 %v722
    %v933 = vunpack.c.l.b16 %v723
    %v934 = vunpack.c.h.b16 %v723
    %v935 = vunpack.c.l.b16 %v724
    %v936 = vunpack.c.h.b16 %v724
    %v937 = vunpack.c.l.b16 %v725
    %v938 = vunpack.c.h.b16 %v725
    %v939 = vunpack.c.l.b16 %v726
    %v940 = vunpack.c.h.b16 %v726
    %v941 = vpack.c.b16 %v817, %v813
    %v942 = vpack.c.b16 %v818, %v814
    %v943 = vpack.c.b16 %v819, %v815
    %v944 = vpack.c.b16 %v820, %v816
    %v945 = vpack.c.b16 %v825, %v821
    %v946 = vpack.c.b16 %v826, %v822
    %v947 = vpack.c.b16 %v827, %v823
    %v948 = vpack.c.b16 %v828, %v824
    %v949 = vpack.c.b16 %v833, %v829
    %v950 = vpack.c.b16 %v834, %v830
    %v951 = vpack.c.b16 %v835, %v831
    %v952 = vpack.c.b16 %v836, %v832
    %v953 = vpack.c.b16 %v841, %v837
    %v954 = vpack.c.b16 %v842, %v838
    %v955 = vpack.c.b16 %v843, %v839
    %v956 = vpack.c.b16 %v844, %v840
    %v957 = vpack.c.b16 %v849, %v845
    %v958 = vpack.c.b16 %v850, %v846
    %v959 = vpack.c.b16 %v851, %v847
    %v960 = vpack.c.b16 %v852, %v848
    %v961 = vpack.c.b16 %v857, %v853
    %v962 = vpack.c.b16 %v858, %v854
    %v963 = vpack.c.b16 %v859, %v855
    %v964 = vpack.c.b16 %v860, %v856
    %v965 = vpack.c.b16 %v865, %v861
    %v966 = vpack.c.b16 %v866, %v862
    %v967 = vpack.c.b16 %v867, %v863
    %v968 = vpack.c.b16 %v868, %v864
    %v969 = vpack.c.b16 %v873, %v869
    %v970 = vpack.c.b16 %v874, %v870
    %v971 = vpack.c.b16 %v875, %v871
    %v972 = vpack.c.b16 %v876, %v872
    %v973 = vpack.c.b16 %v881, %v877
    %v974 = vpack.c.b16 %v882, %v878
    %v975 = vpack.c.b16 %v883, %v879
    %v976 = vpack.c.b16 %v884, %v880
    %v977 = vpack.c.b16 %v889, %v885
    %v978 = vpack.c.b16 %v890, %v886
    %v979 = vpack.c.b16 %v891, %v887
    %v980 = vpack.c.b16 %v892, %v888
    %v981 = vpack.c.b16 %v897, %v893
    %v982 = vpack.c.b16 %v898, %v894
    %v983 = vpack.c.b16 %v899, %v895
    %v984 = vpack.c.b16 %v900, %v896
    %v985 = vpack.c.b16 %v905, %v901
    %v986 = vpack.c.b16 %v906, %v902
    %v987 = vpack.c.b16 %v907, %v903
    %v988 = vpack.c.b16 %v908, %v904
    %v989 = vpack.c.b16 %v913, %v909
    %v990 = vpack.c.b16 %v914, %v910
    %v991 = vpack.c.b16 %v915, %v911
    %v992 = vpack.c.b16 %v916, %v912
    %v993 = vpack.c.b16 %v921, %v917
    %v994 = vpack.c.b16 %v922, %v918
    %v995 = vpack.c.b16 %v923, %v919
    %v996 = vpack.c.b16 %v924, %v920
    %v997 = vpack.c.b16 %v929, %v925
    %v998 = vpack.c.b16 %v930, %v926
    %v999 = vpack.c.b16 %v931, %v927
    %v1000 = vpack.c.b16 %v932, %v928
    %v1001 = vpack.c.b16 %v937, %v933
    %v1002 = vpack.c.b16 %v938, %v934
    %v1003 = vpack.c.b16 %v939, %v935
    %v1004 = vpack.c.b16 %v940, %v936
    %1069 = vmatprep.subr.bf16.mxu0 %v942
    %1070 = vmatpush1.bf16.msra.mxu0 %v941
    %1071 = vmatprep.subr.bf16.mxu0 %v946
    %1072 = vmatpush1.bf16.msra.mxu0 %v945
    %1073 = vmatprep.subr.bf16.mxu0 %v950
    %1074 = vmatpush1.bf16.msra.mxu0 %v949
    %1075 = vmatprep.subr.bf16.mxu0 %v954
    %1076 = vmatpush1.bf16.msra.mxu0 %v953
    %1077 = vmatprep.subr.bf16.mxu0 %v958
    %1078 = vmatpush1.bf16.msra.mxu0 %v957
    %1079 = vmatprep.subr.bf16.mxu0 %v962
    %1080 = vmatpush1.bf16.msra.mxu0 %v961
    %1081 = vmatprep.subr.bf16.mxu0 %v966
    %1082 = vmatpush1.bf16.msra.mxu0 %v965
    %1083 = vmatprep.subr.bf16.mxu0 %v970
    %1084 = vmatpush1.bf16.msra.mxu0 %v969
    %1085 = vmatprep.subr.bf16.mxu0 %v974
    %1086 = vmatpush1.bf16.msra.mxu0 %v973
    %1087 = vmatprep.subr.bf16.mxu0 %v978
    %1088 = vmatpush1.bf16.msra.mxu0 %v977
    %1089 = vmatprep.subr.bf16.mxu0 %v982
    %1090 = vmatpush1.bf16.msra.mxu0 %v981
    %1091 = vmatprep.subr.bf16.mxu0 %v986
    %1092 = vmatpush1.bf16.msra.mxu0 %v985
    %1093 = vmatprep.subr.bf16.mxu0 %v990
    %1094 = vmatpush1.bf16.msra.mxu0 %v989
    %1095 = vmatprep.subr.bf16.mxu0 %v994
    %1096 = vmatpush1.bf16.msra.mxu0 %v993
    %1097 = vmatprep.subr.bf16.mxu0 %v998
    %1098 = vmatpush1.bf16.msra.mxu0 %v997
    %1099 = vmatprep.subr.bf16.mxu0 %v1002
    %1100 = vmatpush1.bf16.msra.mxu0 %v1001
    %1101 = vmatprep.mubr.bf16.mxu0 %v648
    %1102 = vmatmul.mubr.bf16.gmra.mrb[0].mxu0 %v647
    %v1103 = vpop.f32.mrb[0].mxu0
    %v1104 = vadd.f32 %v732, %v1103
    %v1105 = vpop.f32.mrb[0].mxu0
    %v1106 = vadd.f32 %v736, %v1105
    %v1107 = vpop.f32.mrb[0].mxu0
    %v1108 = vadd.f32 %v732, %v1107
    %v1109 = vpop.f32.mrb[0].mxu0
    %v1110 = vadd.f32 %v736, %v1109
    %1111 = vmatprep.mubr.bf16.mxu0 %v650
    %1112 = vmatmul.mubr.bf16.gmra.mrb[0].mxu0 %v649
    %v1113 = vpop.f32.mrb[0].mxu0
    %v1114 = vadd.f32 %v732, %v1113
    %v1115 = vpop.f32.mrb[0].mxu0
    %v1116 = vadd.f32 %v736, %v1115
    %v1117 = vpop.f32.mrb[0].mxu0
    %v1118 = vadd.f32 %v732, %v1117
    %v1119 = vpop.f32.mrb[0].mxu0
    %v1120 = vadd.f32 %v736, %v1119
    %1121 = vmatprep.mubr.bf16.mxu0 %v652
    %1122 = vmatmul.mubr.bf16.gmra.mrb[0].mxu0 %v651
    %v1123 = vpop.f32.mrb[0].mxu0
    %v1124 = vadd.f32 %v732, %v1123
    %v1125 = vpop.f32.mrb[0].mxu0
    %v1126 = vadd.f32 %v736, %v1125
    %v1127 = vpop.f32.mrb[0].mxu0
    %v1128 = vadd.f32 %v732, %v1127
    %v1129 = vpop.f32.mrb[0].mxu0
    %v1130 = vadd.f32 %v736, %v1129
    %1131 = vmatprep.mubr.bf16.mxu0 %v654
    %1132 = vmatmul.mubr.bf16.gmra.mrb[0].mxu0 %v653
    %v1133 = vpop.f32.mrb[0].mxu0
    %v1134 = vadd.f32 %v732, %v1133
    %v1135 = vpop.f32.mrb[0].mxu0
    %v1136 = vadd.f32 %v736, %v1135
    %v1137 = vpop.f32.mrb[0].mxu0
    %v1138 = vadd.f32 %v732, %v1137
    %v1139 = vpop.f32.mrb[0].mxu0
    %v1140 = vadd.f32 %v736, %v1139
    %1141 = vmatprep.mubr.bf16.mxu0 %v656
    %1142 = vmatmul.mubr.bf16.gmra.mrb[0].mxu0 %v655
    %v1143 = vpop.f32.mrb[0].mxu0
    %v1144 = vadd.f32 %v732, %v1143
    %v1145 = vpop.f32.mrb[0].mxu0
    %v1146 = vadd.f32 %v736, %v1145
    %v1147 = vpop.f32.mrb[0].mxu0
    %v1148 = vadd.f32 %v732, %v1147
    %v1149 = vpop.f32.mrb[0].mxu0
    %v1150 = vadd.f32 %v736, %v1149
    %1151 = vmatprep.mubr.bf16.mxu0 %v658
    %1152 = vmatmul.mubr.bf16.gmra.mrb[0].mxu0 %v657
    %v1153 = vpop.f32.mrb[0].mxu0
    %v1154 = vadd.f32 %v732, %v1153
    %v1155 = vpop.f32.mrb[0].mxu0
    %v1156 = vadd.f32 %v736, %v1155
    %v1157 = vpop.f32.mrb[0].mxu0
    %v1158 = vadd.f32 %v732, %v1157
    %v1159 = vpop.f32.mrb[0].mxu0
    %v1160 = vadd.f32 %v736, %v1159
    %1161 = vmatprep.mubr.bf16.mxu0 %v660
    %1162 = vmatmul.mubr.bf16.gmra.mrb[0].mxu0 %v659
    %v1163 = vpop.f32.mrb[0].mxu0
    %v1164 = vadd.f32 %v732, %v1163
    %v1165 = vpop.f32.mrb[0].mxu0
    %v1166 = vadd.f32 %v736, %v1165
    %v1167 = vpop.f32.mrb[0].mxu0
    %v1168 = vadd.f32 %v732, %v1167
    %v1169 = vpop.f32.mrb[0].mxu0
    %v1170 = vadd.f32 %v736, %v1169
    %1171 = vmatprep.mubr.bf16.mxu0 %v662
    %1172 = vmatmul.mubr.bf16.gmra.mrb[0].mxu0 %v661
    %v1173 = vpop.f32.mrb[0].mxu0
    %v1174 = vadd.f32 %v732, %v1173
    %v1175 = vpop.f32.mrb[0].mxu0
    %v1176 = vadd.f32 %v736, %v1175
    %v1177 = vpop.f32.mrb[0].mxu0
    %v1178 = vadd.f32 %v732, %v1177
    %v1179 = vpop.f32.mrb[0].mxu0
    %v1180 = vadd.f32 %v736, %v1179
    %1181 = vdwg.mxu0
    %1182 = vmatprep.subr.bf16.mxu0 %v944
    %1183 = vmatpush1.bf16.msra.mxu0 %v943
    %1184 = vmatprep.subr.bf16.mxu0 %v948
    %1185 = vmatpush1.bf16.msra.mxu0 %v947
    %1186 = vmatprep.subr.bf16.mxu0 %v952
    %1187 = vmatpush1.bf16.msra.mxu0 %v951
    %1188 = vmatprep.subr.bf16.mxu0 %v956
    %1189 = vmatpush1.bf16.msra.mxu0 %v955
    %1190 = vmatprep.subr.bf16.mxu0 %v960
    %1191 = vmatpush1.bf16.msra.mxu0 %v959
    %1192 = vmatprep.subr.bf16.mxu0 %v964
    %1193 = vmatpush1.bf16.msra.mxu0 %v963
    %1194 = vmatprep.subr.bf16.mxu0 %v968
    %1195 = vmatpush1.bf16.msra.mxu0 %v967
    %1196 = vmatprep.subr.bf16.mxu0 %v972
    %1197 = vmatpush1.bf16.msra.mxu0 %v971
    %1198 = vmatprep.subr.bf16.mxu0 %v976
    %1199 = vmatpush1.bf16.msra.mxu0 %v975
    %1200 = vmatprep.subr.bf16.mxu0 %v980
    %1201 = vmatpush1.bf16.msra.mxu0 %v979
    %1202 = vmatprep.subr.bf16.mxu0 %v984
    %1203 = vmatpush1.bf16.msra.mxu0 %v983
    %1204 = vmatprep.subr.bf16.mxu0 %v988
    %1205 = vmatpush1.bf16.msra.mxu0 %v987
    %1206 = vmatprep.subr.bf16.mxu0 %v992
    %1207 = vmatpush1.bf16.msra.mxu0 %v991
    %1208 = vmatprep.subr.bf16.mxu0 %v996
    %1209 = vmatpush1.bf16.msra.mxu0 %v995
    %1210 = vmatprep.subr.bf16.mxu0 %v1000
    %1211 = vmatpush1.bf16.msra.mxu0 %v999
    %1212 = vmatprep.subr.bf16.mxu0 %v1004
    %1213 = vmatpush1.bf16.msra.mxu0 %v1003
    %1214 = vmatprep.mubr.bf16.mxu0 %v648
    %1215 = vmatmul.mubr.bf16.gmra.mrb[0].mxu0 %v647
    %v1216 = vpop.f32.mrb[0].mxu0
    %v1217 = vadd.f32 %v740, %v1216
    %v1218 = vpop.f32.mrb[0].mxu0
    %v1219 = vadd.f32 %v744, %v1218
    %v1220 = vpop.f32.mrb[0].mxu0
    %v1221 = vadd.f32 %v740, %v1220
    %v1222 = vpop.f32.mrb[0].mxu0
    %v1223 = vadd.f32 %v744, %v1222
    %1224 = vmatprep.mubr.bf16.mxu0 %v650
    %1225 = vmatmul.mubr.bf16.gmra.mrb[0].mxu0 %v649
    %v1226 = vpop.f32.mrb[0].mxu0
    %v1227 = vadd.f32 %v740, %v1226
    %v1228 = vpop.f32.mrb[0].mxu0
    %v1229 = vadd.f32 %v744, %v1228
    %v1230 = vpop.f32.mrb[0].mxu0
    %v1231 = vadd.f32 %v740, %v1230
    %v1232 = vpop.f32.mrb[0].mxu0
    %v1233 = vadd.f32 %v744, %v1232
    %1234 = vmatprep.mubr.bf16.mxu0 %v652
    %1235 = vmatmul.mubr.bf16.gmra.mrb[0].mxu0 %v651
    %v1236 = vpop.f32.mrb[0].mxu0
    %v1237 = vadd.f32 %v740, %v1236
    %v1238 = vpop.f32.mrb[0].mxu0
    %v1239 = vadd.f32 %v744, %v1238
    %v1240 = vpop.f32.mrb[0].mxu0
    %v1241 = vadd.f32 %v740, %v1240
    %v1242 = vpop.f32.mrb[0].mxu0
    %v1243 = vadd.f32 %v744, %v1242
    %1244 = vmatprep.mubr.bf16.mxu0 %v654
    %1245 = vmatmul.mubr.bf16.gmra.mrb[0].mxu0 %v653
    %v1246 = vpop.f32.mrb[0].mxu0
    %v1247 = vadd.f32 %v740, %v1246
    %v1248 = vpop.f32.mrb[0].mxu0
    %v1249 = vadd.f32 %v744, %v1248
    %v1250 = vpop.f32.mrb[0].mxu0
    %v1251 = vadd.f32 %v740, %v1250
    %v1252 = vpop.f32.mrb[0].mxu0
    %v1253 = vadd.f32 %v744, %v1252
    %1254 = vmatprep.mubr.bf16.mxu0 %v656
    %1255 = vmatmul.mubr.bf16.gmra.mrb[0].mxu0 %v655
    %v1256 = vpop.f32.mrb[0].mxu0
    %v1257 = vadd.f32 %v740, %v1256
    %v1258 = vpop.f32.mrb[0].mxu0
    %v1259 = vadd.f32 %v744, %v1258
    %v1260 = vpop.f32.mrb[0].mxu0
    %v1261 = vadd.f32 %v740, %v1260
    %v1262 = vpop.f32.mrb[0].mxu0
    %v1263 = vadd.f32 %v744, %v1262
    %1264 = vmatprep.mubr.bf16.mxu0 %v658
    %1265 = vmatmul.mubr.bf16.gmra.mrb[0].mxu0 %v657
    %v1266 = vpop.f32.mrb[0].mxu0
    %v1267 = vadd.f32 %v740, %v1266
    %v1268 = vpop.f32.mrb[0].mxu0
    %v1269 = vadd.f32 %v744, %v1268
    %v1270 = vpop.f32.mrb[0].mxu0
    %v1271 = vadd.f32 %v740, %v1270
    %v1272 = vpop.f32.mrb[0].mxu0
    %v1273 = vadd.f32 %v744, %v1272
    %1274 = vmatprep.mubr.bf16.mxu0 %v660
    %1275 = vmatmul.mubr.bf16.gmra.mrb[0].mxu0 %v659
    %v1276 = vpop.f32.mrb[0].mxu0
    %v1277 = vadd.f32 %v740, %v1276
    %v1278 = vpop.f32.mrb[0].mxu0
    %v1279 = vadd.f32 %v744, %v1278
    %v1280 = vpop.f32.mrb[0].mxu0
    %v1281 = vadd.f32 %v740, %v1280
    %v1282 = vpop.f32.mrb[0].mxu0
    %v1283 = vadd.f32 %v744, %v1282
    %1284 = vmatprep.mubr.bf16.mxu0 %v662
    %1285 = vmatmul.mubr.bf16.gmra.mrb[0].mxu0 %v661
    %v1286 = vpop.f32.mrb[0].mxu0
    %v1287 = vadd.f32 %v740, %v1286
    %v1288 = vpop.f32.mrb[0].mxu0
    %v1289 = vadd.f32 %v744, %v1288
    %v1290 = vpop.f32.mrb[0].mxu0
    %v1291 = vadd.f32 %v740, %v1290
    %v1292 = vpop.f32.mrb[0].mxu0
    %v1293 = vadd.f32 %v744, %v1292
    %1294 = vdwg.mxu0
    %vm1295 = vcmp.gt.f32.partialorder %v1104, 0.0
    %vm1296 = vcmp.gt.f32.partialorder %v1106, 0.0
    %vm1297 = vcmp.gt.f32.partialorder %v1217, 0.0
    %vm1298 = vcmp.gt.f32.partialorder %v1219, 0.0
    %vm1299 = vcmp.gt.f32.partialorder %v1108, 0.0
    %vm1300 = vcmp.gt.f32.partialorder %v1110, 0.0
    %vm1301 = vcmp.gt.f32.partialorder %v1221, 0.0
    %vm1302 = vcmp.gt.f32.partialorder %v1223, 0.0
    %vm1303 = vcmp.gt.f32.partialorder %v1114, 0.0
    %vm1304 = vcmp.gt.f32.partialorder %v1116, 0.0
    %vm1305 = vcmp.gt.f32.partialorder %v1227, 0.0
    %vm1306 = vcmp.gt.f32.partialorder %v1229, 0.0
    %vm1307 = vcmp.gt.f32.partialorder %v1118, 0.0
    %vm1308 = vcmp.gt.f32.partialorder %v1120, 0.0
    %vm1309 = vcmp.gt.f32.partialorder %v1231, 0.0
    %vm1310 = vcmp.gt.f32.partialorder %v1233, 0.0
    %vm1311 = vcmp.gt.f32.partialorder %v1124, 0.0
    %vm1312 = vcmp.gt.f32.partialorder %v1126, 0.0
    %vm1313 = vcmp.gt.f32.partialorder %v1237, 0.0
    %vm1314 = vcmp.gt.f32.partialorder %v1239, 0.0
    %vm1315 = vcmp.gt.f32.partialorder %v1128, 0.0
    %vm1316 = vcmp.gt.f32.partialorder %v1130, 0.0
    %vm1317 = vcmp.gt.f32.partialorder %v1241, 0.0
    %vm1318 = vcmp.gt.f32.partialorder %v1243, 0.0
    %vm1319 = vcmp.gt.f32.partialorder %v1134, 0.0
    %vm1320 = vcmp.gt.f32.partialorder %v1136, 0.0
    %vm1321 = vcmp.gt.f32.partialorder %v1247, 0.0
    %vm1322 = vcmp.gt.f32.partialorder %v1249, 0.0
    %vm1323 = vcmp.gt.f32.partialorder %v1138, 0.0
    %vm1324 = vcmp.gt.f32.partialorder %v1140, 0.0
    %vm1325 = vcmp.gt.f32.partialorder %v1251, 0.0
    %vm1326 = vcmp.gt.f32.partialorder %v1253, 0.0
    %vm1327 = vcmp.gt.f32.partialorder %v1144, 0.0
    %vm1328 = vcmp.gt.f32.partialorder %v1146, 0.0
    %vm1329 = vcmp.gt.f32.partialorder %v1257, 0.0
    %vm1330 = vcmp.gt.f32.partialorder %v1259, 0.0
    %vm1331 = vcmp.gt.f32.partialorder %v1148, 0.0
    %vm1332 = vcmp.gt.f32.partialorder %v1150, 0.0
    %vm1333 = vcmp.gt.f32.partialorder %v1261, 0.0
    %vm1334 = vcmp.gt.f32.partialorder %v1263, 0.0
    %vm1335 = vcmp.gt.f32.partialorder %v1154, 0.0
    %vm1336 = vcmp.gt.f32.partialorder %v1156, 0.0
    %vm1337 = vcmp.gt.f32.partialorder %v1267, 0.0
    %vm1338 = vcmp.gt.f32.partialorder %v1269, 0.0
    %vm1339 = vcmp.gt.f32.partialorder %v1158, 0.0
    %vm1340 = vcmp.gt.f32.partialorder %v1160, 0.0
    %vm1341 = vcmp.gt.f32.partialorder %v1271, 0.0
    %vm1342 = vcmp.gt.f32.partialorder %v1273, 0.0
    %vm1343 = vcmp.gt.f32.partialorder %v1164, 0.0
    %vm1344 = vcmp.gt.f32.partialorder %v1166, 0.0
    %vm1345 = vcmp.gt.f32.partialorder %v1277, 0.0
    %vm1346 = vcmp.gt.f32.partialorder %v1279, 0.0
    %vm1347 = vcmp.gt.f32.partialorder %v1168, 0.0
    %vm1348 = vcmp.gt.f32.partialorder %v1170, 0.0
    %vm1349 = vcmp.gt.f32.partialorder %v1281, 0.0
    %vm1350 = vcmp.gt.f32.partialorder %v1283, 0.0
    %vm1351 = vcmp.gt.f32.partialorder %v1174, 0.0
    %vm1352 = vcmp.gt.f32.partialorder %v1176, 0.0
    %vm1353 = vcmp.gt.f32.partialorder %v1287, 0.0
    %vm1354 = vcmp.gt.f32.partialorder %v1289, 0.0
    %vm1355 = vcmp.gt.f32.partialorder %v1178, 0.0
    %vm1356 = vcmp.gt.f32.partialorder %v1180, 0.0
    %vm1357 = vcmp.gt.f32.partialorder %v1291, 0.0
    %vm1358 = vcmp.gt.f32.partialorder %v1293, 0.0
    %v1359 = vmul.f32 %v1104, 0.2
    %v1360 = vmul.f32 %v1106, 0.2
    %v1361 = vmul.f32 %v1217, 0.2
    %v1362 = vmul.f32 %v1219, 0.2
    %v1363 = vmul.f32 %v1108, 0.2
    %v1364 = vmul.f32 %v1110, 0.2
    %v1365 = vmul.f32 %v1221, 0.2
    %v1366 = vmul.f32 %v1223, 0.2
    %v1367 = vmul.f32 %v1114, 0.2
    %v1368 = vmul.f32 %v1116, 0.2
    %v1369 = vmul.f32 %v1227, 0.2
    %v1370 = vmul.f32 %v1229, 0.2
    %v1371 = vmul.f32 %v1118, 0.2
    %v1372 = vmul.f32 %v1120, 0.2
    %v1373 = vmul.f32 %v1231, 0.2
    %v1374 = vmul.f32 %v1233, 0.2
    %v1375 = vmul.f32 %v1124, 0.2
    %v1376 = vmul.f32 %v1126, 0.2
    %v1377 = vmul.f32 %v1237, 0.2
    %v1378 = vmul.f32 %v1239, 0.2
    %v1379 = vmul.f32 %v1128, 0.2
    %v1380 = vmul.f32 %v1130, 0.2
    %v1381 = vmul.f32 %v1241, 0.2
    %v1382 = vmul.f32 %v1243, 0.2
    %v1383 = vmul.f32 %v1134, 0.2
    %v1384 = vmul.f32 %v1136, 0.2
    %v1385 = vmul.f32 %v1247, 0.2
    %v1386 = vmul.f32 %v1249, 0.2
    %v1387 = vmul.f32 %v1138, 0.2
    %v1388 = vmul.f32 %v1140, 0.2
    %v1389 = vmul.f32 %v1251, 0.2
    %v1390 = vmul.f32 %v1253, 0.2
    %v1391 = vmul.f32 %v1144, 0.2
    %v1392 = vmul.f32 %v1146, 0.2
    %v1393 = vmul.f32 %v1257, 0.2
    %v1394 = vmul.f32 %v1259, 0.2
    %v1395 = vmul.f32 %v1148, 0.2
    %v1396 = vmul.f32 %v1150, 0.2
    %v1397 = vmul.f32 %v1261, 0.2
    %v1398 = vmul.f32 %v1263, 0.2
    %v1399 = vmul.f32 %v1154, 0.2
    %v1400 = vmul.f32 %v1156, 0.2
    %v1401 = vmul.f32 %v1267, 0.2
    %v1402 = vmul.f32 %v1269, 0.2
    %v1403 = vmul.f32 %v1158, 0.2
    %v1404 = vmul.f32 %v1160, 0.2
    %v1405 = vmul.f32 %v1271, 0.2
    %v1406 = vmul.f32 %v1273, 0.2
    %v1407 = vmul.f32 %v1164, 0.2
    %v1408 = vmul.f32 %v1166, 0.2
    %v1409 = vmul.f32 %v1277, 0.2
    %v1410 = vmul.f32 %v1279, 0.2
    %v1411 = vmul.f32 %v1168, 0.2
    %v1412 = vmul.f32 %v1170, 0.2
    %v1413 = vmul.f32 %v1281, 0.2
    %v1414 = vmul.f32 %v1283, 0.2
    %v1415 = vmul.f32 %v1174, 0.2
    %v1416 = vmul.f32 %v1176, 0.2
    %v1417 = vmul.f32 %v1287, 0.2
    %v1418 = vmul.f32 %v1289, 0.2
    %v1419 = vmul.f32 %v1178, 0.2
    %v1420 = vmul.f32 %v1180, 0.2
    %v1421 = vmul.f32 %v1291, 0.2
    %v1422 = vmul.f32 %v1293, 0.2
    %v1423 = vsel %vm1295, %v1104, %v1359
    %v1424 = vsel %vm1296, %v1106, %v1360
    %v1425 = vsel %vm1297, %v1217, %v1361
    %v1426 = vsel %vm1298, %v1219, %v1362
    %v1427 = vsel %vm1299, %v1108, %v1363
    %v1428 = vsel %vm1300, %v1110, %v1364
    %v1429 = vsel %vm1301, %v1221, %v1365
    %v1430 = vsel %vm1302, %v1223, %v1366
    %v1431 = vsel %vm1303, %v1114, %v1367
    %v1432 = vsel %vm1304, %v1116, %v1368
    %v1433 = vsel %vm1305, %v1227, %v1369
    %v1434 = vsel %vm1306, %v1229, %v1370
    %v1435 = vsel %vm1307, %v1118, %v1371
    %v1436 = vsel %vm1308, %v1120, %v1372
    %v1437 = vsel %vm1309, %v1231, %v1373
    %v1438 = vsel %vm1310, %v1233, %v1374
    %v1439 = vsel %vm1311, %v1124, %v1375
    %v1440 = vsel %vm1312, %v1126, %v1376
    %v1441 = vsel %vm1313, %v1237, %v1377
    %v1442 = vsel %vm1314, %v1239, %v1378
    %v1443 = vsel %vm1315, %v1128, %v1379
    %v1444 = vsel %vm1316, %v1130, %v1380
    %v1445 = vsel %vm1317, %v1241, %v1381
    %v1446 = vsel %vm1318, %v1243, %v1382
    %v1447 = vsel %vm1319, %v1134, %v1383
    %v1448 = vsel %vm1320, %v1136, %v1384
    %v1449 = vsel %vm1321, %v1247, %v1385
    %v1450 = vsel %vm1322, %v1249, %v1386
    %v1451 = vsel %vm1323, %v1138, %v1387
    %v1452 = vsel %vm1324, %v1140, %v1388
    %v1453 = vsel %vm1325, %v1251, %v1389
    %v1454 = vsel %vm1326, %v1253, %v1390
    %v1455 = vsel %vm1327, %v1144, %v1391
    %v1456 = vsel %vm1328, %v1146, %v1392
    %v1457 = vsel %vm1329, %v1257, %v1393
    %v1458 = vsel %vm1330, %v1259, %v1394
    %v1459 = vsel %vm1331, %v1148, %v1395
    %v1460 = vsel %vm1332, %v1150, %v1396
    %v1461 = vsel %vm1333, %v1261, %v1397
    %v1462 = vsel %vm1334, %v1263, %v1398
    %v1463 = vsel %vm1335, %v1154, %v1399
    %v1464 = vsel %vm1336, %v1156, %v1400
    %v1465 = vsel %vm1337, %v1267, %v1401
    %v1466 = vsel %vm1338, %v1269, %v1402
    %v1467 = vsel %vm1339, %v1158, %v1403
    %v1468 = vsel %vm1340, %v1160, %v1404
    %v1469 = vsel %vm1341, %v1271, %v1405
    %v1470 = vsel %vm1342, %v1273, %v1406
    %v1471 = vsel %vm1343, %v1164, %v1407
    %v1472 = vsel %vm1344, %v1166, %v1408
    %v1473 = vsel %vm1345, %v1277, %v1409
    %v1474 = vsel %vm1346, %v1279, %v1410
    %v1475 = vsel %vm1347, %v1168, %v1411
    %v1476 = vsel %vm1348, %v1170, %v1412
    %v1477 = vsel %vm1349, %v1281, %v1413
    %v1478 = vsel %vm1350, %v1283, %v1414
    %v1479 = vsel %vm1351, %v1174, %v1415
    %v1480 = vsel %vm1352, %v1176, %v1416
    %v1481 = vsel %vm1353, %v1287, %v1417
    %v1482 = vsel %vm1354, %v1289, %v1418
    %v1483 = vsel %vm1355, %v1178, %v1419
    %v1484 = vsel %vm1356, %v1180, %v1420
    %v1485 = vsel %vm1357, %v1291, %v1421
    %v1486 = vsel %vm1358, %v1293, %v1422
    %v1487 = vadd.f32 %v1423, %v1427
    %v1488 = vadd.f32 %v1487, %v1431
    %v1489 = vadd.f32 %v1488, %v1435
    %v1490 = vadd.f32 %v1489, %v1439
    %v1491 = vadd.f32 %v1490, %v1443
    %v1492 = vadd.f32 %v1491, %v1447
    %v1493 = vadd.f32 %v1492, %v1451
    %v1494 = vadd.f32 %v1493, %v1455
    %v1495 = vadd.f32 %v1494, %v1459
    %v1496 = vadd.f32 %v1495, %v1463
    %v1497 = vadd.f32 %v1496, %v1467
    %v1498 = vadd.f32 %v1497, %v1471
    %v1499 = vadd.f32 %v1498, %v1475
    %v1500 = vadd.f32 %v1499, %v1479
    %v1501 = vadd.f32 %v1500, %v1483
    %v1502 = vrot.slane %v1501, 4
    %v1503 = vadd.f32 %v1501, %v1502
    %v1504 = vrot.slane %v1503, 2
    %v1505 = vadd.f32 %v1503, %v1504
    %v1506 = vrot.slane %v1505, 1
    %v1507 = vadd.f32 %v1505, %v1506
    %v1508 = vadd.f32 %v1424, %v1428
    %v1509 = vadd.f32 %v1508, %v1432
    %v1510 = vadd.f32 %v1509, %v1436
    %v1511 = vadd.f32 %v1510, %v1440
    %v1512 = vadd.f32 %v1511, %v1444
    %v1513 = vadd.f32 %v1512, %v1448
    %v1514 = vadd.f32 %v1513, %v1452
    %v1515 = vadd.f32 %v1514, %v1456
    %v1516 = vadd.f32 %v1515, %v1460
    %v1517 = vadd.f32 %v1516, %v1464
    %v1518 = vadd.f32 %v1517, %v1468
    %v1519 = vadd.f32 %v1518, %v1472
    %v1520 = vadd.f32 %v1519, %v1476
    %v1521 = vadd.f32 %v1520, %v1480
    %v1522 = vadd.f32 %v1521, %v1484
    %v1523 = vrot.slane %v1522, 4
    %v1524 = vadd.f32 %v1522, %v1523
    %v1525 = vrot.slane %v1524, 2
    %v1526 = vadd.f32 %v1524, %v1525
    %v1527 = vrot.slane %v1526, 1
    %v1528 = vadd.f32 %v1526, %v1527
    %v1529 = vadd.f32 %v1425, %v1429
    %v1530 = vadd.f32 %v1529, %v1433
    %v1531 = vadd.f32 %v1530, %v1437
    %v1532 = vadd.f32 %v1531, %v1441
    %v1533 = vadd.f32 %v1532, %v1445
    %v1534 = vadd.f32 %v1533, %v1449
    %v1535 = vadd.f32 %v1534, %v1453
    %v1536 = vadd.f32 %v1535, %v1457
    %v1537 = vadd.f32 %v1536, %v1461
    %v1538 = vadd.f32 %v1537, %v1465
    %v1539 = vadd.f32 %v1538, %v1469
    %v1540 = vadd.f32 %v1539, %v1473
    %v1541 = vadd.f32 %v1540, %v1477
    %v1542 = vadd.f32 %v1541, %v1481
    %v1543 = vadd.f32 %v1542, %v1485
    %v1544 = vrot.slane %v1543, 4
    %v1545 = vadd.f32 %v1543, %v1544
    %v1546 = vrot.slane %v1545, 2
    %v1547 = vadd.f32 %v1545, %v1546
    %v1548 = vrot.slane %v1547, 1
    %v1549 = vadd.f32 %v1547, %v1548
    %v1550 = vadd.f32 %v1426, %v1430
    %v1551 = vadd.f32 %v1550, %v1434
    %v1552 = vadd.f32 %v1551, %v1438
    %v1553 = vadd.f32 %v1552, %v1442
    %v1554 = vadd.f32 %v1553, %v1446
    %v1555 = vadd.f32 %v1554, %v1450
    %v1556 = vadd.f32 %v1555, %v1454
    %v1557 = vadd.f32 %v1556, %v1458
    %v1558 = vadd.f32 %v1557, %v1462
    %v1559 = vadd.f32 %v1558, %v1466
    %v1560 = vadd.f32 %v1559, %v1470
    %v1561 = vadd.f32 %v1560, %v1474
    %v1562 = vadd.f32 %v1561, %v1478
    %v1563 = vadd.f32 %v1562, %v1482
    %v1564 = vadd.f32 %v1563, %v1486
    %v1565 = vrot.slane %v1564, 4
    %v1566 = vadd.f32 %v1564, %v1565
    %v1567 = vrot.slane %v1566, 2
    %v1568 = vadd.f32 %v1566, %v1567
    %v1569 = vrot.slane %v1568, 1
    %v1570 = vadd.f32 %v1568, %v1569
    %v1571 = vmul.f32 %v1423, %v1423
    %v1572 = vmul.f32 %v1424, %v1424
    %v1573 = vmul.f32 %v1425, %v1425
    %v1574 = vmul.f32 %v1426, %v1426
    %v1575 = vmul.f32 %v1427, %v1427
    %v1576 = vmul.f32 %v1428, %v1428
    %v1577 = vmul.f32 %v1429, %v1429
    %v1578 = vmul.f32 %v1430, %v1430
    %v1579 = vmul.f32 %v1431, %v1431
    %v1580 = vmul.f32 %v1432, %v1432
    %v1581 = vmul.f32 %v1433, %v1433
    %v1582 = vmul.f32 %v1434, %v1434
    %v1583 = vmul.f32 %v1435, %v1435
    %v1584 = vmul.f32 %v1436, %v1436
    %v1585 = vmul.f32 %v1437, %v1437
    %v1586 = vmul.f32 %v1438, %v1438
    %v1587 = vmul.f32 %v1439, %v1439
    %v1588 = vmul.f32 %v1440, %v1440
    %v1589 = vmul.f32 %v1441, %v1441
    %v1590 = vmul.f32 %v1442, %v1442
    %v1591 = vmul.f32 %v1443, %v1443
    %v1592 = vmul.f32 %v1444, %v1444
    %v1593 = vmul.f32 %v1445, %v1445
    %v1594 = vmul.f32 %v1446, %v1446
    %v1595 = vmul.f32 %v1447, %v1447
    %v1596 = vmul.f32 %v1448, %v1448
    %v1597 = vmul.f32 %v1449, %v1449
    %v1598 = vmul.f32 %v1450, %v1450
    %v1599 = vmul.f32 %v1451, %v1451
    %v1600 = vmul.f32 %v1452, %v1452
    %v1601 = vmul.f32 %v1453, %v1453
    %v1602 = vmul.f32 %v1454, %v1454
    %v1603 = vmul.f32 %v1455, %v1455
    %v1604 = vmul.f32 %v1456, %v1456
    %v1605 = vmul.f32 %v1457, %v1457
    %v1606 = vmul.f32 %v1458, %v1458
    %v1607 = vmul.f32 %v1459, %v1459
    %v1608 = vmul.f32 %v1460, %v1460
    %v1609 = vmul.f32 %v1461, %v1461
    %v1610 = vmul.f32 %v1462, %v1462
    %v1611 = vmul.f32 %v1463, %v1463
    %v1612 = vmul.f32 %v1464, %v1464
    %v1613 = vmul.f32 %v1465, %v1465
    %v1614 = vmul.f32 %v1466, %v1466
    %v1615 = vmul.f32 %v1467, %v1467
    %v1616 = vmul.f32 %v1468, %v1468
    %v1617 = vmul.f32 %v1469, %v1469
    %v1618 = vmul.f32 %v1470, %v1470
    %v1619 = vmul.f32 %v1471, %v1471
    %v1620 = vmul.f32 %v1472, %v1472
    %v1621 = vmul.f32 %v1473, %v1473
    %v1622 = vmul.f32 %v1474, %v1474
    %v1623 = vmul.f32 %v1475, %v1475
    %v1624 = vmul.f32 %v1476, %v1476
    %v1625 = vmul.f32 %v1477, %v1477
    %v1626 = vmul.f32 %v1478, %v1478
    %v1627 = vmul.f32 %v1479, %v1479
    %v1628 = vmul.f32 %v1480, %v1480
    %v1629 = vmul.f32 %v1481, %v1481
    %v1630 = vmul.f32 %v1482, %v1482
    %v1631 = vmul.f32 %v1483, %v1483
    %v1632 = vmul.f32 %v1484, %v1484
    %v1633 = vmul.f32 %v1485, %v1485
    %v1634 = vmul.f32 %v1486, %v1486
    %v1635 = vadd.f32 %v1571, %v1575
    %v1636 = vadd.f32 %v1635, %v1579
    %v1637 = vadd.f32 %v1636, %v1583
    %v1638 = vadd.f32 %v1637, %v1587
    %v1639 = vadd.f32 %v1638, %v1591
    %v1640 = vadd.f32 %v1639, %v1595
    %v1641 = vadd.f32 %v1640, %v1599
    %v1642 = vadd.f32 %v1641, %v1603
    %v1643 = vadd.f32 %v1642, %v1607
    %v1644 = vadd.f32 %v1643, %v1611
    %v1645 = vadd.f32 %v1644, %v1615
    %v1646 = vadd.f32 %v1645, %v1619
    %v1647 = vadd.f32 %v1646, %v1623
    %v1648 = vadd.f32 %v1647, %v1627
    %v1649 = vadd.f32 %v1648, %v1631
    %v1650 = vrot.slane %v1649, 4
    %v1651 = vadd.f32 %v1649, %v1650
    %v1652 = vrot.slane %v1651, 2
    %v1653 = vadd.f32 %v1651, %v1652
    %v1654 = vrot.slane %v1653, 1
    %v1655 = vadd.f32 %v1653, %v1654
    %v1656 = vadd.f32 %v1572, %v1576
    %v1657 = vadd.f32 %v1656, %v1580
    %v1658 = vadd.f32 %v1657, %v1584
    %v1659 = vadd.f32 %v1658, %v1588
    %v1660 = vadd.f32 %v1659, %v1592
    %v1661 = vadd.f32 %v1660, %v1596
    %v1662 = vadd.f32 %v1661, %v1600
    %v1663 = vadd.f32 %v1662, %v1604
    %v1664 = vadd.f32 %v1663, %v1608
    %v1665 = vadd.f32 %v1664, %v1612
    %v1666 = vadd.f32 %v1665, %v1616
    %v1667 = vadd.f32 %v1666, %v1620
    %v1668 = vadd.f32 %v1667, %v1624
    %v1669 = vadd.f32 %v1668, %v1628
    %v1670 = vadd.f32 %v1669, %v1632
    %v1671 = vrot.slane %v1670, 4
    %v1672 = vadd.f32 %v1670, %v1671
    %v1673 = vrot.slane %v1672, 2
    %v1674 = vadd.f32 %v1672, %v1673
    %v1675 = vrot.slane %v1674, 1
    %v1676 = vadd.f32 %v1674, %v1675
    %v1677 = vadd.f32 %v1573, %v1577
    %v1678 = vadd.f32 %v1677, %v1581
    %v1679 = vadd.f32 %v1678, %v1585
    %v1680 = vadd.f32 %v1679, %v1589
    %v1681 = vadd.f32 %v1680, %v1593
    %v1682 = vadd.f32 %v1681, %v1597
    %v1683 = vadd.f32 %v1682, %v1601
    %v1684 = vadd.f32 %v1683, %v1605
    %v1685 = vadd.f32 %v1684, %v1609
    %v1686 = vadd.f32 %v1685, %v1613
    %v1687 = vadd.f32 %v1686, %v1617
    %v1688 = vadd.f32 %v1687, %v1621
    %v1689 = vadd.f32 %v1688, %v1625
    %v1690 = vadd.f32 %v1689, %v1629
    %v1691 = vadd.f32 %v1690, %v1633
    %v1692 = vrot.slane %v1691, 4
    %v1693 = vadd.f32 %v1691, %v1692
    %v1694 = vrot.slane %v1693, 2
    %v1695 = vadd.f32 %v1693, %v1694
    %v1696 = vrot.slane %v1695, 1
    %v1697 = vadd.f32 %v1695, %v1696
    %v1698 = vadd.f32 %v1574, %v1578
    %v1699 = vadd.f32 %v1698, %v1582
    %v1700 = vadd.f32 %v1699, %v1586
    %v1701 = vadd.f32 %v1700, %v1590
    %v1702 = vadd.f32 %v1701, %v1594
    %v1703 = vadd.f32 %v1702, %v1598
    %v1704 = vadd.f32 %v1703, %v1602
    %v1705 = vadd.f32 %v1704, %v1606
    %v1706 = vadd.f32 %v1705, %v1610
    %v1707 = vadd.f32 %v1706, %v1614
    %v1708 = vadd.f32 %v1707, %v1618
    %v1709 = vadd.f32 %v1708, %v1622
    %v1710 = vadd.f32 %v1709, %v1626
    %v1711 = vadd.f32 %v1710, %v1630
    %v1712 = vadd.f32 %v1711, %v1634
    %v1713 = vrot.slane %v1712, 4
    %v1714 = vadd.f32 %v1712, %v1713
    %v1715 = vrot.slane %v1714, 2
    %v1716 = vadd.f32 %v1714, %v1715
    %v1717 = vrot.slane %v1716, 1
    %v1718 = vadd.f32 %v1716, %v1717
    %v1719 = vmul.f32 %v1507, 0.0078125
    %v1720 = vmul.f32 %v1528, 0.0078125
    %v1721 = vmul.f32 %v1549, 0.0078125
    %v1722 = vmul.f32 %v1570, 0.0078125
    %v1723 = vmul.f32 %v1655, 0.0078125
    %v1724 = vmul.f32 %v1676, 0.0078125
    %v1725 = vmul.f32 %v1697, 0.0078125
    %v1726 = vmul.f32 %v1718, 0.0078125
    %v1727 = vmul.f32 %v1719, %v1719
    %v1728 = vmul.f32 %v1720, %v1720
    %v1729 = vmul.f32 %v1721, %v1721
    %v1730 = vmul.f32 %v1722, %v1722
    %v1731 = vsub.f32 %v1723, %v1727
    %v1732 = vsub.f32 %v1724, %v1728
    %v1733 = vsub.f32 %v1725, %v1729
    %v1734 = vsub.f32 %v1726, %v1730
    %v1735 = vmax.f32 %v1731, 0.0
    %v1736 = vmax.f32 %v1732, 0.0
    %v1737 = vmax.f32 %v1733, 0.0
    %v1738 = vmax.f32 %v1734, 0.0
    %v1739 = vsub.f32 %v1423, %v1719
    %v1740 = vsub.f32 %v1424, %v1720
    %v1741 = vsub.f32 %v1425, %v1721
    %v1742 = vsub.f32 %v1426, %v1722
    %v1743 = vsub.f32 %v1427, %v1719
    %v1744 = vsub.f32 %v1428, %v1720
    %v1745 = vsub.f32 %v1429, %v1721
    %v1746 = vsub.f32 %v1430, %v1722
    %v1747 = vsub.f32 %v1431, %v1719
    %v1748 = vsub.f32 %v1432, %v1720
    %v1749 = vsub.f32 %v1433, %v1721
    %v1750 = vsub.f32 %v1434, %v1722
    %v1751 = vsub.f32 %v1435, %v1719
    %v1752 = vsub.f32 %v1436, %v1720
    %v1753 = vsub.f32 %v1437, %v1721
    %v1754 = vsub.f32 %v1438, %v1722
    %v1755 = vsub.f32 %v1439, %v1719
    %v1756 = vsub.f32 %v1440, %v1720
    %v1757 = vsub.f32 %v1441, %v1721
    %v1758 = vsub.f32 %v1442, %v1722
    %v1759 = vsub.f32 %v1443, %v1719
    %v1760 = vsub.f32 %v1444, %v1720
    %v1761 = vsub.f32 %v1445, %v1721
    %v1762 = vsub.f32 %v1446, %v1722
    %v1763 = vsub.f32 %v1447, %v1719
    %v1764 = vsub.f32 %v1448, %v1720
    %v1765 = vsub.f32 %v1449, %v1721
    %v1766 = vsub.f32 %v1450, %v1722
    %v1767 = vsub.f32 %v1451, %v1719
    %v1768 = vsub.f32 %v1452, %v1720
    %v1769 = vsub.f32 %v1453, %v1721
    %v1770 = vsub.f32 %v1454, %v1722
    %v1771 = vsub.f32 %v1455, %v1719
    %v1772 = vsub.f32 %v1456, %v1720
    %v1773 = vsub.f32 %v1457, %v1721
    %v1774 = vsub.f32 %v1458, %v1722
    %v1775 = vsub.f32 %v1459, %v1719
    %v1776 = vsub.f32 %v1460, %v1720
    %v1777 = vsub.f32 %v1461, %v1721
    %v1778 = vsub.f32 %v1462, %v1722
    %v1779 = vsub.f32 %v1463, %v1719
    %v1780 = vsub.f32 %v1464, %v1720
    %v1781 = vsub.f32 %v1465, %v1721
    %v1782 = vsub.f32 %v1466, %v1722
    %v1783 = vsub.f32 %v1467, %v1719
    %v1784 = vsub.f32 %v1468, %v1720
    %v1785 = vsub.f32 %v1469, %v1721
    %v1786 = vsub.f32 %v1470, %v1722
    %v1787 = vsub.f32 %v1471, %v1719
    %v1788 = vsub.f32 %v1472, %v1720
    %v1789 = vsub.f32 %v1473, %v1721
    %v1790 = vsub.f32 %v1474, %v1722
    %v1791 = vsub.f32 %v1475, %v1719
    %v1792 = vsub.f32 %v1476, %v1720
    %v1793 = vsub.f32 %v1477, %v1721
    %v1794 = vsub.f32 %v1478, %v1722
    %v1795 = vsub.f32 %v1479, %v1719
    %v1796 = vsub.f32 %v1480, %v1720
    %v1797 = vsub.f32 %v1481, %v1721
    %v1798 = vsub.f32 %v1482, %v1722
    %v1799 = vsub.f32 %v1483, %v1719
    %v1800 = vsub.f32 %v1484, %v1720
    %v1801 = vsub.f32 %v1485, %v1721
    %v1802 = vsub.f32 %v1486, %v1722
    %v1803 = vadd.f32 %v1735, 1e-05
    %v1804 = vadd.f32 %v1736, 1e-05
    %v1805 = vadd.f32 %v1737, 1e-05
    %v1806 = vadd.f32 %v1738, 1e-05
    %v1807 = vrsqrt.pop %v1803
    %v1808 = vrsqrt.pop %v1804
    %v1809 = vrsqrt.pop %v1805
    %v1810 = vrsqrt.pop %v1806
    %v1811 = vmul.f32 %v1739, %v1807
    %v1812 = vmul.f32 %v1740, %v1808
    %v1813 = vmul.f32 %v1741, %v1809
    %v1814 = vmul.f32 %v1742, %v1810
    %v1815 = vmul.f32 %v1743, %v1807
    %v1816 = vmul.f32 %v1744, %v1808
    %v1817 = vmul.f32 %v1745, %v1809
    %v1818 = vmul.f32 %v1746, %v1810
    %v1819 = vmul.f32 %v1747, %v1807
    %v1820 = vmul.f32 %v1748, %v1808
    %v1821 = vmul.f32 %v1749, %v1809
    %v1822 = vmul.f32 %v1750, %v1810
    %v1823 = vmul.f32 %v1751, %v1807
    %v1824 = vmul.f32 %v1752, %v1808
    %v1825 = vmul.f32 %v1753, %v1809
    %v1826 = vmul.f32 %v1754, %v1810
    %v1827 = vmul.f32 %v1755, %v1807
    %v1828 = vmul.f32 %v1756, %v1808
    %v1829 = vmul.f32 %v1757, %v1809
    %v1830 = vmul.f32 %v1758, %v1810
    %v1831 = vmul.f32 %v1759, %v1807
    %v1832 = vmul.f32 %v1760, %v1808
    %v1833 = vmul.f32 %v1761, %v1809
    %v1834 = vmul.f32 %v1762, %v1810
    %v1835 = vmul.f32 %v1763, %v1807
    %v1836 = vmul.f32 %v1764, %v1808
    %v1837 = vmul.f32 %v1765, %v1809
    %v1838 = vmul.f32 %v1766, %v1810
    %v1839 = vmul.f32 %v1767, %v1807
    %v1840 = vmul.f32 %v1768, %v1808
    %v1841 = vmul.f32 %v1769, %v1809
    %v1842 = vmul.f32 %v1770, %v1810
    %v1843 = vmul.f32 %v1771, %v1807
    %v1844 = vmul.f32 %v1772, %v1808
    %v1845 = vmul.f32 %v1773, %v1809
    %v1846 = vmul.f32 %v1774, %v1810
    %v1847 = vmul.f32 %v1775, %v1807
    %v1848 = vmul.f32 %v1776, %v1808
    %v1849 = vmul.f32 %v1777, %v1809
    %v1850 = vmul.f32 %v1778, %v1810
    %v1851 = vmul.f32 %v1779, %v1807
    %v1852 = vmul.f32 %v1780, %v1808
    %v1853 = vmul.f32 %v1781, %v1809
    %v1854 = vmul.f32 %v1782, %v1810
    %v1855 = vmul.f32 %v1783, %v1807
    %v1856 = vmul.f32 %v1784, %v1808
    %v1857 = vmul.f32 %v1785, %v1809
    %v1858 = vmul.f32 %v1786, %v1810
    %v1859 = vmul.f32 %v1787, %v1807
    %v1860 = vmul.f32 %v1788, %v1808
    %v1861 = vmul.f32 %v1789, %v1809
    %v1862 = vmul.f32 %v1790, %v1810
    %v1863 = vmul.f32 %v1791, %v1807
    %v1864 = vmul.f32 %v1792, %v1808
    %v1865 = vmul.f32 %v1793, %v1809
    %v1866 = vmul.f32 %v1794, %v1810
    %v1867 = vmul.f32 %v1795, %v1807
    %v1868 = vmul.f32 %v1796, %v1808
    %v1869 = vmul.f32 %v1797, %v1809
    %v1870 = vmul.f32 %v1798, %v1810
    %v1871 = vmul.f32 %v1799, %v1807
    %v1872 = vmul.f32 %v1800, %v1808
    %v1873 = vmul.f32 %v1801, %v1809
    %v1874 = vmul.f32 %v1802, %v1810
    %v1875 = vpack.c.bf16 %v1815, %v1811
    %v1876 = vpack.c.bf16 %v1816, %v1812
    %v1877 = vpack.c.bf16 %v1817, %v1813
    %v1878 = vpack.c.bf16 %v1818, %v1814
    %v1879 = vpack.c.bf16 %v1823, %v1819
    %v1880 = vpack.c.bf16 %v1824, %v1820
    %v1881 = vpack.c.bf16 %v1825, %v1821
    %v1882 = vpack.c.bf16 %v1826, %v1822
    %v1883 = vpack.c.bf16 %v1831, %v1827
    %v1884 = vpack.c.bf16 %v1832, %v1828
    %v1885 = vpack.c.bf16 %v1833, %v1829
    %v1886 = vpack.c.bf16 %v1834, %v1830
    %v1887 = vpack.c.bf16 %v1839, %v1835
    %v1888 = vpack.c.bf16 %v1840, %v1836
    %v1889 = vpack.c.bf16 %v1841, %v1837
    %v1890 = vpack.c.bf16 %v1842, %v1838
    %v1891 = vpack.c.bf16 %v1847, %v1843
    %v1892 = vpack.c.bf16 %v1848, %v1844
    %v1893 = vpack.c.bf16 %v1849, %v1845
    %v1894 = vpack.c.bf16 %v1850, %v1846
    %v1895 = vpack.c.bf16 %v1855, %v1851
    %v1896 = vpack.c.bf16 %v1856, %v1852
    %v1897 = vpack.c.bf16 %v1857, %v1853
    %v1898 = vpack.c.bf16 %v1858, %v1854
    %v1899 = vpack.c.bf16 %v1863, %v1859
    %v1900 = vpack.c.bf16 %v1864, %v1860
    %v1901 = vpack.c.bf16 %v1865, %v1861
    %v1902 = vpack.c.bf16 %v1866, %v1862
    %v1903 = vpack.c.bf16 %v1871, %v1867
    %v1904 = vpack.c.bf16 %v1872, %v1868
    %v1905 = vpack.c.bf16 %v1873, %v1869
    %v1906 = vpack.c.bf16 %v1874, %v1870
    %v1907 = vld [vmem:[#allocation10] sm:$0xff]
    %v1908 = vld [vmem:[#allocation10 + $0x8] sm:$0xff]
    %v1909 = vld [vmem:[#allocation10 + $0x10] sm:$0xff]
    %v1910 = vld [vmem:[#allocation10 + $0x18] sm:$0xff]
    %v1911 = vld [vmem:[#allocation10 + $0x20] sm:$0xff]
    %v1912 = vld [vmem:[#allocation10 + $0x28] sm:$0xff]
    %v1913 = vld [vmem:[#allocation10 + $0x30] sm:$0xff]
    %v1914 = vld [vmem:[#allocation10 + $0x38] sm:$0xff]
    %v1915 = vld [vmem:[#allocation10 + $0x40] sm:$0xff]
    %v1916 = vld [vmem:[#allocation10 + $0x48] sm:$0xff]
    %v1917 = vld [vmem:[#allocation10 + $0x50] sm:$0xff]
    %v1918 = vld [vmem:[#allocation10 + $0x58] sm:$0xff]
    %v1919 = vld [vmem:[#allocation10 + $0x60] sm:$0xff]
    %v1920 = vld [vmem:[#allocation10 + $0x68] sm:$0xff]
    %v1921 = vld [vmem:[#allocation10 + $0x70] sm:$0xff]
    %v1922 = vld [vmem:[#allocation10 + $0x78] sm:$0xff]
    %v1923 = vld [vmem:[#allocation10 + $0x80] sm:$0xff]
    %v1924 = vld [vmem:[#allocation10 + $0x88] sm:$0xff]
    %v1925 = vld [vmem:[#allocation10 + $0x90] sm:$0xff]
    %v1926 = vld [vmem:[#allocation10 + $0x98] sm:$0xff]
    %v1927 = vld [vmem:[#allocation10 + $0xa0] sm:$0xff]
    %v1928 = vld [vmem:[#allocation10 + $0xa8] sm:$0xff]
    %v1929 = vld [vmem:[#allocation10 + $0xb0] sm:$0xff]
    %v1930 = vld [vmem:[#allocation10 + $0xb8] sm:$0xff]
    %v1931 = vld [vmem:[#allocation10 + $0xc0] sm:$0xff]
    %v1932 = vld [vmem:[#allocation10 + $0xc8] sm:$0xff]
    %v1933 = vld [vmem:[#allocation10 + $0xd0] sm:$0xff]
    %v1934 = vld [vmem:[#allocation10 + $0xd8] sm:$0xff]
    %v1935 = vld [vmem:[#allocation10 + $0xe0] sm:$0xff]
    %v1936 = vld [vmem:[#allocation10 + $0xe8] sm:$0xff]
    %v1937 = vld [vmem:[#allocation10 + $0xf0] sm:$0xff]
    %v1938 = vld [vmem:[#allocation10 + $0xf8] sm:$0xff]
    %v1939 = vld [vmem:[#allocation10 + $0x100] sm:$0xff]
    %v1940 = vld [vmem:[#allocation10 + $0x108] sm:$0xff]
    %v1941 = vld [vmem:[#allocation10 + $0x110] sm:$0xff]
    %v1942 = vld [vmem:[#allocation10 + $0x118] sm:$0xff]
    %v1943 = vld [vmem:[#allocation10 + $0x120] sm:$0xff]
    %v1944 = vld [vmem:[#allocation10 + $0x128] sm:$0xff]
    %v1945 = vld [vmem:[#allocation10 + $0x130] sm:$0xff]
    %v1946 = vld [vmem:[#allocation10 + $0x138] sm:$0xff]
    %v1947 = vld [vmem:[#allocation10 + $0x140] sm:$0xff]
    %v1948 = vld [vmem:[#allocation10 + $0x148] sm:$0xff]
    %v1949 = vld [vmem:[#allocation10 + $0x150] sm:$0xff]
    %v1950 = vld [vmem:[#allocation10 + $0x158] sm:$0xff]
    %v1951 = vld [vmem:[#allocation10 + $0x160] sm:$0xff]
    %v1952 = vld [vmem:[#allocation10 + $0x168] sm:$0xff]
    %v1953 = vld [vmem:[#allocation10 + $0x170] sm:$0xff]
    %v1954 = vld [vmem:[#allocation10 + $0x178] sm:$0xff]
    %v1955 = vld [vmem:[#allocation10 + $0x180] sm:$0xff]
    %v1956 = vld [vmem:[#allocation10 + $0x188] sm:$0xff]
    %v1957 = vld [vmem:[#allocation10 + $0x190] sm:$0xff]
    %v1958 = vld [vmem:[#allocation10 + $0x198] sm:$0xff]
    %v1959 = vld [vmem:[#allocation10 + $0x1a0] sm:$0xff]
    %v1960 = vld [vmem:[#allocation10 + $0x1a8] sm:$0xff]
    %v1961 = vld [vmem:[#allocation10 + $0x1b0] sm:$0xff]
    %v1962 = vld [vmem:[#allocation10 + $0x1b8] sm:$0xff]
    %v1963 = vld [vmem:[#allocation10 + $0x1c0] sm:$0xff]
    %v1964 = vld [vmem:[#allocation10 + $0x1c8] sm:$0xff]
    %v1965 = vld [vmem:[#allocation10 + $0x1d0] sm:$0xff]
    %v1966 = vld [vmem:[#allocation10 + $0x1d8] sm:$0xff]
    %v1967 = vld [vmem:[#allocation10 + $0x1e0] sm:$0xff]
    %v1968 = vld [vmem:[#allocation10 + $0x1e8] sm:$0xff]
    %v1969 = vld [vmem:[#allocation10 + $0x1f0] sm:$0xff]
    %v1970 = vld [vmem:[#allocation10 + $0x1f8] sm:$0xff]
    %v1971 = vld [vmem:[#allocation10 + $0x200] sm:$0xff]
    %v1972 = vld [vmem:[#allocation10 + $0x208] sm:$0xff]
    %v1973 = vld [vmem:[#allocation10 + $0x210] sm:$0xff]
    %v1974 = vld [vmem:[#allocation10 + $0x218] sm:$0xff]
    %v1975 = vld [vmem:[#allocation10 + $0x220] sm:$0xff]
    %v1976 = vld [vmem:[#allocation10 + $0x228] sm:$0xff]
    %v1977 = vld [vmem:[#allocation10 + $0x230] sm:$0xff]
    %v1978 = vld [vmem:[#allocation10 + $0x238] sm:$0xff]
    %v1979 = vld [vmem:[#allocation10 + $0x240] sm:$0xff]
    %v1980 = vld [vmem:[#allocation10 + $0x248] sm:$0xff]
    %v1981 = vld [vmem:[#allocation10 + $0x250] sm:$0xff]
    %v1982 = vld [vmem:[#allocation10 + $0x258] sm:$0xff]
    %v1983 = vld [vmem:[#allocation10 + $0x260] sm:$0xff]
    %v1984 = vld [vmem:[#allocation10 + $0x268] sm:$0xff]
    %v1985 = vld [vmem:[#allocation10 + $0x270] sm:$0xff]
    %v1986 = vld [vmem:[#allocation10 + $0x278] sm:$0xff]
    %v1987 = vld [vmem:[#allocation10 + $0x280] sm:$0xff]
    %v1988 = vld [vmem:[#allocation10 + $0x288] sm:$0xff]
    %v1989 = vld [vmem:[#allocation10 + $0x290] sm:$0xff]
    %v1990 = vld [vmem:[#allocation10 + $0x298] sm:$0xff]
    %v1991 = vld [vmem:[#allocation10 + $0x2a0] sm:$0xff]
    %v1992 = vld [vmem:[#allocation10 + $0x2a8] sm:$0xff]
    %v1993 = vld [vmem:[#allocation10 + $0x2b0] sm:$0xff]
    %v1994 = vld [vmem:[#allocation10 + $0x2b8] sm:$0xff]
    %v1995 = vld [vmem:[#allocation10 + $0x2c0] sm:$0xff]
    %v1996 = vld [vmem:[#allocation10 + $0x2c8] sm:$0xff]
    %v1997 = vld [vmem:[#allocation10 + $0x2d0] sm:$0xff]
    %v1998 = vld [vmem:[#allocation10 + $0x2d8] sm:$0xff]
    %v1999 = vld [vmem:[#allocation10 + $0x2e0] sm:$0xff]
    %v2000 = vld [vmem:[#allocation10 + $0x2e8] sm:$0xff]
    %v2001 = vld [vmem:[#allocation10 + $0x2f0] sm:$0xff]
    %v2002 = vld [vmem:[#allocation10 + $0x2f8] sm:$0xff]
    %v2003 = vld [vmem:[#allocation10 + $0x300] sm:$0xff]
    %v2004 = vld [vmem:[#allocation10 + $0x308] sm:$0xff]
    %v2005 = vld [vmem:[#allocation10 + $0x310] sm:$0xff]
    %v2006 = vld [vmem:[#allocation10 + $0x318] sm:$0xff]
    %v2007 = vld [vmem:[#allocation10 + $0x320] sm:$0xff]
    %v2008 = vld [vmem:[#allocation10 + $0x328] sm:$0xff]
    %v2009 = vld [vmem:[#allocation10 + $0x330] sm:$0xff]
    %v2010 = vld [vmem:[#allocation10 + $0x338] sm:$0xff]
    %v2011 = vld [vmem:[#allocation10 + $0x340] sm:$0xff]
    %v2012 = vld [vmem:[#allocation10 + $0x348] sm:$0xff]
    %v2013 = vld [vmem:[#allocation10 + $0x350] sm:$0xff]
    %v2014 = vld [vmem:[#allocation10 + $0x358] sm:$0xff]
    %v2015 = vld [vmem:[#allocation10 + $0x360] sm:$0xff]
    %v2016 = vld [vmem:[#allocation10 + $0x368] sm:$0xff]
    %v2017 = vld [vmem:[#allocation10 + $0x370] sm:$0xff]
    %v2018 = vld [vmem:[#allocation10 + $0x378] sm:$0xff]
    %v2019 = vld [vmem:[#allocation10 + $0x380] sm:$0xff]
    %v2020 = vld [vmem:[#allocation10 + $0x388] sm:$0xff]
    %v2021 = vld [vmem:[#allocation10 + $0x390] sm:$0xff]
    %v2022 = vld [vmem:[#allocation10 + $0x398] sm:$0xff]
    %v2023 = vld [vmem:[#allocation10 + $0x3a0] sm:$0xff]
    %v2024 = vld [vmem:[#allocation10 + $0x3a8] sm:$0xff]
    %v2025 = vld [vmem:[#allocation10 + $0x3b0] sm:$0xff]
    %v2026 = vld [vmem:[#allocation10 + $0x3b8] sm:$0xff]
    %v2027 = vld [vmem:[#allocation10 + $0x3c0] sm:$0xff]
    %v2028 = vld [vmem:[#allocation10 + $0x3c8] sm:$0xff]
    %v2029 = vld [vmem:[#allocation10 + $0x3d0] sm:$0xff]
    %v2030 = vld [vmem:[#allocation10 + $0x3d8] sm:$0xff]
    %v2031 = vld [vmem:[#allocation10 + $0x3e0] sm:$0xff]
    %v2032 = vld [vmem:[#allocation10 + $0x3e8] sm:$0xff]
    %v2033 = vld [vmem:[#allocation10 + $0x3f0] sm:$0xff]
    %v2034 = vld [vmem:[#allocation10 + $0x3f8] sm:$0xff]
    %v2035 = vld [vmem:[#allocation10 + $0x400] sm:$0xff]
    %v2036 = vld [vmem:[#allocation10 + $0x408] sm:$0xff]
    %v2037 = vld [vmem:[#allocation10 + $0x410] sm:$0xff]
    %v2038 = vld [vmem:[#allocation10 + $0x418] sm:$0xff]
    %v2039 = vld [vmem:[#allocation10 + $0x420] sm:$0xff]
    %v2040 = vld [vmem:[#allocation10 + $0x428] sm:$0xff]
    %v2041 = vld [vmem:[#allocation10 + $0x430] sm:$0xff]
    %v2042 = vld [vmem:[#allocation10 + $0x438] sm:$0xff]
    %v2043 = vld [vmem:[#allocation10 + $0x440] sm:$0xff]
    %v2044 = vld [vmem:[#allocation10 + $0x448] sm:$0xff]
    %v2045 = vld [vmem:[#allocation10 + $0x450] sm:$0xff]
    %v2046 = vld [vmem:[#allocation10 + $0x458] sm:$0xff]
    %v2047 = vld [vmem:[#allocation10 + $0x460] sm:$0xff]
    %v2048 = vld [vmem:[#allocation10 + $0x468] sm:$0xff]
    %v2049 = vld [vmem:[#allocation10 + $0x470] sm:$0xff]
    %v2050 = vld [vmem:[#allocation10 + $0x478] sm:$0xff]
    %v2051 = vld [vmem:[#allocation10 + $0x480] sm:$0xff]
    %v2052 = vld [vmem:[#allocation10 + $0x488] sm:$0xff]
    %v2053 = vld [vmem:[#allocation10 + $0x490] sm:$0xff]
    %v2054 = vld [vmem:[#allocation10 + $0x498] sm:$0xff]
    %v2055 = vld [vmem:[#allocation10 + $0x4a0] sm:$0xff]
    %v2056 = vld [vmem:[#allocation10 + $0x4a8] sm:$0xff]
    %v2057 = vld [vmem:[#allocation10 + $0x4b0] sm:$0xff]
    %v2058 = vld [vmem:[#allocation10 + $0x4b8] sm:$0xff]
    %v2059 = vld [vmem:[#allocation10 + $0x4c0] sm:$0xff]
    %v2060 = vld [vmem:[#allocation10 + $0x4c8] sm:$0xff]
    %v2061 = vld [vmem:[#allocation10 + $0x4d0] sm:$0xff]
    %v2062 = vld [vmem:[#allocation10 + $0x4d8] sm:$0xff]
    %v2063 = vld [vmem:[#allocation10 + $0x4e0] sm:$0xff]
    %v2064 = vld [vmem:[#allocation10 + $0x4e8] sm:$0xff]
    %v2065 = vld [vmem:[#allocation10 + $0x4f0] sm:$0xff]
    %v2066 = vld [vmem:[#allocation10 + $0x4f8] sm:$0xff]
    %v2067 = vld [vmem:[#allocation10 + $0x500] sm:$0xff]
    %v2068 = vld [vmem:[#allocation10 + $0x508] sm:$0xff]
    %v2069 = vld [vmem:[#allocation10 + $0x510] sm:$0xff]
    %v2070 = vld [vmem:[#allocation10 + $0x518] sm:$0xff]
    %v2071 = vld [vmem:[#allocation10 + $0x520] sm:$0xff]
    %v2072 = vld [vmem:[#allocation10 + $0x528] sm:$0xff]
    %v2073 = vld [vmem:[#allocation10 + $0x530] sm:$0xff]
    %v2074 = vld [vmem:[#allocation10 + $0x538] sm:$0xff]
    %v2075 = vld [vmem:[#allocation10 + $0x540] sm:$0xff]
    %v2076 = vld [vmem:[#allocation10 + $0x548] sm:$0xff]
    %v2077 = vld [vmem:[#allocation10 + $0x550] sm:$0xff]
    %v2078 = vld [vmem:[#allocation10 + $0x558] sm:$0xff]
    %v2079 = vld [vmem:[#allocation10 + $0x560] sm:$0xff]
    %v2080 = vld [vmem:[#allocation10 + $0x568] sm:$0xff]
    %v2081 = vld [vmem:[#allocation10 + $0x570] sm:$0xff]
    %v2082 = vld [vmem:[#allocation10 + $0x578] sm:$0xff]
    %v2083 = vld [vmem:[#allocation10 + $0x580] sm:$0xff]
    %v2084 = vld [vmem:[#allocation10 + $0x588] sm:$0xff]
    %v2085 = vld [vmem:[#allocation10 + $0x590] sm:$0xff]
    %v2086 = vld [vmem:[#allocation10 + $0x598] sm:$0xff]
    %v2087 = vld [vmem:[#allocation10 + $0x5a0] sm:$0xff]
    %v2088 = vld [vmem:[#allocation10 + $0x5a8] sm:$0xff]
    %v2089 = vld [vmem:[#allocation10 + $0x5b0] sm:$0xff]
    %v2090 = vld [vmem:[#allocation10 + $0x5b8] sm:$0xff]
    %v2091 = vld [vmem:[#allocation10 + $0x5c0] sm:$0xff]
    %v2092 = vld [vmem:[#allocation10 + $0x5c8] sm:$0xff]
    %v2093 = vld [vmem:[#allocation10 + $0x5d0] sm:$0xff]
    %v2094 = vld [vmem:[#allocation10 + $0x5d8] sm:$0xff]
    %v2095 = vld [vmem:[#allocation10 + $0x5e0] sm:$0xff]
    %v2096 = vld [vmem:[#allocation10 + $0x5e8] sm:$0xff]
    %v2097 = vld [vmem:[#allocation10 + $0x5f0] sm:$0xff]
    %v2098 = vld [vmem:[#allocation10 + $0x5f8] sm:$0xff]
    %v2099 = vld [vmem:[#allocation10 + $0x600] sm:$0xff]
    %v2100 = vld [vmem:[#allocation10 + $0x608] sm:$0xff]
    %v2101 = vld [vmem:[#allocation10 + $0x610] sm:$0xff]
    %v2102 = vld [vmem:[#allocation10 + $0x618] sm:$0xff]
    %v2103 = vld [vmem:[#allocation10 + $0x620] sm:$0xff]
    %v2104 = vld [vmem:[#allocation10 + $0x628] sm:$0xff]
    %v2105 = vld [vmem:[#allocation10 + $0x630] sm:$0xff]
    %v2106 = vld [vmem:[#allocation10 + $0x638] sm:$0xff]
    %v2107 = vld [vmem:[#allocation10 + $0x640] sm:$0xff]
    %v2108 = vld [vmem:[#allocation10 + $0x648] sm:$0xff]
    %v2109 = vld [vmem:[#allocation10 + $0x650] sm:$0xff]
    %v2110 = vld [vmem:[#allocation10 + $0x658] sm:$0xff]
    %v2111 = vld [vmem:[#allocation10 + $0x660] sm:$0xff]
    %v2112 = vld [vmem:[#allocation10 + $0x668] sm:$0xff]
    %v2113 = vld [vmem:[#allocation10 + $0x670] sm:$0xff]
    %v2114 = vld [vmem:[#allocation10 + $0x678] sm:$0xff]
    %v2115 = vld [vmem:[#allocation10 + $0x680] sm:$0xff]
    %v2116 = vld [vmem:[#allocation10 + $0x688] sm:$0xff]
    %v2117 = vld [vmem:[#allocation10 + $0x690] sm:$0xff]
    %v2118 = vld [vmem:[#allocation10 + $0x698] sm:$0xff]
    %v2119 = vld [vmem:[#allocation10 + $0x6a0] sm:$0xff]
    %v2120 = vld [vmem:[#allocation10 + $0x6a8] sm:$0xff]
    %v2121 = vld [vmem:[#allocation10 + $0x6b0] sm:$0xff]
    %v2122 = vld [vmem:[#allocation10 + $0x6b8] sm:$0xff]
    %v2123 = vld [vmem:[#allocation10 + $0x6c0] sm:$0xff]
    %v2124 = vld [vmem:[#allocation10 + $0x6c8] sm:$0xff]
    %v2125 = vld [vmem:[#allocation10 + $0x6d0] sm:$0xff]
    %v2126 = vld [vmem:[#allocation10 + $0x6d8] sm:$0xff]
    %v2127 = vld [vmem:[#allocation10 + $0x6e0] sm:$0xff]
    %v2128 = vld [vmem:[#allocation10 + $0x6e8] sm:$0xff]
    %v2129 = vld [vmem:[#allocation10 + $0x6f0] sm:$0xff]
    %v2130 = vld [vmem:[#allocation10 + $0x6f8] sm:$0xff]
    %v2131 = vld [vmem:[#allocation10 + $0x700] sm:$0xff]
    %v2132 = vld [vmem:[#allocation10 + $0x708] sm:$0xff]
    %v2133 = vld [vmem:[#allocation10 + $0x710] sm:$0xff]
    %v2134 = vld [vmem:[#allocation10 + $0x718] sm:$0xff]
    %v2135 = vld [vmem:[#allocation10 + $0x720] sm:$0xff]
    %v2136 = vld [vmem:[#allocation10 + $0x728] sm:$0xff]
    %v2137 = vld [vmem:[#allocation10 + $0x730] sm:$0xff]
    %v2138 = vld [vmem:[#allocation10 + $0x738] sm:$0xff]
    %v2139 = vld [vmem:[#allocation10 + $0x740] sm:$0xff]
    %v2140 = vld [vmem:[#allocation10 + $0x748] sm:$0xff]
    %v2141 = vld [vmem:[#allocation10 + $0x750] sm:$0xff]
    %v2142 = vld [vmem:[#allocation10 + $0x758] sm:$0xff]
    %v2143 = vld [vmem:[#allocation10 + $0x760] sm:$0xff]
    %v2144 = vld [vmem:[#allocation10 + $0x768] sm:$0xff]
    %v2145 = vld [vmem:[#allocation10 + $0x770] sm:$0xff]
    %v2146 = vld [vmem:[#allocation10 + $0x778] sm:$0xff]
    %v2147 = vld [vmem:[#allocation10 + $0x780] sm:$0xff]
    %v2148 = vld [vmem:[#allocation10 + $0x788] sm:$0xff]
    %v2149 = vld [vmem:[#allocation10 + $0x790] sm:$0xff]
    %v2150 = vld [vmem:[#allocation10 + $0x798] sm:$0xff]
    %v2151 = vld [vmem:[#allocation10 + $0x7a0] sm:$0xff]
    %v2152 = vld [vmem:[#allocation10 + $0x7a8] sm:$0xff]
    %v2153 = vld [vmem:[#allocation10 + $0x7b0] sm:$0xff]
    %v2154 = vld [vmem:[#allocation10 + $0x7b8] sm:$0xff]
    %v2155 = vld [vmem:[#allocation10 + $0x7c0] sm:$0xff]
    %v2156 = vld [vmem:[#allocation10 + $0x7c8] sm:$0xff]
    %v2157 = vld [vmem:[#allocation10 + $0x7d0] sm:$0xff]
    %v2158 = vld [vmem:[#allocation10 + $0x7d8] sm:$0xff]
    %v2159 = vld [vmem:[#allocation10 + $0x7e0] sm:$0xff]
    %v2160 = vld [vmem:[#allocation10 + $0x7e8] sm:$0xff]
    %v2161 = vld [vmem:[#allocation10 + $0x7f0] sm:$0xff]
    %v2162 = vld [vmem:[#allocation10 + $0x7f8] sm:$0xff]
    %v2163 = vld [vmem:[#allocation11] sm:$0xff]
    %v2165 = vlaneseq
    %v2166 = vshrl.u32 %v2165, 7
    %v2167 = vsub.s32 0, %v2166
    %v2168 = vrot.slane %v2163, %v2167
    %v2169 = vlaneseq
    %v2170 = vshrl.u32 %v2169, 7
    %v2171 = vsub.s32 1, %v2170
    %v2172 = vrot.slane %v2163, %v2171
    %v2173 = vlaneseq
    %v2174 = vshrl.u32 %v2173, 7
    %v2175 = vsub.s32 2, %v2174
    %v2176 = vrot.slane %v2163, %v2175
    %v2177 = vlaneseq
    %v2178 = vshrl.u32 %v2177, 7
    %v2179 = vsub.s32 3, %v2178
    %v2180 = vrot.slane %v2163, %v2179
    %v2181 = vlaneseq
    %v2182 = vshrl.u32 %v2181, 7
    %v2183 = vsub.s32 4, %v2182
    %v2184 = vrot.slane %v2163, %v2183
    %v2185 = vlaneseq
    %v2186 = vshrl.u32 %v2185, 7
    %v2187 = vsub.s32 5, %v2186
    %v2188 = vrot.slane %v2163, %v2187
    %v2189 = vlaneseq
    %v2190 = vshrl.u32 %v2189, 7
    %v2191 = vsub.s32 6, %v2190
    %v2192 = vrot.slane %v2163, %v2191
    %v2193 = vlaneseq
    %v2194 = vshrl.u32 %v2193, 7
    %v2195 = vsub.s32 7, %v2194
    %v2196 = vrot.slane %v2163, %v2195
    %v2461 = vunpack.c.l.b16 %v1907
    %v2462 = vunpack.c.h.b16 %v1907
    %v2463 = vunpack.c.l.b16 %v1908
    %v2464 = vunpack.c.h.b16 %v1908
    %v2465 = vunpack.c.l.b16 %v1909
    %v2466 = vunpack.c.h.b16 %v1909
    %v2467 = vunpack.c.l.b16 %v1910
    %v2468 = vunpack.c.h.b16 %v1910
    %v2469 = vunpack.c.l.b16 %v1911
    %v2470 = vunpack.c.h.b16 %v1911
    %v2471 = vunpack.c.l.b16 %v1912
    %v2472 = vunpack.c.h.b16 %v1912
    %v2473 = vunpack.c.l.b16 %v1913
    %v2474 = vunpack.c.h.b16 %v1913
    %v2475 = vunpack.c.l.b16 %v1914
    %v2476 = vunpack.c.h.b16 %v1914
    %v2477 = vunpack.c.l.b16 %v1915
    %v2478 = vunpack.c.h.b16 %v1915
    %v2479 = vunpack.c.l.b16 %v1916
    %v2480 = vunpack.c.h.b16 %v1916
    %v2481 = vunpack.c.l.b16 %v1917
    %v2482 = vunpack.c.h.b16 %v1917
    %v2483 = vunpack.c.l.b16 %v1918
    %v2484 = vunpack.c.h.b16 %v1918
    %v2485 = vunpack.c.l.b16 %v1919
    %v2486 = vunpack.c.h.b16 %v1919
    %v2487 = vunpack.c.l.b16 %v1920
    %v2488 = vunpack.c.h.b16 %v1920
    %v2489 = vunpack.c.l.b16 %v1921
    %v2490 = vunpack.c.h.b16 %v1921
    %v2491 = vunpack.c.l.b16 %v1922
    %v2492 = vunpack.c.h.b16 %v1922
    %v2493 = vunpack.c.l.b16 %v1923
    %v2494 = vunpack.c.h.b16 %v1923
    %v2495 = vunpack.c.l.b16 %v1924
    %v2496 = vunpack.c.h.b16 %v1924
    %v2497 = vunpack.c.l.b16 %v1925
    %v2498 = vunpack.c.h.b16 %v1925
    %v2499 = vunpack.c.l.b16 %v1926
    %v2500 = vunpack.c.h.b16 %v1926
    %v2501 = vunpack.c.l.b16 %v1927
    %v2502 = vunpack.c.h.b16 %v1927
    %v2503 = vunpack.c.l.b16 %v1928
    %v2504 = vunpack.c.h.b16 %v1928
    %v2505 = vunpack.c.l.b16 %v1929
    %v2506 = vunpack.c.h.b16 %v1929
    %v2507 = vunpack.c.l.b16 %v1930
    %v2508 = vunpack.c.h.b16 %v1930
    %v2509 = vunpack.c.l.b16 %v1931
    %v2510 = vunpack.c.h.b16 %v1931
    %v2511 = vunpack.c.l.b16 %v1932
    %v2512 = vunpack.c.h.b16 %v1932
    %v2513 = vunpack.c.l.b16 %v1933
    %v2514 = vunpack.c.h.b16 %v1933
    %v2515 = vunpack.c.l.b16 %v1934
    %v2516 = vunpack.c.h.b16 %v1934
    %v2517 = vunpack.c.l.b16 %v1935
    %v2518 = vunpack.c.h.b16 %v1935
    %v2519 = vunpack.c.l.b16 %v1936
    %v2520 = vunpack.c.h.b16 %v1936
    %v2521 = vunpack.c.l.b16 %v1937
    %v2522 = vunpack.c.h.b16 %v1937
    %v2523 = vunpack.c.l.b16 %v1938
    %v2524 = vunpack.c.h.b16 %v1938
    %v2525 = vunpack.c.l.b16 %v1939
    %v2526 = vunpack.c.h.b16 %v1939
    %v2527 = vunpack.c.l.b16 %v1940
    %v2528 = vunpack.c.h.b16 %v1940
    %v2529 = vunpack.c.l.b16 %v1941
    %v2530 = vunpack.c.h.b16 %v1941
    %v2531 = vunpack.c.l.b16 %v1942
    %v2532 = vunpack.c.h.b16 %v1942
    %v2533 = vunpack.c.l.b16 %v1943
    %v2534 = vunpack.c.h.b16 %v1943
    %v2535 = vunpack.c.l.b16 %v1944
    %v2536 = vunpack.c.h.b16 %v1944
    %v2537 = vunpack.c.l.b16 %v1945
    %v2538 = vunpack.c.h.b16 %v1945
    %v2539 = vunpack.c.l.b16 %v1946
    %v2540 = vunpack.c.h.b16 %v1946
    %v2541 = vunpack.c.l.b16 %v1947
    %v2542 = vunpack.c.h.b16 %v1947
    %v2543 = vunpack.c.l.b16 %v1948
    %v2544 = vunpack.c.h.b16 %v1948
    %v2545 = vunpack.c.l.b16 %v1949
    %v2546 = vunpack.c.h.b16 %v1949
    %v2547 = vunpack.c.l.b16 %v1950
    %v2548 = vunpack.c.h.b16 %v1950
    %v2549 = vunpack.c.l.b16 %v1951
    %v2550 = vunpack.c.h.b16 %v1951
    %v2551 = vunpack.c.l.b16 %v1952
    %v2552 = vunpack.c.h.b16 %v1952
    %v2553 = vunpack.c.l.b16 %v1953
    %v2554 = vunpack.c.h.b16 %v1953
    %v2555 = vunpack.c.l.b16 %v1954
    %v2556 = vunpack.c.h.b16 %v1954
    %v2557 = vunpack.c.l.b16 %v1955
    %v2558 = vunpack.c.h.b16 %v1955
    %v2559 = vunpack.c.l.b16 %v1956
    %v2560 = vunpack.c.h.b16 %v1956
    %v2561 = vunpack.c.l.b16 %v1957
    %v2562 = vunpack.c.h.b16 %v1957
    %v2563 = vunpack.c.l.b16 %v1958
    %v2564 = vunpack.c.h.b16 %v1958
    %v2565 = vunpack.c.l.b16 %v1959
    %v2566 = vunpack.c.h.b16 %v1959
    %v2567 = vunpack.c.l.b16 %v1960
    %v2568 = vunpack.c.h.b16 %v1960
    %v2569 = vunpack.c.l.b16 %v1961
    %v2570 = vunpack.c.h.b16 %v1961
    %v2571 = vunpack.c.l.b16 %v1962
    %v2572 = vunpack.c.h.b16 %v1962
    %v2573 = vunpack.c.l.b16 %v1963
    %v2574 = vunpack.c.h.b16 %v1963
    %v2575 = vunpack.c.l.b16 %v1964
    %v2576 = vunpack.c.h.b16 %v1964
    %v2577 = vunpack.c.l.b16 %v1965
    %v2578 = vunpack.c.h.b16 %v1965
    %v2579 = vunpack.c.l.b16 %v1966
    %v2580 = vunpack.c.h.b16 %v1966
    %v2581 = vunpack.c.l.b16 %v1967
    %v2582 = vunpack.c.h.b16 %v1967
    %v2583 = vunpack.c.l.b16 %v1968
    %v2584 = vunpack.c.h.b16 %v1968
    %v2585 = vunpack.c.l.b16 %v1969
    %v2586 = vunpack.c.h.b16 %v1969
    %v2587 = vunpack.c.l.b16 %v1970
    %v2588 = vunpack.c.h.b16 %v1970
    %v2589 = vunpack.c.l.b16 %v1971
    %v2590 = vunpack.c.h.b16 %v1971
    %v2591 = vunpack.c.l.b16 %v1972
    %v2592 = vunpack.c.h.b16 %v1972
    %v2593 = vunpack.c.l.b16 %v1973
    %v2594 = vunpack.c.h.b16 %v1973
    %v2595 = vunpack.c.l.b16 %v1974
    %v2596 = vunpack.c.h.b16 %v1974
    %v2597 = vunpack.c.l.b16 %v1975
    %v2598 = vunpack.c.h.b16 %v1975
    %v2599 = vunpack.c.l.b16 %v1976
    %v2600 = vunpack.c.h.b16 %v1976
    %v2601 = vunpack.c.l.b16 %v1977
    %v2602 = vunpack.c.h.b16 %v1977
    %v2603 = vunpack.c.l.b16 %v1978
    %v2604 = vunpack.c.h.b16 %v1978
    %v2605 = vunpack.c.l.b16 %v1979
    %v2606 = vunpack.c.h.b16 %v1979
    %v2607 = vunpack.c.l.b16 %v1980
    %v2608 = vunpack.c.h.b16 %v1980
    %v2609 = vunpack.c.l.b16 %v1981
    %v2610 = vunpack.c.h.b16 %v1981
    %v2611 = vunpack.c.l.b16 %v1982
    %v2612 = vunpack.c.h.b16 %v1982
    %v2613 = vunpack.c.l.b16 %v1983
    %v2614 = vunpack.c.h.b16 %v1983
    %v2615 = vunpack.c.l.b16 %v1984
    %v2616 = vunpack.c.h.b16 %v1984
    %v2617 = vunpack.c.l.b16 %v1985
    %v2618 = vunpack.c.h.b16 %v1985
    %v2619 = vunpack.c.l.b16 %v1986
    %v2620 = vunpack.c.h.b16 %v1986
    %v2621 = vunpack.c.l.b16 %v1987
    %v2622 = vunpack.c.h.b16 %v1987
    %v2623 = vunpack.c.l.b16 %v1988
    %v2624 = vunpack.c.h.b16 %v1988
    %v2625 = vunpack.c.l.b16 %v1989
    %v2626 = vunpack.c.h.b16 %v1989
    %v2627 = vunpack.c.l.b16 %v1990
    %v2628 = vunpack.c.h.b16 %v1990
    %v2629 = vunpack.c.l.b16 %v1991
    %v2630 = vunpack.c.h.b16 %v1991
    %v2631 = vunpack.c.l.b16 %v1992
    %v2632 = vunpack.c.h.b16 %v1992
    %v2633 = vunpack.c.l.b16 %v1993
    %v2634 = vunpack.c.h.b16 %v1993
    %v2635 = vunpack.c.l.b16 %v1994
    %v2636 = vunpack.c.h.b16 %v1994
    %v2637 = vunpack.c.l.b16 %v1995
    %v2638 = vunpack.c.h.b16 %v1995
    %v2639 = vunpack.c.l.b16 %v1996
    %v2640 = vunpack.c.h.b16 %v1996
    %v2641 = vunpack.c.l.b16 %v1997
    %v2642 = vunpack.c.h.b16 %v1997
    %v2643 = vunpack.c.l.b16 %v1998
    %v2644 = vunpack.c.h.b16 %v1998
    %v2645 = vunpack.c.l.b16 %v1999
    %v2646 = vunpack.c.h.b16 %v1999
    %v2647 = vunpack.c.l.b16 %v2000
    %v2648 = vunpack.c.h.b16 %v2000
    %v2649 = vunpack.c.l.b16 %v2001
    %v2650 = vunpack.c.h.b16 %v2001
    %v2651 = vunpack.c.l.b16 %v2002
    %v2652 = vunpack.c.h.b16 %v2002
    %v2653 = vunpack.c.l.b16 %v2003
    %v2654 = vunpack.c.h.b16 %v2003
    %v2655 = vunpack.c.l.b16 %v2004
    %v2656 = vunpack.c.h.b16 %v2004
    %v2657 = vunpack.c.l.b16 %v2005
    %v2658 = vunpack.c.h.b16 %v2005
    %v2659 = vunpack.c.l.b16 %v2006
    %v2660 = vunpack.c.h.b16 %v2006
    %v2661 = vunpack.c.l.b16 %v2007
    %v2662 = vunpack.c.h.b16 %v2007
    %v2663 = vunpack.c.l.b16 %v2008
    %v2664 = vunpack.c.h.b16 %v2008
    %v2665 = vunpack.c.l.b16 %v2009
    %v2666 = vunpack.c.h.b16 %v2009
    %v2667 = vunpack.c.l.b16 %v2010
    %v2668 = vunpack.c.h.b16 %v2010
    %v2669 = vunpack.c.l.b16 %v2011
    %v2670 = vunpack.c.h.b16 %v2011
    %v2671 = vunpack.c.l.b16 %v2012
    %v2672 = vunpack.c.h.b16 %v2012
    %v2673 = vunpack.c.l.b16 %v2013
    %v2674 = vunpack.c.h.b16 %v2013
    %v2675 = vunpack.c.l.b16 %v2014
    %v2676 = vunpack.c.h.b16 %v2014
    %v2677 = vunpack.c.l.b16 %v2015
    %v2678 = vunpack.c.h.b16 %v2015
    %v2679 = vunpack.c.l.b16 %v2016
    %v2680 = vunpack.c.h.b16 %v2016
    %v2681 = vunpack.c.l.b16 %v2017
    %v2682 = vunpack.c.h.b16 %v2017
    %v2683 = vunpack.c.l.b16 %v2018
    %v2684 = vunpack.c.h.b16 %v2018
    %v2685 = vunpack.c.l.b16 %v2019
    %v2686 = vunpack.c.h.b16 %v2019
    %v2687 = vunpack.c.l.b16 %v2020
    %v2688 = vunpack.c.h.b16 %v2020
    %v2689 = vunpack.c.l.b16 %v2021
    %v2690 = vunpack.c.h.b16 %v2021
    %v2691 = vunpack.c.l.b16 %v2022
    %v2692 = vunpack.c.h.b16 %v2022
    %v2693 = vunpack.c.l.b16 %v2023
    %v2694 = vunpack.c.h.b16 %v2023
    %v2695 = vunpack.c.l.b16 %v2024
    %v2696 = vunpack.c.h.b16 %v2024
    %v2697 = vunpack.c.l.b16 %v2025
    %v2698 = vunpack.c.h.b16 %v2025
    %v2699 = vunpack.c.l.b16 %v2026
    %v2700 = vunpack.c.h.b16 %v2026
    %v2701 = vunpack.c.l.b16 %v2027
    %v2702 = vunpack.c.h.b16 %v2027
    %v2703 = vunpack.c.l.b16 %v2028
    %v2704 = vunpack.c.h.b16 %v2028
    %v2705 = vunpack.c.l.b16 %v2029
    %v2706 = vunpack.c.h.b16 %v2029
    %v2707 = vunpack.c.l.b16 %v2030
    %v2708 = vunpack.c.h.b16 %v2030
    %v2709 = vunpack.c.l.b16 %v2031
    %v2710 = vunpack.c.h.b16 %v2031
    %v2711 = vunpack.c.l.b16 %v2032
    %v2712 = vunpack.c.h.b16 %v2032
    %v2713 = vunpack.c.l.b16 %v2033
    %v2714 = vunpack.c.h.b16 %v2033
    %v2715 = vunpack.c.l.b16 %v2034
    %v2716 = vunpack.c.h.b16 %v2034
    %v2717 = vunpack.c.l.b16 %v2035
    %v2718 = vunpack.c.h.b16 %v2035
    %v2719 = vunpack.c.l.b16 %v2036
    %v2720 = vunpack.c.h.b16 %v2036
    %v2721 = vunpack.c.l.b16 %v2037
    %v2722 = vunpack.c.h.b16 %v2037
    %v2723 = vunpack.c.l.b16 %v2038
    %v2724 = vunpack.c.h.b16 %v2038
    %v2725 = vunpack.c.l.b16 %v2039
    %v2726 = vunpack.c.h.b16 %v2039
    %v2727 = vunpack.c.l.b16 %v2040
    %v2728 = vunpack.c.h.b16 %v2040
    %v2729 = vunpack.c.l.b16 %v2041
    %v2730 = vunpack.c.h.b16 %v2041
    %v2731 = vunpack.c.l.b16 %v2042
    %v2732 = vunpack.c.h.b16 %v2042
    %v2733 = vunpack.c.l.b16 %v2043
    %v2734 = vunpack.c.h.b16 %v2043
    %v2735 = vunpack.c.l.b16 %v2044
    %v2736 = vunpack.c.h.b16 %v2044
    %v2737 = vunpack.c.l.b16 %v2045
    %v2738 = vunpack.c.h.b16 %v2045
    %v2739 = vunpack.c.l.b16 %v2046
    %v2740 = vunpack.c.h.b16 %v2046
    %v2741 = vunpack.c.l.b16 %v2047
    %v2742 = vunpack.c.h.b16 %v2047
    %v2743 = vunpack.c.l.b16 %v2048
    %v2744 = vunpack.c.h.b16 %v2048
    %v2745 = vunpack.c.l.b16 %v2049
    %v2746 = vunpack.c.h.b16 %v2049
    %v2747 = vunpack.c.l.b16 %v2050
    %v2748 = vunpack.c.h.b16 %v2050
    %v2749 = vunpack.c.l.b16 %v2051
    %v2750 = vunpack.c.h.b16 %v2051
    %v2751 = vunpack.c.l.b16 %v2052
    %v2752 = vunpack.c.h.b16 %v2052
    %v2753 = vunpack.c.l.b16 %v2053
    %v2754 = vunpack.c.h.b16 %v2053
    %v2755 = vunpack.c.l.b16 %v2054
    %v2756 = vunpack.c.h.b16 %v2054
    %v2757 = vunpack.c.l.b16 %v2055
    %v2758 = vunpack.c.h.b16 %v2055
    %v2759 = vunpack.c.l.b16 %v2056
    %v2760 = vunpack.c.h.b16 %v2056
    %v2761 = vunpack.c.l.b16 %v2057
    %v2762 = vunpack.c.h.b16 %v2057
    %v2763 = vunpack.c.l.b16 %v2058
    %v2764 = vunpack.c.h.b16 %v2058
    %v2765 = vunpack.c.l.b16 %v2059
    %v2766 = vunpack.c.h.b16 %v2059
    %v2767 = vunpack.c.l.b16 %v2060
    %v2768 = vunpack.c.h.b16 %v2060
    %v2769 = vunpack.c.l.b16 %v2061
    %v2770 = vunpack.c.h.b16 %v2061
    %v2771 = vunpack.c.l.b16 %v2062
    %v2772 = vunpack.c.h.b16 %v2062
    %v2773 = vunpack.c.l.b16 %v2063
    %v2774 = vunpack.c.h.b16 %v2063
    %v2775 = vunpack.c.l.b16 %v2064
    %v2776 = vunpack.c.h.b16 %v2064
    %v2777 = vunpack.c.l.b16 %v2065
    %v2778 = vunpack.c.h.b16 %v2065
    %v2779 = vunpack.c.l.b16 %v2066
    %v2780 = vunpack.c.h.b16 %v2066
    %v2781 = vunpack.c.l.b16 %v2067
    %v2782 = vunpack.c.h.b16 %v2067
    %v2783 = vunpack.c.l.b16 %v2068
    %v2784 = vunpack.c.h.b16 %v2068
    %v2785 = vunpack.c.l.b16 %v2069
    %v2786 = vunpack.c.h.b16 %v2069
    %v2787 = vunpack.c.l.b16 %v2070
    %v2788 = vunpack.c.h.b16 %v2070
    %v2789 = vunpack.c.l.b16 %v2071
    %v2790 = vunpack.c.h.b16 %v2071
    %v2791 = vunpack.c.l.b16 %v2072
    %v2792 = vunpack.c.h.b16 %v2072
    %v2793 = vunpack.c.l.b16 %v2073
    %v2794 = vunpack.c.h.b16 %v2073
    %v2795 = vunpack.c.l.b16 %v2074
    %v2796 = vunpack.c.h.b16 %v2074
    %v2797 = vunpack.c.l.b16 %v2075
    %v2798 = vunpack.c.h.b16 %v2075
    %v2799 = vunpack.c.l.b16 %v2076
    %v2800 = vunpack.c.h.b16 %v2076
    %v2801 = vunpack.c.l.b16 %v2077
    %v2802 = vunpack.c.h.b16 %v2077
    %v2803 = vunpack.c.l.b16 %v2078
    %v2804 = vunpack.c.h.b16 %v2078
    %v2805 = vunpack.c.l.b16 %v2079
    %v2806 = vunpack.c.h.b16 %v2079
    %v2807 = vunpack.c.l.b16 %v2080
    %v2808 = vunpack.c.h.b16 %v2080
    %v2809 = vunpack.c.l.b16 %v2081
    %v2810 = vunpack.c.h.b16 %v2081
    %v2811 = vunpack.c.l.b16 %v2082
    %v2812 = vunpack.c.h.b16 %v2082
    %v2813 = vunpack.c.l.b16 %v2083
    %v2814 = vunpack.c.h.b16 %v2083
    %v2815 = vunpack.c.l.b16 %v2084
    %v2816 = vunpack.c.h.b16 %v2084
    %v2817 = vunpack.c.l.b16 %v2085
    %v2818 = vunpack.c.h.b16 %v2085
    %v2819 = vunpack.c.l.b16 %v2086
    %v2820 = vunpack.c.h.b16 %v2086
    %v2821 = vunpack.c.l.b16 %v2087
    %v2822 = vunpack.c.h.b16 %v2087
    %v2823 = vunpack.c.l.b16 %v2088
    %v2824 = vunpack.c.h.b16 %v2088
    %v2825 = vunpack.c.l.b16 %v2089
    %v2826 = vunpack.c.h.b16 %v2089
    %v2827 = vunpack.c.l.b16 %v2090
    %v2828 = vunpack.c.h.b16 %v2090
    %v2829 = vunpack.c.l.b16 %v2091
    %v2830 = vunpack.c.h.b16 %v2091
    %v2831 = vunpack.c.l.b16 %v2092
    %v2832 = vunpack.c.h.b16 %v2092
    %v2833 = vunpack.c.l.b16 %v2093
    %v2834 = vunpack.c.h.b16 %v2093
    %v2835 = vunpack.c.l.b16 %v2094
    %v2836 = vunpack.c.h.b16 %v2094
    %v2837 = vunpack.c.l.b16 %v2095
    %v2838 = vunpack.c.h.b16 %v2095
    %v2839 = vunpack.c.l.b16 %v2096
    %v2840 = vunpack.c.h.b16 %v2096
    %v2841 = vunpack.c.l.b16 %v2097
    %v2842 = vunpack.c.h.b16 %v2097
    %v2843 = vunpack.c.l.b16 %v2098
    %v2844 = vunpack.c.h.b16 %v2098
    %v2845 = vunpack.c.l.b16 %v2099
    %v2846 = vunpack.c.h.b16 %v2099
    %v2847 = vunpack.c.l.b16 %v2100
    %v2848 = vunpack.c.h.b16 %v2100
    %v2849 = vunpack.c.l.b16 %v2101
    %v2850 = vunpack.c.h.b16 %v2101
    %v2851 = vunpack.c.l.b16 %v2102
    %v2852 = vunpack.c.h.b16 %v2102
    %v2853 = vunpack.c.l.b16 %v2103
    %v2854 = vunpack.c.h.b16 %v2103
    %v2855 = vunpack.c.l.b16 %v2104
    %v2856 = vunpack.c.h.b16 %v2104
    %v2857 = vunpack.c.l.b16 %v2105
    %v2858 = vunpack.c.h.b16 %v2105
    %v2859 = vunpack.c.l.b16 %v2106
    %v2860 = vunpack.c.h.b16 %v2106
    %v2861 = vunpack.c.l.b16 %v2107
    %v2862 = vunpack.c.h.b16 %v2107
    %v2863 = vunpack.c.l.b16 %v2108
    %v2864 = vunpack.c.h.b16 %v2108
    %v2865 = vunpack.c.l.b16 %v2109
    %v2866 = vunpack.c.h.b16 %v2109
    %v2867 = vunpack.c.l.b16 %v2110
    %v2868 = vunpack.c.h.b16 %v2110
    %v2869 = vunpack.c.l.b16 %v2111
    %v2870 = vunpack.c.h.b16 %v2111
    %v2871 = vunpack.c.l.b16 %v2112
    %v2872 = vunpack.c.h.b16 %v2112
    %v2873 = vunpack.c.l.b16 %v2113
    %v2874 = vunpack.c.h.b16 %v2113
    %v2875 = vunpack.c.l.b16 %v2114
    %v2876 = vunpack.c.h.b16 %v2114
    %v2877 = vunpack.c.l.b16 %v2115
    %v2878 = vunpack.c.h.b16 %v2115
    %v2879 = vunpack.c.l.b16 %v2116
    %v2880 = vunpack.c.h.b16 %v2116
    %v2881 = vunpack.c.l.b16 %v2117
    %v2882 = vunpack.c.h.b16 %v2117
    %v2883 = vunpack.c.l.b16 %v2118
    %v2884 = vunpack.c.h.b16 %v2118
    %v2885 = vunpack.c.l.b16 %v2119
    %v2886 = vunpack.c.h.b16 %v2119
    %v2887 = vunpack.c.l.b16 %v2120
    %v2888 = vunpack.c.h.b16 %v2120
    %v2889 = vunpack.c.l.b16 %v2121
    %v2890 = vunpack.c.h.b16 %v2121
    %v2891 = vunpack.c.l.b16 %v2122
    %v2892 = vunpack.c.h.b16 %v2122
    %v2893 = vunpack.c.l.b16 %v2123
    %v2894 = vunpack.c.h.b16 %v2123
    %v2895 = vunpack.c.l.b16 %v2124
    %v2896 = vunpack.c.h.b16 %v2124
    %v2897 = vunpack.c.l.b16 %v2125
    %v2898 = vunpack.c.h.b16 %v2125
    %v2899 = vunpack.c.l.b16 %v2126
    %v2900 = vunpack.c.h.b16 %v2126
    %v2901 = vunpack.c.l.b16 %v2127
    %v2902 = vunpack.c.h.b16 %v2127
    %v2903 = vunpack.c.l.b16 %v2128
    %v2904 = vunpack.c.h.b16 %v2128
    %v2905 = vunpack.c.l.b16 %v2129
    %v2906 = vunpack.c.h.b16 %v2129
    %v2907 = vunpack.c.l.b16 %v2130
    %v2908 = vunpack.c.h.b16 %v2130
    %v2909 = vunpack.c.l.b16 %v2131
    %v2910 = vunpack.c.h.b16 %v2131
    %v2911 = vunpack.c.l.b16 %v2132
    %v2912 = vunpack.c.h.b16 %v2132
    %v2913 = vunpack.c.l.b16 %v2133
    %v2914 = vunpack.c.h.b16 %v2133
    %v2915 = vunpack.c.l.b16 %v2134
    %v2916 = vunpack.c.h.b16 %v2134
    %v2917 = vunpack.c.l.b16 %v2135
    %v2918 = vunpack.c.h.b16 %v2135
    %v2919 = vunpack.c.l.b16 %v2136
    %v2920 = vunpack.c.h.b16 %v2136
    %v2921 = vunpack.c.l.b16 %v2137
    %v2922 = vunpack.c.h.b16 %v2137
    %v2923 = vunpack.c.l.b16 %v2138
    %v2924 = vunpack.c.h.b16 %v2138
    %v2925 = vunpack.c.l.b16 %v2139
    %v2926 = vunpack.c.h.b16 %v2139
    %v2927 = vunpack.c.l.b16 %v2140
    %v2928 = vunpack.c.h.b16 %v2140
    %v2929 = vunpack.c.l.b16 %v2141
    %v2930 = vunpack.c.h.b16 %v2141
    %v2931 = vunpack.c.l.b16 %v2142
    %v2932 = vunpack.c.h.b16 %v2142
    %v2933 = vunpack.c.l.b16 %v2143
    %v2934 = vunpack.c.h.b16 %v2143
    %v2935 = vunpack.c.l.b16 %v2144
    %v2936 = vunpack.c.h.b16 %v2144
    %v2937 = vunpack.c.l.b16 %v2145
    %v2938 = vunpack.c.h.b16 %v2145
    %v2939 = vunpack.c.l.b16 %v2146
    %v2940 = vunpack.c.h.b16 %v2146
    %v2941 = vunpack.c.l.b16 %v2147
    %v2942 = vunpack.c.h.b16 %v2147
    %v2943 = vunpack.c.l.b16 %v2148
    %v2944 = vunpack.c.h.b16 %v2148
    %v2945 = vunpack.c.l.b16 %v2149
    %v2946 = vunpack.c.h.b16 %v2149
    %v2947 = vunpack.c.l.b16 %v2150
    %v2948 = vunpack.c.h.b16 %v2150
    %v2949 = vunpack.c.l.b16 %v2151
    %v2950 = vunpack.c.h.b16 %v2151
    %v2951 = vunpack.c.l.b16 %v2152
    %v2952 = vunpack.c.h.b16 %v2152
    %v2953 = vunpack.c.l.b16 %v2153
    %v2954 = vunpack.c.h.b16 %v2153
    %v2955 = vunpack.c.l.b16 %v2154
    %v2956 = vunpack.c.h.b16 %v2154
    %v2957 = vunpack.c.l.b16 %v2155
    %v2958 = vunpack.c.h.b16 %v2155
    %v2959 = vunpack.c.l.b16 %v2156
    %v2960 = vunpack.c.h.b16 %v2156
    %v2961 = vunpack.c.l.b16 %v2157
    %v2962 = vunpack.c.h.b16 %v2157
    %v2963 = vunpack.c.l.b16 %v2158
    %v2964 = vunpack.c.h.b16 %v2158
    %v2965 = vunpack.c.l.b16 %v2159
    %v2966 = vunpack.c.h.b16 %v2159
    %v2967 = vunpack.c.l.b16 %v2160
    %v2968 = vunpack.c.h.b16 %v2160
    %v2969 = vunpack.c.l.b16 %v2161
    %v2970 = vunpack.c.h.b16 %v2161
    %v2971 = vunpack.c.l.b16 %v2162
    %v2972 = vunpack.c.h.b16 %v2162
    %v2973 = vpack.c.b16 %v2469, %v2461
    %v2974 = vpack.c.b16 %v2470, %v2462
    %v2975 = vpack.c.b16 %v2471, %v2463
    %v2976 = vpack.c.b16 %v2472, %v2464
    %v2977 = vpack.c.b16 %v2473, %v2465
    %v2978 = vpack.c.b16 %v2474, %v2466
    %v2979 = vpack.c.b16 %v2475, %v2467
    %v2980 = vpack.c.b16 %v2476, %v2468
    %v2981 = vpack.c.b16 %v2485, %v2477
    %v2982 = vpack.c.b16 %v2486, %v2478
    %v2983 = vpack.c.b16 %v2487, %v2479
    %v2984 = vpack.c.b16 %v2488, %v2480
    %v2985 = vpack.c.b16 %v2489, %v2481
    %v2986 = vpack.c.b16 %v2490, %v2482
    %v2987 = vpack.c.b16 %v2491, %v2483
    %v2988 = vpack.c.b16 %v2492, %v2484
    %v2989 = vpack.c.b16 %v2501, %v2493
    %v2990 = vpack.c.b16 %v2502, %v2494
    %v2991 = vpack.c.b16 %v2503, %v2495
    %v2992 = vpack.c.b16 %v2504, %v2496
    %v2993 = vpack.c.b16 %v2505, %v2497
    %v2994 = vpack.c.b16 %v2506, %v2498
    %v2995 = vpack.c.b16 %v2507, %v2499
    %v2996 = vpack.c.b16 %v2508, %v2500
    %v2997 = vpack.c.b16 %v2517, %v2509
    %v2998 = vpack.c.b16 %v2518, %v2510
    %v2999 = vpack.c.b16 %v2519, %v2511
    %v3000 = vpack.c.b16 %v2520, %v2512
    %v3001 = vpack.c.b16 %v2521, %v2513
    %v3002 = vpack.c.b16 %v2522, %v2514
    %v3003 = vpack.c.b16 %v2523, %v2515
    %v3004 = vpack.c.b16 %v2524, %v2516
    %v3005 = vpack.c.b16 %v2533, %v2525
    %v3006 = vpack.c.b16 %v2534, %v2526
    %v3007 = vpack.c.b16 %v2535, %v2527
    %v3008 = vpack.c.b16 %v2536, %v2528
    %v3009 = vpack.c.b16 %v2537, %v2529
    %v3010 = vpack.c.b16 %v2538, %v2530
    %v3011 = vpack.c.b16 %v2539, %v2531
    %v3012 = vpack.c.b16 %v2540, %v2532
    %v3013 = vpack.c.b16 %v2549, %v2541
    %v3014 = vpack.c.b16 %v2550, %v2542
    %v3015 = vpack.c.b16 %v2551, %v2543
    %v3016 = vpack.c.b16 %v2552, %v2544
    %v3017 = vpack.c.b16 %v2553, %v2545
    %v3018 = vpack.c.b16 %v2554, %v2546
    %v3019 = vpack.c.b16 %v2555, %v2547
    %v3020 = vpack.c.b16 %v2556, %v2548
    %v3021 = vpack.c.b16 %v2565, %v2557
    %v3022 = vpack.c.b16 %v2566, %v2558
    %v3023 = vpack.c.b16 %v2567, %v2559
    %v3024 = vpack.c.b16 %v2568, %v2560
    %v3025 = vpack.c.b16 %v2569, %v2561
    %v3026 = vpack.c.b16 %v2570, %v2562
    %v3027 = vpack.c.b16 %v2571, %v2563
    %v3028 = vpack.c.b16 %v2572, %v2564
    %v3029 = vpack.c.b16 %v2581, %v2573
    %v3030 = vpack.c.b16 %v2582, %v2574
    %v3031 = vpack.c.b16 %v2583, %v2575
    %v3032 = vpack.c.b16 %v2584, %v2576
    %v3033 = vpack.c.b16 %v2585, %v2577
    %v3034 = vpack.c.b16 %v2586, %v2578
    %v3035 = vpack.c.b16 %v2587, %v2579
    %v3036 = vpack.c.b16 %v2588, %v2580
    %v3037 = vpack.c.b16 %v2597, %v2589
    %v3038 = vpack.c.b16 %v2598, %v2590
    %v3039 = vpack.c.b16 %v2599, %v2591
    %v3040 = vpack.c.b16 %v2600, %v2592
    %v3041 = vpack.c.b16 %v2601, %v2593
    %v3042 = vpack.c.b16 %v2602, %v2594
    %v3043 = vpack.c.b16 %v2603, %v2595
    %v3044 = vpack.c.b16 %v2604, %v2596
    %v3045 = vpack.c.b16 %v2613, %v2605
    %v3046 = vpack.c.b16 %v2614, %v2606
    %v3047 = vpack.c.b16 %v2615, %v2607
    %v3048 = vpack.c.b16 %v2616, %v2608
    %v3049 = vpack.c.b16 %v2617, %v2609
    %v3050 = vpack.c.b16 %v2618, %v2610
    %v3051 = vpack.c.b16 %v2619, %v2611
    %v3052 = vpack.c.b16 %v2620, %v2612
    %v3053 = vpack.c.b16 %v2629, %v2621
    %v3054 = vpack.c.b16 %v2630, %v2622
    %v3055 = vpack.c.b16 %v2631, %v2623
    %v3056 = vpack.c.b16 %v2632, %v2624
    %v3057 = vpack.c.b16 %v2633, %v2625
    %v3058 = vpack.c.b16 %v2634, %v2626
    %v3059 = vpack.c.b16 %v2635, %v2627
    %v3060 = vpack.c.b16 %v2636, %v2628
    %v3061 = vpack.c.b16 %v2645, %v2637
    %v3062 = vpack.c.b16 %v2646, %v2638
    %v3063 = vpack.c.b16 %v2647, %v2639
    %v3064 = vpack.c.b16 %v2648, %v2640
    %v3065 = vpack.c.b16 %v2649, %v2641
    %v3066 = vpack.c.b16 %v2650, %v2642
    %v3067 = vpack.c.b16 %v2651, %v2643
    %v3068 = vpack.c.b16 %v2652, %v2644
    %v3069 = vpack.c.b16 %v2661, %v2653
    %v3070 = vpack.c.b16 %v2662, %v2654
    %v3071 = vpack.c.b16 %v2663, %v2655
    %v3072 = vpack.c.b16 %v2664, %v2656
    %v3073 = vpack.c.b16 %v2665, %v2657
    %v3074 = vpack.c.b16 %v2666, %v2658
    %v3075 = vpack.c.b16 %v2667, %v2659
    %v3076 = vpack.c.b16 %v2668, %v2660
    %v3077 = vpack.c.b16 %v2677, %v2669
    %v3078 = vpack.c.b16 %v2678, %v2670
    %v3079 = vpack.c.b16 %v2679, %v2671
    %v3080 = vpack.c.b16 %v2680, %v2672
    %v3081 = vpack.c.b16 %v2681, %v2673
    %v3082 = vpack.c.b16 %v2682, %v2674
    %v3083 = vpack.c.b16 %v2683, %v2675
    %v3084 = vpack.c.b16 %v2684, %v2676
    %v3085 = vpack.c.b16 %v2693, %v2685
    %v3086 = vpack.c.b16 %v2694, %v2686
    %v3087 = vpack.c.b16 %v2695, %v2687
    %v3088 = vpack.c.b16 %v2696, %v2688
    %v3089 = vpack.c.b16 %v2697, %v2689
    %v3090 = vpack.c.b16 %v2698, %v2690
    %v3091 = vpack.c.b16 %v2699, %v2691
    %v3092 = vpack.c.b16 %v2700, %v2692
    %v3093 = vpack.c.b16 %v2709, %v2701
    %v3094 = vpack.c.b16 %v2710, %v2702
    %v3095 = vpack.c.b16 %v2711, %v2703
    %v3096 = vpack.c.b16 %v2712, %v2704
    %v3097 = vpack.c.b16 %v2713, %v2705
    %v3098 = vpack.c.b16 %v2714, %v2706
    %v3099 = vpack.c.b16 %v2715, %v2707
    %v3100 = vpack.c.b16 %v2716, %v2708
    %v3101 = vpack.c.b16 %v2725, %v2717
    %v3102 = vpack.c.b16 %v2726, %v2718
    %v3103 = vpack.c.b16 %v2727, %v2719
    %v3104 = vpack.c.b16 %v2728, %v2720
    %v3105 = vpack.c.b16 %v2729, %v2721
    %v3106 = vpack.c.b16 %v2730, %v2722
    %v3107 = vpack.c.b16 %v2731, %v2723
    %v3108 = vpack.c.b16 %v2732, %v2724
    %v3109 = vpack.c.b16 %v2741, %v2733
    %v3110 = vpack.c.b16 %v2742, %v2734
    %v3111 = vpack.c.b16 %v2743, %v2735
    %v3112 = vpack.c.b16 %v2744, %v2736
    %v3113 = vpack.c.b16 %v2745, %v2737
    %v3114 = vpack.c.b16 %v2746, %v2738
    %v3115 = vpack.c.b16 %v2747, %v2739
    %v3116 = vpack.c.b16 %v2748, %v2740
    %v3117 = vpack.c.b16 %v2757, %v2749
    %v3118 = vpack.c.b16 %v2758, %v2750
    %v3119 = vpack.c.b16 %v2759, %v2751
    %v3120 = vpack.c.b16 %v2760, %v2752
    %v3121 = vpack.c.b16 %v2761, %v2753
    %v3122 = vpack.c.b16 %v2762, %v2754
    %v3123 = vpack.c.b16 %v2763, %v2755
    %v3124 = vpack.c.b16 %v2764, %v2756
    %v3125 = vpack.c.b16 %v2773, %v2765
    %v3126 = vpack.c.b16 %v2774, %v2766
    %v3127 = vpack.c.b16 %v2775, %v2767
    %v3128 = vpack.c.b16 %v2776, %v2768
    %v3129 = vpack.c.b16 %v2777, %v2769
    %v3130 = vpack.c.b16 %v2778, %v2770
    %v3131 = vpack.c.b16 %v2779, %v2771
    %v3132 = vpack.c.b16 %v2780, %v2772
    %v3133 = vpack.c.b16 %v2789, %v2781
    %v3134 = vpack.c.b16 %v2790, %v2782
    %v3135 = vpack.c.b16 %v2791, %v2783
    %v3136 = vpack.c.b16 %v2792, %v2784
    %v3137 = vpack.c.b16 %v2793, %v2785
    %v3138 = vpack.c.b16 %v2794, %v2786
    %v3139 = vpack.c.b16 %v2795, %v2787
    %v3140 = vpack.c.b16 %v2796, %v2788
    %v3141 = vpack.c.b16 %v2805, %v2797
    %v3142 = vpack.c.b16 %v2806, %v2798
    %v3143 = vpack.c.b16 %v2807, %v2799
    %v3144 = vpack.c.b16 %v2808, %v2800
    %v3145 = vpack.c.b16 %v2809, %v2801
    %v3146 = vpack.c.b16 %v2810, %v2802
    %v3147 = vpack.c.b16 %v2811, %v2803
    %v3148 = vpack.c.b16 %v2812, %v2804
    %v3149 = vpack.c.b16 %v2821, %v2813
    %v3150 = vpack.c.b16 %v2822, %v2814
    %v3151 = vpack.c.b16 %v2823, %v2815
    %v3152 = vpack.c.b16 %v2824, %v2816
    %v3153 = vpack.c.b16 %v2825, %v2817
    %v3154 = vpack.c.b16 %v2826, %v2818
    %v3155 = vpack.c.b16 %v2827, %v2819
    %v3156 = vpack.c.b16 %v2828, %v2820
    %v3157 = vpack.c.b16 %v2837, %v2829
    %v3158 = vpack.c.b16 %v2838, %v2830
    %v3159 = vpack.c.b16 %v2839, %v2831
    %v3160 = vpack.c.b16 %v2840, %v2832
    %v3161 = vpack.c.b16 %v2841, %v2833
    %v3162 = vpack.c.b16 %v2842, %v2834
    %v3163 = vpack.c.b16 %v2843, %v2835
    %v3164 = vpack.c.b16 %v2844, %v2836
    %v3165 = vpack.c.b16 %v2853, %v2845
    %v3166 = vpack.c.b16 %v2854, %v2846
    %v3167 = vpack.c.b16 %v2855, %v2847
    %v3168 = vpack.c.b16 %v2856, %v2848
    %v3169 = vpack.c.b16 %v2857, %v2849
    %v3170 = vpack.c.b16 %v2858, %v2850
    %v3171 = vpack.c.b16 %v2859, %v2851
    %v3172 = vpack.c.b16 %v2860, %v2852
    %v3173 = vpack.c.b16 %v2869, %v2861
    %v3174 = vpack.c.b16 %v2870, %v2862
    %v3175 = vpack.c.b16 %v2871, %v2863
    %v3176 = vpack.c.b16 %v2872, %v2864
    %v3177 = vpack.c.b16 %v2873, %v2865
    %v3178 = vpack.c.b16 %v2874, %v2866
    %v3179 = vpack.c.b16 %v2875, %v2867
    %v3180 = vpack.c.b16 %v2876, %v2868
    %v3181 = vpack.c.b16 %v2885, %v2877
    %v3182 = vpack.c.b16 %v2886, %v2878
    %v3183 = vpack.c.b16 %v2887, %v2879
    %v3184 = vpack.c.b16 %v2888, %v2880
    %v3185 = vpack.c.b16 %v2889, %v2881
    %v3186 = vpack.c.b16 %v2890, %v2882
    %v3187 = vpack.c.b16 %v2891, %v2883
    %v3188 = vpack.c.b16 %v2892, %v2884
    %v3189 = vpack.c.b16 %v2901, %v2893
    %v3190 = vpack.c.b16 %v2902, %v2894
    %v3191 = vpack.c.b16 %v2903, %v2895
    %v3192 = vpack.c.b16 %v2904, %v2896
    %v3193 = vpack.c.b16 %v2905, %v2897
    %v3194 = vpack.c.b16 %v2906, %v2898
    %v3195 = vpack.c.b16 %v2907, %v2899
    %v3196 = vpack.c.b16 %v2908, %v2900
    %v3197 = vpack.c.b16 %v2917, %v2909
    %v3198 = vpack.c.b16 %v2918, %v2910
    %v3199 = vpack.c.b16 %v2919, %v2911
    %v3200 = vpack.c.b16 %v2920, %v2912
    %v3201 = vpack.c.b16 %v2921, %v2913
    %v3202 = vpack.c.b16 %v2922, %v2914
    %v3203 = vpack.c.b16 %v2923, %v2915
    %v3204 = vpack.c.b16 %v2924, %v2916
    %v3205 = vpack.c.b16 %v2933, %v2925
    %v3206 = vpack.c.b16 %v2934, %v2926
    %v3207 = vpack.c.b16 %v2935, %v2927
    %v3208 = vpack.c.b16 %v2936, %v2928
    %v3209 = vpack.c.b16 %v2937, %v2929
    %v3210 = vpack.c.b16 %v2938, %v2930
    %v3211 = vpack.c.b16 %v2939, %v2931
    %v3212 = vpack.c.b16 %v2940, %v2932
    %v3213 = vpack.c.b16 %v2949, %v2941
    %v3214 = vpack.c.b16 %v2950, %v2942
    %v3215 = vpack.c.b16 %v2951, %v2943
    %v3216 = vpack.c.b16 %v2952, %v2944
    %v3217 = vpack.c.b16 %v2953, %v2945
    %v3218 = vpack.c.b16 %v2954, %v2946
    %v3219 = vpack.c.b16 %v2955, %v2947
    %v3220 = vpack.c.b16 %v2956, %v2948
    %v3221 = vpack.c.b16 %v2965, %v2957
    %v3222 = vpack.c.b16 %v2966, %v2958
    %v3223 = vpack.c.b16 %v2967, %v2959
    %v3224 = vpack.c.b16 %v2968, %v2960
    %v3225 = vpack.c.b16 %v2969, %v2961
    %v3226 = vpack.c.b16 %v2970, %v2962
    %v3227 = vpack.c.b16 %v2971, %v2963
    %v3228 = vpack.c.b16 %v2972, %v2964
    %3485 = vmatprep.subr.bf16.mxu0 %v2974
    %3486 = vmatpush1.bf16.msra.mxu0 %v2973
    %3487 = vmatprep.subr.bf16.mxu0 %v2982
    %3488 = vmatpush1.bf16.msra.mxu0 %v2981
    %3489 = vmatprep.subr.bf16.mxu0 %v2990
    %3490 = vmatpush1.bf16.msra.mxu0 %v2989
    %3491 = vmatprep.subr.bf16.mxu0 %v2998
    %3492 = vmatpush1.bf16.msra.mxu0 %v2997
    %3493 = vmatprep.subr.bf16.mxu0 %v3006
    %3494 = vmatpush1.bf16.msra.mxu0 %v3005
    %3495 = vmatprep.subr.bf16.mxu0 %v3014
    %3496 = vmatpush1.bf16.msra.mxu0 %v3013
    %3497 = vmatprep.subr.bf16.mxu0 %v3022
    %3498 = vmatpush1.bf16.msra.mxu0 %v3021
    %3499 = vmatprep.subr.bf16.mxu0 %v3030
    %3500 = vmatpush1.bf16.msra.mxu0 %v3029
    %3501 = vmatprep.subr.bf16.mxu0 %v3038
    %3502 = vmatpush1.bf16.msra.mxu0 %v3037
    %3503 = vmatprep.subr.bf16.mxu0 %v3046
    %3504 = vmatpush1.bf16.msra.mxu0 %v3045
    %3505 = vmatprep.subr.bf16.mxu0 %v3054
    %3506 = vmatpush1.bf16.msra.mxu0 %v3053
    %3507 = vmatprep.subr.bf16.mxu0 %v3062
    %3508 = vmatpush1.bf16.msra.mxu0 %v3061
    %3509 = vmatprep.subr.bf16.mxu0 %v3070
    %3510 = vmatpush1.bf16.msra.mxu0 %v3069
    %3511 = vmatprep.subr.bf16.mxu0 %v3078
    %3512 = vmatpush1.bf16.msra.mxu0 %v3077
    %3513 = vmatprep.subr.bf16.mxu0 %v3086
    %3514 = vmatpush1.bf16.msra.mxu0 %v3085
    %3515 = vmatprep.subr.bf16.mxu0 %v3094
    %3516 = vmatpush1.bf16.msra.mxu0 %v3093
    %3517 = vmatprep.mubr.bf16.mxu0 %v1876
    %3518 = vmatmul.mubr.bf16.gmra.mrb[0].mxu0 %v1875
    %v3519 = vpop.f32.mrb[0].mxu0
    %v3520 = vadd.f32 %v2168, %v3519
    %v3521 = vpop.f32.mrb[0].mxu0
    %v3522 = vadd.f32 %v2172, %v3521
    %v3523 = vpop.f32.mrb[0].mxu0
    %v3524 = vadd.f32 %v2168, %v3523
    %v3525 = vpop.f32.mrb[0].mxu0
    %v3526 = vadd.f32 %v2172, %v3525
    %3527 = vmatprep.mubr.bf16.mxu0 %v1880
    %3528 = vmatmul.mubr.bf16.gmra.mrb[0].mxu0 %v1879
    %v3529 = vpop.f32.mrb[0].mxu0
    %v3530 = vadd.f32 %v2168, %v3529
    %v3531 = vpop.f32.mrb[0].mxu0
    %v3532 = vadd.f32 %v2172, %v3531
    %v3533 = vpop.f32.mrb[0].mxu0
    %v3534 = vadd.f32 %v2168, %v3533
    %v3535 = vpop.f32.mrb[0].mxu0
    %v3536 = vadd.f32 %v2172, %v3535
    %3537 = vmatprep.mubr.bf16.mxu0 %v1884
    %3538 = vmatmul.mubr.bf16.gmra.mrb[0].mxu0 %v1883
    %v3539 = vpop.f32.mrb[0].mxu0
    %v3540 = vadd.f32 %v2168, %v3539
    %v3541 = vpop.f32.mrb[0].mxu0
    %v3542 = vadd.f32 %v2172, %v3541
    %v3543 = vpop.f32.mrb[0].mxu0
    %v3544 = vadd.f32 %v2168, %v3543
    %v3545 = vpop.f32.mrb[0].mxu0
    %v3546 = vadd.f32 %v2172, %v3545
    %3547 = vmatprep.mubr.bf16.mxu0 %v1888
    %3548 = vmatmul.mubr.bf16.gmra.mrb[0].mxu0 %v1887
    %v3549 = vpop.f32.mrb[0].mxu0
    %v3550 = vadd.f32 %v2168, %v3549
    %v3551 = vpop.f32.mrb[0].mxu0
    %v3552 = vadd.f32 %v2172, %v3551
    %v3553 = vpop.f32.mrb[0].mxu0
    %v3554 = vadd.f32 %v2168, %v3553
    %v3555 = vpop.f32.mrb[0].mxu0
    %v3556 = vadd.f32 %v2172, %v3555
    %3557 = vmatprep.mubr.bf16.mxu0 %v1892
    %3558 = vmatmul.mubr.bf16.gmra.mrb[0].mxu0 %v1891
    %v3559 = vpop.f32.mrb[0].mxu0
    %v3560 = vadd.f32 %v2168, %v3559
    %v3561 = vpop.f32.mrb[0].mxu0
    %v3562 = vadd.f32 %v2172, %v3561
    %v3563 = vpop.f32.mrb[0].mxu0
    %v3564 = vadd.f32 %v2168, %v3563
    %v3565 = vpop.f32.mrb[0].mxu0
    %v3566 = vadd.f32 %v2172, %v3565
    %3567 = vmatprep.mubr.bf16.mxu0 %v1896
    %3568 = vmatmul.mubr.bf16.gmra.mrb[0].mxu0 %v1895
    %v3569 = vpop.f32.mrb[0].mxu0
    %v3570 = vadd.f32 %v2168, %v3569
    %v3571 = vpop.f32.mrb[0].mxu0
    %v3572 = vadd.f32 %v2172, %v3571
    %v3573 = vpop.f32.mrb[0].mxu0
    %v3574 = vadd.f32 %v2168, %v3573
    %v3575 = vpop.f32.mrb[0].mxu0
    %v3576 = vadd.f32 %v2172, %v3575
    %3577 = vmatprep.mubr.bf16.mxu0 %v1900
    %3578 = vmatmul.mubr.bf16.gmra.mrb[0].mxu0 %v1899
    %v3579 = vpop.f32.mrb[0].mxu0
    %v3580 = vadd.f32 %v2168, %v3579
    %v3581 = vpop.f32.mrb[0].mxu0
    %v3582 = vadd.f32 %v2172, %v3581
    %v3583 = vpop.f32.mrb[0].mxu0
    %v3584 = vadd.f32 %v2168, %v3583
    %v3585 = vpop.f32.mrb[0].mxu0
    %v3586 = vadd.f32 %v2172, %v3585
    %3587 = vmatprep.mubr.bf16.mxu0 %v1904
    %3588 = vmatmul.mubr.bf16.gmra.mrb[0].mxu0 %v1903
    %v3589 = vpop.f32.mrb[0].mxu0
    %v3590 = vadd.f32 %v2168, %v3589
    %v3591 = vpop.f32.mrb[0].mxu0
    %v3592 = vadd.f32 %v2172, %v3591
    %v3593 = vpop.f32.mrb[0].mxu0
    %v3594 = vadd.f32 %v2168, %v3593
    %v3595 = vpop.f32.mrb[0].mxu0
    %v3596 = vadd.f32 %v2172, %v3595
    %3597 = vdwg.mxu0
    %3598 = vmatprep.subr.bf16.mxu0 %v3102
    %3599 = vmatpush1.bf16.msra.mxu0 %v3101
    %3600 = vmatprep.subr.bf16.mxu0 %v3110
    %3601 = vmatpush1.bf16.msra.mxu0 %v3109
    %3602 = vmatprep.subr.bf16.mxu0 %v3118
    %3603 = vmatpush1.bf16.msra.mxu0 %v3117
    %3604 = vmatprep.subr.bf16.mxu0 %v3126
    %3605 = vmatpush1.bf16.msra.mxu0 %v3125
    %3606 = vmatprep.subr.bf16.mxu0 %v3134
    %3607 = vmatpush1.bf16.msra.mxu0 %v3133
    %3608 = vmatprep.subr.bf16.mxu0 %v3142
    %3609 = vmatpush1.bf16.msra.mxu0 %v3141
    %3610 = vmatprep.subr.bf16.mxu0 %v3150
    %3611 = vmatpush1.bf16.msra.mxu0 %v3149
    %3612 = vmatprep.subr.bf16.mxu0 %v3158
    %3613 = vmatpush1.bf16.msra.mxu0 %v3157
    %3614 = vmatprep.subr.bf16.mxu0 %v3166
    %3615 = vmatpush1.bf16.msra.mxu0 %v3165
    %3616 = vmatprep.subr.bf16.mxu0 %v3174
    %3617 = vmatpush1.bf16.msra.mxu0 %v3173
    %3618 = vmatprep.subr.bf16.mxu0 %v3182
    %3619 = vmatpush1.bf16.msra.mxu0 %v3181
    %3620 = vmatprep.subr.bf16.mxu0 %v3190
    %3621 = vmatpush1.bf16.msra.mxu0 %v3189
    %3622 = vmatprep.subr.bf16.mxu0 %v3198
    %3623 = vmatpush1.bf16.msra.mxu0 %v3197
    %3624 = vmatprep.subr.bf16.mxu0 %v3206
    %3625 = vmatpush1.bf16.msra.mxu0 %v3205
    %3626 = vmatprep.subr.bf16.mxu0 %v3214
    %3627 = vmatpush1.bf16.msra.mxu0 %v3213
    %3628 = vmatprep.subr.bf16.mxu0 %v3222
    %3629 = vmatpush1.bf16.msra.mxu0 %v3221
    %3630 = vmatprep.mubr.bf16.mxu0 %v1878
    %3631 = vmatmul.mubr.bf16.gmra.mrb[0].mxu0 %v1877
    %v3632 = vpop.f32.mrb[0].mxu0
    %v3633 = vadd.f32 %v3520, %v3632
    %v3634 = vpop.f32.mrb[0].mxu0
    %v3635 = vadd.f32 %v3522, %v3634
    %v3636 = vpop.f32.mrb[0].mxu0
    %v3637 = vadd.f32 %v3524, %v3636
    %v3638 = vpop.f32.mrb[0].mxu0
    %v3639 = vadd.f32 %v3526, %v3638
    %3640 = vmatprep.mubr.bf16.mxu0 %v1882
    %3641 = vmatmul.mubr.bf16.gmra.mrb[0].mxu0 %v1881
    %v3642 = vpop.f32.mrb[0].mxu0
    %v3643 = vadd.f32 %v3530, %v3642
    %v3644 = vpop.f32.mrb[0].mxu0
    %v3645 = vadd.f32 %v3532, %v3644
    %v3646 = vpop.f32.mrb[0].mxu0
    %v3647 = vadd.f32 %v3534, %v3646
    %v3648 = vpop.f32.mrb[0].mxu0
    %v3649 = vadd.f32 %v3536, %v3648
    %3650 = vmatprep.mubr.bf16.mxu0 %v1886
    %3651 = vmatmul.mubr.bf16.gmra.mrb[0].mxu0 %v1885
    %v3652 = vpop.f32.mrb[0].mxu0
    %v3653 = vadd.f32 %v3540, %v3652
    %v3654 = vpop.f32.mrb[0].mxu0
    %v3655 = vadd.f32 %v3542, %v3654
    %v3656 = vpop.f32.mrb[0].mxu0
    %v3657 = vadd.f32 %v3544, %v3656
    %v3658 = vpop.f32.mrb[0].mxu0
    %v3659 = vadd.f32 %v3546, %v3658
    %3660 = vmatprep.mubr.bf16.mxu0 %v1890
    %3661 = vmatmul.mubr.bf16.gmra.mrb[0].mxu0 %v1889
    %v3662 = vpop.f32.mrb[0].mxu0
    %v3663 = vadd.f32 %v3550, %v3662
    %v3664 = vpop.f32.mrb[0].mxu0
    %v3665 = vadd.f32 %v3552, %v3664
    %v3666 = vpop.f32.mrb[0].mxu0
    %v3667 = vadd.f32 %v3554, %v3666
    %v3668 = vpop.f32.mrb[0].mxu0
    %v3669 = vadd.f32 %v3556, %v3668
    %3670 = vmatprep.mubr.bf16.mxu0 %v1894
    %3671 = vmatmul.mubr.bf16.gmra.mrb[0].mxu0 %v1893
    %v3672 = vpop.f32.mrb[0].mxu0
    %v3673 = vadd.f32 %v3560, %v3672
    %v3674 = vpop.f32.mrb[0].mxu0
    %v3675 = vadd.f32 %v3562, %v3674
    %v3676 = vpop.f32.mrb[0].mxu0
    %v3677 = vadd.f32 %v3564, %v3676
    %v3678 = vpop.f32.mrb[0].mxu0
    %v3679 = vadd.f32 %v3566, %v3678
    %3680 = vmatprep.mubr.bf16.mxu0 %v1898
    %3681 = vmatmul.mubr.bf16.gmra.mrb[0].mxu0 %v1897
    %v3682 = vpop.f32.mrb[0].mxu0
    %v3683 = vadd.f32 %v3570, %v3682
    %v3684 = vpop.f32.mrb[0].mxu0
    %v3685 = vadd.f32 %v3572, %v3684
    %v3686 = vpop.f32.mrb[0].mxu0
    %v3687 = vadd.f32 %v3574, %v3686
    %v3688 = vpop.f32.mrb[0].mxu0
    %v3689 = vadd.f32 %v3576, %v3688
    %3690 = vmatprep.mubr.bf16.mxu0 %v1902
    %3691 = vmatmul.mubr.bf16.gmra.mrb[0].mxu0 %v1901
    %v3692 = vpop.f32.mrb[0].mxu0
    %v3693 = vadd.f32 %v3580, %v3692
    %v3694 = vpop.f32.mrb[0].mxu0
    %v3695 = vadd.f32 %v3582, %v3694
    %v3696 = vpop.f32.mrb[0].mxu0
    %v3697 = vadd.f32 %v3584, %v3696
    %v3698 = vpop.f32.mrb[0].mxu0
    %v3699 = vadd.f32 %v3586, %v3698
    %3700 = vmatprep.mubr.bf16.mxu0 %v1906
    %3701 = vmatmul.mubr.bf16.gmra.mrb[0].mxu0 %v1905
    %v3702 = vpop.f32.mrb[0].mxu0
    %v3703 = vadd.f32 %v3590, %v3702
    %v3704 = vpop.f32.mrb[0].mxu0
    %v3705 = vadd.f32 %v3592, %v3704
    %v3706 = vpop.f32.mrb[0].mxu0
    %v3707 = vadd.f32 %v3594, %v3706
    %v3708 = vpop.f32.mrb[0].mxu0
    %v3709 = vadd.f32 %v3596, %v3708
    %3710 = vdwg.mxu0
    %3711 = vmatprep.subr.bf16.mxu0 %v2976
    %3712 = vmatpush1.bf16.msra.mxu0 %v2975
    %3713 = vmatprep.subr.bf16.mxu0 %v2984
    %3714 = vmatpush1.bf16.msra.mxu0 %v2983
    %3715 = vmatprep.subr.bf16.mxu0 %v2992
    %3716 = vmatpush1.bf16.msra.mxu0 %v2991
    %3717 = vmatprep.subr.bf16.mxu0 %v3000
    %3718 = vmatpush1.bf16.msra.mxu0 %v2999
    %3719 = vmatprep.subr.bf16.mxu0 %v3008
    %3720 = vmatpush1.bf16.msra.mxu0 %v3007
    %3721 = vmatprep.subr.bf16.mxu0 %v3016
    %3722 = vmatpush1.bf16.msra.mxu0 %v3015
    %3723 = vmatprep.subr.bf16.mxu0 %v3024
    %3724 = vmatpush1.bf16.msra.mxu0 %v3023
    %3725 = vmatprep.subr.bf16.mxu0 %v3032
    %3726 = vmatpush1.bf16.msra.mxu0 %v3031
    %3727 = vmatprep.subr.bf16.mxu0 %v3040
    %3728 = vmatpush1.bf16.msra.mxu0 %v3039
    %3729 = vmatprep.subr.bf16.mxu0 %v3048
    %3730 = vmatpush1.bf16.msra.mxu0 %v3047
    %3731 = vmatprep.subr.bf16.mxu0 %v3056
    %3732 = vmatpush1.bf16.msra.mxu0 %v3055
    %3733 = vmatprep.subr.bf16.mxu0 %v3064
    %3734 = vmatpush1.bf16.msra.mxu0 %v3063
    %3735 = vmatprep.subr.bf16.mxu0 %v3072
    %3736 = vmatpush1.bf16.msra.mxu0 %v3071
    %3737 = vmatprep.subr.bf16.mxu0 %v3080
    %3738 = vmatpush1.bf16.msra.mxu0 %v3079
    %3739 = vmatprep.subr.bf16.mxu0 %v3088
    %3740 = vmatpush1.bf16.msra.mxu0 %v3087
    %3741 = vmatprep.subr.bf16.mxu0 %v3096
    %3742 = vmatpush1.bf16.msra.mxu0 %v3095
    %3743 = vmatprep.mubr.bf16.mxu0 %v1876
    %3744 = vmatmul.mubr.bf16.gmra.mrb[0].mxu0 %v1875
    %v3745 = vpop.f32.mrb[0].mxu0
    %v3746 = vadd.f32 %v2176, %v3745
    %v3747 = vpop.f32.mrb[0].mxu0
    %v3748 = vadd.f32 %v2180, %v3747
    %v3749 = vpop.f32.mrb[0].mxu0
    %v3750 = vadd.f32 %v2176, %v3749
    %v3751 = vpop.f32.mrb[0].mxu0
    %v3752 = vadd.f32 %v2180, %v3751
    %3753 = vmatprep.mubr.bf16.mxu0 %v1880
    %3754 = vmatmul.mubr.bf16.gmra.mrb[0].mxu0 %v1879
    %v3755 = vpop.f32.mrb[0].mxu0
    %v3756 = vadd.f32 %v2176, %v3755
    %v3757 = vpop.f32.mrb[0].mxu0
    %v3758 = vadd.f32 %v2180, %v3757
    %v3759 = vpop.f32.mrb[0].mxu0
    %v3760 = vadd.f32 %v2176, %v3759
    %v3761 = vpop.f32.mrb[0].mxu0
    %v3762 = vadd.f32 %v2180, %v3761
    %3763 = vmatprep.mubr.bf16.mxu0 %v1884
    %3764 = vmatmul.mubr.bf16.gmra.mrb[0].mxu0 %v1883
    %v3765 = vpop.f32.mrb[0].mxu0
    %v3766 = vadd.f32 %v2176, %v3765
    %v3767 = vpop.f32.mrb[0].mxu0
    %v3768 = vadd.f32 %v2180, %v3767
    %v3769 = vpop.f32.mrb[0].mxu0
    %v3770 = vadd.f32 %v2176, %v3769
    %v3771 = vpop.f32.mrb[0].mxu0
    %v3772 = vadd.f32 %v2180, %v3771
    %3773 = vmatprep.mubr.bf16.mxu0 %v1888
    %3774 = vmatmul.mubr.bf16.gmra.mrb[0].mxu0 %v1887
    %v3775 = vpop.f32.mrb[0].mxu0
    %v3776 = vadd.f32 %v2176, %v3775
    %v3777 = vpop.f32.mrb[0].mxu0
    %v3778 = vadd.f32 %v2180, %v3777
    %v3779 = vpop.f32.mrb[0].mxu0
    %v3780 = vadd.f32 %v2176, %v3779
    %v3781 = vpop.f32.mrb[0].mxu0
    %v3782 = vadd.f32 %v2180, %v3781
    %3783 = vmatprep.mubr.bf16.mxu0 %v1892
    %3784 = vmatmul.mubr.bf16.gmra.mrb[0].mxu0 %v1891
    %v3785 = vpop.f32.mrb[0].mxu0
    %v3786 = vadd.f32 %v2176, %v3785
    %v3787 = vpop.f32.mrb[0].mxu0
    %v3788 = vadd.f32 %v2180, %v3787
    %v3789 = vpop.f32.mrb[0].mxu0
    %v3790 = vadd.f32 %v2176, %v3789
    %v3791 = vpop.f32.mrb[0].mxu0
    %v3792 = vadd.f32 %v2180, %v3791
    %3793 = vmatprep.mubr.bf16.mxu0 %v1896
    %3794 = vmatmul.mubr.bf16.gmra.mrb[0].mxu0 %v1895
    %v3795 = vpop.f32.mrb[0].mxu0
    %v3796 = vadd.f32 %v2176, %v3795
    %v3797 = vpop.f32.mrb[0].mxu0
    %v3798 = vadd.f32 %v2180, %v3797
    %v3799 = vpop.f32.mrb[0].mxu0
    %v3800 = vadd.f32 %v2176, %v3799
    %v3801 = vpop.f32.mrb[0].mxu0
    %v3802 = vadd.f32 %v2180, %v3801
    %3803 = vmatprep.mubr.bf16.mxu0 %v1900
    %3804 = vmatmul.mubr.bf16.gmra.mrb[0].mxu0 %v1899
    %v3805 = vpop.f32.mrb[0].mxu0
    %v3806 = vadd.f32 %v2176, %v3805
    %v3807 = vpop.f32.mrb[0].mxu0
    %v3808 = vadd.f32 %v2180, %v3807
    %v3809 = vpop.f32.mrb[0].mxu0
    %v3810 = vadd.f32 %v2176, %v3809
    %v3811 = vpop.f32.mrb[0].mxu0
    %v3812 = vadd.f32 %v2180, %v3811
    %3813 = vmatprep.mubr.bf16.mxu0 %v1904
    %3814 = vmatmul.mubr.bf16.gmra.mrb[0].mxu0 %v1903
    %v3815 = vpop.f32.mrb[0].mxu0
    %v3816 = vadd.f32 %v2176, %v3815
    %v3817 = vpop.f32.mrb[0].mxu0
    %v3818 = vadd.f32 %v2180, %v3817
    %v3819 = vpop.f32.mrb[0].mxu0
    %v3820 = vadd.f32 %v2176, %v3819
    %v3821 = vpop.f32.mrb[0].mxu0
    %v3822 = vadd.f32 %v2180, %v3821
    %3823 = vdwg.mxu0
    %3824 = vmatprep.subr.bf16.mxu0 %v3104
    %3825 = vmatpush1.bf16.msra.mxu0 %v3103
    %3826 = vmatprep.subr.bf16.mxu0 %v3112
    %3827 = vmatpush1.bf16.msra.mxu0 %v3111
    %3828 = vmatprep.subr.bf16.mxu0 %v3120
    %3829 = vmatpush1.bf16.msra.mxu0 %v3119
    %3830 = vmatprep.subr.bf16.mxu0 %v3128
    %3831 = vmatpush1.bf16.msra.mxu0 %v3127
    %3832 = vmatprep.subr.bf16.mxu0 %v3136
    %3833 = vmatpush1.bf16.msra.mxu0 %v3135
    %3834 = vmatprep.subr.bf16.mxu0 %v3144
    %3835 = vmatpush1.bf16.msra.mxu0 %v3143
    %3836 = vmatprep.subr.bf16.mxu0 %v3152
    %3837 = vmatpush1.bf16.msra.mxu0 %v3151
    %3838 = vmatprep.subr.bf16.mxu0 %v3160
    %3839 = vmatpush1.bf16.msra.mxu0 %v3159
    %3840 = vmatprep.subr.bf16.mxu0 %v3168
    %3841 = vmatpush1.bf16.msra.mxu0 %v3167
    %3842 = vmatprep.subr.bf16.mxu0 %v3176
    %3843 = vmatpush1.bf16.msra.mxu0 %v3175
    %3844 = vmatprep.subr.bf16.mxu0 %v3184
    %3845 = vmatpush1.bf16.msra.mxu0 %v3183
    %3846 = vmatprep.subr.bf16.mxu0 %v3192
    %3847 = vmatpush1.bf16.msra.mxu0 %v3191
    %3848 = vmatprep.subr.bf16.mxu0 %v3200
    %3849 = vmatpush1.bf16.msra.mxu0 %v3199
    %3850 = vmatprep.subr.bf16.mxu0 %v3208
    %3851 = vmatpush1.bf16.msra.mxu0 %v3207
    %3852 = vmatprep.subr.bf16.mxu0 %v3216
    %3853 = vmatpush1.bf16.msra.mxu0 %v3215
    %3854 = vmatprep.subr.bf16.mxu0 %v3224
    %3855 = vmatpush1.bf16.msra.mxu0 %v3223
    %3856 = vmatprep.mubr.bf16.mxu0 %v1878
    %3857 = vmatmul.mubr.bf16.gmra.mrb[0].mxu0 %v1877
    %v3858 = vpop.f32.mrb[0].mxu0
    %v3859 = vadd.f32 %v3746, %v3858
    %v3860 = vpop.f32.mrb[0].mxu0
    %v3861 = vadd.f32 %v3748, %v3860
    %v3862 = vpop.f32.mrb[0].mxu0
    %v3863 = vadd.f32 %v3750, %v3862
    %v3864 = vpop.f32.mrb[0].mxu0
    %v3865 = vadd.f32 %v3752, %v3864
    %3866 = vmatprep.mubr.bf16.mxu0 %v1882
    %3867 = vmatmul.mubr.bf16.gmra.mrb[0].mxu0 %v1881
    %v3868 = vpop.f32.mrb[0].mxu0
    %v3869 = vadd.f32 %v3756, %v3868
    %v3870 = vpop.f32.mrb[0].mxu0
    %v3871 = vadd.f32 %v3758, %v3870
    %v3872 = vpop.f32.mrb[0].mxu0
    %v3873 = vadd.f32 %v3760, %v3872
    %v3874 = vpop.f32.mrb[0].mxu0
    %v3875 = vadd.f32 %v3762, %v3874
    %3876 = vmatprep.mubr.bf16.mxu0 %v1886
    %3877 = vmatmul.mubr.bf16.gmra.mrb[0].mxu0 %v1885
    %v3878 = vpop.f32.mrb[0].mxu0
    %v3879 = vadd.f32 %v3766, %v3878
    %v3880 = vpop.f32.mrb[0].mxu0
    %v3881 = vadd.f32 %v3768, %v3880
    %v3882 = vpop.f32.mrb[0].mxu0
    %v3883 = vadd.f32 %v3770, %v3882
    %v3884 = vpop.f32.mrb[0].mxu0
    %v3885 = vadd.f32 %v3772, %v3884
    %3886 = vmatprep.mubr.bf16.mxu0 %v1890
    %3887 = vmatmul.mubr.bf16.gmra.mrb[0].mxu0 %v1889
    %v3888 = vpop.f32.mrb[0].mxu0
    %v3889 = vadd.f32 %v3776, %v3888
    %v3890 = vpop.f32.mrb[0].mxu0
    %v3891 = vadd.f32 %v3778, %v3890
    %v3892 = vpop.f32.mrb[0].mxu0
    %v3893 = vadd.f32 %v3780, %v3892
    %v3894 = vpop.f32.mrb[0].mxu0
    %v3895 = vadd.f32 %v3782, %v3894
    %3896 = vmatprep.mubr.bf16.mxu0 %v1894
    %3897 = vmatmul.mubr.bf16.gmra.mrb[0].mxu0 %v1893
    %v3898 = vpop.f32.mrb[0].mxu0
    %v3899 = vadd.f32 %v3786, %v3898
    %v3900 = vpop.f32.mrb[0].mxu0
    %v3901 = vadd.f32 %v3788, %v3900
    %v3902 = vpop.f32.mrb[0].mxu0
    %v3903 = vadd.f32 %v3790, %v3902
    %v3904 = vpop.f32.mrb[0].mxu0
    %v3905 = vadd.f32 %v3792, %v3904
    %3906 = vmatprep.mubr.bf16.mxu0 %v1898
    %3907 = vmatmul.mubr.bf16.gmra.mrb[0].mxu0 %v1897
    %v3908 = vpop.f32.mrb[0].mxu0
    %v3909 = vadd.f32 %v3796, %v3908
    %v3910 = vpop.f32.mrb[0].mxu0
    %v3911 = vadd.f32 %v3798, %v3910
    %v3912 = vpop.f32.mrb[0].mxu0
    %v3913 = vadd.f32 %v3800, %v3912
    %v3914 = vpop.f32.mrb[0].mxu0
    %v3915 = vadd.f32 %v3802, %v3914
    %3916 = vmatprep.mubr.bf16.mxu0 %v1902
    %3917 = vmatmul.mubr.bf16.gmra.mrb[0].mxu0 %v1901
    %v3918 = vpop.f32.mrb[0].mxu0
    %v3919 = vadd.f32 %v3806, %v3918
    %v3920 = vpop.f32.mrb[0].mxu0
    %v3921 = vadd.f32 %v3808, %v3920
    %v3922 = vpop.f32.mrb[0].mxu0
    %v3923 = vadd.f32 %v3810, %v3922
    %v3924 = vpop.f32.mrb[0].mxu0
    %v3925 = vadd.f32 %v3812, %v3924
    %3926 = vmatprep.mubr.bf16.mxu0 %v1906
    %3927 = vmatmul.mubr.bf16.gmra.mrb[0].mxu0 %v1905
    %v3928 = vpop.f32.mrb[0].mxu0
    %v3929 = vadd.f32 %v3816, %v3928
    %v3930 = vpop.f32.mrb[0].mxu0
    %v3931 = vadd.f32 %v3818, %v3930
    %v3932 = vpop.f32.mrb[0].mxu0
    %v3933 = vadd.f32 %v3820, %v3932
    %v3934 = vpop.f32.mrb[0].mxu0
    %v3935 = vadd.f32 %v3822, %v3934
    %3936 = vdwg.mxu0
    %3937 = vmatprep.subr.bf16.mxu0 %v2978
    %3938 = vmatpush1.bf16.msra.mxu0 %v2977
    %3939 = vmatprep.subr.bf16.mxu0 %v2986
    %3940 = vmatpush1.bf16.msra.mxu0 %v2985
    %3941 = vmatprep.subr.bf16.mxu0 %v2994
    %3942 = vmatpush1.bf16.msra.mxu0 %v2993
    %3943 = vmatprep.subr.bf16.mxu0 %v3002
    %3944 = vmatpush1.bf16.msra.mxu0 %v3001
    %3945 = vmatprep.subr.bf16.mxu0 %v3010
    %3946 = vmatpush1.bf16.msra.mxu0 %v3009
    %3947 = vmatprep.subr.bf16.mxu0 %v3018
    %3948 = vmatpush1.bf16.msra.mxu0 %v3017
    %3949 = vmatprep.subr.bf16.mxu0 %v3026
    %3950 = vmatpush1.bf16.msra.mxu0 %v3025
    %3951 = vmatprep.subr.bf16.mxu0 %v3034
    %3952 = vmatpush1.bf16.msra.mxu0 %v3033
    %3953 = vmatprep.subr.bf16.mxu0 %v3042
    %3954 = vmatpush1.bf16.msra.mxu0 %v3041
    %3955 = vmatprep.subr.bf16.mxu0 %v3050
    %3956 = vmatpush1.bf16.msra.mxu0 %v3049
    %3957 = vmatprep.subr.bf16.mxu0 %v3058
    %3958 = vmatpush1.bf16.msra.mxu0 %v3057
    %3959 = vmatprep.subr.bf16.mxu0 %v3066
    %3960 = vmatpush1.bf16.msra.mxu0 %v3065
    %3961 = vmatprep.subr.bf16.mxu0 %v3074
    %3962 = vmatpush1.bf16.msra.mxu0 %v3073
    %3963 = vmatprep.subr.bf16.mxu0 %v3082
    %3964 = vmatpush1.bf16.msra.mxu0 %v3081
    %3965 = vmatprep.subr.bf16.mxu0 %v3090
    %3966 = vmatpush1.bf16.msra.mxu0 %v3089
    %3967 = vmatprep.subr.bf16.mxu0 %v3098
    %3968 = vmatpush1.bf16.msra.mxu0 %v3097
    %3969 = vmatprep.mubr.bf16.mxu0 %v1876
    %3970 = vmatmul.mubr.bf16.gmra.mrb[0].mxu0 %v1875
    %v3971 = vpop.f32.mrb[0].mxu0
    %v3972 = vadd.f32 %v2184, %v3971
    %v3973 = vpop.f32.mrb[0].mxu0
    %v3974 = vadd.f32 %v2188, %v3973
    %v3975 = vpop.f32.mrb[0].mxu0
    %v3976 = vadd.f32 %v2184, %v3975
    %v3977 = vpop.f32.mrb[0].mxu0
    %v3978 = vadd.f32 %v2188, %v3977
    %3979 = vmatprep.mubr.bf16.mxu0 %v1880
    %3980 = vmatmul.mubr.bf16.gmra.mrb[0].mxu0 %v1879
    %v3981 = vpop.f32.mrb[0].mxu0
    %v3982 = vadd.f32 %v2184, %v3981
    %v3983 = vpop.f32.mrb[0].mxu0
    %v3984 = vadd.f32 %v2188, %v3983
    %v3985 = vpop.f32.mrb[0].mxu0
    %v3986 = vadd.f32 %v2184, %v3985
    %v3987 = vpop.f32.mrb[0].mxu0
    %v3988 = vadd.f32 %v2188, %v3987
    %3989 = vmatprep.mubr.bf16.mxu0 %v1884
    %3990 = vmatmul.mubr.bf16.gmra.mrb[0].mxu0 %v1883
    %v3991 = vpop.f32.mrb[0].mxu0
    %v3992 = vadd.f32 %v2184, %v3991
    %v3993 = vpop.f32.mrb[0].mxu0
    %v3994 = vadd.f32 %v2188, %v3993
    %v3995 = vpop.f32.mrb[0].mxu0
    %v3996 = vadd.f32 %v2184, %v3995
    %v3997 = vpop.f32.mrb[0].mxu0
    %v3998 = vadd.f32 %v2188, %v3997
    %3999 = vmatprep.mubr.bf16.mxu0 %v1888
    %4000 = vmatmul.mubr.bf16.gmra.mrb[0].mxu0 %v1887
    %v4001 = vpop.f32.mrb[0].mxu0
    %v4002 = vadd.f32 %v2184, %v4001
    %v4003 = vpop.f32.mrb[0].mxu0
    %v4004 = vadd.f32 %v2188, %v4003
    %v4005 = vpop.f32.mrb[0].mxu0
    %v4006 = vadd.f32 %v2184, %v4005
    %v4007 = vpop.f32.mrb[0].mxu0
    %v4008 = vadd.f32 %v2188, %v4007
    %4009 = vmatprep.mubr.bf16.mxu0 %v1892
    %4010 = vmatmul.mubr.bf16.gmra.mrb[0].mxu0 %v1891
    %v4011 = vpop.f32.mrb[0].mxu0
    %v4012 = vadd.f32 %v2184, %v4011
    %v4013 = vpop.f32.mrb[0].mxu0
    %v4014 = vadd.f32 %v2188, %v4013
    %v4015 = vpop.f32.mrb[0].mxu0
    %v4016 = vadd.f32 %v2184, %v4015
    %v4017 = vpop.f32.mrb[0].mxu0
    %v4018 = vadd.f32 %v2188, %v4017
    %4019 = vmatprep.mubr.bf16.mxu0 %v1896
    %4020 = vmatmul.mubr.bf16.gmra.mrb[0].mxu0 %v1895
    %v4021 = vpop.f32.mrb[0].mxu0
    %v4022 = vadd.f32 %v2184, %v4021
    %v4023 = vpop.f32.mrb[0].mxu0
    %v4024 = vadd.f32 %v2188, %v4023
    %v4025 = vpop.f32.mrb[0].mxu0
    %v4026 = vadd.f32 %v2184, %v4025
    %v4027 = vpop.f32.mrb[0].mxu0
    %v4028 = vadd.f32 %v2188, %v4027
    %4029 = vmatprep.mubr.bf16.mxu0 %v1900
    %4030 = vmatmul.mubr.bf16.gmra.mrb[0].mxu0 %v1899
    %v4031 = vpop.f32.mrb[0].mxu0
    %v4032 = vadd.f32 %v2184, %v4031
    %v4033 = vpop.f32.mrb[0].mxu0
    %v4034 = vadd.f32 %v2188, %v4033
    %v4035 = vpop.f32.mrb[0].mxu0
    %v4036 = vadd.f32 %v2184, %v4035
    %v4037 = vpop.f32.mrb[0].mxu0
    %v4038 = vadd.f32 %v2188, %v4037
    %4039 = vmatprep.mubr.bf16.mxu0 %v1904
    %4040 = vmatmul.mubr.bf16.gmra.mrb[0].mxu0 %v1903
    %v4041 = vpop.f32.mrb[0].mxu0
    %v4042 = vadd.f32 %v2184, %v4041
    %v4043 = vpop.f32.mrb[0].mxu0
    %v4044 = vadd.f32 %v2188, %v4043
    %v4045 = vpop.f32.mrb[0].mxu0
    %v4046 = vadd.f32 %v2184, %v4045
    %v4047 = vpop.f32.mrb[0].mxu0
    %v4048 = vadd.f32 %v2188, %v4047
    %4049 = vdwg.mxu0
    %4050 = vmatprep.subr.bf16.mxu0 %v3106
    %4051 = vmatpush1.bf16.msra.mxu0 %v3105
    %4052 = vmatprep.subr.bf16.mxu0 %v3114
    %4053 = vmatpush1.bf16.msra.mxu0 %v3113
    %4054 = vmatprep.subr.bf16.mxu0 %v3122
    %4055 = vmatpush1.bf16.msra.mxu0 %v3121
    %4056 = vmatprep.subr.bf16.mxu0 %v3130
    %4057 = vmatpush1.bf16.msra.mxu0 %v3129
    %4058 = vmatprep.subr.bf16.mxu0 %v3138
    %4059 = vmatpush1.bf16.msra.mxu0 %v3137
    %4060 = vmatprep.subr.bf16.mxu0 %v3146
    %4061 = vmatpush1.bf16.msra.mxu0 %v3145
    %4062 = vmatprep.subr.bf16.mxu0 %v3154
    %4063 = vmatpush1.bf16.msra.mxu0 %v3153
    %4064 = vmatprep.subr.bf16.mxu0 %v3162
    %4065 = vmatpush1.bf16.msra.mxu0 %v3161
    %4066 = vmatprep.subr.bf16.mxu0 %v3170
    %4067 = vmatpush1.bf16.msra.mxu0 %v3169
    %4068 = vmatprep.subr.bf16.mxu0 %v3178
    %4069 = vmatpush1.bf16.msra.mxu0 %v3177
    %4070 = vmatprep.subr.bf16.mxu0 %v3186
    %4071 = vmatpush1.bf16.msra.mxu0 %v3185
    %4072 = vmatprep.subr.bf16.mxu0 %v3194
    %4073 = vmatpush1.bf16.msra.mxu0 %v3193
    %4074 = vmatprep.subr.bf16.mxu0 %v3202
    %4075 = vmatpush1.bf16.msra.mxu0 %v3201
    %4076 = vmatprep.subr.bf16.mxu0 %v3210
    %4077 = vmatpush1.bf16.msra.mxu0 %v3209
    %4078 = vmatprep.subr.bf16.mxu0 %v3218
    %4079 = vmatpush1.bf16.msra.mxu0 %v3217
    %4080 = vmatprep.subr.bf16.mxu0 %v3226
    %4081 = vmatpush1.bf16.msra.mxu0 %v3225
    %4082 = vmatprep.mubr.bf16.mxu0 %v1878
    %4083 = vmatmul.mubr.bf16.gmra.mrb[0].mxu0 %v1877
    %v4084 = vpop.f32.mrb[0].mxu0
    %v4085 = vadd.f32 %v3972, %v4084
    %v4086 = vpop.f32.mrb[0].mxu0
    %v4087 = vadd.f32 %v3974, %v4086
    %v4088 = vpop.f32.mrb[0].mxu0
    %v4089 = vadd.f32 %v3976, %v4088
    %v4090 = vpop.f32.mrb[0].mxu0
    %v4091 = vadd.f32 %v3978, %v4090
    %4092 = vmatprep.mubr.bf16.mxu0 %v1882
    %4093 = vmatmul.mubr.bf16.gmra.mrb[0].mxu0 %v1881
    %v4094 = vpop.f32.mrb[0].mxu0
    %v4095 = vadd.f32 %v3982, %v4094
    %v4096 = vpop.f32.mrb[0].mxu0
    %v4097 = vadd.f32 %v3984, %v4096
    %v4098 = vpop.f32.mrb[0].mxu0
    %v4099 = vadd.f32 %v3986, %v4098
    %v4100 = vpop.f32.mrb[0].mxu0
    %v4101 = vadd.f32 %v3988, %v4100
    %4102 = vmatprep.mubr.bf16.mxu0 %v1886
    %4103 = vmatmul.mubr.bf16.gmra.mrb[0].mxu0 %v1885
    %v4104 = vpop.f32.mrb[0].mxu0
    %v4105 = vadd.f32 %v3992, %v4104
    %v4106 = vpop.f32.mrb[0].mxu0
    %v4107 = vadd.f32 %v3994, %v4106
    %v4108 = vpop.f32.mrb[0].mxu0
    %v4109 = vadd.f32 %v3996, %v4108
    %v4110 = vpop.f32.mrb[0].mxu0
    %v4111 = vadd.f32 %v3998, %v4110
    %4112 = vmatprep.mubr.bf16.mxu0 %v1890
    %4113 = vmatmul.mubr.bf16.gmra.mrb[0].mxu0 %v1889
    %v4114 = vpop.f32.mrb[0].mxu0
    %v4115 = vadd.f32 %v4002, %v4114
    %v4116 = vpop.f32.mrb[0].mxu0
    %v4117 = vadd.f32 %v4004, %v4116
    %v4118 = vpop.f32.mrb[0].mxu0
    %v4119 = vadd.f32 %v4006, %v4118
    %v4120 = vpop.f32.mrb[0].mxu0
    %v4121 = vadd.f32 %v4008, %v4120
    %4122 = vmatprep.mubr.bf16.mxu0 %v1894
    %4123 = vmatmul.mubr.bf16.gmra.mrb[0].mxu0 %v1893
    %v4124 = vpop.f32.mrb[0].mxu0
    %v4125 = vadd.f32 %v4012, %v4124
    %v4126 = vpop.f32.mrb[0].mxu0
    %v4127 = vadd.f32 %v4014, %v4126
    %v4128 = vpop.f32.mrb[0].mxu0
    %v4129 = vadd.f32 %v4016, %v4128
    %v4130 = vpop.f32.mrb[0].mxu0
    %v4131 = vadd.f32 %v4018, %v4130
    %4132 = vmatprep.mubr.bf16.mxu0 %v1898
    %4133 = vmatmul.mubr.bf16.gmra.mrb[0].mxu0 %v1897
    %v4134 = vpop.f32.mrb[0].mxu0
    %v4135 = vadd.f32 %v4022, %v4134
    %v4136 = vpop.f32.mrb[0].mxu0
    %v4137 = vadd.f32 %v4024, %v4136
    %v4138 = vpop.f32.mrb[0].mxu0
    %v4139 = vadd.f32 %v4026, %v4138
    %v4140 = vpop.f32.mrb[0].mxu0
    %v4141 = vadd.f32 %v4028, %v4140
    %4142 = vmatprep.mubr.bf16.mxu0 %v1902
    %4143 = vmatmul.mubr.bf16.gmra.mrb[0].mxu0 %v1901
    %v4144 = vpop.f32.mrb[0].mxu0
    %v4145 = vadd.f32 %v4032, %v4144
    %v4146 = vpop.f32.mrb[0].mxu0
    %v4147 = vadd.f32 %v4034, %v4146
    %v4148 = vpop.f32.mrb[0].mxu0
    %v4149 = vadd.f32 %v4036, %v4148
    %v4150 = vpop.f32.mrb[0].mxu0
    %v4151 = vadd.f32 %v4038, %v4150
    %4152 = vmatprep.mubr.bf16.mxu0 %v1906
    %4153 = vmatmul.mubr.bf16.gmra.mrb[0].mxu0 %v1905
    %v4154 = vpop.f32.mrb[0].mxu0
    %v4155 = vadd.f32 %v4042, %v4154
    %v4156 = vpop.f32.mrb[0].mxu0
    %v4157 = vadd.f32 %v4044, %v4156
    %v4158 = vpop.f32.mrb[0].mxu0
    %v4159 = vadd.f32 %v4046, %v4158
    %v4160 = vpop.f32.mrb[0].mxu0
    %v4161 = vadd.f32 %v4048, %v4160
    %4162 = vdwg.mxu0
    %4163 = vmatprep.subr.bf16.mxu0 %v2980
    %4164 = vmatpush1.bf16.msra.mxu0 %v2979
    %4165 = vmatprep.subr.bf16.mxu0 %v2988
    %4166 = vmatpush1.bf16.msra.mxu0 %v2987
    %4167 = vmatprep.subr.bf16.mxu0 %v2996
    %4168 = vmatpush1.bf16.msra.mxu0 %v2995
    %4169 = vmatprep.subr.bf16.mxu0 %v3004
    %4170 = vmatpush1.bf16.msra.mxu0 %v3003
    %4171 = vmatprep.subr.bf16.mxu0 %v3012
    %4172 = vmatpush1.bf16.msra.mxu0 %v3011
    %4173 = vmatprep.subr.bf16.mxu0 %v3020
    %4174 = vmatpush1.bf16.msra.mxu0 %v3019
    %4175 = vmatprep.subr.bf16.mxu0 %v3028
    %4176 = vmatpush1.bf16.msra.mxu0 %v3027
    %4177 = vmatprep.subr.bf16.mxu0 %v3036
    %4178 = vmatpush1.bf16.msra.mxu0 %v3035
    %4179 = vmatprep.subr.bf16.mxu0 %v3044
    %4180 = vmatpush1.bf16.msra.mxu0 %v3043
    %4181 = vmatprep.subr.bf16.mxu0 %v3052
    %4182 = vmatpush1.bf16.msra.mxu0 %v3051
    %4183 = vmatprep.subr.bf16.mxu0 %v3060
    %4184 = vmatpush1.bf16.msra.mxu0 %v3059
    %4185 = vmatprep.subr.bf16.mxu0 %v3068
    %4186 = vmatpush1.bf16.msra.mxu0 %v3067
    %4187 = vmatprep.subr.bf16.mxu0 %v3076
    %4188 = vmatpush1.bf16.msra.mxu0 %v3075
    %4189 = vmatprep.subr.bf16.mxu0 %v3084
    %4190 = vmatpush1.bf16.msra.mxu0 %v3083
    %4191 = vmatprep.subr.bf16.mxu0 %v3092
    %4192 = vmatpush1.bf16.msra.mxu0 %v3091
    %4193 = vmatprep.subr.bf16.mxu0 %v3100
    %4194 = vmatpush1.bf16.msra.mxu0 %v3099
    %4195 = vmatprep.mubr.bf16.mxu0 %v1876
    %4196 = vmatmul.mubr.bf16.gmra.mrb[0].mxu0 %v1875
    %v4197 = vpop.f32.mrb[0].mxu0
    %v4198 = vadd.f32 %v2192, %v4197
    %v4199 = vpop.f32.mrb[0].mxu0
    %v4200 = vadd.f32 %v2196, %v4199
    %v4201 = vpop.f32.mrb[0].mxu0
    %v4202 = vadd.f32 %v2192, %v4201
    %v4203 = vpop.f32.mrb[0].mxu0
    %v4204 = vadd.f32 %v2196, %v4203
    %4205 = vmatprep.mubr.bf16.mxu0 %v1880
    %4206 = vmatmul.mubr.bf16.gmra.mrb[0].mxu0 %v1879
    %v4207 = vpop.f32.mrb[0].mxu0
    %v4208 = vadd.f32 %v2192, %v4207
    %v4209 = vpop.f32.mrb[0].mxu0
    %v4210 = vadd.f32 %v2196, %v4209
    %v4211 = vpop.f32.mrb[0].mxu0
    %v4212 = vadd.f32 %v2192, %v4211
    %v4213 = vpop.f32.mrb[0].mxu0
    %v4214 = vadd.f32 %v2196, %v4213
    %4215 = vmatprep.mubr.bf16.mxu0 %v1884
    %4216 = vmatmul.mubr.bf16.gmra.mrb[0].mxu0 %v1883
    %v4217 = vpop.f32.mrb[0].mxu0
    %v4218 = vadd.f32 %v2192, %v4217
    %v4219 = vpop.f32.mrb[0].mxu0
    %v4220 = vadd.f32 %v2196, %v4219
    %v4221 = vpop.f32.mrb[0].mxu0
    %v4222 = vadd.f32 %v2192, %v4221
    %v4223 = vpop.f32.mrb[0].mxu0
    %v4224 = vadd.f32 %v2196, %v4223
    %4225 = vmatprep.mubr.bf16.mxu0 %v1888
    %4226 = vmatmul.mubr.bf16.gmra.mrb[0].mxu0 %v1887
    %v4227 = vpop.f32.mrb[0].mxu0
    %v4228 = vadd.f32 %v2192, %v4227
    %v4229 = vpop.f32.mrb[0].mxu0
    %v4230 = vadd.f32 %v2196, %v4229
    %v4231 = vpop.f32.mrb[0].mxu0
    %v4232 = vadd.f32 %v2192, %v4231
    %v4233 = vpop.f32.mrb[0].mxu0
    %v4234 = vadd.f32 %v2196, %v4233
    %4235 = vmatprep.mubr.bf16.mxu0 %v1892
    %4236 = vmatmul.mubr.bf16.gmra.mrb[0].mxu0 %v1891
    %v4237 = vpop.f32.mrb[0].mxu0
    %v4238 = vadd.f32 %v2192, %v4237
    %v4239 = vpop.f32.mrb[0].mxu0
    %v4240 = vadd.f32 %v2196, %v4239
    %v4241 = vpop.f32.mrb[0].mxu0
    %v4242 = vadd.f32 %v2192, %v4241
    %v4243 = vpop.f32.mrb[0].mxu0
    %v4244 = vadd.f32 %v2196, %v4243
    %4245 = vmatprep.mubr.bf16.mxu0 %v1896
    %4246 = vmatmul.mubr.bf16.gmra.mrb[0].mxu0 %v1895
    %v4247 = vpop.f32.mrb[0].mxu0
    %v4248 = vadd.f32 %v2192, %v4247
    %v4249 = vpop.f32.mrb[0].mxu0
    %v4250 = vadd.f32 %v2196, %v4249
    %v4251 = vpop.f32.mrb[0].mxu0
    %v4252 = vadd.f32 %v2192, %v4251
    %v4253 = vpop.f32.mrb[0].mxu0
    %v4254 = vadd.f32 %v2196, %v4253
    %4255 = vmatprep.mubr.bf16.mxu0 %v1900
    %4256 = vmatmul.mubr.bf16.gmra.mrb[0].mxu0 %v1899
    %v4257 = vpop.f32.mrb[0].mxu0
    %v4258 = vadd.f32 %v2192, %v4257
    %v4259 = vpop.f32.mrb[0].mxu0
    %v4260 = vadd.f32 %v2196, %v4259
    %v4261 = vpop.f32.mrb[0].mxu0
    %v4262 = vadd.f32 %v2192, %v4261
    %v4263 = vpop.f32.mrb[0].mxu0
    %v4264 = vadd.f32 %v2196, %v4263
    %4265 = vmatprep.mubr.bf16.mxu0 %v1904
    %4266 = vmatmul.mubr.bf16.gmra.mrb[0].mxu0 %v1903
    %v4267 = vpop.f32.mrb[0].mxu0
    %v4268 = vadd.f32 %v2192, %v4267
    %v4269 = vpop.f32.mrb[0].mxu0
    %v4270 = vadd.f32 %v2196, %v4269
    %v4271 = vpop.f32.mrb[0].mxu0
    %v4272 = vadd.f32 %v2192, %v4271
    %v4273 = vpop.f32.mrb[0].mxu0
    %v4274 = vadd.f32 %v2196, %v4273
    %4275 = vdwg.mxu0
    %4276 = vmatprep.subr.bf16.mxu0 %v3108
    %4277 = vmatpush1.bf16.msra.mxu0 %v3107
    %4278 = vmatprep.subr.bf16.mxu0 %v3116
    %4279 = vmatpush1.bf16.msra.mxu0 %v3115
    %4280 = vmatprep.subr.bf16.mxu0 %v3124
    %4281 = vmatpush1.bf16.msra.mxu0 %v3123
    %4282 = vmatprep.subr.bf16.mxu0 %v3132
    %4283 = vmatpush1.bf16.msra.mxu0 %v3131
    %4284 = vmatprep.subr.bf16.mxu0 %v3140
    %4285 = vmatpush1.bf16.msra.mxu0 %v3139
    %4286 = vmatprep.subr.bf16.mxu0 %v3148
    %4287 = vmatpush1.bf16.msra.mxu0 %v3147
    %4288 = vmatprep.subr.bf16.mxu0 %v3156
    %4289 = vmatpush1.bf16.msra.mxu0 %v3155
    %4290 = vmatprep.subr.bf16.mxu0 %v3164
    %4291 = vmatpush1.bf16.msra.mxu0 %v3163
    %4292 = vmatprep.subr.bf16.mxu0 %v3172
    %4293 = vmatpush1.bf16.msra.mxu0 %v3171
    %4294 = vmatprep.subr.bf16.mxu0 %v3180
    %4295 = vmatpush1.bf16.msra.mxu0 %v3179
    %4296 = vmatprep.subr.bf16.mxu0 %v3188
    %4297 = vmatpush1.bf16.msra.mxu0 %v3187
    %4298 = vmatprep.subr.bf16.mxu0 %v3196
    %4299 = vmatpush1.bf16.msra.mxu0 %v3195
    %4300 = vmatprep.subr.bf16.mxu0 %v3204
    %4301 = vmatpush1.bf16.msra.mxu0 %v3203
    %4302 = vmatprep.subr.bf16.mxu0 %v3212
    %4303 = vmatpush1.bf16.msra.mxu0 %v3211
    %4304 = vmatprep.subr.bf16.mxu0 %v3220
    %4305 = vmatpush1.bf16.msra.mxu0 %v3219
    %4306 = vmatprep.subr.bf16.mxu0 %v3228
    %4307 = vmatpush1.bf16.msra.mxu0 %v3227
    %4308 = vmatprep.mubr.bf16.mxu0 %v1878
    %4309 = vmatmul.mubr.bf16.gmra.mrb[0].mxu0 %v1877
    %v4310 = vpop.f32.mrb[0].mxu0
    %v4311 = vadd.f32 %v4198, %v4310
    %v4312 = vpop.f32.mrb[0].mxu0
    %v4313 = vadd.f32 %v4200, %v4312
    %v4314 = vpop.f32.mrb[0].mxu0
    %v4315 = vadd.f32 %v4202, %v4314
    %v4316 = vpop.f32.mrb[0].mxu0
    %v4317 = vadd.f32 %v4204, %v4316
    %4318 = vmatprep.mubr.bf16.mxu0 %v1882
    %4319 = vmatmul.mubr.bf16.gmra.mrb[0].mxu0 %v1881
    %v4320 = vpop.f32.mrb[0].mxu0
    %v4321 = vadd.f32 %v4208, %v4320
    %v4322 = vpop.f32.mrb[0].mxu0
    %v4323 = vadd.f32 %v4210, %v4322
    %v4324 = vpop.f32.mrb[0].mxu0
    %v4325 = vadd.f32 %v4212, %v4324
    %v4326 = vpop.f32.mrb[0].mxu0
    %v4327 = vadd.f32 %v4214, %v4326
    %4328 = vmatprep.mubr.bf16.mxu0 %v1886
    %4329 = vmatmul.mubr.bf16.gmra.mrb[0].mxu0 %v1885
    %v4330 = vpop.f32.mrb[0].mxu0
    %v4331 = vadd.f32 %v4218, %v4330
    %v4332 = vpop.f32.mrb[0].mxu0
    %v4333 = vadd.f32 %v4220, %v4332
    %v4334 = vpop.f32.mrb[0].mxu0
    %v4335 = vadd.f32 %v4222, %v4334
    %v4336 = vpop.f32.mrb[0].mxu0
    %v4337 = vadd.f32 %v4224, %v4336
    %4338 = vmatprep.mubr.bf16.mxu0 %v1890
    %4339 = vmatmul.mubr.bf16.gmra.mrb[0].mxu0 %v1889
    %v4340 = vpop.f32.mrb[0].mxu0
    %v4341 = vadd.f32 %v4228, %v4340
    %v4342 = vpop.f32.mrb[0].mxu0
    %v4343 = vadd.f32 %v4230, %v4342
    %v4344 = vpop.f32.mrb[0].mxu0
    %v4345 = vadd.f32 %v4232, %v4344
    %v4346 = vpop.f32.mrb[0].mxu0
    %v4347 = vadd.f32 %v4234, %v4346
    %4348 = vmatprep.mubr.bf16.mxu0 %v1894
    %4349 = vmatmul.mubr.bf16.gmra.mrb[0].mxu0 %v1893
    %v4350 = vpop.f32.mrb[0].mxu0
    %v4351 = vadd.f32 %v4238, %v4350
    %v4352 = vpop.f32.mrb[0].mxu0
    %v4353 = vadd.f32 %v4240, %v4352
    %v4354 = vpop.f32.mrb[0].mxu0
    %v4355 = vadd.f32 %v4242, %v4354
    %v4356 = vpop.f32.mrb[0].mxu0
    %v4357 = vadd.f32 %v4244, %v4356
    %4358 = vmatprep.mubr.bf16.mxu0 %v1898
    %4359 = vmatmul.mubr.bf16.gmra.mrb[0].mxu0 %v1897
    %v4360 = vpop.f32.mrb[0].mxu0
    %v4361 = vadd.f32 %v4248, %v4360
    %v4362 = vpop.f32.mrb[0].mxu0
    %v4363 = vadd.f32 %v4250, %v4362
    %v4364 = vpop.f32.mrb[0].mxu0
    %v4365 = vadd.f32 %v4252, %v4364
    %v4366 = vpop.f32.mrb[0].mxu0
    %v4367 = vadd.f32 %v4254, %v4366
    %4368 = vmatprep.mubr.bf16.mxu0 %v1902
    %4369 = vmatmul.mubr.bf16.gmra.mrb[0].mxu0 %v1901
    %v4370 = vpop.f32.mrb[0].mxu0
    %v4371 = vadd.f32 %v4258, %v4370
    %v4372 = vpop.f32.mrb[0].mxu0
    %v4373 = vadd.f32 %v4260, %v4372
    %v4374 = vpop.f32.mrb[0].mxu0
    %v4375 = vadd.f32 %v4262, %v4374
    %v4376 = vpop.f32.mrb[0].mxu0
    %v4377 = vadd.f32 %v4264, %v4376
    %4378 = vmatprep.mubr.bf16.mxu0 %v1906
    %4379 = vmatmul.mubr.bf16.gmra.mrb[0].mxu0 %v1905
    %v4380 = vpop.f32.mrb[0].mxu0
    %v4381 = vadd.f32 %v4268, %v4380
    %v4382 = vpop.f32.mrb[0].mxu0
    %v4383 = vadd.f32 %v4270, %v4382
    %v4384 = vpop.f32.mrb[0].mxu0
    %v4385 = vadd.f32 %v4272, %v4384
    %v4386 = vpop.f32.mrb[0].mxu0
    %v4387 = vadd.f32 %v4274, %v4386
    %4388 = vdwg.mxu0
    %vm4389 = vcmp.gt.f32.partialorder %v3633, 0.0
    %vm4390 = vcmp.gt.f32.partialorder %v3635, 0.0
    %vm4391 = vcmp.gt.f32.partialorder %v3859, 0.0
    %vm4392 = vcmp.gt.f32.partialorder %v3861, 0.0
    %vm4393 = vcmp.gt.f32.partialorder %v4085, 0.0
    %vm4394 = vcmp.gt.f32.partialorder %v4087, 0.0
    %vm4395 = vcmp.gt.f32.partialorder %v4311, 0.0
    %vm4396 = vcmp.gt.f32.partialorder %v4313, 0.0
    %vm4397 = vcmp.gt.f32.partialorder %v3637, 0.0
    %vm4398 = vcmp.gt.f32.partialorder %v3639, 0.0
    %vm4399 = vcmp.gt.f32.partialorder %v3863, 0.0
    %vm4400 = vcmp.gt.f32.partialorder %v3865, 0.0
    %vm4401 = vcmp.gt.f32.partialorder %v4089, 0.0
    %vm4402 = vcmp.gt.f32.partialorder %v4091, 0.0
    %vm4403 = vcmp.gt.f32.partialorder %v4315, 0.0
    %vm4404 = vcmp.gt.f32.partialorder %v4317, 0.0
    %vm4405 = vcmp.gt.f32.partialorder %v3643, 0.0
    %vm4406 = vcmp.gt.f32.partialorder %v3645, 0.0
    %vm4407 = vcmp.gt.f32.partialorder %v3869, 0.0
    %vm4408 = vcmp.gt.f32.partialorder %v3871, 0.0
    %vm4409 = vcmp.gt.f32.partialorder %v4095, 0.0
    %vm4410 = vcmp.gt.f32.partialorder %v4097, 0.0
    %vm4411 = vcmp.gt.f32.partialorder %v4321, 0.0
    %vm4412 = vcmp.gt.f32.partialorder %v4323, 0.0
    %vm4413 = vcmp.gt.f32.partialorder %v3647, 0.0
    %vm4414 = vcmp.gt.f32.partialorder %v3649, 0.0
    %vm4415 = vcmp.gt.f32.partialorder %v3873, 0.0
    %vm4416 = vcmp.gt.f32.partialorder %v3875, 0.0
    %vm4417 = vcmp.gt.f32.partialorder %v4099, 0.0
    %vm4418 = vcmp.gt.f32.partialorder %v4101, 0.0
    %vm4419 = vcmp.gt.f32.partialorder %v4325, 0.0
    %vm4420 = vcmp.gt.f32.partialorder %v4327, 0.0
    %vm4421 = vcmp.gt.f32.partialorder %v3653, 0.0
    %vm4422 = vcmp.gt.f32.partialorder %v3655, 0.0
    %vm4423 = vcmp.gt.f32.partialorder %v3879, 0.0
    %vm4424 = vcmp.gt.f32.partialorder %v3881, 0.0
    %vm4425 = vcmp.gt.f32.partialorder %v4105, 0.0
    %vm4426 = vcmp.gt.f32.partialorder %v4107, 0.0
    %vm4427 = vcmp.gt.f32.partialorder %v4331, 0.0
    %vm4428 = vcmp.gt.f32.partialorder %v4333, 0.0
    %vm4429 = vcmp.gt.f32.partialorder %v3657, 0.0
    %vm4430 = vcmp.gt.f32.partialorder %v3659, 0.0
    %vm4431 = vcmp.gt.f32.partialorder %v3883, 0.0
    %vm4432 = vcmp.gt.f32.partialorder %v3885, 0.0
    %vm4433 = vcmp.gt.f32.partialorder %v4109, 0.0
    %vm4434 = vcmp.gt.f32.partialorder %v4111, 0.0
    %vm4435 = vcmp.gt.f32.partialorder %v4335, 0.0
    %vm4436 = vcmp.gt.f32.partialorder %v4337, 0.0
    %vm4437 = vcmp.gt.f32.partialorder %v3663, 0.0
    %vm4438 = vcmp.gt.f32.partialorder %v3665, 0.0
    %vm4439 = vcmp.gt.f32.partialorder %v3889, 0.0
    %vm4440 = vcmp.gt.f32.partialorder %v3891, 0.0
    %vm4441 = vcmp.gt.f32.partialorder %v4115, 0.0
    %vm4442 = vcmp.gt.f32.partialorder %v4117, 0.0
    %vm4443 = vcmp.gt.f32.partialorder %v4341, 0.0
    %vm4444 = vcmp.gt.f32.partialorder %v4343, 0.0
    %vm4445 = vcmp.gt.f32.partialorder %v3667, 0.0
    %vm4446 = vcmp.gt.f32.partialorder %v3669, 0.0
    %vm4447 = vcmp.gt.f32.partialorder %v3893, 0.0
    %vm4448 = vcmp.gt.f32.partialorder %v3895, 0.0
    %vm4449 = vcmp.gt.f32.partialorder %v4119, 0.0
    %vm4450 = vcmp.gt.f32.partialorder %v4121, 0.0
    %vm4451 = vcmp.gt.f32.partialorder %v4345, 0.0
    %vm4452 = vcmp.gt.f32.partialorder %v4347, 0.0
    %vm4453 = vcmp.gt.f32.partialorder %v3673, 0.0
    %vm4454 = vcmp.gt.f32.partialorder %v3675, 0.0
    %vm4455 = vcmp.gt.f32.partialorder %v3899, 0.0
    %vm4456 = vcmp.gt.f32.partialorder %v3901, 0.0
    %vm4457 = vcmp.gt.f32.partialorder %v4125, 0.0
    %vm4458 = vcmp.gt.f32.partialorder %v4127, 0.0
    %vm4459 = vcmp.gt.f32.partialorder %v4351, 0.0
    %vm4460 = vcmp.gt.f32.partialorder %v4353, 0.0
    %vm4461 = vcmp.gt.f32.partialorder %v3677, 0.0
    %vm4462 = vcmp.gt.f32.partialorder %v3679, 0.0
    %vm4463 = vcmp.gt.f32.partialorder %v3903, 0.0
    %vm4464 = vcmp.gt.f32.partialorder %v3905, 0.0
    %vm4465 = vcmp.gt.f32.partialorder %v4129, 0.0
    %vm4466 = vcmp.gt.f32.partialorder %v4131, 0.0
    %vm4467 = vcmp.gt.f32.partialorder %v4355, 0.0
    %vm4468 = vcmp.gt.f32.partialorder %v4357, 0.0
    %vm4469 = vcmp.gt.f32.partialorder %v3683, 0.0
    %vm4470 = vcmp.gt.f32.partialorder %v3685, 0.0
    %vm4471 = vcmp.gt.f32.partialorder %v3909, 0.0
    %vm4472 = vcmp.gt.f32.partialorder %v3911, 0.0
    %vm4473 = vcmp.gt.f32.partialorder %v4135, 0.0
    %vm4474 = vcmp.gt.f32.partialorder %v4137, 0.0
    %vm4475 = vcmp.gt.f32.partialorder %v4361, 0.0
    %vm4476 = vcmp.gt.f32.partialorder %v4363, 0.0
    %vm4477 = vcmp.gt.f32.partialorder %v3687, 0.0
    %vm4478 = vcmp.gt.f32.partialorder %v3689, 0.0
    %vm4479 = vcmp.gt.f32.partialorder %v3913, 0.0
    %vm4480 = vcmp.gt.f32.partialorder %v3915, 0.0
    %vm4481 = vcmp.gt.f32.partialorder %v4139, 0.0
    %vm4482 = vcmp.gt.f32.partialorder %v4141, 0.0
    %vm4483 = vcmp.gt.f32.partialorder %v4365, 0.0
    %vm4484 = vcmp.gt.f32.partialorder %v4367, 0.0
    %vm4485 = vcmp.gt.f32.partialorder %v3693, 0.0
    %vm4486 = vcmp.gt.f32.partialorder %v3695, 0.0
    %vm4487 = vcmp.gt.f32.partialorder %v3919, 0.0
    %vm4488 = vcmp.gt.f32.partialorder %v3921, 0.0
    %vm4489 = vcmp.gt.f32.partialorder %v4145, 0.0
    %vm4490 = vcmp.gt.f32.partialorder %v4147, 0.0
    %vm4491 = vcmp.gt.f32.partialorder %v4371, 0.0
    %vm4492 = vcmp.gt.f32.partialorder %v4373, 0.0
    %vm4493 = vcmp.gt.f32.partialorder %v3697, 0.0
    %vm4494 = vcmp.gt.f32.partialorder %v3699, 0.0
    %vm4495 = vcmp.gt.f32.partialorder %v3923, 0.0
    %vm4496 = vcmp.gt.f32.partialorder %v3925, 0.0
    %vm4497 = vcmp.gt.f32.partialorder %v4149, 0.0
    %vm4498 = vcmp.gt.f32.partialorder %v4151, 0.0
    %vm4499 = vcmp.gt.f32.partialorder %v4375, 0.0
    %vm4500 = vcmp.gt.f32.partialorder %v4377, 0.0
    %vm4501 = vcmp.gt.f32.partialorder %v3703, 0.0
    %vm4502 = vcmp.gt.f32.partialorder %v3705, 0.0
    %vm4503 = vcmp.gt.f32.partialorder %v3929, 0.0
    %vm4504 = vcmp.gt.f32.partialorder %v3931, 0.0
    %vm4505 = vcmp.gt.f32.partialorder %v4155, 0.0
    %vm4506 = vcmp.gt.f32.partialorder %v4157, 0.0
    %vm4507 = vcmp.gt.f32.partialorder %v4381, 0.0
    %vm4508 = vcmp.gt.f32.partialorder %v4383, 0.0
    %vm4509 = vcmp.gt.f32.partialorder %v3707, 0.0
    %vm4510 = vcmp.gt.f32.partialorder %v3709, 0.0
    %vm4511 = vcmp.gt.f32.partialorder %v3933, 0.0
    %vm4512 = vcmp.gt.f32.partialorder %v3935, 0.0
    %vm4513 = vcmp.gt.f32.partialorder %v4159, 0.0
    %vm4514 = vcmp.gt.f32.partialorder %v4161, 0.0
    %vm4515 = vcmp.gt.f32.partialorder %v4385, 0.0
    %vm4516 = vcmp.gt.f32.partialorder %v4387, 0.0
    %v4517 = vmul.f32 %v3633, 0.2
    %v4518 = vmul.f32 %v3635, 0.2
    %v4519 = vmul.f32 %v3859, 0.2
    %v4520 = vmul.f32 %v3861, 0.2
    %v4521 = vmul.f32 %v4085, 0.2
    %v4522 = vmul.f32 %v4087, 0.2
    %v4523 = vmul.f32 %v4311, 0.2
    %v4524 = vmul.f32 %v4313, 0.2
    %v4525 = vmul.f32 %v3637, 0.2
    %v4526 = vmul.f32 %v3639, 0.2
    %v4527 = vmul.f32 %v3863, 0.2
    %v4528 = vmul.f32 %v3865, 0.2
    %v4529 = vmul.f32 %v4089, 0.2
    %v4530 = vmul.f32 %v4091, 0.2
    %v4531 = vmul.f32 %v4315, 0.2
    %v4532 = vmul.f32 %v4317, 0.2
    %v4533 = vmul.f32 %v3643, 0.2
    %v4534 = vmul.f32 %v3645, 0.2
    %v4535 = vmul.f32 %v3869, 0.2
    %v4536 = vmul.f32 %v3871, 0.2
    %v4537 = vmul.f32 %v4095, 0.2
    %v4538 = vmul.f32 %v4097, 0.2
    %v4539 = vmul.f32 %v4321, 0.2
    %v4540 = vmul.f32 %v4323, 0.2
    %v4541 = vmul.f32 %v3647, 0.2
    %v4542 = vmul.f32 %v3649, 0.2
    %v4543 = vmul.f32 %v3873, 0.2
    %v4544 = vmul.f32 %v3875, 0.2
    %v4545 = vmul.f32 %v4099, 0.2
    %v4546 = vmul.f32 %v4101, 0.2
    %v4547 = vmul.f32 %v4325, 0.2
    %v4548 = vmul.f32 %v4327, 0.2
    %v4549 = vmul.f32 %v3653, 0.2
    %v4550 = vmul.f32 %v3655, 0.2
    %v4551 = vmul.f32 %v3879, 0.2
    %v4552 = vmul.f32 %v3881, 0.2
    %v4553 = vmul.f32 %v4105, 0.2
    %v4554 = vmul.f32 %v4107, 0.2
    %v4555 = vmul.f32 %v4331, 0.2
    %v4556 = vmul.f32 %v4333, 0.2
    %v4557 = vmul.f32 %v3657, 0.2
    %v4558 = vmul.f32 %v3659, 0.2
    %v4559 = vmul.f32 %v3883, 0.2
    %v4560 = vmul.f32 %v3885, 0.2
    %v4561 = vmul.f32 %v4109, 0.2
    %v4562 = vmul.f32 %v4111, 0.2
    %v4563 = vmul.f32 %v4335, 0.2
    %v4564 = vmul.f32 %v4337, 0.2
    %v4565 = vmul.f32 %v3663, 0.2
    %v4566 = vmul.f32 %v3665, 0.2
    %v4567 = vmul.f32 %v3889, 0.2
    %v4568 = vmul.f32 %v3891, 0.2
    %v4569 = vmul.f32 %v4115, 0.2
    %v4570 = vmul.f32 %v4117, 0.2
    %v4571 = vmul.f32 %v4341, 0.2
    %v4572 = vmul.f32 %v4343, 0.2
    %v4573 = vmul.f32 %v3667, 0.2
    %v4574 = vmul.f32 %v3669, 0.2
    %v4575 = vmul.f32 %v3893, 0.2
    %v4576 = vmul.f32 %v3895, 0.2
    %v4577 = vmul.f32 %v4119, 0.2
    %v4578 = vmul.f32 %v4121, 0.2
    %v4579 = vmul.f32 %v4345, 0.2
    %v4580 = vmul.f32 %v4347, 0.2
    %v4581 = vmul.f32 %v3673, 0.2
    %v4582 = vmul.f32 %v3675, 0.2
    %v4583 = vmul.f32 %v3899, 0.2
    %v4584 = vmul.f32 %v3901, 0.2
    %v4585 = vmul.f32 %v4125, 0.2
    %v4586 = vmul.f32 %v4127, 0.2
    %v4587 = vmul.f32 %v4351, 0.2
    %v4588 = vmul.f32 %v4353, 0.2
    %v4589 = vmul.f32 %v3677, 0.2
    %v4590 = vmul.f32 %v3679, 0.2
    %v4591 = vmul.f32 %v3903, 0.2
    %v4592 = vmul.f32 %v3905, 0.2
    %v4593 = vmul.f32 %v4129, 0.2
    %v4594 = vmul.f32 %v4131, 0.2
    %v4595 = vmul.f32 %v4355, 0.2
    %v4596 = vmul.f32 %v4357, 0.2
    %v4597 = vmul.f32 %v3683, 0.2
    %v4598 = vmul.f32 %v3685, 0.2
    %v4599 = vmul.f32 %v3909, 0.2
    %v4600 = vmul.f32 %v3911, 0.2
    %v4601 = vmul.f32 %v4135, 0.2
    %v4602 = vmul.f32 %v4137, 0.2
    %v4603 = vmul.f32 %v4361, 0.2
    %v4604 = vmul.f32 %v4363, 0.2
    %v4605 = vmul.f32 %v3687, 0.2
    %v4606 = vmul.f32 %v3689, 0.2
    %v4607 = vmul.f32 %v3913, 0.2
    %v4608 = vmul.f32 %v3915, 0.2
    %v4609 = vmul.f32 %v4139, 0.2
    %v4610 = vmul.f32 %v4141, 0.2
    %v4611 = vmul.f32 %v4365, 0.2
    %v4612 = vmul.f32 %v4367, 0.2
    %v4613 = vmul.f32 %v3693, 0.2
    %v4614 = vmul.f32 %v3695, 0.2
    %v4615 = vmul.f32 %v3919, 0.2
    %v4616 = vmul.f32 %v3921, 0.2
    %v4617 = vmul.f32 %v4145, 0.2
    %v4618 = vmul.f32 %v4147, 0.2
    %v4619 = vmul.f32 %v4371, 0.2
    %v4620 = vmul.f32 %v4373, 0.2
    %v4621 = vmul.f32 %v3697, 0.2
    %v4622 = vmul.f32 %v3699, 0.2
    %v4623 = vmul.f32 %v3923, 0.2
    %v4624 = vmul.f32 %v3925, 0.2
    %v4625 = vmul.f32 %v4149, 0.2
    %v4626 = vmul.f32 %v4151, 0.2
    %v4627 = vmul.f32 %v4375, 0.2
    %v4628 = vmul.f32 %v4377, 0.2
    %v4629 = vmul.f32 %v3703, 0.2
    %v4630 = vmul.f32 %v3705, 0.2
    %v4631 = vmul.f32 %v3929, 0.2
    %v4632 = vmul.f32 %v3931, 0.2
    %v4633 = vmul.f32 %v4155, 0.2
    %v4634 = vmul.f32 %v4157, 0.2
    %v4635 = vmul.f32 %v4381, 0.2
    %v4636 = vmul.f32 %v4383, 0.2
    %v4637 = vmul.f32 %v3707, 0.2
    %v4638 = vmul.f32 %v3709, 0.2
    %v4639 = vmul.f32 %v3933, 0.2
    %v4640 = vmul.f32 %v3935, 0.2
    %v4641 = vmul.f32 %v4159, 0.2
    %v4642 = vmul.f32 %v4161, 0.2
    %v4643 = vmul.f32 %v4385, 0.2
    %v4644 = vmul.f32 %v4387, 0.2
    %v4645 = vsel %vm4389, %v3633, %v4517
    %v4646 = vsel %vm4390, %v3635, %v4518
    %v4647 = vsel %vm4391, %v3859, %v4519
    %v4648 = vsel %vm4392, %v3861, %v4520
    %v4649 = vsel %vm4393, %v4085, %v4521
    %v4650 = vsel %vm4394, %v4087, %v4522
    %v4651 = vsel %vm4395, %v4311, %v4523
    %v4652 = vsel %vm4396, %v4313, %v4524
    %v4653 = vsel %vm4397, %v3637, %v4525
    %v4654 = vsel %vm4398, %v3639, %v4526
    %v4655 = vsel %vm4399, %v3863, %v4527
    %v4656 = vsel %vm4400, %v3865, %v4528
    %v4657 = vsel %vm4401, %v4089, %v4529
    %v4658 = vsel %vm4402, %v4091, %v4530
    %v4659 = vsel %vm4403, %v4315, %v4531
    %v4660 = vsel %vm4404, %v4317, %v4532
    %v4661 = vsel %vm4405, %v3643, %v4533
    %v4662 = vsel %vm4406, %v3645, %v4534
    %v4663 = vsel %vm4407, %v3869, %v4535
    %v4664 = vsel %vm4408, %v3871, %v4536
    %v4665 = vsel %vm4409, %v4095, %v4537
    %v4666 = vsel %vm4410, %v4097, %v4538
    %v4667 = vsel %vm4411, %v4321, %v4539
    %v4668 = vsel %vm4412, %v4323, %v4540
    %v4669 = vsel %vm4413, %v3647, %v4541
    %v4670 = vsel %vm4414, %v3649, %v4542
    %v4671 = vsel %vm4415, %v3873, %v4543
    %v4672 = vsel %vm4416, %v3875, %v4544
    %v4673 = vsel %vm4417, %v4099, %v4545
    %v4674 = vsel %vm4418, %v4101, %v4546
    %v4675 = vsel %vm4419, %v4325, %v4547
    %v4676 = vsel %vm4420, %v4327, %v4548
    %v4677 = vsel %vm4421, %v3653, %v4549
    %v4678 = vsel %vm4422, %v3655, %v4550
    %v4679 = vsel %vm4423, %v3879, %v4551
    %v4680 = vsel %vm4424, %v3881, %v4552
    %v4681 = vsel %vm4425, %v4105, %v4553
    %v4682 = vsel %vm4426, %v4107, %v4554
    %v4683 = vsel %vm4427, %v4331, %v4555
    %v4684 = vsel %vm4428, %v4333, %v4556
    %v4685 = vsel %vm4429, %v3657, %v4557
    %v4686 = vsel %vm4430, %v3659, %v4558
    %v4687 = vsel %vm4431, %v3883, %v4559
    %v4688 = vsel %vm4432, %v3885, %v4560
    %v4689 = vsel %vm4433, %v4109, %v4561
    %v4690 = vsel %vm4434, %v4111, %v4562
    %v4691 = vsel %vm4435, %v4335, %v4563
    %v4692 = vsel %vm4436, %v4337, %v4564
    %v4693 = vsel %vm4437, %v3663, %v4565
    %v4694 = vsel %vm4438, %v3665, %v4566
    %v4695 = vsel %vm4439, %v3889, %v4567
    %v4696 = vsel %vm4440, %v3891, %v4568
    %v4697 = vsel %vm4441, %v4115, %v4569
    %v4698 = vsel %vm4442, %v4117, %v4570
    %v4699 = vsel %vm4443, %v4341, %v4571
    %v4700 = vsel %vm4444, %v4343, %v4572
    %v4701 = vsel %vm4445, %v3667, %v4573
    %v4702 = vsel %vm4446, %v3669, %v4574
    %v4703 = vsel %vm4447, %v3893, %v4575
    %v4704 = vsel %vm4448, %v3895, %v4576
    %v4705 = vsel %vm4449, %v4119, %v4577
    %v4706 = vsel %vm4450, %v4121, %v4578
    %v4707 = vsel %vm4451, %v4345, %v4579
    %v4708 = vsel %vm4452, %v4347, %v4580
    %v4709 = vsel %vm4453, %v3673, %v4581
    %v4710 = vsel %vm4454, %v3675, %v4582
    %v4711 = vsel %vm4455, %v3899, %v4583
    %v4712 = vsel %vm4456, %v3901, %v4584
    %v4713 = vsel %vm4457, %v4125, %v4585
    %v4714 = vsel %vm4458, %v4127, %v4586
    %v4715 = vsel %vm4459, %v4351, %v4587
    %v4716 = vsel %vm4460, %v4353, %v4588
    %v4717 = vsel %vm4461, %v3677, %v4589
    %v4718 = vsel %vm4462, %v3679, %v4590
    %v4719 = vsel %vm4463, %v3903, %v4591
    %v4720 = vsel %vm4464, %v3905, %v4592
    %v4721 = vsel %vm4465, %v4129, %v4593
    %v4722 = vsel %vm4466, %v4131, %v4594
    %v4723 = vsel %vm4467, %v4355, %v4595
    %v4724 = vsel %vm4468, %v4357, %v4596
    %v4725 = vsel %vm4469, %v3683, %v4597
    %v4726 = vsel %vm4470, %v3685, %v4598
    %v4727 = vsel %vm4471, %v3909, %v4599
    %v4728 = vsel %vm4472, %v3911, %v4600
    %v4729 = vsel %vm4473, %v4135, %v4601
    %v4730 = vsel %vm4474, %v4137, %v4602
    %v4731 = vsel %vm4475, %v4361, %v4603
    %v4732 = vsel %vm4476, %v4363, %v4604
    %v4733 = vsel %vm4477, %v3687, %v4605
    %v4734 = vsel %vm4478, %v3689, %v4606
    %v4735 = vsel %vm4479, %v3913, %v4607
    %v4736 = vsel %vm4480, %v3915, %v4608
    %v4737 = vsel %vm4481, %v4139, %v4609
    %v4738 = vsel %vm4482, %v4141, %v4610
    %v4739 = vsel %vm4483, %v4365, %v4611
    %v4740 = vsel %vm4484, %v4367, %v4612
    %v4741 = vsel %vm4485, %v3693, %v4613
    %v4742 = vsel %vm4486, %v3695, %v4614
    %v4743 = vsel %vm4487, %v3919, %v4615
    %v4744 = vsel %vm4488, %v3921, %v4616
    %v4745 = vsel %vm4489, %v4145, %v4617
    %v4746 = vsel %vm4490, %v4147, %v4618
    %v4747 = vsel %vm4491, %v4371, %v4619
    %v4748 = vsel %vm4492, %v4373, %v4620
    %v4749 = vsel %vm4493, %v3697, %v4621
    %v4750 = vsel %vm4494, %v3699, %v4622
    %v4751 = vsel %vm4495, %v3923, %v4623
    %v4752 = vsel %vm4496, %v3925, %v4624
    %v4753 = vsel %vm4497, %v4149, %v4625
    %v4754 = vsel %vm4498, %v4151, %v4626
    %v4755 = vsel %vm4499, %v4375, %v4627
    %v4756 = vsel %vm4500, %v4377, %v4628
    %v4757 = vsel %vm4501, %v3703, %v4629
    %v4758 = vsel %vm4502, %v3705, %v4630
    %v4759 = vsel %vm4503, %v3929, %v4631
    %v4760 = vsel %vm4504, %v3931, %v4632
    %v4761 = vsel %vm4505, %v4155, %v4633
    %v4762 = vsel %vm4506, %v4157, %v4634
    %v4763 = vsel %vm4507, %v4381, %v4635
    %v4764 = vsel %vm4508, %v4383, %v4636
    %v4765 = vsel %vm4509, %v3707, %v4637
    %v4766 = vsel %vm4510, %v3709, %v4638
    %v4767 = vsel %vm4511, %v3933, %v4639
    %v4768 = vsel %vm4512, %v3935, %v4640
    %v4769 = vsel %vm4513, %v4159, %v4641
    %v4770 = vsel %vm4514, %v4161, %v4642
    %v4771 = vsel %vm4515, %v4385, %v4643
    %v4772 = vsel %vm4516, %v4387, %v4644
    %v4773 = vadd.f32 %v4645, %v4653
    %v4774 = vadd.f32 %v4773, %v4661
    %v4775 = vadd.f32 %v4774, %v4669
    %v4776 = vadd.f32 %v4775, %v4677
    %v4777 = vadd.f32 %v4776, %v4685
    %v4778 = vadd.f32 %v4777, %v4693
    %v4779 = vadd.f32 %v4778, %v4701
    %v4780 = vadd.f32 %v4779, %v4709
    %v4781 = vadd.f32 %v4780, %v4717
    %v4782 = vadd.f32 %v4781, %v4725
    %v4783 = vadd.f32 %v4782, %v4733
    %v4784 = vadd.f32 %v4783, %v4741
    %v4785 = vadd.f32 %v4784, %v4749
    %v4786 = vadd.f32 %v4785, %v4757
    %v4787 = vadd.f32 %v4786, %v4765
    %v4788 = vrot.slane %v4787, 4
    %v4789 = vadd.f32 %v4787, %v4788
    %v4790 = vrot.slane %v4789, 2
    %v4791 = vadd.f32 %v4789, %v4790
    %v4792 = vrot.slane %v4791, 1
    %v4793 = vadd.f32 %v4791, %v4792
    %v4794 = vadd.f32 %v4646, %v4654
    %v4795 = vadd.f32 %v4794, %v4662
    %v4796 = vadd.f32 %v4795, %v4670
    %v4797 = vadd.f32 %v4796, %v4678
    %v4798 = vadd.f32 %v4797, %v4686
    %v4799 = vadd.f32 %v4798, %v4694
    %v4800 = vadd.f32 %v4799, %v4702
    %v4801 = vadd.f32 %v4800, %v4710
    %v4802 = vadd.f32 %v4801, %v4718
    %v4803 = vadd.f32 %v4802, %v4726
    %v4804 = vadd.f32 %v4803, %v4734
    %v4805 = vadd.f32 %v4804, %v4742
    %v4806 = vadd.f32 %v4805, %v4750
    %v4807 = vadd.f32 %v4806, %v4758
    %v4808 = vadd.f32 %v4807, %v4766
    %v4809 = vrot.slane %v4808, 4
    %v4810 = vadd.f32 %v4808, %v4809
    %v4811 = vrot.slane %v4810, 2
    %v4812 = vadd.f32 %v4810, %v4811
    %v4813 = vrot.slane %v4812, 1
    %v4814 = vadd.f32 %v4812, %v4813
    %v4815 = vadd.f32 %v4647, %v4655
    %v4816 = vadd.f32 %v4815, %v4663
    %v4817 = vadd.f32 %v4816, %v4671
    %v4818 = vadd.f32 %v4817, %v4679
    %v4819 = vadd.f32 %v4818, %v4687
    %v4820 = vadd.f32 %v4819, %v4695
    %v4821 = vadd.f32 %v4820, %v4703
    %v4822 = vadd.f32 %v4821, %v4711
    %v4823 = vadd.f32 %v4822, %v4719
    %v4824 = vadd.f32 %v4823, %v4727
    %v4825 = vadd.f32 %v4824, %v4735
    %v4826 = vadd.f32 %v4825, %v4743
    %v4827 = vadd.f32 %v4826, %v4751
    %v4828 = vadd.f32 %v4827, %v4759
    %v4829 = vadd.f32 %v4828, %v4767
    %v4830 = vrot.slane %v4829, 4
    %v4831 = vadd.f32 %v4829, %v4830
    %v4832 = vrot.slane %v4831, 2
    %v4833 = vadd.f32 %v4831, %v4832
    %v4834 = vrot.slane %v4833, 1
    %v4835 = vadd.f32 %v4833, %v4834
    %v4836 = vadd.f32 %v4648, %v4656
    %v4837 = vadd.f32 %v4836, %v4664
    %v4838 = vadd.f32 %v4837, %v4672
    %v4839 = vadd.f32 %v4838, %v4680
    %v4840 = vadd.f32 %v4839, %v4688
    %v4841 = vadd.f32 %v4840, %v4696
    %v4842 = vadd.f32 %v4841, %v4704
    %v4843 = vadd.f32 %v4842, %v4712
    %v4844 = vadd.f32 %v4843, %v4720
    %v4845 = vadd.f32 %v4844, %v4728
    %v4846 = vadd.f32 %v4845, %v4736
    %v4847 = vadd.f32 %v4846, %v4744
    %v4848 = vadd.f32 %v4847, %v4752
    %v4849 = vadd.f32 %v4848, %v4760
    %v4850 = vadd.f32 %v4849, %v4768
    %v4851 = vrot.slane %v4850, 4
    %v4852 = vadd.f32 %v4850, %v4851
    %v4853 = vrot.slane %v4852, 2
    %v4854 = vadd.f32 %v4852, %v4853
    %v4855 = vrot.slane %v4854, 1
    %v4856 = vadd.f32 %v4854, %v4855
    %v4857 = vadd.f32 %v4649, %v4657
    %v4858 = vadd.f32 %v4857, %v4665
    %v4859 = vadd.f32 %v4858, %v4673
    %v4860 = vadd.f32 %v4859, %v4681
    %v4861 = vadd.f32 %v4860, %v4689
    %v4862 = vadd.f32 %v4861, %v4697
    %v4863 = vadd.f32 %v4862, %v4705
    %v4864 = vadd.f32 %v4863, %v4713
    %v4865 = vadd.f32 %v4864, %v4721
    %v4866 = vadd.f32 %v4865, %v4729
    %v4867 = vadd.f32 %v4866, %v4737
    %v4868 = vadd.f32 %v4867, %v4745
    %v4869 = vadd.f32 %v4868, %v4753
    %v4870 = vadd.f32 %v4869, %v4761
    %v4871 = vadd.f32 %v4870, %v4769
    %v4872 = vrot.slane %v4871, 4
    %v4873 = vadd.f32 %v4871, %v4872
    %v4874 = vrot.slane %v4873, 2
    %v4875 = vadd.f32 %v4873, %v4874
    %v4876 = vrot.slane %v4875, 1
    %v4877 = vadd.f32 %v4875, %v4876
    %v4878 = vadd.f32 %v4650, %v4658
    %v4879 = vadd.f32 %v4878, %v4666
    %v4880 = vadd.f32 %v4879, %v4674
    %v4881 = vadd.f32 %v4880, %v4682
    %v4882 = vadd.f32 %v4881, %v4690
    %v4883 = vadd.f32 %v4882, %v4698
    %v4884 = vadd.f32 %v4883, %v4706
    %v4885 = vadd.f32 %v4884, %v4714
    %v4886 = vadd.f32 %v4885, %v4722
    %v4887 = vadd.f32 %v4886, %v4730
    %v4888 = vadd.f32 %v4887, %v4738
    %v4889 = vadd.f32 %v4888, %v4746
    %v4890 = vadd.f32 %v4889, %v4754
    %v4891 = vadd.f32 %v4890, %v4762
    %v4892 = vadd.f32 %v4891, %v4770
    %v4893 = vrot.slane %v4892, 4
    %v4894 = vadd.f32 %v4892, %v4893
    %v4895 = vrot.slane %v4894, 2
    %v4896 = vadd.f32 %v4894, %v4895
    %v4897 = vrot.slane %v4896, 1
    %v4898 = vadd.f32 %v4896, %v4897
    %v4899 = vadd.f32 %v4651, %v4659
    %v4900 = vadd.f32 %v4899, %v4667
    %v4901 = vadd.f32 %v4900, %v4675
    %v4902 = vadd.f32 %v4901, %v4683
    %v4903 = vadd.f32 %v4902, %v4691
    %v4904 = vadd.f32 %v4903, %v4699
    %v4905 = vadd.f32 %v4904, %v4707
    %v4906 = vadd.f32 %v4905, %v4715
    %v4907 = vadd.f32 %v4906, %v4723
    %v4908 = vadd.f32 %v4907, %v4731
    %v4909 = vadd.f32 %v4908, %v4739
    %v4910 = vadd.f32 %v4909, %v4747
    %v4911 = vadd.f32 %v4910, %v4755
    %v4912 = vadd.f32 %v4911, %v4763
    %v4913 = vadd.f32 %v4912, %v4771
    %v4914 = vrot.slane %v4913, 4
    %v4915 = vadd.f32 %v4913, %v4914
    %v4916 = vrot.slane %v4915, 2
    %v4917 = vadd.f32 %v4915, %v4916
    %v4918 = vrot.slane %v4917, 1
    %v4919 = vadd.f32 %v4917, %v4918
    %v4920 = vadd.f32 %v4652, %v4660
    %v4921 = vadd.f32 %v4920, %v4668
    %v4922 = vadd.f32 %v4921, %v4676
    %v4923 = vadd.f32 %v4922, %v4684
    %v4924 = vadd.f32 %v4923, %v4692
    %v4925 = vadd.f32 %v4924, %v4700
    %v4926 = vadd.f32 %v4925, %v4708
    %v4927 = vadd.f32 %v4926, %v4716
    %v4928 = vadd.f32 %v4927, %v4724
    %v4929 = vadd.f32 %v4928, %v4732
    %v4930 = vadd.f32 %v4929, %v4740
    %v4931 = vadd.f32 %v4930, %v4748
    %v4932 = vadd.f32 %v4931, %v4756
    %v4933 = vadd.f32 %v4932, %v4764
    %v4934 = vadd.f32 %v4933, %v4772
    %v4935 = vrot.slane %v4934, 4
    %v4936 = vadd.f32 %v4934, %v4935
    %v4937 = vrot.slane %v4936, 2
    %v4938 = vadd.f32 %v4936, %v4937
    %v4939 = vrot.slane %v4938, 1
    %v4940 = vadd.f32 %v4938, %v4939
    %v4941 = vmul.f32 %v4645, %v4645
    %v4942 = vmul.f32 %v4646, %v4646
    %v4943 = vmul.f32 %v4647, %v4647
    %v4944 = vmul.f32 %v4648, %v4648
    %v4945 = vmul.f32 %v4649, %v4649
    %v4946 = vmul.f32 %v4650, %v4650
    %v4947 = vmul.f32 %v4651, %v4651
    %v4948 = vmul.f32 %v4652, %v4652
    %v4949 = vmul.f32 %v4653, %v4653
    %v4950 = vmul.f32 %v4654, %v4654
    %v4951 = vmul.f32 %v4655, %v4655
    %v4952 = vmul.f32 %v4656, %v4656
    %v4953 = vmul.f32 %v4657, %v4657
    %v4954 = vmul.f32 %v4658, %v4658
    %v4955 = vmul.f32 %v4659, %v4659
    %v4956 = vmul.f32 %v4660, %v4660
    %v4957 = vmul.f32 %v4661, %v4661
    %v4958 = vmul.f32 %v4662, %v4662
    %v4959 = vmul.f32 %v4663, %v4663
    %v4960 = vmul.f32 %v4664, %v4664
    %v4961 = vmul.f32 %v4665, %v4665
    %v4962 = vmul.f32 %v4666, %v4666
    %v4963 = vmul.f32 %v4667, %v4667
    %v4964 = vmul.f32 %v4668, %v4668
    %v4965 = vmul.f32 %v4669, %v4669
    %v4966 = vmul.f32 %v4670, %v4670
    %v4967 = vmul.f32 %v4671, %v4671
    %v4968 = vmul.f32 %v4672, %v4672
    %v4969 = vmul.f32 %v4673, %v4673
    %v4970 = vmul.f32 %v4674, %v4674
    %v4971 = vmul.f32 %v4675, %v4675
    %v4972 = vmul.f32 %v4676, %v4676
    %v4973 = vmul.f32 %v4677, %v4677
    %v4974 = vmul.f32 %v4678, %v4678
    %v4975 = vmul.f32 %v4679, %v4679
    %v4976 = vmul.f32 %v4680, %v4680
    %v4977 = vmul.f32 %v4681, %v4681
    %v4978 = vmul.f32 %v4682, %v4682
    %v4979 = vmul.f32 %v4683, %v4683
    %v4980 = vmul.f32 %v4684, %v4684
    %v4981 = vmul.f32 %v4685, %v4685
    %v4982 = vmul.f32 %v4686, %v4686
    %v4983 = vmul.f32 %v4687, %v4687
    %v4984 = vmul.f32 %v4688, %v4688
    %v4985 = vmul.f32 %v4689, %v4689
    %v4986 = vmul.f32 %v4690, %v4690
    %v4987 = vmul.f32 %v4691, %v4691
    %v4988 = vmul.f32 %v4692, %v4692
    %v4989 = vmul.f32 %v4693, %v4693
    %v4990 = vmul.f32 %v4694, %v4694
    %v4991 = vmul.f32 %v4695, %v4695
    %v4992 = vmul.f32 %v4696, %v4696
    %v4993 = vmul.f32 %v4697, %v4697
    %v4994 = vmul.f32 %v4698, %v4698
    %v4995 = vmul.f32 %v4699, %v4699
    %v4996 = vmul.f32 %v4700, %v4700
    %v4997 = vmul.f32 %v4701, %v4701
    %v4998 = vmul.f32 %v4702, %v4702
    %v4999 = vmul.f32 %v4703, %v4703
    %v5000 = vmul.f32 %v4704, %v4704
    %v5001 = vmul.f32 %v4705, %v4705
    %v5002 = vmul.f32 %v4706, %v4706
    %v5003 = vmul.f32 %v4707, %v4707
    %v5004 = vmul.f32 %v4708, %v4708
    %v5005 = vmul.f32 %v4709, %v4709
    %v5006 = vmul.f32 %v4710, %v4710
    %v5007 = vmul.f32 %v4711, %v4711
    %v5008 = vmul.f32 %v4712, %v4712
    %v5009 = vmul.f32 %v4713, %v4713
    %v5010 = vmul.f32 %v4714, %v4714
    %v5011 = vmul.f32 %v4715, %v4715
    %v5012 = vmul.f32 %v4716, %v4716
    %v5013 = vmul.f32 %v4717, %v4717
    %v5014 = vmul.f32 %v4718, %v4718
    %v5015 = vmul.f32 %v4719, %v4719
    %v5016 = vmul.f32 %v4720, %v4720
    %v5017 = vmul.f32 %v4721, %v4721
    %v5018 = vmul.f32 %v4722, %v4722
    %v5019 = vmul.f32 %v4723, %v4723
    %v5020 = vmul.f32 %v4724, %v4724
    %v5021 = vmul.f32 %v4725, %v4725
    %v5022 = vmul.f32 %v4726, %v4726
    %v5023 = vmul.f32 %v4727, %v4727
    %v5024 = vmul.f32 %v4728, %v4728
    %v5025 = vmul.f32 %v4729, %v4729
    %v5026 = vmul.f32 %v4730, %v4730
    %v5027 = vmul.f32 %v4731, %v4731
    %v5028 = vmul.f32 %v4732, %v4732
    %v5029 = vmul.f32 %v4733, %v4733
    %v5030 = vmul.f32 %v4734, %v4734
    %v5031 = vmul.f32 %v4735, %v4735
    %v5032 = vmul.f32 %v4736, %v4736
    %v5033 = vmul.f32 %v4737, %v4737
    %v5034 = vmul.f32 %v4738, %v4738
    %v5035 = vmul.f32 %v4739, %v4739
    %v5036 = vmul.f32 %v4740, %v4740
    %v5037 = vmul.f32 %v4741, %v4741
    %v5038 = vmul.f32 %v4742, %v4742
    %v5039 = vmul.f32 %v4743, %v4743
    %v5040 = vmul.f32 %v4744, %v4744
    %v5041 = vmul.f32 %v4745, %v4745
    %v5042 = vmul.f32 %v4746, %v4746
    %v5043 = vmul.f32 %v4747, %v4747
    %v5044 = vmul.f32 %v4748, %v4748
    %v5045 = vmul.f32 %v4749, %v4749
    %v5046 = vmul.f32 %v4750, %v4750
    %v5047 = vmul.f32 %v4751, %v4751
    %v5048 = vmul.f32 %v4752, %v4752
    %v5049 = vmul.f32 %v4753, %v4753
    %v5050 = vmul.f32 %v4754, %v4754
    %v5051 = vmul.f32 %v4755, %v4755
    %v5052 = vmul.f32 %v4756, %v4756
    %v5053 = vmul.f32 %v4757, %v4757
    %v5054 = vmul.f32 %v4758, %v4758
    %v5055 = vmul.f32 %v4759, %v4759
    %v5056 = vmul.f32 %v4760, %v4760
    %v5057 = vmul.f32 %v4761, %v4761
    %v5058 = vmul.f32 %v4762, %v4762
    %v5059 = vmul.f32 %v4763, %v4763
    %v5060 = vmul.f32 %v4764, %v4764
    %v5061 = vmul.f32 %v4765, %v4765
    %v5062 = vmul.f32 %v4766, %v4766
    %v5063 = vmul.f32 %v4767, %v4767
    %v5064 = vmul.f32 %v4768, %v4768
    %v5065 = vmul.f32 %v4769, %v4769
    %v5066 = vmul.f32 %v4770, %v4770
    %v5067 = vmul.f32 %v4771, %v4771
    %v5068 = vmul.f32 %v4772, %v4772
    %v5069 = vadd.f32 %v4941, %v4949
    %v5070 = vadd.f32 %v5069, %v4957
    %v5071 = vadd.f32 %v5070, %v4965
    %v5072 = vadd.f32 %v5071, %v4973
    %v5073 = vadd.f32 %v5072, %v4981
    %v5074 = vadd.f32 %v5073, %v4989
    %v5075 = vadd.f32 %v5074, %v4997
    %v5076 = vadd.f32 %v5075, %v5005
    %v5077 = vadd.f32 %v5076, %v5013
    %v5078 = vadd.f32 %v5077, %v5021
    %v5079 = vadd.f32 %v5078, %v5029
    %v5080 = vadd.f32 %v5079, %v5037
    %v5081 = vadd.f32 %v5080, %v5045
    %v5082 = vadd.f32 %v5081, %v5053
    %v5083 = vadd.f32 %v5082, %v5061
    %v5084 = vrot.slane %v5083, 4
    %v5085 = vadd.f32 %v5083, %v5084
    %v5086 = vrot.slane %v5085, 2
    %v5087 = vadd.f32 %v5085, %v5086
    %v5088 = vrot.slane %v5087, 1
    %v5089 = vadd.f32 %v5087, %v5088
    %v5090 = vadd.f32 %v4942, %v4950
    %v5091 = vadd.f32 %v5090, %v4958
    %v5092 = vadd.f32 %v5091, %v4966
    %v5093 = vadd.f32 %v5092, %v4974
    %v5094 = vadd.f32 %v5093, %v4982
    %v5095 = vadd.f32 %v5094, %v4990
    %v5096 = vadd.f32 %v5095, %v4998
    %v5097 = vadd.f32 %v5096, %v5006
    %v5098 = vadd.f32 %v5097, %v5014
    %v5099 = vadd.f32 %v5098, %v5022
    %v5100 = vadd.f32 %v5099, %v5030
    %v5101 = vadd.f32 %v5100, %v5038
    %v5102 = vadd.f32 %v5101, %v5046
    %v5103 = vadd.f32 %v5102, %v5054
    %v5104 = vadd.f32 %v5103, %v5062
    %v5105 = vrot.slane %v5104, 4
    %v5106 = vadd.f32 %v5104, %v5105
    %v5107 = vrot.slane %v5106, 2
    %v5108 = vadd.f32 %v5106, %v5107
    %v5109 = vrot.slane %v5108, 1
    %v5110 = vadd.f32 %v5108, %v5109
    %v5111 = vadd.f32 %v4943, %v4951
    %v5112 = vadd.f32 %v5111, %v4959
    %v5113 = vadd.f32 %v5112, %v4967
    %v5114 = vadd.f32 %v5113, %v4975
    %v5115 = vadd.f32 %v5114, %v4983
    %v5116 = vadd.f32 %v5115, %v4991
    %v5117 = vadd.f32 %v5116, %v4999
    %v5118 = vadd.f32 %v5117, %v5007
    %v5119 = vadd.f32 %v5118, %v5015
    %v5120 = vadd.f32 %v5119, %v5023
    %v5121 = vadd.f32 %v5120, %v5031
    %v5122 = vadd.f32 %v5121, %v5039
    %v5123 = vadd.f32 %v5122, %v5047
    %v5124 = vadd.f32 %v5123, %v5055
    %v5125 = vadd.f32 %v5124, %v5063
    %v5126 = vrot.slane %v5125, 4
    %v5127 = vadd.f32 %v5125, %v5126
    %v5128 = vrot.slane %v5127, 2
    %v5129 = vadd.f32 %v5127, %v5128
    %v5130 = vrot.slane %v5129, 1
    %v5131 = vadd.f32 %v5129, %v5130
    %v5132 = vadd.f32 %v4944, %v4952
    %v5133 = vadd.f32 %v5132, %v4960
    %v5134 = vadd.f32 %v5133, %v4968
    %v5135 = vadd.f32 %v5134, %v4976
    %v5136 = vadd.f32 %v5135, %v4984
    %v5137 = vadd.f32 %v5136, %v4992
    %v5138 = vadd.f32 %v5137, %v5000
    %v5139 = vadd.f32 %v5138, %v5008
    %v5140 = vadd.f32 %v5139, %v5016
    %v5141 = vadd.f32 %v5140, %v5024
    %v5142 = vadd.f32 %v5141, %v5032
    %v5143 = vadd.f32 %v5142, %v5040
    %v5144 = vadd.f32 %v5143, %v5048
    %v5145 = vadd.f32 %v5144, %v5056
    %v5146 = vadd.f32 %v5145, %v5064
    %v5147 = vrot.slane %v5146, 4
    %v5148 = vadd.f32 %v5146, %v5147
    %v5149 = vrot.slane %v5148, 2
    %v5150 = vadd.f32 %v5148, %v5149
    %v5151 = vrot.slane %v5150, 1
    %v5152 = vadd.f32 %v5150, %v5151
    %v5153 = vadd.f32 %v4945, %v4953
    %v5154 = vadd.f32 %v5153, %v4961
    %v5155 = vadd.f32 %v5154, %v4969
    %v5156 = vadd.f32 %v5155, %v4977
    %v5157 = vadd.f32 %v5156, %v4985
    %v5158 = vadd.f32 %v5157, %v4993
    %v5159 = vadd.f32 %v5158, %v5001
    %v5160 = vadd.f32 %v5159, %v5009
    %v5161 = vadd.f32 %v5160, %v5017
    %v5162 = vadd.f32 %v5161, %v5025
    %v5163 = vadd.f32 %v5162, %v5033
    %v5164 = vadd.f32 %v5163, %v5041
    %v5165 = vadd.f32 %v5164, %v5049
    %v5166 = vadd.f32 %v5165, %v5057
    %v5167 = vadd.f32 %v5166, %v5065
    %v5168 = vrot.slane %v5167, 4
    %v5169 = vadd.f32 %v5167, %v5168
    %v5170 = vrot.slane %v5169, 2
    %v5171 = vadd.f32 %v5169, %v5170
    %v5172 = vrot.slane %v5171, 1
    %v5173 = vadd.f32 %v5171, %v5172
    %v5174 = vadd.f32 %v4946, %v4954
    %v5175 = vadd.f32 %v5174, %v4962
    %v5176 = vadd.f32 %v5175, %v4970
    %v5177 = vadd.f32 %v5176, %v4978
    %v5178 = vadd.f32 %v5177, %v4986
    %v5179 = vadd.f32 %v5178, %v4994
    %v5180 = vadd.f32 %v5179, %v5002
    %v5181 = vadd.f32 %v5180, %v5010
    %v5182 = vadd.f32 %v5181, %v5018
    %v5183 = vadd.f32 %v5182, %v5026
    %v5184 = vadd.f32 %v5183, %v5034
    %v5185 = vadd.f32 %v5184, %v5042
    %v5186 = vadd.f32 %v5185, %v5050
    %v5187 = vadd.f32 %v5186, %v5058
    %v5188 = vadd.f32 %v5187, %v5066
    %v5189 = vrot.slane %v5188, 4
    %v5190 = vadd.f32 %v5188, %v5189
    %v5191 = vrot.slane %v5190, 2
    %v5192 = vadd.f32 %v5190, %v5191
    %v5193 = vrot.slane %v5192, 1
    %v5194 = vadd.f32 %v5192, %v5193
    %v5195 = vadd.f32 %v4947, %v4955
    %v5196 = vadd.f32 %v5195, %v4963
    %v5197 = vadd.f32 %v5196, %v4971
    %v5198 = vadd.f32 %v5197, %v4979
    %v5199 = vadd.f32 %v5198, %v4987
    %v5200 = vadd.f32 %v5199, %v4995
    %v5201 = vadd.f32 %v5200, %v5003
    %v5202 = vadd.f32 %v5201, %v5011
    %v5203 = vadd.f32 %v5202, %v5019
    %v5204 = vadd.f32 %v5203, %v5027
    %v5205 = vadd.f32 %v5204, %v5035
    %v5206 = vadd.f32 %v5205, %v5043
    %v5207 = vadd.f32 %v5206, %v5051
    %v5208 = vadd.f32 %v5207, %v5059
    %v5209 = vadd.f32 %v5208, %v5067
    %v5210 = vrot.slane %v5209, 4
    %v5211 = vadd.f32 %v5209, %v5210
    %v5212 = vrot.slane %v5211, 2
    %v5213 = vadd.f32 %v5211, %v5212
    %v5214 = vrot.slane %v5213, 1
    %v5215 = vadd.f32 %v5213, %v5214
    %v5216 = vadd.f32 %v4948, %v4956
    %v5217 = vadd.f32 %v5216, %v4964
    %v5218 = vadd.f32 %v5217, %v4972
    %v5219 = vadd.f32 %v5218, %v4980
    %v5220 = vadd.f32 %v5219, %v4988
    %v5221 = vadd.f32 %v5220, %v4996
    %v5222 = vadd.f32 %v5221, %v5004
    %v5223 = vadd.f32 %v5222, %v5012
    %v5224 = vadd.f32 %v5223, %v5020
    %v5225 = vadd.f32 %v5224, %v5028
    %v5226 = vadd.f32 %v5225, %v5036
    %v5227 = vadd.f32 %v5226, %v5044
    %v5228 = vadd.f32 %v5227, %v5052
    %v5229 = vadd.f32 %v5228, %v5060
    %v5230 = vadd.f32 %v5229, %v5068
    %v5231 = vrot.slane %v5230, 4
    %v5232 = vadd.f32 %v5230, %v5231
    %v5233 = vrot.slane %v5232, 2
    %v5234 = vadd.f32 %v5232, %v5233
    %v5235 = vrot.slane %v5234, 1
    %v5236 = vadd.f32 %v5234, %v5235
    %v5237 = vmul.f32 %v4793, 0.0078125
    %v5238 = vmul.f32 %v4814, 0.0078125
    %v5239 = vmul.f32 %v4835, 0.0078125
    %v5240 = vmul.f32 %v4856, 0.0078125
    %v5241 = vmul.f32 %v4877, 0.0078125
    %v5242 = vmul.f32 %v4898, 0.0078125
    %v5243 = vmul.f32 %v4919, 0.0078125
    %v5244 = vmul.f32 %v4940, 0.0078125
    %v5245 = vmul.f32 %v5089, 0.0078125
    %v5246 = vmul.f32 %v5110, 0.0078125
    %v5247 = vmul.f32 %v5131, 0.0078125
    %v5248 = vmul.f32 %v5152, 0.0078125
    %v5249 = vmul.f32 %v5173, 0.0078125
    %v5250 = vmul.f32 %v5194, 0.0078125
    %v5251 = vmul.f32 %v5215, 0.0078125
    %v5252 = vmul.f32 %v5236, 0.0078125
    %v5253 = vmul.f32 %v5237, %v5237
    %v5254 = vmul.f32 %v5238, %v5238
    %v5255 = vmul.f32 %v5239, %v5239
    %v5256 = vmul.f32 %v5240, %v5240
    %v5257 = vmul.f32 %v5241, %v5241
    %v5258 = vmul.f32 %v5242, %v5242
    %v5259 = vmul.f32 %v5243, %v5243
    %v5260 = vmul.f32 %v5244, %v5244
    %v5261 = vsub.f32 %v5245, %v5253
    %v5262 = vsub.f32 %v5246, %v5254
    %v5263 = vsub.f32 %v5247, %v5255
    %v5264 = vsub.f32 %v5248, %v5256
    %v5265 = vsub.f32 %v5249, %v5257
    %v5266 = vsub.f32 %v5250, %v5258
    %v5267 = vsub.f32 %v5251, %v5259
    %v5268 = vsub.f32 %v5252, %v5260
    %v5269 = vmax.f32 %v5261, 0.0
    %v5270 = vmax.f32 %v5262, 0.0
    %v5271 = vmax.f32 %v5263, 0.0
    %v5272 = vmax.f32 %v5264, 0.0
    %v5273 = vmax.f32 %v5265, 0.0
    %v5274 = vmax.f32 %v5266, 0.0
    %v5275 = vmax.f32 %v5267, 0.0
    %v5276 = vmax.f32 %v5268, 0.0
    %v5277 = vsub.f32 %v4645, %v5237
    %v5278 = vsub.f32 %v4646, %v5238
    %v5279 = vsub.f32 %v4647, %v5239
    %v5280 = vsub.f32 %v4648, %v5240
    %v5281 = vsub.f32 %v4649, %v5241
    %v5282 = vsub.f32 %v4650, %v5242
    %v5283 = vsub.f32 %v4651, %v5243
    %v5284 = vsub.f32 %v4652, %v5244
    %v5285 = vsub.f32 %v4653, %v5237
    %v5286 = vsub.f32 %v4654, %v5238
    %v5287 = vsub.f32 %v4655, %v5239
    %v5288 = vsub.f32 %v4656, %v5240
    %v5289 = vsub.f32 %v4657, %v5241
    %v5290 = vsub.f32 %v4658, %v5242
    %v5291 = vsub.f32 %v4659, %v5243
    %v5292 = vsub.f32 %v4660, %v5244
    %v5293 = vsub.f32 %v4661, %v5237
    %v5294 = vsub.f32 %v4662, %v5238
    %v5295 = vsub.f32 %v4663, %v5239
    %v5296 = vsub.f32 %v4664, %v5240
    %v5297 = vsub.f32 %v4665, %v5241
    %v5298 = vsub.f32 %v4666, %v5242
    %v5299 = vsub.f32 %v4667, %v5243
    %v5300 = vsub.f32 %v4668, %v5244
    %v5301 = vsub.f32 %v4669, %v5237
    %v5302 = vsub.f32 %v4670, %v5238
    %v5303 = vsub.f32 %v4671, %v5239
    %v5304 = vsub.f32 %v4672, %v5240
    %v5305 = vsub.f32 %v4673, %v5241
    %v5306 = vsub.f32 %v4674, %v5242
    %v5307 = vsub.f32 %v4675, %v5243
    %v5308 = vsub.f32 %v4676, %v5244
    %v5309 = vsub.f32 %v4677, %v5237
    %v5310 = vsub.f32 %v4678, %v5238
    %v5311 = vsub.f32 %v4679, %v5239
    %v5312 = vsub.f32 %v4680, %v5240
    %v5313 = vsub.f32 %v4681, %v5241
    %v5314 = vsub.f32 %v4682, %v5242
    %v5315 = vsub.f32 %v4683, %v5243
    %v5316 = vsub.f32 %v4684, %v5244
    %v5317 = vsub.f32 %v4685, %v5237
    %v5318 = vsub.f32 %v4686, %v5238
    %v5319 = vsub.f32 %v4687, %v5239
    %v5320 = vsub.f32 %v4688, %v5240
    %v5321 = vsub.f32 %v4689, %v5241
    %v5322 = vsub.f32 %v4690, %v5242
    %v5323 = vsub.f32 %v4691, %v5243
    %v5324 = vsub.f32 %v4692, %v5244
    %v5325 = vsub.f32 %v4693, %v5237
    %v5326 = vsub.f32 %v4694, %v5238
    %v5327 = vsub.f32 %v4695, %v5239
    %v5328 = vsub.f32 %v4696, %v5240
    %v5329 = vsub.f32 %v4697, %v5241
    %v5330 = vsub.f32 %v4698, %v5242
    %v5331 = vsub.f32 %v4699, %v5243
    %v5332 = vsub.f32 %v4700, %v5244
    %v5333 = vsub.f32 %v4701, %v5237
    %v5334 = vsub.f32 %v4702, %v5238
    %v5335 = vsub.f32 %v4703, %v5239
    %v5336 = vsub.f32 %v4704, %v5240
    %v5337 = vsub.f32 %v4705, %v5241
    %v5338 = vsub.f32 %v4706, %v5242
    %v5339 = vsub.f32 %v4707, %v5243
    %v5340 = vsub.f32 %v4708, %v5244
    %v5341 = vsub.f32 %v4709, %v5237
    %v5342 = vsub.f32 %v4710, %v5238
    %v5343 = vsub.f32 %v4711, %v5239
    %v5344 = vsub.f32 %v4712, %v5240
    %v5345 = vsub.f32 %v4713, %v5241
    %v5346 = vsub.f32 %v4714, %v5242
    %v5347 = vsub.f32 %v4715, %v5243
    %v5348 = vsub.f32 %v4716, %v5244
    %v5349 = vsub.f32 %v4717, %v5237
    %v5350 = vsub.f32 %v4718, %v5238
    %v5351 = vsub.f32 %v4719, %v5239
    %v5352 = vsub.f32 %v4720, %v5240
    %v5353 = vsub.f32 %v4721, %v5241
    %v5354 = vsub.f32 %v4722, %v5242
    %v5355 = vsub.f32 %v4723, %v5243
    %v5356 = vsub.f32 %v4724, %v5244
    %v5357 = vsub.f32 %v4725, %v5237
    %v5358 = vsub.f32 %v4726, %v5238
    %v5359 = vsub.f32 %v4727, %v5239
    %v5360 = vsub.f32 %v4728, %v5240
    %v5361 = vsub.f32 %v4729, %v5241
    %v5362 = vsub.f32 %v4730, %v5242
    %v5363 = vsub.f32 %v4731, %v5243
    %v5364 = vsub.f32 %v4732, %v5244
    %v5365 = vsub.f32 %v4733, %v5237
    %v5366 = vsub.f32 %v4734, %v5238
    %v5367 = vsub.f32 %v4735, %v5239
    %v5368 = vsub.f32 %v4736, %v5240
    %v5369 = vsub.f32 %v4737, %v5241
    %v5370 = vsub.f32 %v4738, %v5242
    %v5371 = vsub.f32 %v4739, %v5243
    %v5372 = vsub.f32 %v4740, %v5244
    %v5373 = vsub.f32 %v4741, %v5237
    %v5374 = vsub.f32 %v4742, %v5238
    %v5375 = vsub.f32 %v4743, %v5239
    %v5376 = vsub.f32 %v4744, %v5240
    %v5377 = vsub.f32 %v4745, %v5241
    %v5378 = vsub.f32 %v4746, %v5242
    %v5379 = vsub.f32 %v4747, %v5243
    %v5380 = vsub.f32 %v4748, %v5244
    %v5381 = vsub.f32 %v4749, %v5237
    %v5382 = vsub.f32 %v4750, %v5238
    %v5383 = vsub.f32 %v4751, %v5239
    %v5384 = vsub.f32 %v4752, %v5240
    %v5385 = vsub.f32 %v4753, %v5241
    %v5386 = vsub.f32 %v4754, %v5242
    %v5387 = vsub.f32 %v4755, %v5243
    %v5388 = vsub.f32 %v4756, %v5244
    %v5389 = vsub.f32 %v4757, %v5237
    %v5390 = vsub.f32 %v4758, %v5238
    %v5391 = vsub.f32 %v4759, %v5239
    %v5392 = vsub.f32 %v4760, %v5240
    %v5393 = vsub.f32 %v4761, %v5241
    %v5394 = vsub.f32 %v4762, %v5242
    %v5395 = vsub.f32 %v4763, %v5243
    %v5396 = vsub.f32 %v4764, %v5244
    %v5397 = vsub.f32 %v4765, %v5237
    %v5398 = vsub.f32 %v4766, %v5238
    %v5399 = vsub.f32 %v4767, %v5239
    %v5400 = vsub.f32 %v4768, %v5240
    %v5401 = vsub.f32 %v4769, %v5241
    %v5402 = vsub.f32 %v4770, %v5242
    %v5403 = vsub.f32 %v4771, %v5243
    %v5404 = vsub.f32 %v4772, %v5244
    %v5405 = vadd.f32 %v5269, 1e-05
    %v5406 = vadd.f32 %v5270, 1e-05
    %v5407 = vadd.f32 %v5271, 1e-05
    %v5408 = vadd.f32 %v5272, 1e-05
    %v5409 = vadd.f32 %v5273, 1e-05
    %v5410 = vadd.f32 %v5274, 1e-05
    %v5411 = vadd.f32 %v5275, 1e-05
    %v5412 = vadd.f32 %v5276, 1e-05
    %v5413 = vrsqrt.pop %v5405
    %v5414 = vrsqrt.pop %v5406
    %v5415 = vrsqrt.pop %v5407
    %v5416 = vrsqrt.pop %v5408
    %v5417 = vrsqrt.pop %v5409
    %v5418 = vrsqrt.pop %v5410
    %v5419 = vrsqrt.pop %v5411
    %v5420 = vrsqrt.pop %v5412
    %v5421 = vmul.f32 %v5277, %v5413
    %v5422 = vmul.f32 %v5278, %v5414
    %v5423 = vmul.f32 %v5279, %v5415
    %v5424 = vmul.f32 %v5280, %v5416
    %v5425 = vmul.f32 %v5281, %v5417
    %v5426 = vmul.f32 %v5282, %v5418
    %v5427 = vmul.f32 %v5283, %v5419
    %v5428 = vmul.f32 %v5284, %v5420
    %v5429 = vmul.f32 %v5285, %v5413
    %v5430 = vmul.f32 %v5286, %v5414
    %v5431 = vmul.f32 %v5287, %v5415
    %v5432 = vmul.f32 %v5288, %v5416
    %v5433 = vmul.f32 %v5289, %v5417
    %v5434 = vmul.f32 %v5290, %v5418
    %v5435 = vmul.f32 %v5291, %v5419
    %v5436 = vmul.f32 %v5292, %v5420
    %v5437 = vmul.f32 %v5293, %v5413
    %v5438 = vmul.f32 %v5294, %v5414
    %v5439 = vmul.f32 %v5295, %v5415
    %v5440 = vmul.f32 %v5296, %v5416
    %v5441 = vmul.f32 %v5297, %v5417
    %v5442 = vmul.f32 %v5298, %v5418
    %v5443 = vmul.f32 %v5299, %v5419
    %v5444 = vmul.f32 %v5300, %v5420
    %v5445 = vmul.f32 %v5301, %v5413
    %v5446 = vmul.f32 %v5302, %v5414
    %v5447 = vmul.f32 %v5303, %v5415
    %v5448 = vmul.f32 %v5304, %v5416
    %v5449 = vmul.f32 %v5305, %v5417
    %v5450 = vmul.f32 %v5306, %v5418
    %v5451 = vmul.f32 %v5307, %v5419
    %v5452 = vmul.f32 %v5308, %v5420
    %v5453 = vmul.f32 %v5309, %v5413
    %v5454 = vmul.f32 %v5310, %v5414
    %v5455 = vmul.f32 %v5311, %v5415
    %v5456 = vmul.f32 %v5312, %v5416
    %v5457 = vmul.f32 %v5313, %v5417
    %v5458 = vmul.f32 %v5314, %v5418
    %v5459 = vmul.f32 %v5315, %v5419
    %v5460 = vmul.f32 %v5316, %v5420
    %v5461 = vmul.f32 %v5317, %v5413
    %v5462 = vmul.f32 %v5318, %v5414
    %v5463 = vmul.f32 %v5319, %v5415
    %v5464 = vmul.f32 %v5320, %v5416
    %v5465 = vmul.f32 %v5321, %v5417
    %v5466 = vmul.f32 %v5322, %v5418
    %v5467 = vmul.f32 %v5323, %v5419
    %v5468 = vmul.f32 %v5324, %v5420
    %v5469 = vmul.f32 %v5325, %v5413
    %v5470 = vmul.f32 %v5326, %v5414
    %v5471 = vmul.f32 %v5327, %v5415
    %v5472 = vmul.f32 %v5328, %v5416
    %v5473 = vmul.f32 %v5329, %v5417
    %v5474 = vmul.f32 %v5330, %v5418
    %v5475 = vmul.f32 %v5331, %v5419
    %v5476 = vmul.f32 %v5332, %v5420
    %v5477 = vmul.f32 %v5333, %v5413
    %v5478 = vmul.f32 %v5334, %v5414
    %v5479 = vmul.f32 %v5335, %v5415
    %v5480 = vmul.f32 %v5336, %v5416
    %v5481 = vmul.f32 %v5337, %v5417
    %v5482 = vmul.f32 %v5338, %v5418
    %v5483 = vmul.f32 %v5339, %v5419
    %v5484 = vmul.f32 %v5340, %v5420
    %v5485 = vmul.f32 %v5341, %v5413
    %v5486 = vmul.f32 %v5342, %v5414
    %v5487 = vmul.f32 %v5343, %v5415
    %v5488 = vmul.f32 %v5344, %v5416
    %v5489 = vmul.f32 %v5345, %v5417
    %v5490 = vmul.f32 %v5346, %v5418
    %v5491 = vmul.f32 %v5347, %v5419
    %v5492 = vmul.f32 %v5348, %v5420
    %v5493 = vmul.f32 %v5349, %v5413
    %v5494 = vmul.f32 %v5350, %v5414
    %v5495 = vmul.f32 %v5351, %v5415
    %v5496 = vmul.f32 %v5352, %v5416
    %v5497 = vmul.f32 %v5353, %v5417
    %v5498 = vmul.f32 %v5354, %v5418
    %v5499 = vmul.f32 %v5355, %v5419
    %v5500 = vmul.f32 %v5356, %v5420
    %v5501 = vmul.f32 %v5357, %v5413
    %v5502 = vmul.f32 %v5358, %v5414
    %v5503 = vmul.f32 %v5359, %v5415
    %v5504 = vmul.f32 %v5360, %v5416
    %v5505 = vmul.f32 %v5361, %v5417
    %v5506 = vmul.f32 %v5362, %v5418
    %v5507 = vmul.f32 %v5363, %v5419
    %v5508 = vmul.f32 %v5364, %v5420
    %v5509 = vmul.f32 %v5365, %v5413
    %v5510 = vmul.f32 %v5366, %v5414
    %v5511 = vmul.f32 %v5367, %v5415
    %v5512 = vmul.f32 %v5368, %v5416
    %v5513 = vmul.f32 %v5369, %v5417
    %v5514 = vmul.f32 %v5370, %v5418
    %v5515 = vmul.f32 %v5371, %v5419
    %v5516 = vmul.f32 %v5372, %v5420
    %v5517 = vmul.f32 %v5373, %v5413
    %v5518 = vmul.f32 %v5374, %v5414
    %v5519 = vmul.f32 %v5375, %v5415
    %v5520 = vmul.f32 %v5376, %v5416
    %v5521 = vmul.f32 %v5377, %v5417
    %v5522 = vmul.f32 %v5378, %v5418
    %v5523 = vmul.f32 %v5379, %v5419
    %v5524 = vmul.f32 %v5380, %v5420
    %v5525 = vmul.f32 %v5381, %v5413
    %v5526 = vmul.f32 %v5382, %v5414
    %v5527 = vmul.f32 %v5383, %v5415
    %v5528 = vmul.f32 %v5384, %v5416
    %v5529 = vmul.f32 %v5385, %v5417
    %v5530 = vmul.f32 %v5386, %v5418
    %v5531 = vmul.f32 %v5387, %v5419
    %v5532 = vmul.f32 %v5388, %v5420
    %v5533 = vmul.f32 %v5389, %v5413
    %v5534 = vmul.f32 %v5390, %v5414
    %v5535 = vmul.f32 %v5391, %v5415
    %v5536 = vmul.f32 %v5392, %v5416
    %v5537 = vmul.f32 %v5393, %v5417
    %v5538 = vmul.f32 %v5394, %v5418
    %v5539 = vmul.f32 %v5395, %v5419
    %v5540 = vmul.f32 %v5396, %v5420
    %v5541 = vmul.f32 %v5397, %v5413
    %v5542 = vmul.f32 %v5398, %v5414
    %v5543 = vmul.f32 %v5399, %v5415
    %v5544 = vmul.f32 %v5400, %v5416
    %v5545 = vmul.f32 %v5401, %v5417
    %v5546 = vmul.f32 %v5402, %v5418
    %v5547 = vmul.f32 %v5403, %v5419
    %v5548 = vmul.f32 %v5404, %v5420
    %v5549 = vpack.c.bf16 %v5429, %v5421
    %v5550 = vpack.c.bf16 %v5430, %v5422
    %v5551 = vpack.c.bf16 %v5431, %v5423
    %v5552 = vpack.c.bf16 %v5432, %v5424
    %v5553 = vpack.c.bf16 %v5433, %v5425
    %v5554 = vpack.c.bf16 %v5434, %v5426
    %v5555 = vpack.c.bf16 %v5435, %v5427
    %v5556 = vpack.c.bf16 %v5436, %v5428
    %v5557 = vpack.c.bf16 %v5445, %v5437
    %v5558 = vpack.c.bf16 %v5446, %v5438
    %v5559 = vpack.c.bf16 %v5447, %v5439
    %v5560 = vpack.c.bf16 %v5448, %v5440
    %v5561 = vpack.c.bf16 %v5449, %v5441
    %v5562 = vpack.c.bf16 %v5450, %v5442
    %v5563 = vpack.c.bf16 %v5451, %v5443
    %v5564 = vpack.c.bf16 %v5452, %v5444
    %v5565 = vpack.c.bf16 %v5461, %v5453
    %v5566 = vpack.c.bf16 %v5462, %v5454
    %v5567 = vpack.c.bf16 %v5463, %v5455
    %v5568 = vpack.c.bf16 %v5464, %v5456
    %v5569 = vpack.c.bf16 %v5465, %v5457
    %v5570 = vpack.c.bf16 %v5466, %v5458
    %v5571 = vpack.c.bf16 %v5467, %v5459
    %v5572 = vpack.c.bf16 %v5468, %v5460
    %v5573 = vpack.c.bf16 %v5477, %v5469
    %v5574 = vpack.c.bf16 %v5478, %v5470
    %v5575 = vpack.c.bf16 %v5479, %v5471
    %v5576 = vpack.c.bf16 %v5480, %v5472
    %v5577 = vpack.c.bf16 %v5481, %v5473
    %v5578 = vpack.c.bf16 %v5482, %v5474
    %v5579 = vpack.c.bf16 %v5483, %v5475
    %v5580 = vpack.c.bf16 %v5484, %v5476
    %v5581 = vpack.c.bf16 %v5493, %v5485
    %v5582 = vpack.c.bf16 %v5494, %v5486
    %v5583 = vpack.c.bf16 %v5495, %v5487
    %v5584 = vpack.c.bf16 %v5496, %v5488
    %v5585 = vpack.c.bf16 %v5497, %v5489
    %v5586 = vpack.c.bf16 %v5498, %v5490
    %v5587 = vpack.c.bf16 %v5499, %v5491
    %v5588 = vpack.c.bf16 %v5500, %v5492
    %v5589 = vpack.c.bf16 %v5509, %v5501
    %v5590 = vpack.c.bf16 %v5510, %v5502
    %v5591 = vpack.c.bf16 %v5511, %v5503
    %v5592 = vpack.c.bf16 %v5512, %v5504
    %v5593 = vpack.c.bf16 %v5513, %v5505
    %v5594 = vpack.c.bf16 %v5514, %v5506
    %v5595 = vpack.c.bf16 %v5515, %v5507
    %v5596 = vpack.c.bf16 %v5516, %v5508
    %v5597 = vpack.c.bf16 %v5525, %v5517
    %v5598 = vpack.c.bf16 %v5526, %v5518
    %v5599 = vpack.c.bf16 %v5527, %v5519
    %v5600 = vpack.c.bf16 %v5528, %v5520
    %v5601 = vpack.c.bf16 %v5529, %v5521
    %v5602 = vpack.c.bf16 %v5530, %v5522
    %v5603 = vpack.c.bf16 %v5531, %v5523
    %v5604 = vpack.c.bf16 %v5532, %v5524
    %v5605 = vpack.c.bf16 %v5541, %v5533
    %v5606 = vpack.c.bf16 %v5542, %v5534
    %v5607 = vpack.c.bf16 %v5543, %v5535
    %v5608 = vpack.c.bf16 %v5544, %v5536
    %v5609 = vpack.c.bf16 %v5545, %v5537
    %v5610 = vpack.c.bf16 %v5546, %v5538
    %v5611 = vpack.c.bf16 %v5547, %v5539
    %v5612 = vpack.c.bf16 %v5548, %v5540
    %v5613 = vld [vmem:[#allocation13] sm:$0xff]
    %v5614 = vld [vmem:[#allocation13 + $0x8] sm:$0xff]
    %v5615 = vld [vmem:[#allocation13 + $0x10] sm:$0xff]
    %v5616 = vld [vmem:[#allocation13 + $0x18] sm:$0xf]
    %v5617 = vld [vmem:[#allocation13 + $0x1c] sm:$0xff]
    %v5618 = vld [vmem:[#allocation13 + $0x24] sm:$0xff]
    %v5619 = vld [vmem:[#allocation13 + $0x2c] sm:$0xff]
    %v5620 = vld [vmem:[#allocation13 + $0x34] sm:$0xf]
    %v5621 = vld [vmem:[#allocation13 + $0x38] sm:$0xff]
    %v5622 = vld [vmem:[#allocation13 + $0x40] sm:$0xff]
    %v5623 = vld [vmem:[#allocation13 + $0x48] sm:$0xff]
    %v5624 = vld [vmem:[#allocation13 + $0x50] sm:$0xf]
    %v5625 = vld [vmem:[#allocation13 + $0x54] sm:$0xff]
    %v5626 = vld [vmem:[#allocation13 + $0x5c] sm:$0xff]
    %v5627 = vld [vmem:[#allocation13 + $0x64] sm:$0xff]
    %v5628 = vld [vmem:[#allocation13 + $0x6c] sm:$0xf]
    %v5629 = vld [vmem:[#allocation13 + $0x70] sm:$0xff]
    %v5630 = vld [vmem:[#allocation13 + $0x78] sm:$0xff]
    %v5631 = vld [vmem:[#allocation13 + $0x80] sm:$0xff]
    %v5632 = vld [vmem:[#allocation13 + $0x88] sm:$0xf]
    %v5633 = vld [vmem:[#allocation13 + $0x8c] sm:$0xff]
    %v5634 = vld [vmem:[#allocation13 + $0x94] sm:$0xff]
    %v5635 = vld [vmem:[#allocation13 + $0x9c] sm:$0xff]
    %v5636 = vld [vmem:[#allocation13 + $0xa4] sm:$0xf]
    %v5637 = vld [vmem:[#allocation13 + $0xa8] sm:$0xff]
    %v5638 = vld [vmem:[#allocation13 + $0xb0] sm:$0xff]
    %v5639 = vld [vmem:[#allocation13 + $0xb8] sm:$0xff]
    %v5640 = vld [vmem:[#allocation13 + $0xc0] sm:$0xf]
    %v5641 = vld [vmem:[#allocation13 + $0xc4] sm:$0xff]
    %v5642 = vld [vmem:[#allocation13 + $0xcc] sm:$0xff]
    %v5643 = vld [vmem:[#allocation13 + $0xd4] sm:$0xff]
    %v5644 = vld [vmem:[#allocation13 + $0xdc] sm:$0xf]
    %v5645 = vld [vmem:[#allocation13 + $0xe0] sm:$0xff]
    %v5646 = vld [vmem:[#allocation13 + $0xe8] sm:$0xff]
    %v5647 = vld [vmem:[#allocation13 + $0xf0] sm:$0xff]
    %v5648 = vld [vmem:[#allocation13 + $0xf8] sm:$0xf]
    %v5649 = vld [vmem:[#allocation13 + $0xfc] sm:$0xff]
    %v5650 = vld [vmem:[#allocation13 + $0x104] sm:$0xff]
    %v5651 = vld [vmem:[#allocation13 + $0x10c] sm:$0xff]
    %v5652 = vld [vmem:[#allocation13 + $0x114] sm:$0xf]
    %v5653 = vld [vmem:[#allocation13 + $0x118] sm:$0xff]
    %v5654 = vld [vmem:[#allocation13 + $0x120] sm:$0xff]
    %v5655 = vld [vmem:[#allocation13 + $0x128] sm:$0xff]
    %v5656 = vld [vmem:[#allocation13 + $0x130] sm:$0xf]
    %v5657 = vld [vmem:[#allocation13 + $0x134] sm:$0xff]
    %v5658 = vld [vmem:[#allocation13 + $0x13c] sm:$0xff]
    %v5659 = vld [vmem:[#allocation13 + $0x144] sm:$0xff]
    %v5660 = vld [vmem:[#allocation13 + $0x14c] sm:$0xf]
    %v5661 = vld [vmem:[#allocation13 + $0x150] sm:$0xff]
    %v5662 = vld [vmem:[#allocation13 + $0x158] sm:$0xff]
    %v5663 = vld [vmem:[#allocation13 + $0x160] sm:$0xff]
    %v5664 = vld [vmem:[#allocation13 + $0x168] sm:$0xf]
    %v5665 = vld [vmem:[#allocation13 + $0x16c] sm:$0xff]
    %v5666 = vld [vmem:[#allocation13 + $0x174] sm:$0xff]
    %v5667 = vld [vmem:[#allocation13 + $0x17c] sm:$0xff]
    %v5668 = vld [vmem:[#allocation13 + $0x184] sm:$0xf]
    %v5669 = vld [vmem:[#allocation13 + $0x188] sm:$0xff]
    %v5670 = vld [vmem:[#allocation13 + $0x190] sm:$0xff]
    %v5671 = vld [vmem:[#allocation13 + $0x198] sm:$0xff]
    %v5672 = vld [vmem:[#allocation13 + $0x1a0] sm:$0xf]
    %v5673 = vld [vmem:[#allocation13 + $0x1a4] sm:$0xff]
    %v5674 = vld [vmem:[#allocation13 + $0x1ac] sm:$0xff]
    %v5675 = vld [vmem:[#allocation13 + $0x1b4] sm:$0xff]
    %v5676 = vld [vmem:[#allocation13 + $0x1bc] sm:$0xf]
    %v5677 = vld [vmem:[#allocation13 + $0x1c0] sm:$0xff]
    %v5678 = vld [vmem:[#allocation13 + $0x1c8] sm:$0xff]
    %v5679 = vld [vmem:[#allocation13 + $0x1d0] sm:$0xff]
    %v5680 = vld [vmem:[#allocation13 + $0x1d8] sm:$0xf]
    %v5681 = vld [vmem:[#allocation13 + $0x1dc] sm:$0xff]
    %v5682 = vld [vmem:[#allocation13 + $0x1e4] sm:$0xff]
    %v5683 = vld [vmem:[#allocation13 + $0x1ec] sm:$0xff]
    %v5684 = vld [vmem:[#allocation13 + $0x1f4] sm:$0xf]
    %v5685 = vld [vmem:[#allocation13 + $0x1f8] sm:$0xff]
    %v5686 = vld [vmem:[#allocation13 + $0x200] sm:$0xff]
    %v5687 = vld [vmem:[#allocation13 + $0x208] sm:$0xff]
    %v5688 = vld [vmem:[#allocation13 + $0x210] sm:$0xf]
    %v5689 = vld [vmem:[#allocation13 + $0x214] sm:$0xff]
    %v5690 = vld [vmem:[#allocation13 + $0x21c] sm:$0xff]
    %v5691 = vld [vmem:[#allocation13 + $0x224] sm:$0xff]
    %v5692 = vld [vmem:[#allocation13 + $0x22c] sm:$0xf]
    %v5693 = vld [vmem:[#allocation13 + $0x230] sm:$0xff]
    %v5694 = vld [vmem:[#allocation13 + $0x238] sm:$0xff]
    %v5695 = vld [vmem:[#allocation13 + $0x240] sm:$0xff]
    %v5696 = vld [vmem:[#allocation13 + $0x248] sm:$0xf]
    %v5697 = vld [vmem:[#allocation13 + $0x24c] sm:$0xff]
    %v5698 = vld [vmem:[#allocation13 + $0x254] sm:$0xff]
    %v5699 = vld [vmem:[#allocation13 + $0x25c] sm:$0xff]
    %v5700 = vld [vmem:[#allocation13 + $0x264] sm:$0xf]
    %v5701 = vld [vmem:[#allocation13 + $0x268] sm:$0xff]
    %v5702 = vld [vmem:[#allocation13 + $0x270] sm:$0xff]
    %v5703 = vld [vmem:[#allocation13 + $0x278] sm:$0xff]
    %v5704 = vld [vmem:[#allocation13 + $0x280] sm:$0xf]
    %v5705 = vld [vmem:[#allocation13 + $0x284] sm:$0xff]
    %v5706 = vld [vmem:[#allocation13 + $0x28c] sm:$0xff]
    %v5707 = vld [vmem:[#allocation13 + $0x294] sm:$0xff]
    %v5708 = vld [vmem:[#allocation13 + $0x29c] sm:$0xf]
    %v5709 = vld [vmem:[#allocation13 + $0x2a0] sm:$0xff]
    %v5710 = vld [vmem:[#allocation13 + $0x2a8] sm:$0xff]
    %v5711 = vld [vmem:[#allocation13 + $0x2b0] sm:$0xff]
    %v5712 = vld [vmem:[#allocation13 + $0x2b8] sm:$0xf]
    %v5713 = vld [vmem:[#allocation13 + $0x2bc] sm:$0xff]
    %v5714 = vld [vmem:[#allocation13 + $0x2c4] sm:$0xff]
    %v5715 = vld [vmem:[#allocation13 + $0x2cc] sm:$0xff]
    %v5716 = vld [vmem:[#allocation13 + $0x2d4] sm:$0xf]
    %v5717 = vld [vmem:[#allocation13 + $0x2d8] sm:$0xff]
    %v5718 = vld [vmem:[#allocation13 + $0x2e0] sm:$0xff]
    %v5719 = vld [vmem:[#allocation13 + $0x2e8] sm:$0xff]
    %v5720 = vld [vmem:[#allocation13 + $0x2f0] sm:$0xf]
    %v5721 = vld [vmem:[#allocation13 + $0x2f4] sm:$0xff]
    %v5722 = vld [vmem:[#allocation13 + $0x2fc] sm:$0xff]
    %v5723 = vld [vmem:[#allocation13 + $0x304] sm:$0xff]
    %v5724 = vld [vmem:[#allocation13 + $0x30c] sm:$0xf]
    %v5725 = vld [vmem:[#allocation13 + $0x310] sm:$0xff]
    %v5726 = vld [vmem:[#allocation13 + $0x318] sm:$0xff]
    %v5727 = vld [vmem:[#allocation13 + $0x320] sm:$0xff]
    %v5728 = vld [vmem:[#allocation13 + $0x328] sm:$0xf]
    %v5729 = vld [vmem:[#allocation13 + $0x32c] sm:$0xff]
    %v5730 = vld [vmem:[#allocation13 + $0x334] sm:$0xff]
    %v5731 = vld [vmem:[#allocation13 + $0x33c] sm:$0xff]
    %v5732 = vld [vmem:[#allocation13 + $0x344] sm:$0xf]
    %v5733 = vld [vmem:[#allocation13 + $0x348] sm:$0xff]
    %v5734 = vld [vmem:[#allocation13 + $0x350] sm:$0xff]
    %v5735 = vld [vmem:[#allocation13 + $0x358] sm:$0xff]
    %v5736 = vld [vmem:[#allocation13 + $0x360] sm:$0xf]
    %v5737 = vld [vmem:[#allocation13 + $0x364] sm:$0xff]
    %v5738 = vld [vmem:[#allocation13 + $0x36c] sm:$0xff]
    %v5739 = vld [vmem:[#allocation13 + $0x374] sm:$0xff]
    %v5740 = vld [vmem:[#allocation13 + $0x37c] sm:$0xf]
    %v5741 = vld [vmem:[#allocation13 + $0x380] sm:$0xff]
    %v5742 = vld [vmem:[#allocation13 + $0x388] sm:$0xff]
    %v5743 = vld [vmem:[#allocation13 + $0x390] sm:$0xff]
    %v5744 = vld [vmem:[#allocation13 + $0x398] sm:$0xf]
    %v5745 = vld [vmem:[#allocation13 + $0x39c] sm:$0xff]
    %v5746 = vld [vmem:[#allocation13 + $0x3a4] sm:$0xff]
    %v5747 = vld [vmem:[#allocation13 + $0x3ac] sm:$0xff]
    %v5748 = vld [vmem:[#allocation13 + $0x3b4] sm:$0xf]
    %v5749 = vld [vmem:[#allocation13 + $0x3b8] sm:$0xff]
    %v5750 = vld [vmem:[#allocation13 + $0x3c0] sm:$0xff]
    %v5751 = vld [vmem:[#allocation13 + $0x3c8] sm:$0xff]
    %v5752 = vld [vmem:[#allocation13 + $0x3d0] sm:$0xf]
    %v5753 = vld [vmem:[#allocation13 + $0x3d4] sm:$0xff]
    %v5754 = vld [vmem:[#allocation13 + $0x3dc] sm:$0xff]
    %v5755 = vld [vmem:[#allocation13 + $0x3e4] sm:$0xff]
    %v5756 = vld [vmem:[#allocation13 + $0x3ec] sm:$0xf]
    %v5757 = vld [vmem:[#allocation13 + $0x3f0] sm:$0xff]
    %v5758 = vld [vmem:[#allocation13 + $0x3f8] sm:$0xff]
    %v5759 = vld [vmem:[#allocation13 + $0x400] sm:$0xff]
    %v5760 = vld [vmem:[#allocation13 + $0x408] sm:$0xf]
    %v5761 = vld [vmem:[#allocation13 + $0x40c] sm:$0xff]
    %v5762 = vld [vmem:[#allocation13 + $0x414] sm:$0xff]
    %v5763 = vld [vmem:[#allocation13 + $0x41c] sm:$0xff]
    %v5764 = vld [vmem:[#allocation13 + $0x424] sm:$0xf]
    %v5765 = vld [vmem:[#allocation13 + $0x428] sm:$0xff]
    %v5766 = vld [vmem:[#allocation13 + $0x430] sm:$0xff]
    %v5767 = vld [vmem:[#allocation13 + $0x438] sm:$0xff]
    %v5768 = vld [vmem:[#allocation13 + $0x440] sm:$0xf]
    %v5769 = vld [vmem:[#allocation13 + $0x444] sm:$0xff]
    %v5770 = vld [vmem:[#allocation13 + $0x44c] sm:$0xff]
    %v5771 = vld [vmem:[#allocation13 + $0x454] sm:$0xff]
    %v5772 = vld [vmem:[#allocation13 + $0x45c] sm:$0xf]
    %v5773 = vld [vmem:[#allocation13 + $0x460] sm:$0xff]
    %v5774 = vld [vmem:[#allocation13 + $0x468] sm:$0xff]
    %v5775 = vld [vmem:[#allocation13 + $0x470] sm:$0xff]
    %v5776 = vld [vmem:[#allocation13 + $0x478] sm:$0xf]
    %v5777 = vld [vmem:[#allocation13 + $0x47c] sm:$0xff]
    %v5778 = vld [vmem:[#allocation13 + $0x484] sm:$0xff]
    %v5779 = vld [vmem:[#allocation13 + $0x48c] sm:$0xff]
    %v5780 = vld [vmem:[#allocation13 + $0x494] sm:$0xf]
    %v5781 = vld [vmem:[#allocation13 + $0x498] sm:$0xff]
    %v5782 = vld [vmem:[#allocation13 + $0x4a0] sm:$0xff]
    %v5783 = vld [vmem:[#allocation13 + $0x4a8] sm:$0xff]
    %v5784 = vld [vmem:[#allocation13 + $0x4b0] sm:$0xf]
    %v5785 = vld [vmem:[#allocation13 + $0x4b4] sm:$0xff]
    %v5786 = vld [vmem:[#allocation13 + $0x4bc] sm:$0xff]
    %v5787 = vld [vmem:[#allocation13 + $0x4c4] sm:$0xff]
    %v5788 = vld [vmem:[#allocation13 + $0x4cc] sm:$0xf]
    %v5789 = vld [vmem:[#allocation13 + $0x4d0] sm:$0xff]
    %v5790 = vld [vmem:[#allocation13 + $0x4d8] sm:$0xff]
    %v5791 = vld [vmem:[#allocation13 + $0x4e0] sm:$0xff]
    %v5792 = vld [vmem:[#allocation13 + $0x4e8] sm:$0xf]
    %v5793 = vld [vmem:[#allocation13 + $0x4ec] sm:$0xff]
    %v5794 = vld [vmem:[#allocation13 + $0x4f4] sm:$0xff]
    %v5795 = vld [vmem:[#allocation13 + $0x4fc] sm:$0xff]
    %v5796 = vld [vmem:[#allocation13 + $0x504] sm:$0xf]
    %v5797 = vld [vmem:[#allocation13 + $0x508] sm:$0xff]
    %v5798 = vld [vmem:[#allocation13 + $0x510] sm:$0xff]
    %v5799 = vld [vmem:[#allocation13 + $0x518] sm:$0xff]
    %v5800 = vld [vmem:[#allocation13 + $0x520] sm:$0xf]
    %v5801 = vld [vmem:[#allocation13 + $0x524] sm:$0xff]
    %v5802 = vld [vmem:[#allocation13 + $0x52c] sm:$0xff]
    %v5803 = vld [vmem:[#allocation13 + $0x534] sm:$0xff]
    %v5804 = vld [vmem:[#allocation13 + $0x53c] sm:$0xf]
    %v5805 = vld [vmem:[#allocation13 + $0x540] sm:$0xff]
    %v5806 = vld [vmem:[#allocation13 + $0x548] sm:$0xff]
    %v5807 = vld [vmem:[#allocation13 + $0x550] sm:$0xff]
    %v5808 = vld [vmem:[#allocation13 + $0x558] sm:$0xf]
    %v5809 = vld [vmem:[#allocation13 + $0x55c] sm:$0xff]
    %v5810 = vld [vmem:[#allocation13 + $0x564] sm:$0xff]
    %v5811 = vld [vmem:[#allocation13 + $0x56c] sm:$0xff]
    %v5812 = vld [vmem:[#allocation13 + $0x574] sm:$0xf]
    %v5813 = vld [vmem:[#allocation13 + $0x578] sm:$0xff]
    %v5814 = vld [vmem:[#allocation13 + $0x580] sm:$0xff]
    %v5815 = vld [vmem:[#allocation13 + $0x588] sm:$0xff]
    %v5816 = vld [vmem:[#allocation13 + $0x590] sm:$0xf]
    %v5817 = vld [vmem:[#allocation13 + $0x594] sm:$0xff]
    %v5818 = vld [vmem:[#allocation13 + $0x59c] sm:$0xff]
    %v5819 = vld [vmem:[#allocation13 + $0x5a4] sm:$0xff]
    %v5820 = vld [vmem:[#allocation13 + $0x5ac] sm:$0xf]
    %v5821 = vld [vmem:[#allocation13 + $0x5b0] sm:$0xff]
    %v5822 = vld [vmem:[#allocation13 + $0x5b8] sm:$0xff]
    %v5823 = vld [vmem:[#allocation13 + $0x5c0] sm:$0xff]
    %v5824 = vld [vmem:[#allocation13 + $0x5c8] sm:$0xf]
    %v5825 = vld [vmem:[#allocation13 + $0x5cc] sm:$0xff]
    %v5826 = vld [vmem:[#allocation13 + $0x5d4] sm:$0xff]
    %v5827 = vld [vmem:[#allocation13 + $0x5dc] sm:$0xff]
    %v5828 = vld [vmem:[#allocation13 + $0x5e4] sm:$0xf]
    %v5829 = vld [vmem:[#allocation13 + $0x5e8] sm:$0xff]
    %v5830 = vld [vmem:[#allocation13 + $0x5f0] sm:$0xff]
    %v5831 = vld [vmem:[#allocation13 + $0x5f8] sm:$0xff]
    %v5832 = vld [vmem:[#allocation13 + $0x600] sm:$0xf]
    %v5833 = vld [vmem:[#allocation13 + $0x604] sm:$0xff]
    %v5834 = vld [vmem:[#allocation13 + $0x60c] sm:$0xff]
    %v5835 = vld [vmem:[#allocation13 + $0x614] sm:$0xff]
    %v5836 = vld [vmem:[#allocation13 + $0x61c] sm:$0xf]
    %v5837 = vld [vmem:[#allocation13 + $0x620] sm:$0xff]
    %v5838 = vld [vmem:[#allocation13 + $0x628] sm:$0xff]
    %v5839 = vld [vmem:[#allocation13 + $0x630] sm:$0xff]
    %v5840 = vld [vmem:[#allocation13 + $0x638] sm:$0xf]
    %v5841 = vld [vmem:[#allocation13 + $0x63c] sm:$0xff]
    %v5842 = vld [vmem:[#allocation13 + $0x644] sm:$0xff]
    %v5843 = vld [vmem:[#allocation13 + $0x64c] sm:$0xff]
    %v5844 = vld [vmem:[#allocation13 + $0x654] sm:$0xf]
    %v5845 = vld [vmem:[#allocation13 + $0x658] sm:$0xff]
    %v5846 = vld [vmem:[#allocation13 + $0x660] sm:$0xff]
    %v5847 = vld [vmem:[#allocation13 + $0x668] sm:$0xff]
    %v5848 = vld [vmem:[#allocation13 + $0x670] sm:$0xf]
    %v5849 = vld [vmem:[#allocation13 + $0x674] sm:$0xff]
    %v5850 = vld [vmem:[#allocation13 + $0x67c] sm:$0xff]
    %v5851 = vld [vmem:[#allocation13 + $0x684] sm:$0xff]
    %v5852 = vld [vmem:[#allocation13 + $0x68c] sm:$0xf]
    %v5853 = vld [vmem:[#allocation13 + $0x690] sm:$0xff]
    %v5854 = vld [vmem:[#allocation13 + $0x698] sm:$0xff]
    %v5855 = vld [vmem:[#allocation13 + $0x6a0] sm:$0xff]
    %v5856 = vld [vmem:[#allocation13 + $0x6a8] sm:$0xf]
    %v5857 = vld [vmem:[#allocation13 + $0x6ac] sm:$0xff]
    %v5858 = vld [vmem:[#allocation13 + $0x6b4] sm:$0xff]
    %v5859 = vld [vmem:[#allocation13 + $0x6bc] sm:$0xff]
    %v5860 = vld [vmem:[#allocation13 + $0x6c4] sm:$0xf]
    %v5861 = vld [vmem:[#allocation13 + $0x6c8] sm:$0xff]
    %v5862 = vld [vmem:[#allocation13 + $0x6d0] sm:$0xff]
    %v5863 = vld [vmem:[#allocation13 + $0x6d8] sm:$0xff]
    %v5864 = vld [vmem:[#allocation13 + $0x6e0] sm:$0xf]
    %v5865 = vld [vmem:[#allocation13 + $0x6e4] sm:$0xff]
    %v5866 = vld [vmem:[#allocation13 + $0x6ec] sm:$0xff]
    %v5867 = vld [vmem:[#allocation13 + $0x6f4] sm:$0xff]
    %v5868 = vld [vmem:[#allocation13 + $0x6fc] sm:$0xf]
    %v5869 = vld [vmem:[#allocation13 + $0x700] sm:$0xff]
    %v5870 = vld [vmem:[#allocation13 + $0x708] sm:$0xff]
    %v5871 = vld [vmem:[#allocation13 + $0x710] sm:$0xff]
    %v5872 = vld [vmem:[#allocation13 + $0x718] sm:$0xf]
    %v5873 = vld [vmem:[#allocation13 + $0x71c] sm:$0xff]
    %v5874 = vld [vmem:[#allocation13 + $0x724] sm:$0xff]
    %v5875 = vld [vmem:[#allocation13 + $0x72c] sm:$0xff]
    %v5876 = vld [vmem:[#allocation13 + $0x734] sm:$0xf]
    %v5877 = vld [vmem:[#allocation13 + $0x738] sm:$0xff]
    %v5878 = vld [vmem:[#allocation13 + $0x740] sm:$0xff]
    %v5879 = vld [vmem:[#allocation13 + $0x748] sm:$0xff]
    %v5880 = vld [vmem:[#allocation13 + $0x750] sm:$0xf]
    %v5881 = vld [vmem:[#allocation13 + $0x754] sm:$0xff]
    %v5882 = vld [vmem:[#allocation13 + $0x75c] sm:$0xff]
    %v5883 = vld [vmem:[#allocation13 + $0x764] sm:$0xff]
    %v5884 = vld [vmem:[#allocation13 + $0x76c] sm:$0xf]
    %v5885 = vld [vmem:[#allocation13 + $0x770] sm:$0xff]
    %v5886 = vld [vmem:[#allocation13 + $0x778] sm:$0xff]
    %v5887 = vld [vmem:[#allocation13 + $0x780] sm:$0xff]
    %v5888 = vld [vmem:[#allocation13 + $0x788] sm:$0xf]
    %v5889 = vld [vmem:[#allocation13 + $0x78c] sm:$0xff]
    %v5890 = vld [vmem:[#allocation13 + $0x794] sm:$0xff]
    %v5891 = vld [vmem:[#allocation13 + $0x79c] sm:$0xff]
    %v5892 = vld [vmem:[#allocation13 + $0x7a4] sm:$0xf]
    %v5893 = vld [vmem:[#allocation13 + $0x7a8] sm:$0xff]
    %v5894 = vld [vmem:[#allocation13 + $0x7b0] sm:$0xff]
    %v5895 = vld [vmem:[#allocation13 + $0x7b8] sm:$0xff]
    %v5896 = vld [vmem:[#allocation13 + $0x7c0] sm:$0xf]
    %v5897 = vld [vmem:[#allocation13 + $0x7c4] sm:$0xff]
    %v5898 = vld [vmem:[#allocation13 + $0x7cc] sm:$0xff]
    %v5899 = vld [vmem:[#allocation13 + $0x7d4] sm:$0xff]
    %v5900 = vld [vmem:[#allocation13 + $0x7dc] sm:$0xf]
    %v5901 = vld [vmem:[#allocation13 + $0x7e0] sm:$0xff]
    %v5902 = vld [vmem:[#allocation13 + $0x7e8] sm:$0xff]
    %v5903 = vld [vmem:[#allocation13 + $0x7f0] sm:$0xff]
    %v5904 = vld [vmem:[#allocation13 + $0x7f8] sm:$0xf]
    %v5905 = vld [vmem:[#allocation13 + $0x7fc] sm:$0xff]
    %v5906 = vld [vmem:[#allocation13 + $0x804] sm:$0xff]
    %v5907 = vld [vmem:[#allocation13 + $0x80c] sm:$0xff]
    %v5908 = vld [vmem:[#allocation13 + $0x814] sm:$0xf]
    %v5909 = vld [vmem:[#allocation13 + $0x818] sm:$0xff]
    %v5910 = vld [vmem:[#allocation13 + $0x820] sm:$0xff]
    %v5911 = vld [vmem:[#allocation13 + $0x828] sm:$0xff]
    %v5912 = vld [vmem:[#allocation13 + $0x830] sm:$0xf]
    %v5913 = vld [vmem:[#allocation13 + $0x834] sm:$0xff]
    %v5914 = vld [vmem:[#allocation13 + $0x83c] sm:$0xff]
    %v5915 = vld [vmem:[#allocation13 + $0x844] sm:$0xff]
    %v5916 = vld [vmem:[#allocation13 + $0x84c] sm:$0xf]
    %v5917 = vld [vmem:[#allocation13 + $0x850] sm:$0xff]
    %v5918 = vld [vmem:[#allocation13 + $0x858] sm:$0xff]
    %v5919 = vld [vmem:[#allocation13 + $0x860] sm:$0xff]
    %v5920 = vld [vmem:[#allocation13 + $0x868] sm:$0xf]
    %v5921 = vld [vmem:[#allocation13 + $0x86c] sm:$0xff]
    %v5922 = vld [vmem:[#allocation13 + $0x874] sm:$0xff]
    %v5923 = vld [vmem:[#allocation13 + $0x87c] sm:$0xff]
    %v5924 = vld [vmem:[#allocation13 + $0x884] sm:$0xf]
    %v5925 = vld [vmem:[#allocation13 + $0x888] sm:$0xff]
    %v5926 = vld [vmem:[#allocation13 + $0x890] sm:$0xff]
    %v5927 = vld [vmem:[#allocation13 + $0x898] sm:$0xff]
    %v5928 = vld [vmem:[#allocation13 + $0x8a0] sm:$0xf]
    %v5929 = vld [vmem:[#allocation13 + $0x8a4] sm:$0xff]
    %v5930 = vld [vmem:[#allocation13 + $0x8ac] sm:$0xff]
    %v5931 = vld [vmem:[#allocation13 + $0x8b4] sm:$0xff]
    %v5932 = vld [vmem:[#allocation13 + $0x8bc] sm:$0xf]
    %v5933 = vld [vmem:[#allocation13 + $0x8c0] sm:$0xff]
    %v5934 = vld [vmem:[#allocation13 + $0x8c8] sm:$0xff]
    %v5935 = vld [vmem:[#allocation13 + $0x8d0] sm:$0xff]
    %v5936 = vld [vmem:[#allocation13 + $0x8d8] sm:$0xf]
    %v5937 = vld [vmem:[#allocation13 + $0x8dc] sm:$0xff]
    %v5938 = vld [vmem:[#allocation13 + $0x8e4] sm:$0xff]
    %v5939 = vld [vmem:[#allocation13 + $0x8ec] sm:$0xff]
    %v5940 = vld [vmem:[#allocation13 + $0x8f4] sm:$0xf]
    %v5941 = vld [vmem:[#allocation13 + $0x8f8] sm:$0xff]
    %v5942 = vld [vmem:[#allocation13 + $0x900] sm:$0xff]
    %v5943 = vld [vmem:[#allocation13 + $0x908] sm:$0xff]
    %v5944 = vld [vmem:[#allocation13 + $0x910] sm:$0xf]
    %v5945 = vld [vmem:[#allocation13 + $0x914] sm:$0xff]
    %v5946 = vld [vmem:[#allocation13 + $0x91c] sm:$0xff]
    %v5947 = vld [vmem:[#allocation13 + $0x924] sm:$0xff]
    %v5948 = vld [vmem:[#allocation13 + $0x92c] sm:$0xf]
    %v5949 = vld [vmem:[#allocation13 + $0x930] sm:$0xff]
    %v5950 = vld [vmem:[#allocation13 + $0x938] sm:$0xff]
    %v5951 = vld [vmem:[#allocation13 + $0x940] sm:$0xff]
    %v5952 = vld [vmem:[#allocation13 + $0x948] sm:$0xf]
    %v5953 = vld [vmem:[#allocation13 + $0x94c] sm:$0xff]
    %v5954 = vld [vmem:[#allocation13 + $0x954] sm:$0xff]
    %v5955 = vld [vmem:[#allocation13 + $0x95c] sm:$0xff]
    %v5956 = vld [vmem:[#allocation13 + $0x964] sm:$0xf]
    %v5957 = vld [vmem:[#allocation13 + $0x968] sm:$0xff]
    %v5958 = vld [vmem:[#allocation13 + $0x970] sm:$0xff]
    %v5959 = vld [vmem:[#allocation13 + $0x978] sm:$0xff]
    %v5960 = vld [vmem:[#allocation13 + $0x980] sm:$0xf]
    %v5961 = vld [vmem:[#allocation13 + $0x984] sm:$0xff]
    %v5962 = vld [vmem:[#allocation13 + $0x98c] sm:$0xff]
    %v5963 = vld [vmem:[#allocation13 + $0x994] sm:$0xff]
    %v5964 = vld [vmem:[#allocation13 + $0x99c] sm:$0xf]
    %v5965 = vld [vmem:[#allocation13 + $0x9a0] sm:$0xff]
    %v5966 = vld [vmem:[#allocation13 + $0x9a8] sm:$0xff]
    %v5967 = vld [vmem:[#allocation13 + $0x9b0] sm:$0xff]
    %v5968 = vld [vmem:[#allocation13 + $0x9b8] sm:$0xf]
    %v5969 = vld [vmem:[#allocation13 + $0x9bc] sm:$0xff]
    %v5970 = vld [vmem:[#allocation13 + $0x9c4] sm:$0xff]
    %v5971 = vld [vmem:[#allocation13 + $0x9cc] sm:$0xff]
    %v5972 = vld [vmem:[#allocation13 + $0x9d4] sm:$0xf]
    %v5973 = vld [vmem:[#allocation13 + $0x9d8] sm:$0xff]
    %v5974 = vld [vmem:[#allocation13 + $0x9e0] sm:$0xff]
    %v5975 = vld [vmem:[#allocation13 + $0x9e8] sm:$0xff]
    %v5976 = vld [vmem:[#allocation13 + $0x9f0] sm:$0xf]
    %v5977 = vld [vmem:[#allocation13 + $0x9f4] sm:$0xff]
    %v5978 = vld [vmem:[#allocation13 + $0x9fc] sm:$0xff]
    %v5979 = vld [vmem:[#allocation13 + $0xa04] sm:$0xff]
    %v5980 = vld [vmem:[#allocation13 + $0xa0c] sm:$0xf]
    %v5981 = vld [vmem:[#allocation13 + $0xa10] sm:$0xff]
    %v5982 = vld [vmem:[#allocation13 + $0xa18] sm:$0xff]
    %v5983 = vld [vmem:[#allocation13 + $0xa20] sm:$0xff]
    %v5984 = vld [vmem:[#allocation13 + $0xa28] sm:$0xf]
    %v5985 = vld [vmem:[#allocation13 + $0xa2c] sm:$0xff]
    %v5986 = vld [vmem:[#allocation13 + $0xa34] sm:$0xff]
    %v5987 = vld [vmem:[#allocation13 + $0xa3c] sm:$0xff]
    %v5988 = vld [vmem:[#allocation13 + $0xa44] sm:$0xf]
    %v5989 = vld [vmem:[#allocation13 + $0xa48] sm:$0xff]
    %v5990 = vld [vmem:[#allocation13 + $0xa50] sm:$0xff]
    %v5991 = vld [vmem:[#allocation13 + $0xa58] sm:$0xff]
    %v5992 = vld [vmem:[#allocation13 + $0xa60] sm:$0xf]
    %v5993 = vld [vmem:[#allocation13 + $0xa64] sm:$0xff]
    %v5994 = vld [vmem:[#allocation13 + $0xa6c] sm:$0xff]
    %v5995 = vld [vmem:[#allocation13 + $0xa74] sm:$0xff]
    %v5996 = vld [vmem:[#allocation13 + $0xa7c] sm:$0xf]
    %v5997 = vld [vmem:[#allocation13 + $0xa80] sm:$0xff]
    %v5998 = vld [vmem:[#allocation13 + $0xa88] sm:$0xff]
    %v5999 = vld [vmem:[#allocation13 + $0xa90] sm:$0xff]
    %v6000 = vld [vmem:[#allocation13 + $0xa98] sm:$0xf]
    %v6001 = vld [vmem:[#allocation13 + $0xa9c] sm:$0xff]
    %v6002 = vld [vmem:[#allocation13 + $0xaa4] sm:$0xff]
    %v6003 = vld [vmem:[#allocation13 + $0xaac] sm:$0xff]
    %v6004 = vld [vmem:[#allocation13 + $0xab4] sm:$0xf]
    %v6005 = vld [vmem:[#allocation13 + $0xab8] sm:$0xff]
    %v6006 = vld [vmem:[#allocation13 + $0xac0] sm:$0xff]
    %v6007 = vld [vmem:[#allocation13 + $0xac8] sm:$0xff]
    %v6008 = vld [vmem:[#allocation13 + $0xad0] sm:$0xf]
    %v6009 = vld [vmem:[#allocation13 + $0xad4] sm:$0xff]
    %v6010 = vld [vmem:[#allocation13 + $0xadc] sm:$0xff]
    %v6011 = vld [vmem:[#allocation13 + $0xae4] sm:$0xff]
    %v6012 = vld [vmem:[#allocation13 + $0xaec] sm:$0xf]
    %v6013 = vld [vmem:[#allocation13 + $0xaf0] sm:$0xff]
    %v6014 = vld [vmem:[#allocation13 + $0xaf8] sm:$0xff]
    %v6015 = vld [vmem:[#allocation13 + $0xb00] sm:$0xff]
    %v6016 = vld [vmem:[#allocation13 + $0xb08] sm:$0xf]
    %v6017 = vld [vmem:[#allocation13 + $0xb0c] sm:$0xff]
    %v6018 = vld [vmem:[#allocation13 + $0xb14] sm:$0xff]
    %v6019 = vld [vmem:[#allocation13 + $0xb1c] sm:$0xff]
    %v6020 = vld [vmem:[#allocation13 + $0xb24] sm:$0xf]
    %v6021 = vld [vmem:[#allocation13 + $0xb28] sm:$0xff]
    %v6022 = vld [vmem:[#allocation13 + $0xb30] sm:$0xff]
    %v6023 = vld [vmem:[#allocation13 + $0xb38] sm:$0xff]
    %v6024 = vld [vmem:[#allocation13 + $0xb40] sm:$0xf]
    %v6025 = vld [vmem:[#allocation13 + $0xb44] sm:$0xff]
    %v6026 = vld [vmem:[#allocation13 + $0xb4c] sm:$0xff]
    %v6027 = vld [vmem:[#allocation13 + $0xb54] sm:$0xff]
    %v6028 = vld [vmem:[#allocation13 + $0xb5c] sm:$0xf]
    %v6029 = vld [vmem:[#allocation13 + $0xb60] sm:$0xff]
    %v6030 = vld [vmem:[#allocation13 + $0xb68] sm:$0xff]
    %v6031 = vld [vmem:[#allocation13 + $0xb70] sm:$0xff]
    %v6032 = vld [vmem:[#allocation13 + $0xb78] sm:$0xf]
    %v6033 = vld [vmem:[#allocation13 + $0xb7c] sm:$0xff]
    %v6034 = vld [vmem:[#allocation13 + $0xb84] sm:$0xff]
    %v6035 = vld [vmem:[#allocation13 + $0xb8c] sm:$0xff]
    %v6036 = vld [vmem:[#allocation13 + $0xb94] sm:$0xf]
    %v6037 = vld [vmem:[#allocation13 + $0xb98] sm:$0xff]
    %v6038 = vld [vmem:[#allocation13 + $0xba0] sm:$0xff]
    %v6039 = vld [vmem:[#allocation13 + $0xba8] sm:$0xff]
    %v6040 = vld [vmem:[#allocation13 + $0xbb0] sm:$0xf]
    %v6041 = vld [vmem:[#allocation13 + $0xbb4] sm:$0xff]
    %v6042 = vld [vmem:[#allocation13 + $0xbbc] sm:$0xff]
    %v6043 = vld [vmem:[#allocation13 + $0xbc4] sm:$0xff]
    %v6044 = vld [vmem:[#allocation13 + $0xbcc] sm:$0xf]
    %v6045 = vld [vmem:[#allocation13 + $0xbd0] sm:$0xff]
    %v6046 = vld [vmem:[#allocation13 + $0xbd8] sm:$0xff]
    %v6047 = vld [vmem:[#allocation13 + $0xbe0] sm:$0xff]
    %v6048 = vld [vmem:[#allocation13 + $0xbe8] sm:$0xf]
    %v6049 = vld [vmem:[#allocation13 + $0xbec] sm:$0xff]
    %v6050 = vld [vmem:[#allocation13 + $0xbf4] sm:$0xff]
    %v6051 = vld [vmem:[#allocation13 + $0xbfc] sm:$0xff]
    %v6052 = vld [vmem:[#allocation13 + $0xc04] sm:$0xf]
    %v6053 = vld [vmem:[#allocation13 + $0xc08] sm:$0xff]
    %v6054 = vld [vmem:[#allocation13 + $0xc10] sm:$0xff]
    %v6055 = vld [vmem:[#allocation13 + $0xc18] sm:$0xff]
    %v6056 = vld [vmem:[#allocation13 + $0xc20] sm:$0xf]
    %v6057 = vld [vmem:[#allocation13 + $0xc24] sm:$0xff]
    %v6058 = vld [vmem:[#allocation13 + $0xc2c] sm:$0xff]
    %v6059 = vld [vmem:[#allocation13 + $0xc34] sm:$0xff]
    %v6060 = vld [vmem:[#allocation13 + $0xc3c] sm:$0xf]
    %v6061 = vld [vmem:[#allocation13 + $0xc40] sm:$0xff]
    %v6062 = vld [vmem:[#allocation13 + $0xc48] sm:$0xff]
    %v6063 = vld [vmem:[#allocation13 + $0xc50] sm:$0xff]
    %v6064 = vld [vmem:[#allocation13 + $0xc58] sm:$0xf]
    %v6065 = vld [vmem:[#allocation13 + $0xc5c] sm:$0xff]
    %v6066 = vld [vmem:[#allocation13 + $0xc64] sm:$0xff]
    %v6067 = vld [vmem:[#allocation13 + $0xc6c] sm:$0xff]
    %v6068 = vld [vmem:[#allocation13 + $0xc74] sm:$0xf]
    %v6069 = vld [vmem:[#allocation13 + $0xc78] sm:$0xff]
    %v6070 = vld [vmem:[#allocation13 + $0xc80] sm:$0xff]
    %v6071 = vld [vmem:[#allocation13 + $0xc88] sm:$0xff]
    %v6072 = vld [vmem:[#allocation13 + $0xc90] sm:$0xf]
    %v6073 = vld [vmem:[#allocation13 + $0xc94] sm:$0xff]
    %v6074 = vld [vmem:[#allocation13 + $0xc9c] sm:$0xff]
    %v6075 = vld [vmem:[#allocation13 + $0xca4] sm:$0xff]
    %v6076 = vld [vmem:[#allocation13 + $0xcac] sm:$0xf]
    %v6077 = vld [vmem:[#allocation13 + $0xcb0] sm:$0xff]
    %v6078 = vld [vmem:[#allocation13 + $0xcb8] sm:$0xff]
    %v6079 = vld [vmem:[#allocation13 + $0xcc0] sm:$0xff]
    %v6080 = vld [vmem:[#allocation13 + $0xcc8] sm:$0xf]
    %v6081 = vld [vmem:[#allocation13 + $0xccc] sm:$0xff]
    %v6082 = vld [vmem:[#allocation13 + $0xcd4] sm:$0xff]
    %v6083 = vld [vmem:[#allocation13 + $0xcdc] sm:$0xff]
    %v6084 = vld [vmem:[#allocation13 + $0xce4] sm:$0xf]
    %v6085 = vld [vmem:[#allocation13 + $0xce8] sm:$0xff]
    %v6086 = vld [vmem:[#allocation13 + $0xcf0] sm:$0xff]
    %v6087 = vld [vmem:[#allocation13 + $0xcf8] sm:$0xff]
    %v6088 = vld [vmem:[#allocation13 + $0xd00] sm:$0xf]
    %v6089 = vld [vmem:[#allocation13 + $0xd04] sm:$0xff]
    %v6090 = vld [vmem:[#allocation13 + $0xd0c] sm:$0xff]
    %v6091 = vld [vmem:[#allocation13 + $0xd14] sm:$0xff]
    %v6092 = vld [vmem:[#allocation13 + $0xd1c] sm:$0xf]
    %v6093 = vld [vmem:[#allocation13 + $0xd20] sm:$0xff]
    %v6094 = vld [vmem:[#allocation13 + $0xd28] sm:$0xff]
    %v6095 = vld [vmem:[#allocation13 + $0xd30] sm:$0xff]
    %v6096 = vld [vmem:[#allocation13 + $0xd38] sm:$0xf]
    %v6097 = vld [vmem:[#allocation13 + $0xd3c] sm:$0xff]
    %v6098 = vld [vmem:[#allocation13 + $0xd44] sm:$0xff]
    %v6099 = vld [vmem:[#allocation13 + $0xd4c] sm:$0xff]
    %v6100 = vld [vmem:[#allocation13 + $0xd54] sm:$0xf]
    %v6101 = vld [vmem:[#allocation13 + $0xd58] sm:$0xff]
    %v6102 = vld [vmem:[#allocation13 + $0xd60] sm:$0xff]
    %v6103 = vld [vmem:[#allocation13 + $0xd68] sm:$0xff]
    %v6104 = vld [vmem:[#allocation13 + $0xd70] sm:$0xf]
    %v6105 = vld [vmem:[#allocation13 + $0xd74] sm:$0xff]
    %v6106 = vld [vmem:[#allocation13 + $0xd7c] sm:$0xff]
    %v6107 = vld [vmem:[#allocation13 + $0xd84] sm:$0xff]
    %v6108 = vld [vmem:[#allocation13 + $0xd8c] sm:$0xf]
    %v6109 = vld [vmem:[#allocation13 + $0xd90] sm:$0xff]
    %v6110 = vld [vmem:[#allocation13 + $0xd98] sm:$0xff]
    %v6111 = vld [vmem:[#allocation13 + $0xda0] sm:$0xff]
    %v6112 = vld [vmem:[#allocation13 + $0xda8] sm:$0xf]
    %v6113 = vld [vmem:[#allocation13 + $0xdac] sm:$0xff]
    %v6114 = vld [vmem:[#allocation13 + $0xdb4] sm:$0xff]
    %v6115 = vld [vmem:[#allocation13 + $0xdbc] sm:$0xff]
    %v6116 = vld [vmem:[#allocation13 + $0xdc4] sm:$0xf]
    %v6117 = vld [vmem:[#allocation13 + $0xdc8] sm:$0xff]
    %v6118 = vld [vmem:[#allocation13 + $0xdd0] sm:$0xff]
    %v6119 = vld [vmem:[#allocation13 + $0xdd8] sm:$0xff]
    %v6120 = vld [vmem:[#allocation13 + $0xde0] sm:$0xf]
    %v6121 = vld [vmem:[#allocation13 + $0xde4] sm:$0xff]
    %v6122 = vld [vmem:[#allocation13 + $0xdec] sm:$0xff]
    %v6123 = vld [vmem:[#allocation13 + $0xdf4] sm:$0xff]
    %v6124 = vld [vmem:[#allocation13 + $0xdfc] sm:$0xf]
    %v6125 = vld [vmem:[#allocation14] sm:$0xff]
    %v6127 = vlaneseq
    %v6128 = vshrl.u32 %v6127, 7
    %v6129 = vsub.s32 0, %v6128
    %v6130 = vrot.slane %v6125, %v6129
    %v6131 = vlaneseq
    %v6132 = vshrl.u32 %v6131, 7
    %v6133 = vsub.s32 1, %v6132
    %v6134 = vrot.slane %v6125, %v6133
    %v6135 = vlaneseq
    %v6136 = vshrl.u32 %v6135, 7
    %v6137 = vsub.s32 2, %v6136
    %v6138 = vrot.slane %v6125, %v6137
    %v6139 = vlaneseq
    %v6140 = vshrl.u32 %v6139, 7
    %v6141 = vsub.s32 3, %v6140
    %v6142 = vrot.slane %v6125, %v6141
    %v6143 = vlaneseq
    %v6144 = vshrl.u32 %v6143, 7
    %v6145 = vsub.s32 4, %v6144
    %v6146 = vrot.slane %v6125, %v6145
    %v6147 = vlaneseq
    %v6148 = vshrl.u32 %v6147, 7
    %v6149 = vsub.s32 5, %v6148
    %v6150 = vrot.slane %v6125, %v6149
    %v6151 = vlaneseq
    %v6152 = vshrl.u32 %v6151, 7
    %v6153 = vsub.s32 6, %v6152
    %v6154 = vrot.slane %v6125, %v6153
    %v6674 = vunpack.c.l.b16 %v5613
    %v6675 = vunpack.c.h.b16 %v5613
    %v6676 = vunpack.c.l.b16 %v5614
    %v6677 = vunpack.c.h.b16 %v5614
    %v6678 = vunpack.c.l.b16 %v5615
    %v6679 = vunpack.c.h.b16 %v5615
    %v6680 = vunpack.c.l.b16 %v5616
    %v6681 = vunpack.c.l.b16 %v5617
    %v6682 = vunpack.c.h.b16 %v5617
    %v6683 = vunpack.c.l.b16 %v5618
    %v6684 = vunpack.c.h.b16 %v5618
    %v6685 = vunpack.c.l.b16 %v5619
    %v6686 = vunpack.c.h.b16 %v5619
    %v6687 = vunpack.c.l.b16 %v5620
    %v6688 = vunpack.c.l.b16 %v5621
    %v6689 = vunpack.c.h.b16 %v5621
    %v6690 = vunpack.c.l.b16 %v5622
    %v6691 = vunpack.c.h.b16 %v5622
    %v6692 = vunpack.c.l.b16 %v5623
    %v6693 = vunpack.c.h.b16 %v5623
    %v6694 = vunpack.c.l.b16 %v5624
    %v6695 = vunpack.c.l.b16 %v5625
    %v6696 = vunpack.c.h.b16 %v5625
    %v6697 = vunpack.c.l.b16 %v5626
    %v6698 = vunpack.c.h.b16 %v5626
    %v6699 = vunpack.c.l.b16 %v5627
    %v6700 = vunpack.c.h.b16 %v5627
    %v6701 = vunpack.c.l.b16 %v5628
    %v6702 = vunpack.c.l.b16 %v5629
    %v6703 = vunpack.c.h.b16 %v5629
    %v6704 = vunpack.c.l.b16 %v5630
    %v6705 = vunpack.c.h.b16 %v5630
    %v6706 = vunpack.c.l.b16 %v5631
    %v6707 = vunpack.c.h.b16 %v5631
    %v6708 = vunpack.c.l.b16 %v5632
    %v6709 = vunpack.c.l.b16 %v5633
    %v6710 = vunpack.c.h.b16 %v5633
    %v6711 = vunpack.c.l.b16 %v5634
    %v6712 = vunpack.c.h.b16 %v5634
    %v6713 = vunpack.c.l.b16 %v5635
    %v6714 = vunpack.c.h.b16 %v5635
    %v6715 = vunpack.c.l.b16 %v5636
    %v6716 = vunpack.c.l.b16 %v5637
    %v6717 = vunpack.c.h.b16 %v5637
    %v6718 = vunpack.c.l.b16 %v5638
    %v6719 = vunpack.c.h.b16 %v5638
    %v6720 = vunpack.c.l.b16 %v5639
    %v6721 = vunpack.c.h.b16 %v5639
    %v6722 = vunpack.c.l.b16 %v5640
    %v6723 = vunpack.c.l.b16 %v5641
    %v6724 = vunpack.c.h.b16 %v5641
    %v6725 = vunpack.c.l.b16 %v5642
    %v6726 = vunpack.c.h.b16 %v5642
    %v6727 = vunpack.c.l.b16 %v5643
    %v6728 = vunpack.c.h.b16 %v5643
    %v6729 = vunpack.c.l.b16 %v5644
    %v6730 = vunpack.c.l.b16 %v5645
    %v6731 = vunpack.c.h.b16 %v5645
    %v6732 = vunpack.c.l.b16 %v5646
    %v6733 = vunpack.c.h.b16 %v5646
    %v6734 = vunpack.c.l.b16 %v5647
    %v6735 = vunpack.c.h.b16 %v5647
    %v6736 = vunpack.c.l.b16 %v5648
    %v6737 = vunpack.c.l.b16 %v5649
    %v6738 = vunpack.c.h.b16 %v5649
    %v6739 = vunpack.c.l.b16 %v5650
    %v6740 = vunpack.c.h.b16 %v5650
    %v6741 = vunpack.c.l.b16 %v5651
    %v6742 = vunpack.c.h.b16 %v5651
    %v6743 = vunpack.c.l.b16 %v5652
    %v6744 = vunpack.c.l.b16 %v5653
    %v6745 = vunpack.c.h.b16 %v5653
    %v6746 = vunpack.c.l.b16 %v5654
    %v6747 = vunpack.c.h.b16 %v5654
    %v6748 = vunpack.c.l.b16 %v5655
    %v6749 = vunpack.c.h.b16 %v5655
    %v6750 = vunpack.c.l.b16 %v5656
    %v6751 = vunpack.c.l.b16 %v5657
    %v6752 = vunpack.c.h.b16 %v5657
    %v6753 = vunpack.c.l.b16 %v5658
    %v6754 = vunpack.c.h.b16 %v5658
    %v6755 = vunpack.c.l.b16 %v5659
    %v6756 = vunpack.c.h.b16 %v5659
    %v6757 = vunpack.c.l.b16 %v5660
    %v6758 = vunpack.c.l.b16 %v5661
    %v6759 = vunpack.c.h.b16 %v5661
    %v6760 = vunpack.c.l.b16 %v5662
    %v6761 = vunpack.c.h.b16 %v5662
    %v6762 = vunpack.c.l.b16 %v5663
    %v6763 = vunpack.c.h.b16 %v5663
    %v6764 = vunpack.c.l.b16 %v5664
    %v6765 = vunpack.c.l.b16 %v5665
    %v6766 = vunpack.c.h.b16 %v5665
    %v6767 = vunpack.c.l.b16 %v5666
    %v6768 = vunpack.c.h.b16 %v5666
    %v6769 = vunpack.c.l.b16 %v5667
    %v6770 = vunpack.c.h.b16 %v5667
    %v6771 = vunpack.c.l.b16 %v5668
    %v6772 = vunpack.c.l.b16 %v5669
    %v6773 = vunpack.c.h.b16 %v5669
    %v6774 = vunpack.c.l.b16 %v5670
    %v6775 = vunpack.c.h.b16 %v5670
    %v6776 = vunpack.c.l.b16 %v5671
    %v6777 = vunpack.c.h.b16 %v5671
    %v6778 = vunpack.c.l.b16 %v5672
    %v6779 = vunpack.c.l.b16 %v5673
    %v6780 = vunpack.c.h.b16 %v5673
    %v6781 = vunpack.c.l.b16 %v5674
    %v6782 = vunpack.c.h.b16 %v5674
    %v6783 = vunpack.c.l.b16 %v5675
    %v6784 = vunpack.c.h.b16 %v5675
    %v6785 = vunpack.c.l.b16 %v5676
    %v6786 = vunpack.c.l.b16 %v5677
    %v6787 = vunpack.c.h.b16 %v5677
    %v6788 = vunpack.c.l.b16 %v5678
    %v6789 = vunpack.c.h.b16 %v5678
    %v6790 = vunpack.c.l.b16 %v5679
    %v6791 = vunpack.c.h.b16 %v5679
    %v6792 = vunpack.c.l.b16 %v5680
    %v6793 = vunpack.c.l.b16 %v5681
    %v6794 = vunpack.c.h.b16 %v5681
    %v6795 = vunpack.c.l.b16 %v5682
    %v6796 = vunpack.c.h.b16 %v5682
    %v6797 = vunpack.c.l.b16 %v5683
    %v6798 = vunpack.c.h.b16 %v5683
    %v6799 = vunpack.c.l.b16 %v5684
    %v6800 = vunpack.c.l.b16 %v5685
    %v6801 = vunpack.c.h.b16 %v5685
    %v6802 = vunpack.c.l.b16 %v5686
    %v6803 = vunpack.c.h.b16 %v5686
    %v6804 = vunpack.c.l.b16 %v5687
    %v6805 = vunpack.c.h.b16 %v5687
    %v6806 = vunpack.c.l.b16 %v5688
    %v6807 = vunpack.c.l.b16 %v5689
    %v6808 = vunpack.c.h.b16 %v5689
    %v6809 = vunpack.c.l.b16 %v5690
    %v6810 = vunpack.c.h.b16 %v5690
    %v6811 = vunpack.c.l.b16 %v5691
    %v6812 = vunpack.c.h.b16 %v5691
    %v6813 = vunpack.c.l.b16 %v5692
    %v6814 = vunpack.c.l.b16 %v5693
    %v6815 = vunpack.c.h.b16 %v5693
    %v6816 = vunpack.c.l.b16 %v5694
    %v6817 = vunpack.c.h.b16 %v5694
    %v6818 = vunpack.c.l.b16 %v5695
    %v6819 = vunpack.c.h.b16 %v5695
    %v6820 = vunpack.c.l.b16 %v5696
    %v6821 = vunpack.c.l.b16 %v5697
    %v6822 = vunpack.c.h.b16 %v5697
    %v6823 = vunpack.c.l.b16 %v5698
    %v6824 = vunpack.c.h.b16 %v5698
    %v6825 = vunpack.c.l.b16 %v5699
    %v6826 = vunpack.c.h.b16 %v5699
    %v6827 = vunpack.c.l.b16 %v5700
    %v6828 = vunpack.c.l.b16 %v5701
    %v6829 = vunpack.c.h.b16 %v5701
    %v6830 = vunpack.c.l.b16 %v5702
    %v6831 = vunpack.c.h.b16 %v5702
    %v6832 = vunpack.c.l.b16 %v5703
    %v6833 = vunpack.c.h.b16 %v5703
    %v6834 = vunpack.c.l.b16 %v5704
    %v6835 = vunpack.c.l.b16 %v5705
    %v6836 = vunpack.c.h.b16 %v5705
    %v6837 = vunpack.c.l.b16 %v5706
    %v6838 = vunpack.c.h.b16 %v5706
    %v6839 = vunpack.c.l.b16 %v5707
    %v6840 = vunpack.c.h.b16 %v5707
    %v6841 = vunpack.c.l.b16 %v5708
    %v6842 = vunpack.c.l.b16 %v5709
    %v6843 = vunpack.c.h.b16 %v5709
    %v6844 = vunpack.c.l.b16 %v5710
    %v6845 = vunpack.c.h.b16 %v5710
    %v6846 = vunpack.c.l.b16 %v5711
    %v6847 = vunpack.c.h.b16 %v5711
    %v6848 = vunpack.c.l.b16 %v5712
    %v6849 = vunpack.c.l.b16 %v5713
    %v6850 = vunpack.c.h.b16 %v5713
    %v6851 = vunpack.c.l.b16 %v5714
    %v6852 = vunpack.c.h.b16 %v5714
    %v6853 = vunpack.c.l.b16 %v5715
    %v6854 = vunpack.c.h.b16 %v5715
    %v6855 = vunpack.c.l.b16 %v5716
    %v6856 = vunpack.c.l.b16 %v5717
    %v6857 = vunpack.c.h.b16 %v5717
    %v6858 = vunpack.c.l.b16 %v5718
    %v6859 = vunpack.c.h.b16 %v5718
    %v6860 = vunpack.c.l.b16 %v5719
    %v6861 = vunpack.c.h.b16 %v5719
    %v6862 = vunpack.c.l.b16 %v5720
    %v6863 = vunpack.c.l.b16 %v5721
    %v6864 = vunpack.c.h.b16 %v5721
    %v6865 = vunpack.c.l.b16 %v5722
    %v6866 = vunpack.c.h.b16 %v5722
    %v6867 = vunpack.c.l.b16 %v5723
    %v6868 = vunpack.c.h.b16 %v5723
    %v6869 = vunpack.c.l.b16 %v5724
    %v6870 = vunpack.c.l.b16 %v5725
    %v6871 = vunpack.c.h.b16 %v5725
    %v6872 = vunpack.c.l.b16 %v5726
    %v6873 = vunpack.c.h.b16 %v5726
    %v6874 = vunpack.c.l.b16 %v5727
    %v6875 = vunpack.c.h.b16 %v5727
    %v6876 = vunpack.c.l.b16 %v5728
    %v6877 = vunpack.c.l.b16 %v5729
    %v6878 = vunpack.c.h.b16 %v5729
    %v6879 = vunpack.c.l.b16 %v5730
    %v6880 = vunpack.c.h.b16 %v5730
    %v6881 = vunpack.c.l.b16 %v5731
    %v6882 = vunpack.c.h.b16 %v5731
    %v6883 = vunpack.c.l.b16 %v5732
    %v6884 = vunpack.c.l.b16 %v5733
    %v6885 = vunpack.c.h.b16 %v5733
    %v6886 = vunpack.c.l.b16 %v5734
    %v6887 = vunpack.c.h.b16 %v5734
    %v6888 = vunpack.c.l.b16 %v5735
    %v6889 = vunpack.c.h.b16 %v5735
    %v6890 = vunpack.c.l.b16 %v5736
    %v6891 = vunpack.c.l.b16 %v5737
    %v6892 = vunpack.c.h.b16 %v5737
    %v6893 = vunpack.c.l.b16 %v5738
    %v6894 = vunpack.c.h.b16 %v5738
    %v6895 = vunpack.c.l.b16 %v5739
    %v6896 = vunpack.c.h.b16 %v5739
    %v6897 = vunpack.c.l.b16 %v5740
    %v6898 = vunpack.c.l.b16 %v5741
    %v6899 = vunpack.c.h.b16 %v5741
    %v6900 = vunpack.c.l.b16 %v5742
    %v6901 = vunpack.c.h.b16 %v5742
    %v6902 = vunpack.c.l.b16 %v5743
    %v6903 = vunpack.c.h.b16 %v5743
    %v6904 = vunpack.c.l.b16 %v5744
    %v6905 = vunpack.c.l.b16 %v5745
    %v6906 = vunpack.c.h.b16 %v5745
    %v6907 = vunpack.c.l.b16 %v5746
    %v6908 = vunpack.c.h.b16 %v5746
    %v6909 = vunpack.c.l.b16 %v5747
    %v6910 = vunpack.c.h.b16 %v5747
    %v6911 = vunpack.c.l.b16 %v5748
    %v6912 = vunpack.c.l.b16 %v5749
    %v6913 = vunpack.c.h.b16 %v5749
    %v6914 = vunpack.c.l.b16 %v5750
    %v6915 = vunpack.c.h.b16 %v5750
    %v6916 = vunpack.c.l.b16 %v5751
    %v6917 = vunpack.c.h.b16 %v5751
    %v6918 = vunpack.c.l.b16 %v5752
    %v6919 = vunpack.c.l.b16 %v5753
    %v6920 = vunpack.c.h.b16 %v5753
    %v6921 = vunpack.c.l.b16 %v5754
    %v6922 = vunpack.c.h.b16 %v5754
    %v6923 = vunpack.c.l.b16 %v5755
    %v6924 = vunpack.c.h.b16 %v5755
    %v6925 = vunpack.c.l.b16 %v5756
    %v6926 = vunpack.c.l.b16 %v5757
    %v6927 = vunpack.c.h.b16 %v5757
    %v6928 = vunpack.c.l.b16 %v5758
    %v6929 = vunpack.c.h.b16 %v5758
    %v6930 = vunpack.c.l.b16 %v5759
    %v6931 = vunpack.c.h.b16 %v5759
    %v6932 = vunpack.c.l.b16 %v5760
    %v6933 = vunpack.c.l.b16 %v5761
    %v6934 = vunpack.c.h.b16 %v5761
    %v6935 = vunpack.c.l.b16 %v5762
    %v6936 = vunpack.c.h.b16 %v5762
    %v6937 = vunpack.c.l.b16 %v5763
    %v6938 = vunpack.c.h.b16 %v5763
    %v6939 = vunpack.c.l.b16 %v5764
    %v6940 = vunpack.c.l.b16 %v5765
    %v6941 = vunpack.c.h.b16 %v5765
    %v6942 = vunpack.c.l.b16 %v5766
    %v6943 = vunpack.c.h.b16 %v5766
    %v6944 = vunpack.c.l.b16 %v5767
    %v6945 = vunpack.c.h.b16 %v5767
    %v6946 = vunpack.c.l.b16 %v5768
    %v6947 = vunpack.c.l.b16 %v5769
    %v6948 = vunpack.c.h.b16 %v5769
    %v6949 = vunpack.c.l.b16 %v5770
    %v6950 = vunpack.c.h.b16 %v5770
    %v6951 = vunpack.c.l.b16 %v5771
    %v6952 = vunpack.c.h.b16 %v5771
    %v6953 = vunpack.c.l.b16 %v5772
    %v6954 = vunpack.c.l.b16 %v5773
    %v6955 = vunpack.c.h.b16 %v5773
    %v6956 = vunpack.c.l.b16 %v5774
    %v6957 = vunpack.c.h.b16 %v5774
    %v6958 = vunpack.c.l.b16 %v5775
    %v6959 = vunpack.c.h.b16 %v5775
    %v6960 = vunpack.c.l.b16 %v5776
    %v6961 = vunpack.c.l.b16 %v5777
    %v6962 = vunpack.c.h.b16 %v5777
    %v6963 = vunpack.c.l.b16 %v5778
    %v6964 = vunpack.c.h.b16 %v5778
    %v6965 = vunpack.c.l.b16 %v5779
    %v6966 = vunpack.c.h.b16 %v5779
    %v6967 = vunpack.c.l.b16 %v5780
    %v6968 = vunpack.c.l.b16 %v5781
    %v6969 = vunpack.c.h.b16 %v5781
    %v6970 = vunpack.c.l.b16 %v5782
    %v6971 = vunpack.c.h.b16 %v5782
    %v6972 = vunpack.c.l.b16 %v5783
    %v6973 = vunpack.c.h.b16 %v5783
    %v6974 = vunpack.c.l.b16 %v5784
    %v6975 = vunpack.c.l.b16 %v5785
    %v6976 = vunpack.c.h.b16 %v5785
    %v6977 = vunpack.c.l.b16 %v5786
    %v6978 = vunpack.c.h.b16 %v5786
    %v6979 = vunpack.c.l.b16 %v5787
    %v6980 = vunpack.c.h.b16 %v5787
    %v6981 = vunpack.c.l.b16 %v5788
    %v6982 = vunpack.c.l.b16 %v5789
    %v6983 = vunpack.c.h.b16 %v5789
    %v6984 = vunpack.c.l.b16 %v5790
    %v6985 = vunpack.c.h.b16 %v5790
    %v6986 = vunpack.c.l.b16 %v5791
    %v6987 = vunpack.c.h.b16 %v5791
    %v6988 = vunpack.c.l.b16 %v5792
    %v6989 = vunpack.c.l.b16 %v5793
    %v6990 = vunpack.c.h.b16 %v5793
    %v6991 = vunpack.c.l.b16 %v5794
    %v6992 = vunpack.c.h.b16 %v5794
    %v6993 = vunpack.c.l.b16 %v5795
    %v6994 = vunpack.c.h.b16 %v5795
    %v6995 = vunpack.c.l.b16 %v5796
    %v6996 = vunpack.c.l.b16 %v5797
    %v6997 = vunpack.c.h.b16 %v5797
    %v6998 = vunpack.c.l.b16 %v5798
    %v6999 = vunpack.c.h.b16 %v5798
    %v7000 = vunpack.c.l.b16 %v5799
    %v7001 = vunpack.c.h.b16 %v5799
    %v7002 = vunpack.c.l.b16 %v5800
    %v7003 = vunpack.c.l.b16 %v5801
    %v7004 = vunpack.c.h.b16 %v5801
    %v7005 = vunpack.c.l.b16 %v5802
    %v7006 = vunpack.c.h.b16 %v5802
    %v7007 = vunpack.c.l.b16 %v5803
    %v7008 = vunpack.c.h.b16 %v5803
    %v7009 = vunpack.c.l.b16 %v5804
    %v7010 = vunpack.c.l.b16 %v5805
    %v7011 = vunpack.c.h.b16 %v5805
    %v7012 = vunpack.c.l.b16 %v5806
    %v7013 = vunpack.c.h.b16 %v5806
    %v7014 = vunpack.c.l.b16 %v5807
    %v7015 = vunpack.c.h.b16 %v5807
    %v7016 = vunpack.c.l.b16 %v5808
    %v7017 = vunpack.c.l.b16 %v5809
    %v7018 = vunpack.c.h.b16 %v5809
    %v7019 = vunpack.c.l.b16 %v5810
    %v7020 = vunpack.c.h.b16 %v5810
    %v7021 = vunpack.c.l.b16 %v5811
    %v7022 = vunpack.c.h.b16 %v5811
    %v7023 = vunpack.c.l.b16 %v5812
    %v7024 = vunpack.c.l.b16 %v5813
    %v7025 = vunpack.c.h.b16 %v5813
    %v7026 = vunpack.c.l.b16 %v5814
    %v7027 = vunpack.c.h.b16 %v5814
    %v7028 = vunpack.c.l.b16 %v5815
    %v7029 = vunpack.c.h.b16 %v5815
    %v7030 = vunpack.c.l.b16 %v5816
    %v7031 = vunpack.c.l.b16 %v5817
    %v7032 = vunpack.c.h.b16 %v5817
    %v7033 = vunpack.c.l.b16 %v5818
    %v7034 = vunpack.c.h.b16 %v5818
    %v7035 = vunpack.c.l.b16 %v5819
    %v7036 = vunpack.c.h.b16 %v5819
    %v7037 = vunpack.c.l.b16 %v5820
    %v7038 = vunpack.c.l.b16 %v5821
    %v7039 = vunpack.c.h.b16 %v5821
    %v7040 = vunpack.c.l.b16 %v5822
    %v7041 = vunpack.c.h.b16 %v5822
    %v7042 = vunpack.c.l.b16 %v5823
    %v7043 = vunpack.c.h.b16 %v5823
    %v7044 = vunpack.c.l.b16 %v5824
    %v7045 = vunpack.c.l.b16 %v5825
    %v7046 = vunpack.c.h.b16 %v5825
    %v7047 = vunpack.c.l.b16 %v5826
    %v7048 = vunpack.c.h.b16 %v5826
    %v7049 = vunpack.c.l.b16 %v5827
    %v7050 = vunpack.c.h.b16 %v5827
    %v7051 = vunpack.c.l.b16 %v5828
    %v7052 = vunpack.c.l.b16 %v5829
    %v7053 = vunpack.c.h.b16 %v5829
    %v7054 = vunpack.c.l.b16 %v5830
    %v7055 = vunpack.c.h.b16 %v5830
    %v7056 = vunpack.c.l.b16 %v5831
    %v7057 = vunpack.c.h.b16 %v5831
    %v7058 = vunpack.c.l.b16 %v5832
    %v7059 = vunpack.c.l.b16 %v5833
    %v7060 = vunpack.c.h.b16 %v5833
    %v7061 = vunpack.c.l.b16 %v5834
    %v7062 = vunpack.c.h.b16 %v5834
    %v7063 = vunpack.c.l.b16 %v5835
    %v7064 = vunpack.c.h.b16 %v5835
    %v7065 = vunpack.c.l.b16 %v5836
    %v7066 = vunpack.c.l.b16 %v5837
    %v7067 = vunpack.c.h.b16 %v5837
    %v7068 = vunpack.c.l.b16 %v5838
    %v7069 = vunpack.c.h.b16 %v5838
    %v7070 = vunpack.c.l.b16 %v5839
    %v7071 = vunpack.c.h.b16 %v5839
    %v7072 = vunpack.c.l.b16 %v5840
    %v7073 = vunpack.c.l.b16 %v5841
    %v7074 = vunpack.c.h.b16 %v5841
    %v7075 = vunpack.c.l.b16 %v5842
    %v7076 = vunpack.c.h.b16 %v5842
    %v7077 = vunpack.c.l.b16 %v5843
    %v7078 = vunpack.c.h.b16 %v5843
    %v7079 = vunpack.c.l.b16 %v5844
    %v7080 = vunpack.c.l.b16 %v5845
    %v7081 = vunpack.c.h.b16 %v5845
    %v7082 = vunpack.c.l.b16 %v5846
    %v7083 = vunpack.c.h.b16 %v5846
    %v7084 = vunpack.c.l.b16 %v5847
    %v7085 = vunpack.c.h.b16 %v5847
    %v7086 = vunpack.c.l.b16 %v5848
    %v7087 = vunpack.c.l.b16 %v5849
    %v7088 = vunpack.c.h.b16 %v5849
    %v7089 = vunpack.c.l.b16 %v5850
    %v7090 = vunpack.c.h.b16 %v5850
    %v7091 = vunpack.c.l.b16 %v5851
    %v7092 = vunpack.c.h.b16 %v5851
    %v7093 = vunpack.c.l.b16 %v5852
    %v7094 = vunpack.c.l.b16 %v5853
    %v7095 = vunpack.c.h.b16 %v5853
    %v7096 = vunpack.c.l.b16 %v5854
    %v7097 = vunpack.c.h.b16 %v5854
    %v7098 = vunpack.c.l.b16 %v5855
    %v7099 = vunpack.c.h.b16 %v5855
    %v7100 = vunpack.c.l.b16 %v5856
    %v7101 = vunpack.c.l.b16 %v5857
    %v7102 = vunpack.c.h.b16 %v5857
    %v7103 = vunpack.c.l.b16 %v5858
    %v7104 = vunpack.c.h.b16 %v5858
    %v7105 = vunpack.c.l.b16 %v5859
    %v7106 = vunpack.c.h.b16 %v5859
    %v7107 = vunpack.c.l.b16 %v5860
    %v7108 = vunpack.c.l.b16 %v5861
    %v7109 = vunpack.c.h.b16 %v5861
    %v7110 = vunpack.c.l.b16 %v5862
    %v7111 = vunpack.c.h.b16 %v5862
    %v7112 = vunpack.c.l.b16 %v5863
    %v7113 = vunpack.c.h.b16 %v5863
    %v7114 = vunpack.c.l.b16 %v5864
    %v7115 = vunpack.c.l.b16 %v5865
    %v7116 = vunpack.c.h.b16 %v5865
    %v7117 = vunpack.c.l.b16 %v5866
    %v7118 = vunpack.c.h.b16 %v5866
    %v7119 = vunpack.c.l.b16 %v5867
    %v7120 = vunpack.c.h.b16 %v5867
    %v7121 = vunpack.c.l.b16 %v5868
    %v7122 = vunpack.c.l.b16 %v5869
    %v7123 = vunpack.c.h.b16 %v5869
    %v7124 = vunpack.c.l.b16 %v5870
    %v7125 = vunpack.c.h.b16 %v5870
    %v7126 = vunpack.c.l.b16 %v5871
    %v7127 = vunpack.c.h.b16 %v5871
    %v7128 = vunpack.c.l.b16 %v5872
    %v7129 = vunpack.c.l.b16 %v5873
    %v7130 = vunpack.c.h.b16 %v5873
    %v7131 = vunpack.c.l.b16 %v5874
    %v7132 = vunpack.c.h.b16 %v5874
    %v7133 = vunpack.c.l.b16 %v5875
    %v7134 = vunpack.c.h.b16 %v5875
    %v7135 = vunpack.c.l.b16 %v5876
    %v7136 = vunpack.c.l.b16 %v5877
    %v7137 = vunpack.c.h.b16 %v5877
    %v7138 = vunpack.c.l.b16 %v5878
    %v7139 = vunpack.c.h.b16 %v5878
    %v7140 = vunpack.c.l.b16 %v5879
    %v7141 = vunpack.c.h.b16 %v5879
    %v7142 = vunpack.c.l.b16 %v5880
    %v7143 = vunpack.c.l.b16 %v5881
    %v7144 = vunpack.c.h.b16 %v5881
    %v7145 = vunpack.c.l.b16 %v5882
    %v7146 = vunpack.c.h.b16 %v5882
    %v7147 = vunpack.c.l.b16 %v5883
    %v7148 = vunpack.c.h.b16 %v5883
    %v7149 = vunpack.c.l.b16 %v5884
    %v7150 = vunpack.c.l.b16 %v5885
    %v7151 = vunpack.c.h.b16 %v5885
    %v7152 = vunpack.c.l.b16 %v5886
    %v7153 = vunpack.c.h.b16 %v5886
    %v7154 = vunpack.c.l.b16 %v5887
    %v7155 = vunpack.c.h.b16 %v5887
    %v7156 = vunpack.c.l.b16 %v5888
    %v7157 = vunpack.c.l.b16 %v5889
    %v7158 = vunpack.c.h.b16 %v5889
    %v7159 = vunpack.c.l.b16 %v5890
    %v7160 = vunpack.c.h.b16 %v5890
    %v7161 = vunpack.c.l.b16 %v5891
    %v7162 = vunpack.c.h.b16 %v5891
    %v7163 = vunpack.c.l.b16 %v5892
    %v7164 = vunpack.c.l.b16 %v5893
    %v7165 = vunpack.c.h.b16 %v5893
    %v7166 = vunpack.c.l.b16 %v5894
    %v7167 = vunpack.c.h.b16 %v5894
    %v7168 = vunpack.c.l.b16 %v5895
    %v7169 = vunpack.c.h.b16 %v5895
    %v7170 = vunpack.c.l.b16 %v5896
    %v7171 = vunpack.c.l.b16 %v5897
    %v7172 = vunpack.c.h.b16 %v5897
    %v7173 = vunpack.c.l.b16 %v5898
    %v7174 = vunpack.c.h.b16 %v5898
    %v7175 = vunpack.c.l.b16 %v5899
    %v7176 = vunpack.c.h.b16 %v5899
    %v7177 = vunpack.c.l.b16 %v5900
    %v7178 = vunpack.c.l.b16 %v5901
    %v7179 = vunpack.c.h.b16 %v5901
    %v7180 = vunpack.c.l.b16 %v5902
    %v7181 = vunpack.c.h.b16 %v5902
    %v7182 = vunpack.c.l.b16 %v5903
    %v7183 = vunpack.c.h.b16 %v5903
    %v7184 = vunpack.c.l.b16 %v5904
    %v7185 = vunpack.c.l.b16 %v5905
    %v7186 = vunpack.c.h.b16 %v5905
    %v7187 = vunpack.c.l.b16 %v5906
    %v7188 = vunpack.c.h.b16 %v5906
    %v7189 = vunpack.c.l.b16 %v5907
    %v7190 = vunpack.c.h.b16 %v5907
    %v7191 = vunpack.c.l.b16 %v5908
    %v7192 = vunpack.c.l.b16 %v5909
    %v7193 = vunpack.c.h.b16 %v5909
    %v7194 = vunpack.c.l.b16 %v5910
    %v7195 = vunpack.c.h.b16 %v5910
    %v7196 = vunpack.c.l.b16 %v5911
    %v7197 = vunpack.c.h.b16 %v5911
    %v7198 = vunpack.c.l.b16 %v5912
    %v7199 = vunpack.c.l.b16 %v5913
    %v7200 = vunpack.c.h.b16 %v5913
    %v7201 = vunpack.c.l.b16 %v5914
    %v7202 = vunpack.c.h.b16 %v5914
    %v7203 = vunpack.c.l.b16 %v5915
    %v7204 = vunpack.c.h.b16 %v5915
    %v7205 = vunpack.c.l.b16 %v5916
    %v7206 = vunpack.c.l.b16 %v5917
    %v7207 = vunpack.c.h.b16 %v5917
    %v7208 = vunpack.c.l.b16 %v5918
    %v7209 = vunpack.c.h.b16 %v5918
    %v7210 = vunpack.c.l.b16 %v5919
    %v7211 = vunpack.c.h.b16 %v5919
    %v7212 = vunpack.c.l.b16 %v5920
    %v7213 = vunpack.c.l.b16 %v5921
    %v7214 = vunpack.c.h.b16 %v5921
    %v7215 = vunpack.c.l.b16 %v5922
    %v7216 = vunpack.c.h.b16 %v5922
    %v7217 = vunpack.c.l.b16 %v5923
    %v7218 = vunpack.c.h.b16 %v5923
    %v7219 = vunpack.c.l.b16 %v5924
    %v7220 = vunpack.c.l.b16 %v5925
    %v7221 = vunpack.c.h.b16 %v5925
    %v7222 = vunpack.c.l.b16 %v5926
    %v7223 = vunpack.c.h.b16 %v5926
    %v7224 = vunpack.c.l.b16 %v5927
    %v7225 = vunpack.c.h.b16 %v5927
    %v7226 = vunpack.c.l.b16 %v5928
    %v7227 = vunpack.c.l.b16 %v5929
    %v7228 = vunpack.c.h.b16 %v5929
    %v7229 = vunpack.c.l.b16 %v5930
    %v7230 = vunpack.c.h.b16 %v5930
    %v7231 = vunpack.c.l.b16 %v5931
    %v7232 = vunpack.c.h.b16 %v5931
    %v7233 = vunpack.c.l.b16 %v5932
    %v7234 = vunpack.c.l.b16 %v5933
    %v7235 = vunpack.c.h.b16 %v5933
    %v7236 = vunpack.c.l.b16 %v5934
    %v7237 = vunpack.c.h.b16 %v5934
    %v7238 = vunpack.c.l.b16 %v5935
    %v7239 = vunpack.c.h.b16 %v5935
    %v7240 = vunpack.c.l.b16 %v5936
    %v7241 = vunpack.c.l.b16 %v5937
    %v7242 = vunpack.c.h.b16 %v5937
    %v7243 = vunpack.c.l.b16 %v5938
    %v7244 = vunpack.c.h.b16 %v5938
    %v7245 = vunpack.c.l.b16 %v5939
    %v7246 = vunpack.c.h.b16 %v5939
    %v7247 = vunpack.c.l.b16 %v5940
    %v7248 = vunpack.c.l.b16 %v5941
    %v7249 = vunpack.c.h.b16 %v5941
    %v7250 = vunpack.c.l.b16 %v5942
    %v7251 = vunpack.c.h.b16 %v5942
    %v7252 = vunpack.c.l.b16 %v5943
    %v7253 = vunpack.c.h.b16 %v5943
    %v7254 = vunpack.c.l.b16 %v5944
    %v7255 = vunpack.c.l.b16 %v5945
    %v7256 = vunpack.c.h.b16 %v5945
    %v7257 = vunpack.c.l.b16 %v5946
    %v7258 = vunpack.c.h.b16 %v5946
    %v7259 = vunpack.c.l.b16 %v5947
    %v7260 = vunpack.c.h.b16 %v5947
    %v7261 = vunpack.c.l.b16 %v5948
    %v7262 = vunpack.c.l.b16 %v5949
    %v7263 = vunpack.c.h.b16 %v5949
    %v7264 = vunpack.c.l.b16 %v5950
    %v7265 = vunpack.c.h.b16 %v5950
    %v7266 = vunpack.c.l.b16 %v5951
    %v7267 = vunpack.c.h.b16 %v5951
    %v7268 = vunpack.c.l.b16 %v5952
    %v7269 = vunpack.c.l.b16 %v5953
    %v7270 = vunpack.c.h.b16 %v5953
    %v7271 = vunpack.c.l.b16 %v5954
    %v7272 = vunpack.c.h.b16 %v5954
    %v7273 = vunpack.c.l.b16 %v5955
    %v7274 = vunpack.c.h.b16 %v5955
    %v7275 = vunpack.c.l.b16 %v5956
    %v7276 = vunpack.c.l.b16 %v5957
    %v7277 = vunpack.c.h.b16 %v5957
    %v7278 = vunpack.c.l.b16 %v5958
    %v7279 = vunpack.c.h.b16 %v5958
    %v7280 = vunpack.c.l.b16 %v5959
    %v7281 = vunpack.c.h.b16 %v5959
    %v7282 = vunpack.c.l.b16 %v5960
    %v7283 = vunpack.c.l.b16 %v5961
    %v7284 = vunpack.c.h.b16 %v5961
    %v7285 = vunpack.c.l.b16 %v5962
    %v7286 = vunpack.c.h.b16 %v5962
    %v7287 = vunpack.c.l.b16 %v5963
    %v7288 = vunpack.c.h.b16 %v5963
    %v7289 = vunpack.c.l.b16 %v5964
    %v7290 = vunpack.c.l.b16 %v5965
    %v7291 = vunpack.c.h.b16 %v5965
    %v7292 = vunpack.c.l.b16 %v5966
    %v7293 = vunpack.c.h.b16 %v5966
    %v7294 = vunpack.c.l.b16 %v5967
    %v7295 = vunpack.c.h.b16 %v5967
    %v7296 = vunpack.c.l.b16 %v5968
    %v7297 = vunpack.c.l.b16 %v5969
    %v7298 = vunpack.c.h.b16 %v5969
    %v7299 = vunpack.c.l.b16 %v5970
    %v7300 = vunpack.c.h.b16 %v5970
    %v7301 = vunpack.c.l.b16 %v5971
    %v7302 = vunpack.c.h.b16 %v5971
    %v7303 = vunpack.c.l.b16 %v5972
    %v7304 = vunpack.c.l.b16 %v5973
    %v7305 = vunpack.c.h.b16 %v5973
    %v7306 = vunpack.c.l.b16 %v5974
    %v7307 = vunpack.c.h.b16 %v5974
    %v7308 = vunpack.c.l.b16 %v5975
    %v7309 = vunpack.c.h.b16 %v5975
    %v7310 = vunpack.c.l.b16 %v5976
    %v7311 = vunpack.c.l.b16 %v5977
    %v7312 = vunpack.c.h.b16 %v5977
    %v7313 = vunpack.c.l.b16 %v5978
    %v7314 = vunpack.c.h.b16 %v5978
    %v7315 = vunpack.c.l.b16 %v5979
    %v7316 = vunpack.c.h.b16 %v5979
    %v7317 = vunpack.c.l.b16 %v5980
    %v7318 = vunpack.c.l.b16 %v5981
    %v7319 = vunpack.c.h.b16 %v5981
    %v7320 = vunpack.c.l.b16 %v5982
    %v7321 = vunpack.c.h.b16 %v5982
    %v7322 = vunpack.c.l.b16 %v5983
    %v7323 = vunpack.c.h.b16 %v5983
    %v7324 = vunpack.c.l.b16 %v5984
    %v7325 = vunpack.c.l.b16 %v5985
    %v7326 = vunpack.c.h.b16 %v5985
    %v7327 = vunpack.c.l.b16 %v5986
    %v7328 = vunpack.c.h.b16 %v5986
    %v7329 = vunpack.c.l.b16 %v5987
    %v7330 = vunpack.c.h.b16 %v5987
    %v7331 = vunpack.c.l.b16 %v5988
    %v7332 = vunpack.c.l.b16 %v5989
    %v7333 = vunpack.c.h.b16 %v5989
    %v7334 = vunpack.c.l.b16 %v5990
    %v7335 = vunpack.c.h.b16 %v5990
    %v7336 = vunpack.c.l.b16 %v5991
    %v7337 = vunpack.c.h.b16 %v5991
    %v7338 = vunpack.c.l.b16 %v5992
    %v7339 = vunpack.c.l.b16 %v5993
    %v7340 = vunpack.c.h.b16 %v5993
    %v7341 = vunpack.c.l.b16 %v5994
    %v7342 = vunpack.c.h.b16 %v5994
    %v7343 = vunpack.c.l.b16 %v5995
    %v7344 = vunpack.c.h.b16 %v5995
    %v7345 = vunpack.c.l.b16 %v5996
    %v7346 = vunpack.c.l.b16 %v5997
    %v7347 = vunpack.c.h.b16 %v5997
    %v7348 = vunpack.c.l.b16 %v5998
    %v7349 = vunpack.c.h.b16 %v5998
    %v7350 = vunpack.c.l.b16 %v5999
    %v7351 = vunpack.c.h.b16 %v5999
    %v7352 = vunpack.c.l.b16 %v6000
    %v7353 = vunpack.c.l.b16 %v6001
    %v7354 = vunpack.c.h.b16 %v6001
    %v7355 = vunpack.c.l.b16 %v6002
    %v7356 = vunpack.c.h.b16 %v6002
    %v7357 = vunpack.c.l.b16 %v6003
    %v7358 = vunpack.c.h.b16 %v6003
    %v7359 = vunpack.c.l.b16 %v6004
    %v7360 = vunpack.c.l.b16 %v6005
    %v7361 = vunpack.c.h.b16 %v6005
    %v7362 = vunpack.c.l.b16 %v6006
    %v7363 = vunpack.c.h.b16 %v6006
    %v7364 = vunpack.c.l.b16 %v6007
    %v7365 = vunpack.c.h.b16 %v6007
    %v7366 = vunpack.c.l.b16 %v6008
    %v7367 = vunpack.c.l.b16 %v6009
    %v7368 = vunpack.c.h.b16 %v6009
    %v7369 = vunpack.c.l.b16 %v6010
    %v7370 = vunpack.c.h.b16 %v6010
    %v7371 = vunpack.c.l.b16 %v6011
    %v7372 = vunpack.c.h.b16 %v6011
    %v7373 = vunpack.c.l.b16 %v6012
    %v7374 = vunpack.c.l.b16 %v6013
    %v7375 = vunpack.c.h.b16 %v6013
    %v7376 = vunpack.c.l.b16 %v6014
    %v7377 = vunpack.c.h.b16 %v6014
    %v7378 = vunpack.c.l.b16 %v6015
    %v7379 = vunpack.c.h.b16 %v6015
    %v7380 = vunpack.c.l.b16 %v6016
    %v7381 = vunpack.c.l.b16 %v6017
    %v7382 = vunpack.c.h.b16 %v6017
    %v7383 = vunpack.c.l.b16 %v6018
    %v7384 = vunpack.c.h.b16 %v6018
    %v7385 = vunpack.c.l.b16 %v6019
    %v7386 = vunpack.c.h.b16 %v6019
    %v7387 = vunpack.c.l.b16 %v6020
    %v7388 = vunpack.c.l.b16 %v6021
    %v7389 = vunpack.c.h.b16 %v6021
    %v7390 = vunpack.c.l.b16 %v6022
    %v7391 = vunpack.c.h.b16 %v6022
    %v7392 = vunpack.c.l.b16 %v6023
    %v7393 = vunpack.c.h.b16 %v6023
    %v7394 = vunpack.c.l.b16 %v6024
    %v7395 = vunpack.c.l.b16 %v6025
    %v7396 = vunpack.c.h.b16 %v6025
    %v7397 = vunpack.c.l.b16 %v6026
    %v7398 = vunpack.c.h.b16 %v6026
    %v7399 = vunpack.c.l.b16 %v6027
    %v7400 = vunpack.c.h.b16 %v6027
    %v7401 = vunpack.c.l.b16 %v6028
    %v7402 = vunpack.c.l.b16 %v6029
    %v7403 = vunpack.c.h.b16 %v6029
    %v7404 = vunpack.c.l.b16 %v6030
    %v7405 = vunpack.c.h.b16 %v6030
    %v7406 = vunpack.c.l.b16 %v6031
    %v7407 = vunpack.c.h.b16 %v6031
    %v7408 = vunpack.c.l.b16 %v6032
    %v7409 = vunpack.c.l.b16 %v6033
    %v7410 = vunpack.c.h.b16 %v6033
    %v7411 = vunpack.c.l.b16 %v6034
    %v7412 = vunpack.c.h.b16 %v6034
    %v7413 = vunpack.c.l.b16 %v6035
    %v7414 = vunpack.c.h.b16 %v6035
    %v7415 = vunpack.c.l.b16 %v6036
    %v7416 = vunpack.c.l.b16 %v6037
    %v7417 = vunpack.c.h.b16 %v6037
    %v7418 = vunpack.c.l.b16 %v6038
    %v7419 = vunpack.c.h.b16 %v6038
    %v7420 = vunpack.c.l.b16 %v6039
    %v7421 = vunpack.c.h.b16 %v6039
    %v7422 = vunpack.c.l.b16 %v6040
    %v7423 = vunpack.c.l.b16 %v6041
    %v7424 = vunpack.c.h.b16 %v6041
    %v7425 = vunpack.c.l.b16 %v6042
    %v7426 = vunpack.c.h.b16 %v6042
    %v7427 = vunpack.c.l.b16 %v6043
    %v7428 = vunpack.c.h.b16 %v6043
    %v7429 = vunpack.c.l.b16 %v6044
    %v7430 = vunpack.c.l.b16 %v6045
    %v7431 = vunpack.c.h.b16 %v6045
    %v7432 = vunpack.c.l.b16 %v6046
    %v7433 = vunpack.c.h.b16 %v6046
    %v7434 = vunpack.c.l.b16 %v6047
    %v7435 = vunpack.c.h.b16 %v6047
    %v7436 = vunpack.c.l.b16 %v6048
    %v7437 = vunpack.c.l.b16 %v6049
    %v7438 = vunpack.c.h.b16 %v6049
    %v7439 = vunpack.c.l.b16 %v6050
    %v7440 = vunpack.c.h.b16 %v6050
    %v7441 = vunpack.c.l.b16 %v6051
    %v7442 = vunpack.c.h.b16 %v6051
    %v7443 = vunpack.c.l.b16 %v6052
    %v7444 = vunpack.c.l.b16 %v6053
    %v7445 = vunpack.c.h.b16 %v6053
    %v7446 = vunpack.c.l.b16 %v6054
    %v7447 = vunpack.c.h.b16 %v6054
    %v7448 = vunpack.c.l.b16 %v6055
    %v7449 = vunpack.c.h.b16 %v6055
    %v7450 = vunpack.c.l.b16 %v6056
    %v7451 = vunpack.c.l.b16 %v6057
    %v7452 = vunpack.c.h.b16 %v6057
    %v7453 = vunpack.c.l.b16 %v6058
    %v7454 = vunpack.c.h.b16 %v6058
    %v7455 = vunpack.c.l.b16 %v6059
    %v7456 = vunpack.c.h.b16 %v6059
    %v7457 = vunpack.c.l.b16 %v6060
    %v7458 = vunpack.c.l.b16 %v6061
    %v7459 = vunpack.c.h.b16 %v6061
    %v7460 = vunpack.c.l.b16 %v6062
    %v7461 = vunpack.c.h.b16 %v6062
    %v7462 = vunpack.c.l.b16 %v6063
    %v7463 = vunpack.c.h.b16 %v6063
    %v7464 = vunpack.c.l.b16 %v6064
    %v7465 = vunpack.c.l.b16 %v6065
    %v7466 = vunpack.c.h.b16 %v6065
    %v7467 = vunpack.c.l.b16 %v6066
    %v7468 = vunpack.c.h.b16 %v6066
    %v7469 = vunpack.c.l.b16 %v6067
    %v7470 = vunpack.c.h.b16 %v6067
    %v7471 = vunpack.c.l.b16 %v6068
    %v7472 = vunpack.c.l.b16 %v6069
    %v7473 = vunpack.c.h.b16 %v6069
    %v7474 = vunpack.c.l.b16 %v6070
    %v7475 = vunpack.c.h.b16 %v6070
    %v7476 = vunpack.c.l.b16 %v6071
    %v7477 = vunpack.c.h.b16 %v6071
    %v7478 = vunpack.c.l.b16 %v6072
    %v7479 = vunpack.c.l.b16 %v6073
    %v7480 = vunpack.c.h.b16 %v6073
    %v7481 = vunpack.c.l.b16 %v6074
    %v7482 = vunpack.c.h.b16 %v6074
    %v7483 = vunpack.c.l.b16 %v6075
    %v7484 = vunpack.c.h.b16 %v6075
    %v7485 = vunpack.c.l.b16 %v6076
    %v7486 = vunpack.c.l.b16 %v6077
    %v7487 = vunpack.c.h.b16 %v6077
    %v7488 = vunpack.c.l.b16 %v6078
    %v7489 = vunpack.c.h.b16 %v6078
    %v7490 = vunpack.c.l.b16 %v6079
    %v7491 = vunpack.c.h.b16 %v6079
    %v7492 = vunpack.c.l.b16 %v6080
    %v7493 = vunpack.c.l.b16 %v6081
    %v7494 = vunpack.c.h.b16 %v6081
    %v7495 = vunpack.c.l.b16 %v6082
    %v7496 = vunpack.c.h.b16 %v6082
    %v7497 = vunpack.c.l.b16 %v6083
    %v7498 = vunpack.c.h.b16 %v6083
    %v7499 = vunpack.c.l.b16 %v6084
    %v7500 = vunpack.c.l.b16 %v6085
    %v7501 = vunpack.c.h.b16 %v6085
    %v7502 = vunpack.c.l.b16 %v6086
    %v7503 = vunpack.c.h.b16 %v6086
    %v7504 = vunpack.c.l.b16 %v6087
    %v7505 = vunpack.c.h.b16 %v6087
    %v7506 = vunpack.c.l.b16 %v6088
    %v7507 = vunpack.c.l.b16 %v6089
    %v7508 = vunpack.c.h.b16 %v6089
    %v7509 = vunpack.c.l.b16 %v6090
    %v7510 = vunpack.c.h.b16 %v6090
    %v7511 = vunpack.c.l.b16 %v6091
    %v7512 = vunpack.c.h.b16 %v6091
    %v7513 = vunpack.c.l.b16 %v6092
    %v7514 = vunpack.c.l.b16 %v6093
    %v7515 = vunpack.c.h.b16 %v6093
    %v7516 = vunpack.c.l.b16 %v6094
    %v7517 = vunpack.c.h.b16 %v6094
    %v7518 = vunpack.c.l.b16 %v6095
    %v7519 = vunpack.c.h.b16 %v6095
    %v7520 = vunpack.c.l.b16 %v6096
    %v7521 = vunpack.c.l.b16 %v6097
    %v7522 = vunpack.c.h.b16 %v6097
    %v7523 = vunpack.c.l.b16 %v6098
    %v7524 = vunpack.c.h.b16 %v6098
    %v7525 = vunpack.c.l.b16 %v6099
    %v7526 = vunpack.c.h.b16 %v6099
    %v7527 = vunpack.c.l.b16 %v6100
    %v7528 = vunpack.c.l.b16 %v6101
    %v7529 = vunpack.c.h.b16 %v6101
    %v7530 = vunpack.c.l.b16 %v6102
    %v7531 = vunpack.c.h.b16 %v6102
    %v7532 = vunpack.c.l.b16 %v6103
    %v7533 = vunpack.c.h.b16 %v6103
    %v7534 = vunpack.c.l.b16 %v6104
    %v7535 = vunpack.c.l.b16 %v6105
    %v7536 = vunpack.c.h.b16 %v6105
    %v7537 = vunpack.c.l.b16 %v6106
    %v7538 = vunpack.c.h.b16 %v6106
    %v7539 = vunpack.c.l.b16 %v6107
    %v7540 = vunpack.c.h.b16 %v6107
    %v7541 = vunpack.c.l.b16 %v6108
    %v7542 = vunpack.c.l.b16 %v6109
    %v7543 = vunpack.c.h.b16 %v6109
    %v7544 = vunpack.c.l.b16 %v6110
    %v7545 = vunpack.c.h.b16 %v6110
    %v7546 = vunpack.c.l.b16 %v6111
    %v7547 = vunpack.c.h.b16 %v6111
    %v7548 = vunpack.c.l.b16 %v6112
    %v7549 = vunpack.c.l.b16 %v6113
    %v7550 = vunpack.c.h.b16 %v6113
    %v7551 = vunpack.c.l.b16 %v6114
    %v7552 = vunpack.c.h.b16 %v6114
    %v7553 = vunpack.c.l.b16 %v6115
    %v7554 = vunpack.c.h.b16 %v6115
    %v7555 = vunpack.c.l.b16 %v6116
    %v7556 = vunpack.c.l.b16 %v6117
    %v7557 = vunpack.c.h.b16 %v6117
    %v7558 = vunpack.c.l.b16 %v6118
    %v7559 = vunpack.c.h.b16 %v6118
    %v7560 = vunpack.c.l.b16 %v6119
    %v7561 = vunpack.c.h.b16 %v6119
    %v7562 = vunpack.c.l.b16 %v6120
    %v7563 = vunpack.c.l.b16 %v6121
    %v7564 = vunpack.c.h.b16 %v6121
    %v7565 = vunpack.c.l.b16 %v6122
    %v7566 = vunpack.c.h.b16 %v6122
    %v7567 = vunpack.c.l.b16 %v6123
    %v7568 = vunpack.c.h.b16 %v6123
    %v7569 = vunpack.c.l.b16 %v6124
    %v7570 = vpack.c.b16 %v6681, %v6674
    %v7571 = vpack.c.b16 %v6682, %v6675
    %v7572 = vpack.c.b16 %v6683, %v6676
    %v7573 = vpack.c.b16 %v6684, %v6677
    %v7574 = vpack.c.b16 %v6685, %v6678
    %v7575 = vpack.c.b16 %v6686, %v6679
    %v7576 = vpack.c.b16 %v6687, %v6680
    %v7577 = vpack.c.b16 %v6695, %v6688
    %v7578 = vpack.c.b16 %v6696, %v6689
    %v7579 = vpack.c.b16 %v6697, %v6690
    %v7580 = vpack.c.b16 %v6698, %v6691
    %v7581 = vpack.c.b16 %v6699, %v6692
    %v7582 = vpack.c.b16 %v6700, %v6693
    %v7583 = vpack.c.b16 %v6701, %v6694
    %v7584 = vpack.c.b16 %v6709, %v6702
    %v7585 = vpack.c.b16 %v6710, %v6703
    %v7586 = vpack.c.b16 %v6711, %v6704
    %v7587 = vpack.c.b16 %v6712, %v6705
    %v7588 = vpack.c.b16 %v6713, %v6706
    %v7589 = vpack.c.b16 %v6714, %v6707
    %v7590 = vpack.c.b16 %v6715, %v6708
    %v7591 = vpack.c.b16 %v6723, %v6716
    %v7592 = vpack.c.b16 %v6724, %v6717
    %v7593 = vpack.c.b16 %v6725, %v6718
    %v7594 = vpack.c.b16 %v6726, %v6719
    %v7595 = vpack.c.b16 %v6727, %v6720
    %v7596 = vpack.c.b16 %v6728, %v6721
    %v7597 = vpack.c.b16 %v6729, %v6722
    %v7598 = vpack.c.b16 %v6737, %v6730
    %v7599 = vpack.c.b16 %v6738, %v6731
    %v7600 = vpack.c.b16 %v6739, %v6732
    %v7601 = vpack.c.b16 %v6740, %v6733
    %v7602 = vpack.c.b16 %v6741, %v6734
    %v7603 = vpack.c.b16 %v6742, %v6735
    %v7604 = vpack.c.b16 %v6743, %v6736
    %v7605 = vpack.c.b16 %v6751, %v6744
    %v7606 = vpack.c.b16 %v6752, %v6745
    %v7607 = vpack.c.b16 %v6753, %v6746
    %v7608 = vpack.c.b16 %v6754, %v6747
    %v7609 = vpack.c.b16 %v6755, %v6748
    %v7610 = vpack.c.b16 %v6756, %v6749
    %v7611 = vpack.c.b16 %v6757, %v6750
    %v7612 = vpack.c.b16 %v6765, %v6758
    %v7613 = vpack.c.b16 %v6766, %v6759
    %v7614 = vpack.c.b16 %v6767, %v6760
    %v7615 = vpack.c.b16 %v6768, %v6761
    %v7616 = vpack.c.b16 %v6769, %v6762
    %v7617 = vpack.c.b16 %v6770, %v6763
    %v7618 = vpack.c.b16 %v6771, %v6764
    %v7619 = vpack.c.b16 %v6779, %v6772
    %v7620 = vpack.c.b16 %v6780, %v6773
    %v7621 = vpack.c.b16 %v6781, %v6774
    %v7622 = vpack.c.b16 %v6782, %v6775
    %v7623 = vpack.c.b16 %v6783, %v6776
    %v7624 = vpack.c.b16 %v6784, %v6777
    %v7625 = vpack.c.b16 %v6785, %v6778
    %v7626 = vpack.c.b16 %v6793, %v6786
    %v7627 = vpack.c.b16 %v6794, %v6787
    %v7628 = vpack.c.b16 %v6795, %v6788
    %v7629 = vpack.c.b16 %v6796, %v6789
    %v7630 = vpack.c.b16 %v6797, %v6790
    %v7631 = vpack.c.b16 %v6798, %v6791
    %v7632 = vpack.c.b16 %v6799, %v6792
    %v7633 = vpack.c.b16 %v6807, %v6800
    %v7634 = vpack.c.b16 %v6808, %v6801
    %v7635 = vpack.c.b16 %v6809, %v6802
    %v7636 = vpack.c.b16 %v6810, %v6803
    %v7637 = vpack.c.b16 %v6811, %v6804
    %v7638 = vpack.c.b16 %v6812, %v6805
    %v7639 = vpack.c.b16 %v6813, %v6806
    %v7640 = vpack.c.b16 %v6821, %v6814
    %v7641 = vpack.c.b16 %v6822, %v6815
    %v7642 = vpack.c.b16 %v6823, %v6816
    %v7643 = vpack.c.b16 %v6824, %v6817
    %v7644 = vpack.c.b16 %v6825, %v6818
    %v7645 = vpack.c.b16 %v6826, %v6819
    %v7646 = vpack.c.b16 %v6827, %v6820
    %v7647 = vpack.c.b16 %v6835, %v6828
    %v7648 = vpack.c.b16 %v6836, %v6829
    %v7649 = vpack.c.b16 %v6837, %v6830
    %v7650 = vpack.c.b16 %v6838, %v6831
    %v7651 = vpack.c.b16 %v6839, %v6832
    %v7652 = vpack.c.b16 %v6840, %v6833
    %v7653 = vpack.c.b16 %v6841, %v6834
    %v7654 = vpack.c.b16 %v6849, %v6842
    %v7655 = vpack.c.b16 %v6850, %v6843
    %v7656 = vpack.c.b16 %v6851, %v6844
    %v7657 = vpack.c.b16 %v6852, %v6845
    %v7658 = vpack.c.b16 %v6853, %v6846
    %v7659 = vpack.c.b16 %v6854, %v6847
    %v7660 = vpack.c.b16 %v6855, %v6848
    %v7661 = vpack.c.b16 %v6863, %v6856
    %v7662 = vpack.c.b16 %v6864, %v6857
    %v7663 = vpack.c.b16 %v6865, %v6858
    %v7664 = vpack.c.b16 %v6866, %v6859
    %v7665 = vpack.c.b16 %v6867, %v6860
    %v7666 = vpack.c.b16 %v6868, %v6861
    %v7667 = vpack.c.b16 %v6869, %v6862
    %v7668 = vpack.c.b16 %v6877, %v6870
    %v7669 = vpack.c.b16 %v6878, %v6871
    %v7670 = vpack.c.b16 %v6879, %v6872
    %v7671 = vpack.c.b16 %v6880, %v6873
    %v7672 = vpack.c.b16 %v6881, %v6874
    %v7673 = vpack.c.b16 %v6882, %v6875
    %v7674 = vpack.c.b16 %v6883, %v6876
    %v7675 = vpack.c.b16 %v6891, %v6884
    %v7676 = vpack.c.b16 %v6892, %v6885
    %v7677 = vpack.c.b16 %v6893, %v6886
    %v7678 = vpack.c.b16 %v6894, %v6887
    %v7679 = vpack.c.b16 %v6895, %v6888
    %v7680 = vpack.c.b16 %v6896, %v6889
    %v7681 = vpack.c.b16 %v6897, %v6890
    %v7682 = vpack.c.b16 %v6905, %v6898
    %v7683 = vpack.c.b16 %v6906, %v6899
    %v7684 = vpack.c.b16 %v6907, %v6900
    %v7685 = vpack.c.b16 %v6908, %v6901
    %v7686 = vpack.c.b16 %v6909, %v6902
    %v7687 = vpack.c.b16 %v6910, %v6903
    %v7688 = vpack.c.b16 %v6911, %v6904
    %v7689 = vpack.c.b16 %v6919, %v6912
    %v7690 = vpack.c.b16 %v6920, %v6913
    %v7691 = vpack.c.b16 %v6921, %v6914
    %v7692 = vpack.c.b16 %v6922, %v6915
    %v7693 = vpack.c.b16 %v6923, %v6916
    %v7694 = vpack.c.b16 %v6924, %v6917
    %v7695 = vpack.c.b16 %v6925, %v6918
    %v7696 = vpack.c.b16 %v6933, %v6926
    %v7697 = vpack.c.b16 %v6934, %v6927
    %v7698 = vpack.c.b16 %v6935, %v6928
    %v7699 = vpack.c.b16 %v6936, %v6929
    %v7700 = vpack.c.b16 %v6937, %v6930
    %v7701 = vpack.c.b16 %v6938, %v6931
    %v7702 = vpack.c.b16 %v6939, %v6932
    %v7703 = vpack.c.b16 %v6947, %v6940
    %v7704 = vpack.c.b16 %v6948, %v6941
    %v7705 = vpack.c.b16 %v6949, %v6942
    %v7706 = vpack.c.b16 %v6950, %v6943
    %v7707 = vpack.c.b16 %v6951, %v6944
    %v7708 = vpack.c.b16 %v6952, %v6945
    %v7709 = vpack.c.b16 %v6953, %v6946
    %v7710 = vpack.c.b16 %v6961, %v6954
    %v7711 = vpack.c.b16 %v6962, %v6955
    %v7712 = vpack.c.b16 %v6963, %v6956
    %v7713 = vpack.c.b16 %v6964, %v6957
    %v7714 = vpack.c.b16 %v6965, %v6958
    %v7715 = vpack.c.b16 %v6966, %v6959
    %v7716 = vpack.c.b16 %v6967, %v6960
    %v7717 = vpack.c.b16 %v6975, %v6968
    %v7718 = vpack.c.b16 %v6976, %v6969
    %v7719 = vpack.c.b16 %v6977, %v6970
    %v7720 = vpack.c.b16 %v6978, %v6971
    %v7721 = vpack.c.b16 %v6979, %v6972
    %v7722 = vpack.c.b16 %v6980, %v6973
    %v7723 = vpack.c.b16 %v6981, %v6974
    %v7724 = vpack.c.b16 %v6989, %v6982
    %v7725 = vpack.c.b16 %v6990, %v6983
    %v7726 = vpack.c.b16 %v6991, %v6984
    %v7727 = vpack.c.b16 %v6992, %v6985
    %v7728 = vpack.c.b16 %v6993, %v6986
    %v7729 = vpack.c.b16 %v6994, %v6987
    %v7730 = vpack.c.b16 %v6995, %v6988
    %v7731 = vpack.c.b16 %v7003, %v6996
    %v7732 = vpack.c.b16 %v7004, %v6997
    %v7733 = vpack.c.b16 %v7005, %v6998
    %v7734 = vpack.c.b16 %v7006, %v6999
    %v7735 = vpack.c.b16 %v7007, %v7000
    %v7736 = vpack.c.b16 %v7008, %v7001
    %v7737 = vpack.c.b16 %v7009, %v7002
    %v7738 = vpack.c.b16 %v7017, %v7010
    %v7739 = vpack.c.b16 %v7018, %v7011
    %v7740 = vpack.c.b16 %v7019, %v7012
    %v7741 = vpack.c.b16 %v7020, %v7013
    %v7742 = vpack.c.b16 %v7021, %v7014
    %v7743 = vpack.c.b16 %v7022, %v7015
    %v7744 = vpack.c.b16 %v7023, %v7016
    %v7745 = vpack.c.b16 %v7031, %v7024
    %v7746 = vpack.c.b16 %v7032, %v7025
    %v7747 = vpack.c.b16 %v7033, %v7026
    %v7748 = vpack.c.b16 %v7034, %v7027
    %v7749 = vpack.c.b16 %v7035, %v7028
    %v7750 = vpack.c.b16 %v7036, %v7029
    %v7751 = vpack.c.b16 %v7037, %v7030
    %v7752 = vpack.c.b16 %v7045, %v7038
    %v7753 = vpack.c.b16 %v7046, %v7039
    %v7754 = vpack.c.b16 %v7047, %v7040
    %v7755 = vpack.c.b16 %v7048, %v7041
    %v7756 = vpack.c.b16 %v7049, %v7042
    %v7757 = vpack.c.b16 %v7050, %v7043
    %v7758 = vpack.c.b16 %v7051, %v7044
    %v7759 = vpack.c.b16 %v7059, %v7052
    %v7760 = vpack.c.b16 %v7060, %v7053
    %v7761 = vpack.c.b16 %v7061, %v7054
    %v7762 = vpack.c.b16 %v7062, %v7055
    %v7763 = vpack.c.b16 %v7063, %v7056
    %v7764 = vpack.c.b16 %v7064, %v7057
    %v7765 = vpack.c.b16 %v7065, %v7058
    %v7766 = vpack.c.b16 %v7073, %v7066
    %v7767 = vpack.c.b16 %v7074, %v7067
    %v7768 = vpack.c.b16 %v7075, %v7068
    %v7769 = vpack.c.b16 %v7076, %v7069
    %v7770 = vpack.c.b16 %v7077, %v7070
    %v7771 = vpack.c.b16 %v7078, %v7071
    %v7772 = vpack.c.b16 %v7079, %v7072
    %v7773 = vpack.c.b16 %v7087, %v7080
    %v7774 = vpack.c.b16 %v7088, %v7081
    %v7775 = vpack.c.b16 %v7089, %v7082
    %v7776 = vpack.c.b16 %v7090, %v7083
    %v7777 = vpack.c.b16 %v7091, %v7084
    %v7778 = vpack.c.b16 %v7092, %v7085
    %v7779 = vpack.c.b16 %v7093, %v7086
    %v7780 = vpack.c.b16 %v7101, %v7094
    %v7781 = vpack.c.b16 %v7102, %v7095
    %v7782 = vpack.c.b16 %v7103, %v7096
    %v7783 = vpack.c.b16 %v7104, %v7097
    %v7784 = vpack.c.b16 %v7105, %v7098
    %v7785 = vpack.c.b16 %v7106, %v7099
    %v7786 = vpack.c.b16 %v7107, %v7100
    %v7787 = vpack.c.b16 %v7115, %v7108
    %v7788 = vpack.c.b16 %v7116, %v7109
    %v7789 = vpack.c.b16 %v7117, %v7110
    %v7790 = vpack.c.b16 %v7118, %v7111
    %v7791 = vpack.c.b16 %v7119, %v7112
    %v7792 = vpack.c.b16 %v7120, %v7113
    %v7793 = vpack.c.b16 %v7121, %v7114
    %v7794 = vpack.c.b16 %v7129, %v7122
    %v7795 = vpack.c.b16 %v7130, %v7123
    %v7796 = vpack.c.b16 %v7131, %v7124
    %v7797 = vpack.c.b16 %v7132, %v7125
    %v7798 = vpack.c.b16 %v7133, %v7126
    %v7799 = vpack.c.b16 %v7134, %v7127
    %v7800 = vpack.c.b16 %v7135, %v7128
    %v7801 = vpack.c.b16 %v7143, %v7136
    %v7802 = vpack.c.b16 %v7144, %v7137
    %v7803 = vpack.c.b16 %v7145, %v7138
    %v7804 = vpack.c.b16 %v7146, %v7139
    %v7805 = vpack.c.b16 %v7147, %v7140
    %v7806 = vpack.c.b16 %v7148, %v7141
    %v7807 = vpack.c.b16 %v7149, %v7142
    %v7808 = vpack.c.b16 %v7157, %v7150
    %v7809 = vpack.c.b16 %v7158, %v7151
    %v7810 = vpack.c.b16 %v7159, %v7152
    %v7811 = vpack.c.b16 %v7160, %v7153
    %v7812 = vpack.c.b16 %v7161, %v7154
    %v7813 = vpack.c.b16 %v7162, %v7155
    %v7814 = vpack.c.b16 %v7163, %v7156
    %v7815 = vpack.c.b16 %v7171, %v7164
    %v7816 = vpack.c.b16 %v7172, %v7165
    %v7817 = vpack.c.b16 %v7173, %v7166
    %v7818 = vpack.c.b16 %v7174, %v7167
    %v7819 = vpack.c.b16 %v7175, %v7168
    %v7820 = vpack.c.b16 %v7176, %v7169
    %v7821 = vpack.c.b16 %v7177, %v7170
    %v7822 = vpack.c.b16 %v7185, %v7178
    %v7823 = vpack.c.b16 %v7186, %v7179
    %v7824 = vpack.c.b16 %v7187, %v7180
    %v7825 = vpack.c.b16 %v7188, %v7181
    %v7826 = vpack.c.b16 %v7189, %v7182
    %v7827 = vpack.c.b16 %v7190, %v7183
    %v7828 = vpack.c.b16 %v7191, %v7184
    %v7829 = vpack.c.b16 %v7199, %v7192
    %v7830 = vpack.c.b16 %v7200, %v7193
    %v7831 = vpack.c.b16 %v7201, %v7194
    %v7832 = vpack.c.b16 %v7202, %v7195
    %v7833 = vpack.c.b16 %v7203, %v7196
    %v7834 = vpack.c.b16 %v7204, %v7197
    %v7835 = vpack.c.b16 %v7205, %v7198
    %v7836 = vpack.c.b16 %v7213, %v7206
    %v7837 = vpack.c.b16 %v7214, %v7207
    %v7838 = vpack.c.b16 %v7215, %v7208
    %v7839 = vpack.c.b16 %v7216, %v7209
    %v7840 = vpack.c.b16 %v7217, %v7210
    %v7841 = vpack.c.b16 %v7218, %v7211
    %v7842 = vpack.c.b16 %v7219, %v7212
    %v7843 = vpack.c.b16 %v7227, %v7220
    %v7844 = vpack.c.b16 %v7228, %v7221
    %v7845 = vpack.c.b16 %v7229, %v7222
    %v7846 = vpack.c.b16 %v7230, %v7223
    %v7847 = vpack.c.b16 %v7231, %v7224
    %v7848 = vpack.c.b16 %v7232, %v7225
    %v7849 = vpack.c.b16 %v7233, %v7226
    %v7850 = vpack.c.b16 %v7241, %v7234
    %v7851 = vpack.c.b16 %v7242, %v7235
    %v7852 = vpack.c.b16 %v7243, %v7236
    %v7853 = vpack.c.b16 %v7244, %v7237
    %v7854 = vpack.c.b16 %v7245, %v7238
    %v7855 = vpack.c.b16 %v7246, %v7239
    %v7856 = vpack.c.b16 %v7247, %v7240
    %v7857 = vpack.c.b16 %v7255, %v7248
    %v7858 = vpack.c.b16 %v7256, %v7249
    %v7859 = vpack.c.b16 %v7257, %v7250
    %v7860 = vpack.c.b16 %v7258, %v7251
    %v7861 = vpack.c.b16 %v7259, %v7252
    %v7862 = vpack.c.b16 %v7260, %v7253
    %v7863 = vpack.c.b16 %v7261, %v7254
    %v7864 = vpack.c.b16 %v7269, %v7262
    %v7865 = vpack.c.b16 %v7270, %v7263
    %v7866 = vpack.c.b16 %v7271, %v7264
    %v7867 = vpack.c.b16 %v7272, %v7265
    %v7868 = vpack.c.b16 %v7273, %v7266
    %v7869 = vpack.c.b16 %v7274, %v7267
    %v7870 = vpack.c.b16 %v7275, %v7268
    %v7871 = vpack.c.b16 %v7283, %v7276
    %v7872 = vpack.c.b16 %v7284, %v7277
    %v7873 = vpack.c.b16 %v7285, %v7278
    %v7874 = vpack.c.b16 %v7286, %v7279
    %v7875 = vpack.c.b16 %v7287, %v7280
    %v7876 = vpack.c.b16 %v7288, %v7281
    %v7877 = vpack.c.b16 %v7289, %v7282
    %v7878 = vpack.c.b16 %v7297, %v7290
    %v7879 = vpack.c.b16 %v7298, %v7291
    %v7880 = vpack.c.b16 %v7299, %v7292
    %v7881 = vpack.c.b16 %v7300, %v7293
    %v7882 = vpack.c.b16 %v7301, %v7294
    %v7883 = vpack.c.b16 %v7302, %v7295
    %v7884 = vpack.c.b16 %v7303, %v7296
    %v7885 = vpack.c.b16 %v7311, %v7304
    %v7886 = vpack.c.b16 %v7312, %v7305
    %v7887 = vpack.c.b16 %v7313, %v7306
    %v7888 = vpack.c.b16 %v7314, %v7307
    %v7889 = vpack.c.b16 %v7315, %v7308
    %v7890 = vpack.c.b16 %v7316, %v7309
    %v7891 = vpack.c.b16 %v7317, %v7310
    %v7892 = vpack.c.b16 %v7325, %v7318
    %v7893 = vpack.c.b16 %v7326, %v7319
    %v7894 = vpack.c.b16 %v7327, %v7320
    %v7895 = vpack.c.b16 %v7328, %v7321
    %v7896 = vpack.c.b16 %v7329, %v7322
    %v7897 = vpack.c.b16 %v7330, %v7323
    %v7898 = vpack.c.b16 %v7331, %v7324
    %v7899 = vpack.c.b16 %v7339, %v7332
    %v7900 = vpack.c.b16 %v7340, %v7333
    %v7901 = vpack.c.b16 %v7341, %v7334
    %v7902 = vpack.c.b16 %v7342, %v7335
    %v7903 = vpack.c.b16 %v7343, %v7336
    %v7904 = vpack.c.b16 %v7344, %v7337
    %v7905 = vpack.c.b16 %v7345, %v7338
    %v7906 = vpack.c.b16 %v7353, %v7346
    %v7907 = vpack.c.b16 %v7354, %v7347
    %v7908 = vpack.c.b16 %v7355, %v7348
    %v7909 = vpack.c.b16 %v7356, %v7349
    %v7910 = vpack.c.b16 %v7357, %v7350
    %v7911 = vpack.c.b16 %v7358, %v7351
    %v7912 = vpack.c.b16 %v7359, %v7352
    %v7913 = vpack.c.b16 %v7367, %v7360
    %v7914 = vpack.c.b16 %v7368, %v7361
    %v7915 = vpack.c.b16 %v7369, %v7362
    %v7916 = vpack.c.b16 %v7370, %v7363
    %v7917 = vpack.c.b16 %v7371, %v7364
    %v7918 = vpack.c.b16 %v7372, %v7365
    %v7919 = vpack.c.b16 %v7373, %v7366
    %v7920 = vpack.c.b16 %v7381, %v7374
    %v7921 = vpack.c.b16 %v7382, %v7375
    %v7922 = vpack.c.b16 %v7383, %v7376
    %v7923 = vpack.c.b16 %v7384, %v7377
    %v7924 = vpack.c.b16 %v7385, %v7378
    %v7925 = vpack.c.b16 %v7386, %v7379
    %v7926 = vpack.c.b16 %v7387, %v7380
    %v7927 = vpack.c.b16 %v7395, %v7388
    %v7928 = vpack.c.b16 %v7396, %v7389
    %v7929 = vpack.c.b16 %v7397, %v7390
    %v7930 = vpack.c.b16 %v7398, %v7391
    %v7931 = vpack.c.b16 %v7399, %v7392
    %v7932 = vpack.c.b16 %v7400, %v7393
    %v7933 = vpack.c.b16 %v7401, %v7394
    %v7934 = vpack.c.b16 %v7409, %v7402
    %v7935 = vpack.c.b16 %v7410, %v7403
    %v7936 = vpack.c.b16 %v7411, %v7404
    %v7937 = vpack.c.b16 %v7412, %v7405
    %v7938 = vpack.c.b16 %v7413, %v7406
    %v7939 = vpack.c.b16 %v7414, %v7407
    %v7940 = vpack.c.b16 %v7415, %v7408
    %v7941 = vpack.c.b16 %v7423, %v7416
    %v7942 = vpack.c.b16 %v7424, %v7417
    %v7943 = vpack.c.b16 %v7425, %v7418
    %v7944 = vpack.c.b16 %v7426, %v7419
    %v7945 = vpack.c.b16 %v7427, %v7420
    %v7946 = vpack.c.b16 %v7428, %v7421
    %v7947 = vpack.c.b16 %v7429, %v7422
    %v7948 = vpack.c.b16 %v7437, %v7430
    %v7949 = vpack.c.b16 %v7438, %v7431
    %v7950 = vpack.c.b16 %v7439, %v7432
    %v7951 = vpack.c.b16 %v7440, %v7433
    %v7952 = vpack.c.b16 %v7441, %v7434
    %v7953 = vpack.c.b16 %v7442, %v7435
    %v7954 = vpack.c.b16 %v7443, %v7436
    %v7955 = vpack.c.b16 %v7451, %v7444
    %v7956 = vpack.c.b16 %v7452, %v7445
    %v7957 = vpack.c.b16 %v7453, %v7446
    %v7958 = vpack.c.b16 %v7454, %v7447
    %v7959 = vpack.c.b16 %v7455, %v7448
    %v7960 = vpack.c.b16 %v7456, %v7449
    %v7961 = vpack.c.b16 %v7457, %v7450
    %v7962 = vpack.c.b16 %v7465, %v7458
    %v7963 = vpack.c.b16 %v7466, %v7459
    %v7964 = vpack.c.b16 %v7467, %v7460
    %v7965 = vpack.c.b16 %v7468, %v7461
    %v7966 = vpack.c.b16 %v7469, %v7462
    %v7967 = vpack.c.b16 %v7470, %v7463
    %v7968 = vpack.c.b16 %v7471, %v7464
    %v7969 = vpack.c.b16 %v7479, %v7472
    %v7970 = vpack.c.b16 %v7480, %v7473
    %v7971 = vpack.c.b16 %v7481, %v7474
    %v7972 = vpack.c.b16 %v7482, %v7475
    %v7973 = vpack.c.b16 %v7483, %v7476
    %v7974 = vpack.c.b16 %v7484, %v7477
    %v7975 = vpack.c.b16 %v7485, %v7478
    %v7976 = vpack.c.b16 %v7493, %v7486
    %v7977 = vpack.c.b16 %v7494, %v7487
    %v7978 = vpack.c.b16 %v7495, %v7488
    %v7979 = vpack.c.b16 %v7496, %v7489
    %v7980 = vpack.c.b16 %v7497, %v7490
    %v7981 = vpack.c.b16 %v7498, %v7491
    %v7982 = vpack.c.b16 %v7499, %v7492
    %v7983 = vpack.c.b16 %v7507, %v7500
    %v7984 = vpack.c.b16 %v7508, %v7501
    %v7985 = vpack.c.b16 %v7509, %v7502
    %v7986 = vpack.c.b16 %v7510, %v7503
    %v7987 = vpack.c.b16 %v7511, %v7504
    %v7988 = vpack.c.b16 %v7512, %v7505
    %v7989 = vpack.c.b16 %v7513, %v7506
    %v7990 = vpack.c.b16 %v7521, %v7514
    %v7991 = vpack.c.b16 %v7522, %v7515
    %v7992 = vpack.c.b16 %v7523, %v7516
    %v7993 = vpack.c.b16 %v7524, %v7517
    %v7994 = vpack.c.b16 %v7525, %v7518
    %v7995 = vpack.c.b16 %v7526, %v7519
    %v7996 = vpack.c.b16 %v7527, %v7520
    %v7997 = vpack.c.b16 %v7535, %v7528
    %v7998 = vpack.c.b16 %v7536, %v7529
    %v7999 = vpack.c.b16 %v7537, %v7530
    %v8000 = vpack.c.b16 %v7538, %v7531
    %v8001 = vpack.c.b16 %v7539, %v7532
    %v8002 = vpack.c.b16 %v7540, %v7533
    %v8003 = vpack.c.b16 %v7541, %v7534
    %v8004 = vpack.c.b16 %v7549, %v7542
    %v8005 = vpack.c.b16 %v7550, %v7543
    %v8006 = vpack.c.b16 %v7551, %v7544
    %v8007 = vpack.c.b16 %v7552, %v7545
    %v8008 = vpack.c.b16 %v7553, %v7546
    %v8009 = vpack.c.b16 %v7554, %v7547
    %v8010 = vpack.c.b16 %v7555, %v7548
    %v8011 = vpack.c.b16 %v7563, %v7556
    %v8012 = vpack.c.b16 %v7564, %v7557
    %v8013 = vpack.c.b16 %v7565, %v7558
    %v8014 = vpack.c.b16 %v7566, %v7559
    %v8015 = vpack.c.b16 %v7567, %v7560
    %v8016 = vpack.c.b16 %v7568, %v7561
    %v8017 = vpack.c.b16 %v7569, %v7562
    %8466 = vmatprep.subr.bf16.mxu0 %v7571
    %8467 = vmatpush1.bf16.msra.mxu0 %v7570
    %8468 = vmatprep.subr.bf16.mxu0 %v7578
    %8469 = vmatpush1.bf16.msra.mxu0 %v7577
    %8470 = vmatprep.subr.bf16.mxu0 %v7585
    %8471 = vmatpush1.bf16.msra.mxu0 %v7584
    %8472 = vmatprep.subr.bf16.mxu0 %v7592
    %8473 = vmatpush1.bf16.msra.mxu0 %v7591
    %8474 = vmatprep.subr.bf16.mxu0 %v7599
    %8475 = vmatpush1.bf16.msra.mxu0 %v7598
    %8476 = vmatprep.subr.bf16.mxu0 %v7606
    %8477 = vmatpush1.bf16.msra.mxu0 %v7605
    %8478 = vmatprep.subr.bf16.mxu0 %v7613
    %8479 = vmatpush1.bf16.msra.mxu0 %v7612
    %8480 = vmatprep.subr.bf16.mxu0 %v7620
    %8481 = vmatpush1.bf16.msra.mxu0 %v7619
    %8482 = vmatprep.subr.bf16.mxu0 %v7627
    %8483 = vmatpush1.bf16.msra.mxu0 %v7626
    %8484 = vmatprep.subr.bf16.mxu0 %v7634
    %8485 = vmatpush1.bf16.msra.mxu0 %v7633
    %8486 = vmatprep.subr.bf16.mxu0 %v7641
    %8487 = vmatpush1.bf16.msra.mxu0 %v7640
    %8488 = vmatprep.subr.bf16.mxu0 %v7648
    %8489 = vmatpush1.bf16.msra.mxu0 %v7647
    %8490 = vmatprep.subr.bf16.mxu0 %v7655
    %8491 = vmatpush1.bf16.msra.mxu0 %v7654
    %8492 = vmatprep.subr.bf16.mxu0 %v7662
    %8493 = vmatpush1.bf16.msra.mxu0 %v7661
    %8494 = vmatprep.subr.bf16.mxu0 %v7669
    %8495 = vmatpush1.bf16.msra.mxu0 %v7668
    %8496 = vmatprep.subr.bf16.mxu0 %v7676
    %8497 = vmatpush1.bf16.msra.mxu0 %v7675
    %8498 = vmatprep.mubr.bf16.mxu0 %v5550
    %8499 = vmatmul.mubr.bf16.gmra.mrb[0].mxu0 %v5549
    %v8500 = vpop.f32.mrb[0].mxu0
    %v8501 = vadd.f32 %v6130, %v8500
    %v8502 = vpop.f32.mrb[0].mxu0
    %v8503 = vadd.f32 %v6134, %v8502
    %v8504 = vpop.f32.mrb[0].mxu0
    %v8505 = vadd.f32 %v6130, %v8504
    %v8506 = vpop.f32.mrb[0].mxu0
    %v8507 = vadd.f32 %v6134, %v8506
    %8508 = vmatprep.mubr.bf16.mxu0 %v5558
    %8509 = vmatmul.mubr.bf16.gmra.mrb[0].mxu0 %v5557
    %v8510 = vpop.f32.mrb[0].mxu0
    %v8511 = vadd.f32 %v6130, %v8510
    %v8512 = vpop.f32.mrb[0].mxu0
    %v8513 = vadd.f32 %v6134, %v8512
    %v8514 = vpop.f32.mrb[0].mxu0
    %v8515 = vadd.f32 %v6130, %v8514
    %v8516 = vpop.f32.mrb[0].mxu0
    %v8517 = vadd.f32 %v6134, %v8516
    %8518 = vmatprep.mubr.bf16.mxu0 %v5566
    %8519 = vmatmul.mubr.bf16.gmra.mrb[0].mxu0 %v5565
    %v8520 = vpop.f32.mrb[0].mxu0
    %v8521 = vadd.f32 %v6130, %v8520
    %v8522 = vpop.f32.mrb[0].mxu0
    %v8523 = vadd.f32 %v6134, %v8522
    %v8524 = vpop.f32.mrb[0].mxu0
    %v8525 = vadd.f32 %v6130, %v8524
    %v8526 = vpop.f32.mrb[0].mxu0
    %v8527 = vadd.f32 %v6134, %v8526
    %8528 = vmatprep.mubr.bf16.mxu0 %v5574
    %8529 = vmatmul.mubr.bf16.gmra.mrb[0].mxu0 %v5573
    %v8530 = vpop.f32.mrb[0].mxu0
    %v8531 = vadd.f32 %v6130, %v8530
    %v8532 = vpop.f32.mrb[0].mxu0
    %v8533 = vadd.f32 %v6134, %v8532
    %v8534 = vpop.f32.mrb[0].mxu0
    %v8535 = vadd.f32 %v6130, %v8534
    %v8536 = vpop.f32.mrb[0].mxu0
    %v8537 = vadd.f32 %v6134, %v8536
    %8538 = vmatprep.mubr.bf16.mxu0 %v5582
    %8539 = vmatmul.mubr.bf16.gmra.mrb[0].mxu0 %v5581
    %v8540 = vpop.f32.mrb[0].mxu0
    %v8541 = vadd.f32 %v6130, %v8540
    %v8542 = vpop.f32.mrb[0].mxu0
    %v8543 = vadd.f32 %v6134, %v8542
    %v8544 = vpop.f32.mrb[0].mxu0
    %v8545 = vadd.f32 %v6130, %v8544
    %v8546 = vpop.f32.mrb[0].mxu0
    %v8547 = vadd.f32 %v6134, %v8546
    %8548 = vmatprep.mubr.bf16.mxu0 %v5590
    %8549 = vmatmul.mubr.bf16.gmra.mrb[0].mxu0 %v5589
    %v8550 = vpop.f32.mrb[0].mxu0
    %v8551 = vadd.f32 %v6130, %v8550
    %v8552 = vpop.f32.mrb[0].mxu0
    %v8553 = vadd.f32 %v6134, %v8552
    %v8554 = vpop.f32.mrb[0].mxu0
    %v8555 = vadd.f32 %v6130, %v8554
    %v8556 = vpop.f32.mrb[0].mxu0
    %v8557 = vadd.f32 %v6134, %v8556
    %8558 = vmatprep.mubr.bf16.mxu0 %v5598
    %8559 = vmatmul.mubr.bf16.gmra.mrb[0].mxu0 %v5597
    %v8560 = vpop.f32.mrb[0].mxu0
    %v8561 = vadd.f32 %v6130, %v8560
    %v8562 = vpop.f32.mrb[0].mxu0
    %v8563 = vadd.f32 %v6134, %v8562
    %v8564 = vpop.f32.mrb[0].mxu0
    %v8565 = vadd.f32 %v6130, %v8564
    %v8566 = vpop.f32.mrb[0].mxu0
    %v8567 = vadd.f32 %v6134, %v8566
    %8568 = vmatprep.mubr.bf16.mxu0 %v5606
    %8569 = vmatmul.mubr.bf16.gmra.mrb[0].mxu0 %v5605
    %v8570 = vpop.f32.mrb[0].mxu0
    %v8571 = vadd.f32 %v6130, %v8570
    %v8572 = vpop.f32.mrb[0].mxu0
    %v8573 = vadd.f32 %v6134, %v8572
    %v8574 = vpop.f32.mrb[0].mxu0
    %v8575 = vadd.f32 %v6130, %v8574
    %v8576 = vpop.f32.mrb[0].mxu0
    %v8577 = vadd.f32 %v6134, %v8576
    %8578 = vdwg.mxu0
    %8579 = vmatprep.subr.bf16.mxu0 %v7683
    %8580 = vmatpush1.bf16.msra.mxu0 %v7682
    %8581 = vmatprep.subr.bf16.mxu0 %v7690
    %8582 = vmatpush1.bf16.msra.mxu0 %v7689
    %8583 = vmatprep.subr.bf16.mxu0 %v7697
    %8584 = vmatpush1.bf16.msra.mxu0 %v7696
    %8585 = vmatprep.subr.bf16.mxu0 %v7704
    %8586 = vmatpush1.bf16.msra.mxu0 %v7703
    %8587 = vmatprep.subr.bf16.mxu0 %v7711
    %8588 = vmatpush1.bf16.msra.mxu0 %v7710
    %8589 = vmatprep.subr.bf16.mxu0 %v7718
    %8590 = vmatpush1.bf16.msra.mxu0 %v7717
    %8591 = vmatprep.subr.bf16.mxu0 %v7725
    %8592 = vmatpush1.bf16.msra.mxu0 %v7724
    %8593 = vmatprep.subr.bf16.mxu0 %v7732
    %8594 = vmatpush1.bf16.msra.mxu0 %v7731
    %8595 = vmatprep.subr.bf16.mxu0 %v7739
    %8596 = vmatpush1.bf16.msra.mxu0 %v7738
    %8597 = vmatprep.subr.bf16.mxu0 %v7746
    %8598 = vmatpush1.bf16.msra.mxu0 %v7745
    %8599 = vmatprep.subr.bf16.mxu0 %v7753
    %8600 = vmatpush1.bf16.msra.mxu0 %v7752
    %8601 = vmatprep.subr.bf16.mxu0 %v7760
    %8602 = vmatpush1.bf16.msra.mxu0 %v7759
    %8603 = vmatprep.subr.bf16.mxu0 %v7767
    %8604 = vmatpush1.bf16.msra.mxu0 %v7766
    %8605 = vmatprep.subr.bf16.mxu0 %v7774
    %8606 = vmatpush1.bf16.msra.mxu0 %v7773
    %8607 = vmatprep.subr.bf16.mxu0 %v7781
    %8608 = vmatpush1.bf16.msra.mxu0 %v7780
    %8609 = vmatprep.subr.bf16.mxu0 %v7788
    %8610 = vmatpush1.bf16.msra.mxu0 %v7787
    %8611 = vmatprep.mubr.bf16.mxu0 %v5552
    %8612 = vmatmul.mubr.bf16.gmra.mrb[0].mxu0 %v5551
    %v8613 = vpop.f32.mrb[0].mxu0
    %v8614 = vadd.f32 %v8501, %v8613
    %v8615 = vpop.f32.mrb[0].mxu0
    %v8616 = vadd.f32 %v8503, %v8615
    %v8617 = vpop.f32.mrb[0].mxu0
    %v8618 = vadd.f32 %v8505, %v8617
    %v8619 = vpop.f32.mrb[0].mxu0
    %v8620 = vadd.f32 %v8507, %v8619
    %8621 = vmatprep.mubr.bf16.mxu0 %v5560
    %8622 = vmatmul.mubr.bf16.gmra.mrb[0].mxu0 %v5559
    %v8623 = vpop.f32.mrb[0].mxu0
    %v8624 = vadd.f32 %v8511, %v8623
    %v8625 = vpop.f32.mrb[0].mxu0
    %v8626 = vadd.f32 %v8513, %v8625
    %v8627 = vpop.f32.mrb[0].mxu0
    %v8628 = vadd.f32 %v8515, %v8627
    %v8629 = vpop.f32.mrb[0].mxu0
    %v8630 = vadd.f32 %v8517, %v8629
    %8631 = vmatprep.mubr.bf16.mxu0 %v5568
    %8632 = vmatmul.mubr.bf16.gmra.mrb[0].mxu0 %v5567
    %v8633 = vpop.f32.mrb[0].mxu0
    %v8634 = vadd.f32 %v8521, %v8633
    %v8635 = vpop.f32.mrb[0].mxu0
    %v8636 = vadd.f32 %v8523, %v8635
    %v8637 = vpop.f32.mrb[0].mxu0
    %v8638 = vadd.f32 %v8525, %v8637
    %v8639 = vpop.f32.mrb[0].mxu0
    %v8640 = vadd.f32 %v8527, %v8639
    %8641 = vmatprep.mubr.bf16.mxu0 %v5576
    %8642 = vmatmul.mubr.bf16.gmra.mrb[0].mxu0 %v5575
    %v8643 = vpop.f32.mrb[0].mxu0
    %v8644 = vadd.f32 %v8531, %v8643
    %v8645 = vpop.f32.mrb[0].mxu0
    %v8646 = vadd.f32 %v8533, %v8645
    %v8647 = vpop.f32.mrb[0].mxu0
    %v8648 = vadd.f32 %v8535, %v8647
    %v8649 = vpop.f32.mrb[0].mxu0
    %v8650 = vadd.f32 %v8537, %v8649
    %8651 = vmatprep.mubr.bf16.mxu0 %v5584
    %8652 = vmatmul.mubr.bf16.gmra.mrb[0].mxu0 %v5583
    %v8653 = vpop.f32.mrb[0].mxu0
    %v8654 = vadd.f32 %v8541, %v8653
    %v8655 = vpop.f32.mrb[0].mxu0
    %v8656 = vadd.f32 %v8543, %v8655
    %v8657 = vpop.f32.mrb[0].mxu0
    %v8658 = vadd.f32 %v8545, %v8657
    %v8659 = vpop.f32.mrb[0].mxu0
    %v8660 = vadd.f32 %v8547, %v8659
    %8661 = vmatprep.mubr.bf16.mxu0 %v5592
    %8662 = vmatmul.mubr.bf16.gmra.mrb[0].mxu0 %v5591
    %v8663 = vpop.f32.mrb[0].mxu0
    %v8664 = vadd.f32 %v8551, %v8663
    %v8665 = vpop.f32.mrb[0].mxu0
    %v8666 = vadd.f32 %v8553, %v8665
    %v8667 = vpop.f32.mrb[0].mxu0
    %v8668 = vadd.f32 %v8555, %v8667
    %v8669 = vpop.f32.mrb[0].mxu0
    %v8670 = vadd.f32 %v8557, %v8669
    %8671 = vmatprep.mubr.bf16.mxu0 %v5600
    %8672 = vmatmul.mubr.bf16.gmra.mrb[0].mxu0 %v5599
    %v8673 = vpop.f32.mrb[0].mxu0
    %v8674 = vadd.f32 %v8561, %v8673
    %v8675 = vpop.f32.mrb[0].mxu0
    %v8676 = vadd.f32 %v8563, %v8675
    %v8677 = vpop.f32.mrb[0].mxu0
    %v8678 = vadd.f32 %v8565, %v8677
    %v8679 = vpop.f32.mrb[0].mxu0
    %v8680 = vadd.f32 %v8567, %v8679
    %8681 = vmatprep.mubr.bf16.mxu0 %v5608
    %8682 = vmatmul.mubr.bf16.gmra.mrb[0].mxu0 %v5607
    %v8683 = vpop.f32.mrb[0].mxu0
    %v8684 = vadd.f32 %v8571, %v8683
    %v8685 = vpop.f32.mrb[0].mxu0
    %v8686 = vadd.f32 %v8573, %v8685
    %v8687 = vpop.f32.mrb[0].mxu0
    %v8688 = vadd.f32 %v8575, %v8687
    %v8689 = vpop.f32.mrb[0].mxu0
    %v8690 = vadd.f32 %v8577, %v8689
    %8691 = vdwg.mxu0
    %8692 = vmatprep.subr.bf16.mxu0 %v7795
    %8693 = vmatpush1.bf16.msra.mxu0 %v7794
    %8694 = vmatprep.subr.bf16.mxu0 %v7802
    %8695 = vmatpush1.bf16.msra.mxu0 %v7801
    %8696 = vmatprep.subr.bf16.mxu0 %v7809
    %8697 = vmatpush1.bf16.msra.mxu0 %v7808
    %8698 = vmatprep.subr.bf16.mxu0 %v7816
    %8699 = vmatpush1.bf16.msra.mxu0 %v7815
    %8700 = vmatprep.subr.bf16.mxu0 %v7823
    %8701 = vmatpush1.bf16.msra.mxu0 %v7822
    %8702 = vmatprep.subr.bf16.mxu0 %v7830
    %8703 = vmatpush1.bf16.msra.mxu0 %v7829
    %8704 = vmatprep.subr.bf16.mxu0 %v7837
    %8705 = vmatpush1.bf16.msra.mxu0 %v7836
    %8706 = vmatprep.subr.bf16.mxu0 %v7844
    %8707 = vmatpush1.bf16.msra.mxu0 %v7843
    %8708 = vmatprep.subr.bf16.mxu0 %v7851
    %8709 = vmatpush1.bf16.msra.mxu0 %v7850
    %8710 = vmatprep.subr.bf16.mxu0 %v7858
    %8711 = vmatpush1.bf16.msra.mxu0 %v7857
    %8712 = vmatprep.subr.bf16.mxu0 %v7865
    %8713 = vmatpush1.bf16.msra.mxu0 %v7864
    %8714 = vmatprep.subr.bf16.mxu0 %v7872
    %8715 = vmatpush1.bf16.msra.mxu0 %v7871
    %8716 = vmatprep.subr.bf16.mxu0 %v7879
    %8717 = vmatpush1.bf16.msra.mxu0 %v7878
    %8718 = vmatprep.subr.bf16.mxu0 %v7886
    %8719 = vmatpush1.bf16.msra.mxu0 %v7885
    %8720 = vmatprep.subr.bf16.mxu0 %v7893
    %8721 = vmatpush1.bf16.msra.mxu0 %v7892
    %8722 = vmatprep.subr.bf16.mxu0 %v7900
    %8723 = vmatpush1.bf16.msra.mxu0 %v7899
    %8724 = vmatprep.mubr.bf16.mxu0 %v5554
    %8725 = vmatmul.mubr.bf16.gmra.mrb[0].mxu0 %v5553
    %v8726 = vpop.f32.mrb[0].mxu0
    %v8727 = vadd.f32 %v8614, %v8726
    %v8728 = vpop.f32.mrb[0].mxu0
    %v8729 = vadd.f32 %v8616, %v8728
    %v8730 = vpop.f32.mrb[0].mxu0
    %v8731 = vadd.f32 %v8618, %v8730
    %v8732 = vpop.f32.mrb[0].mxu0
    %v8733 = vadd.f32 %v8620, %v8732
    %8734 = vmatprep.mubr.bf16.mxu0 %v5562
    %8735 = vmatmul.mubr.bf16.gmra.mrb[0].mxu0 %v5561
    %v8736 = vpop.f32.mrb[0].mxu0
    %v8737 = vadd.f32 %v8624, %v8736
    %v8738 = vpop.f32.mrb[0].mxu0
    %v8739 = vadd.f32 %v8626, %v8738
    %v8740 = vpop.f32.mrb[0].mxu0
    %v8741 = vadd.f32 %v8628, %v8740
    %v8742 = vpop.f32.mrb[0].mxu0
    %v8743 = vadd.f32 %v8630, %v8742
    %8744 = vmatprep.mubr.bf16.mxu0 %v5570
    %8745 = vmatmul.mubr.bf16.gmra.mrb[0].mxu0 %v5569
    %v8746 = vpop.f32.mrb[0].mxu0
    %v8747 = vadd.f32 %v8634, %v8746
    %v8748 = vpop.f32.mrb[0].mxu0
    %v8749 = vadd.f32 %v8636, %v8748
    %v8750 = vpop.f32.mrb[0].mxu0
    %v8751 = vadd.f32 %v8638, %v8750
    %v8752 = vpop.f32.mrb[0].mxu0
    %v8753 = vadd.f32 %v8640, %v8752
    %8754 = vmatprep.mubr.bf16.mxu0 %v5578
    %8755 = vmatmul.mubr.bf16.gmra.mrb[0].mxu0 %v5577
    %v8756 = vpop.f32.mrb[0].mxu0
    %v8757 = vadd.f32 %v8644, %v8756
    %v8758 = vpop.f32.mrb[0].mxu0
    %v8759 = vadd.f32 %v8646, %v8758
    %v8760 = vpop.f32.mrb[0].mxu0
    %v8761 = vadd.f32 %v8648, %v8760
    %v8762 = vpop.f32.mrb[0].mxu0
    %v8763 = vadd.f32 %v8650, %v8762
    %8764 = vmatprep.mubr.bf16.mxu0 %v5586
    %8765 = vmatmul.mubr.bf16.gmra.mrb[0].mxu0 %v5585
    %v8766 = vpop.f32.mrb[0].mxu0
    %v8767 = vadd.f32 %v8654, %v8766
    %v8768 = vpop.f32.mrb[0].mxu0
    %v8769 = vadd.f32 %v8656, %v8768
    %v8770 = vpop.f32.mrb[0].mxu0
    %v8771 = vadd.f32 %v8658, %v8770
    %v8772 = vpop.f32.mrb[0].mxu0
    %v8773 = vadd.f32 %v8660, %v8772
    %8774 = vmatprep.mubr.bf16.mxu0 %v5594
    %8775 = vmatmul.mubr.bf16.gmra.mrb[0].mxu0 %v5593
    %v8776 = vpop.f32.mrb[0].mxu0
    %v8777 = vadd.f32 %v8664, %v8776
    %v8778 = vpop.f32.mrb[0].mxu0
    %v8779 = vadd.f32 %v8666, %v8778
    %v8780 = vpop.f32.mrb[0].mxu0
    %v8781 = vadd.f32 %v8668, %v8780
    %v8782 = vpop.f32.mrb[0].mxu0
    %v8783 = vadd.f32 %v8670, %v8782
    %8784 = vmatprep.mubr.bf16.mxu0 %v5602
    %8785 = vmatmul.mubr.bf16.gmra.mrb[0].mxu0 %v5601
    %v8786 = vpop.f32.mrb[0].mxu0
    %v8787 = vadd.f32 %v8674, %v8786
    %v8788 = vpop.f32.mrb[0].mxu0
    %v8789 = vadd.f32 %v8676, %v8788
    %v8790 = vpop.f32.mrb[0].mxu0
    %v8791 = vadd.f32 %v8678, %v8790
    %v8792 = vpop.f32.mrb[0].mxu0
    %v8793 = vadd.f32 %v8680, %v8792
    %8794 = vmatprep.mubr.bf16.mxu0 %v5610
    %8795 = vmatmul.mubr.bf16.gmra.mrb[0].mxu0 %v5609
    %v8796 = vpop.f32.mrb[0].mxu0
    %v8797 = vadd.f32 %v8684, %v8796
    %v8798 = vpop.f32.mrb[0].mxu0
    %v8799 = vadd.f32 %v8686, %v8798
    %v8800 = vpop.f32.mrb[0].mxu0
    %v8801 = vadd.f32 %v8688, %v8800
    %v8802 = vpop.f32.mrb[0].mxu0
    %v8803 = vadd.f32 %v8690, %v8802
    %8804 = vdwg.mxu0
    %8805 = vmatprep.subr.bf16.mxu0 %v7907
    %8806 = vmatpush1.bf16.msra.mxu0 %v7906
    %8807 = vmatprep.subr.bf16.mxu0 %v7914
    %8808 = vmatpush1.bf16.msra.mxu0 %v7913
    %8809 = vmatprep.subr.bf16.mxu0 %v7921
    %8810 = vmatpush1.bf16.msra.mxu0 %v7920
    %8811 = vmatprep.subr.bf16.mxu0 %v7928
    %8812 = vmatpush1.bf16.msra.mxu0 %v7927
    %8813 = vmatprep.subr.bf16.mxu0 %v7935
    %8814 = vmatpush1.bf16.msra.mxu0 %v7934
    %8815 = vmatprep.subr.bf16.mxu0 %v7942
    %8816 = vmatpush1.bf16.msra.mxu0 %v7941
    %8817 = vmatprep.subr.bf16.mxu0 %v7949
    %8818 = vmatpush1.bf16.msra.mxu0 %v7948
    %8819 = vmatprep.subr.bf16.mxu0 %v7956
    %8820 = vmatpush1.bf16.msra.mxu0 %v7955
    %8821 = vmatprep.subr.bf16.mxu0 %v7963
    %8822 = vmatpush1.bf16.msra.mxu0 %v7962
    %8823 = vmatprep.subr.bf16.mxu0 %v7970
    %8824 = vmatpush1.bf16.msra.mxu0 %v7969
    %8825 = vmatprep.subr.bf16.mxu0 %v7977
    %8826 = vmatpush1.bf16.msra.mxu0 %v7976
    %8827 = vmatprep.subr.bf16.mxu0 %v7984
    %8828 = vmatpush1.bf16.msra.mxu0 %v7983
    %8829 = vmatprep.subr.bf16.mxu0 %v7991
    %8830 = vmatpush1.bf16.msra.mxu0 %v7990
    %8831 = vmatprep.subr.bf16.mxu0 %v7998
    %8832 = vmatpush1.bf16.msra.mxu0 %v7997
    %8833 = vmatprep.subr.bf16.mxu0 %v8005
    %8834 = vmatpush1.bf16.msra.mxu0 %v8004
    %8835 = vmatprep.subr.bf16.mxu0 %v8012
    %8836 = vmatpush1.bf16.msra.mxu0 %v8011
    %8837 = vmatprep.mubr.bf16.mxu0 %v5556
    %8838 = vmatmul.mubr.bf16.gmra.mrb[0].mxu0 %v5555
    %v8839 = vpop.f32.mrb[0].mxu0
    %v8840 = vadd.f32 %v8727, %v8839
    %v8841 = vpop.f32.mrb[0].mxu0
    %v8842 = vadd.f32 %v8729, %v8841
    %v8843 = vpop.f32.mrb[0].mxu0
    %v8844 = vadd.f32 %v8731, %v8843
    %v8845 = vpop.f32.mrb[0].mxu0
    %v8846 = vadd.f32 %v8733, %v8845
    %8847 = vmatprep.mubr.bf16.mxu0 %v5564
    %8848 = vmatmul.mubr.bf16.gmra.mrb[0].mxu0 %v5563
    %v8849 = vpop.f32.mrb[0].mxu0
    %v8850 = vadd.f32 %v8737, %v8849
    %v8851 = vpop.f32.mrb[0].mxu0
    %v8852 = vadd.f32 %v8739, %v8851
    %v8853 = vpop.f32.mrb[0].mxu0
    %v8854 = vadd.f32 %v8741, %v8853
    %v8855 = vpop.f32.mrb[0].mxu0
    %v8856 = vadd.f32 %v8743, %v8855
    %8857 = vmatprep.mubr.bf16.mxu0 %v5572
    %8858 = vmatmul.mubr.bf16.gmra.mrb[0].mxu0 %v5571
    %v8859 = vpop.f32.mrb[0].mxu0
    %v8860 = vadd.f32 %v8747, %v8859
    %v8861 = vpop.f32.mrb[0].mxu0
    %v8862 = vadd.f32 %v8749, %v8861
    %v8863 = vpop.f32.mrb[0].mxu0
    %v8864 = vadd.f32 %v8751, %v8863
    %v8865 = vpop.f32.mrb[0].mxu0
    %v8866 = vadd.f32 %v8753, %v8865
    %8867 = vmatprep.mubr.bf16.mxu0 %v5580
    %8868 = vmatmul.mubr.bf16.gmra.mrb[0].mxu0 %v5579
    %v8869 = vpop.f32.mrb[0].mxu0
    %v8870 = vadd.f32 %v8757, %v8869
    %v8871 = vpop.f32.mrb[0].mxu0
    %v8872 = vadd.f32 %v8759, %v8871
    %v8873 = vpop.f32.mrb[0].mxu0
    %v8874 = vadd.f32 %v8761, %v8873
    %v8875 = vpop.f32.mrb[0].mxu0
    %v8876 = vadd.f32 %v8763, %v8875
    %8877 = vmatprep.mubr.bf16.mxu0 %v5588
    %8878 = vmatmul.mubr.bf16.gmra.mrb[0].mxu0 %v5587
    %v8879 = vpop.f32.mrb[0].mxu0
    %v8880 = vadd.f32 %v8767, %v8879
    %v8881 = vpop.f32.mrb[0].mxu0
    %v8882 = vadd.f32 %v8769, %v8881
    %v8883 = vpop.f32.mrb[0].mxu0
    %v8884 = vadd.f32 %v8771, %v8883
    %v8885 = vpop.f32.mrb[0].mxu0
    %v8886 = vadd.f32 %v8773, %v8885
    %8887 = vmatprep.mubr.bf16.mxu0 %v5596
    %8888 = vmatmul.mubr.bf16.gmra.mrb[0].mxu0 %v5595
    %v8889 = vpop.f32.mrb[0].mxu0
    %v8890 = vadd.f32 %v8777, %v8889
    %v8891 = vpop.f32.mrb[0].mxu0
    %v8892 = vadd.f32 %v8779, %v8891
    %v8893 = vpop.f32.mrb[0].mxu0
    %v8894 = vadd.f32 %v8781, %v8893
    %v8895 = vpop.f32.mrb[0].mxu0
    %v8896 = vadd.f32 %v8783, %v8895
    %8897 = vmatprep.mubr.bf16.mxu0 %v5604
    %8898 = vmatmul.mubr.bf16.gmra.mrb[0].mxu0 %v5603
    %v8899 = vpop.f32.mrb[0].mxu0
    %v8900 = vadd.f32 %v8787, %v8899
    %v8901 = vpop.f32.mrb[0].mxu0
    %v8902 = vadd.f32 %v8789, %v8901
    %v8903 = vpop.f32.mrb[0].mxu0
    %v8904 = vadd.f32 %v8791, %v8903
    %v8905 = vpop.f32.mrb[0].mxu0
    %v8906 = vadd.f32 %v8793, %v8905
    %8907 = vmatprep.mubr.bf16.mxu0 %v5612
    %8908 = vmatmul.mubr.bf16.gmra.mrb[0].mxu0 %v5611
    %v8909 = vpop.f32.mrb[0].mxu0
    %v8910 = vadd.f32 %v8797, %v8909
    %v8911 = vpop.f32.mrb[0].mxu0
    %v8912 = vadd.f32 %v8799, %v8911
    %v8913 = vpop.f32.mrb[0].mxu0
    %v8914 = vadd.f32 %v8801, %v8913
    %v8915 = vpop.f32.mrb[0].mxu0
    %v8916 = vadd.f32 %v8803, %v8915
    %8917 = vdwg.mxu0
    %8918 = vmatprep.subr.bf16.mxu0 %v7573
    %8919 = vmatpush1.bf16.msra.mxu0 %v7572
    %8920 = vmatprep.subr.bf16.mxu0 %v7580
    %8921 = vmatpush1.bf16.msra.mxu0 %v7579
    %8922 = vmatprep.subr.bf16.mxu0 %v7587
    %8923 = vmatpush1.bf16.msra.mxu0 %v7586
    %8924 = vmatprep.subr.bf16.mxu0 %v7594
    %8925 = vmatpush1.bf16.msra.mxu0 %v7593
    %8926 = vmatprep.subr.bf16.mxu0 %v7601
    %8927 = vmatpush1.bf16.msra.mxu0 %v7600
    %8928 = vmatprep.subr.bf16.mxu0 %v7608
    %8929 = vmatpush1.bf16.msra.mxu0 %v7607
    %8930 = vmatprep.subr.bf16.mxu0 %v7615
    %8931 = vmatpush1.bf16.msra.mxu0 %v7614
    %8932 = vmatprep.subr.bf16.mxu0 %v7622
    %8933 = vmatpush1.bf16.msra.mxu0 %v7621
    %8934 = vmatprep.subr.bf16.mxu0 %v7629
    %8935 = vmatpush1.bf16.msra.mxu0 %v7628
    %8936 = vmatprep.subr.bf16.mxu0 %v7636
    %8937 = vmatpush1.bf16.msra.mxu0 %v7635
    %8938 = vmatprep.subr.bf16.mxu0 %v7643
    %8939 = vmatpush1.bf16.msra.mxu0 %v7642
    %8940 = vmatprep.subr.bf16.mxu0 %v7650
    %8941 = vmatpush1.bf16.msra.mxu0 %v7649
    %8942 = vmatprep.subr.bf16.mxu0 %v7657
    %8943 = vmatpush1.bf16.msra.mxu0 %v7656
    %8944 = vmatprep.subr.bf16.mxu0 %v7664
    %8945 = vmatpush1.bf16.msra.mxu0 %v7663
    %8946 = vmatprep.subr.bf16.mxu0 %v7671
    %8947 = vmatpush1.bf16.msra.mxu0 %v7670
    %8948 = vmatprep.subr.bf16.mxu0 %v7678
    %8949 = vmatpush1.bf16.msra.mxu0 %v7677
    %8950 = vmatprep.mubr.bf16.mxu0 %v5550
    %8951 = vmatmul.mubr.bf16.gmra.mrb[0].mxu0 %v5549
    %v8952 = vpop.f32.mrb[0].mxu0
    %v8953 = vadd.f32 %v6138, %v8952
    %v8954 = vpop.f32.mrb[0].mxu0
    %v8955 = vadd.f32 %v6142, %v8954
    %v8956 = vpop.f32.mrb[0].mxu0
    %v8957 = vadd.f32 %v6138, %v8956
    %v8958 = vpop.f32.mrb[0].mxu0
    %v8959 = vadd.f32 %v6142, %v8958
    %8960 = vmatprep.mubr.bf16.mxu0 %v5558
    %8961 = vmatmul.mubr.bf16.gmra.mrb[0].mxu0 %v5557
    %v8962 = vpop.f32.mrb[0].mxu0
    %v8963 = vadd.f32 %v6138, %v8962
    %v8964 = vpop.f32.mrb[0].mxu0
    %v8965 = vadd.f32 %v6142, %v8964
    %v8966 = vpop.f32.mrb[0].mxu0
    %v8967 = vadd.f32 %v6138, %v8966
    %v8968 = vpop.f32.mrb[0].mxu0
    %v8969 = vadd.f32 %v6142, %v8968
    %8970 = vmatprep.mubr.bf16.mxu0 %v5566
    %8971 = vmatmul.mubr.bf16.gmra.mrb[0].mxu0 %v5565
    %v8972 = vpop.f32.mrb[0].mxu0
    %v8973 = vadd.f32 %v6138, %v8972
    %v8974 = vpop.f32.mrb[0].mxu0
    %v8975 = vadd.f32 %v6142, %v8974
    %v8976 = vpop.f32.mrb[0].mxu0
    %v8977 = vadd.f32 %v6138, %v8976
    %v8978 = vpop.f32.mrb[0].mxu0
    %v8979 = vadd.f32 %v6142, %v8978
    %8980 = vmatprep.mubr.bf16.mxu0 %v5574
    %8981 = vmatmul.mubr.bf16.gmra.mrb[0].mxu0 %v5573
    %v8982 = vpop.f32.mrb[0].mxu0
    %v8983 = vadd.f32 %v6138, %v8982
    %v8984 = vpop.f32.mrb[0].mxu0
    %v8985 = vadd.f32 %v6142, %v8984
    %v8986 = vpop.f32.mrb[0].mxu0
    %v8987 = vadd.f32 %v6138, %v8986
    %v8988 = vpop.f32.mrb[0].mxu0
    %v8989 = vadd.f32 %v6142, %v8988
    %8990 = vmatprep.mubr.bf16.mxu0 %v5582
    %8991 = vmatmul.mubr.bf16.gmra.mrb[0].mxu0 %v5581
    %v8992 = vpop.f32.mrb[0].mxu0
    %v8993 = vadd.f32 %v6138, %v8992
    %v8994 = vpop.f32.mrb[0].mxu0
    %v8995 = vadd.f32 %v6142, %v8994
    %v8996 = vpop.f32.mrb[0].mxu0
    %v8997 = vadd.f32 %v6138, %v8996
    %v8998 = vpop.f32.mrb[0].mxu0
    %v8999 = vadd.f32 %v6142, %v8998
    %9000 = vmatprep.mubr.bf16.mxu0 %v5590
    %9001 = vmatmul.mubr.bf16.gmra.mrb[0].mxu0 %v5589
    %v9002 = vpop.f32.mrb[0].mxu0
    %v9003 = vadd.f32 %v6138, %v9002
    %v9004 = vpop.f32.mrb[0].mxu0
    %v9005 = vadd.f32 %v6142, %v9004
    %v9006 = vpop.f32.mrb[0].mxu0
    %v9007 = vadd.f32 %v6138, %v9006
    %v9008 = vpop.f32.mrb[0].mxu0
    %v9009 = vadd.f32 %v6142, %v9008
    %9010 = vmatprep.mubr.bf16.mxu0 %v5598
    %9011 = vmatmul.mubr.bf16.gmra.mrb[0].mxu0 %v5597
    %v9012 = vpop.f32.mrb[0].mxu0
    %v9013 = vadd.f32 %v6138, %v9012
    %v9014 = vpop.f32.mrb[0].mxu0
    %v9015 = vadd.f32 %v6142, %v9014
    %v9016 = vpop.f32.mrb[0].mxu0
    %v9017 = vadd.f32 %v6138, %v9016
    %v9018 = vpop.f32.mrb[0].mxu0
    %v9019 = vadd.f32 %v6142, %v9018
    %9020 = vmatprep.mubr.bf16.mxu0 %v5606
    %9021 = vmatmul.mubr.bf16.gmra.mrb[0].mxu0 %v5605
    %v9022 = vpop.f32.mrb[0].mxu0
    %v9023 = vadd.f32 %v6138, %v9022
    %v9024 = vpop.f32.mrb[0].mxu0
    %v9025 = vadd.f32 %v6142, %v9024
    %v9026 = vpop.f32.mrb[0].mxu0
    %v9027 = vadd.f32 %v6138, %v9026
    %v9028 = vpop.f32.mrb[0].mxu0
    %v9029 = vadd.f32 %v6142, %v9028
    %9030 = vdwg.mxu0
    %9031 = vmatprep.subr.bf16.mxu0 %v7685
    %9032 = vmatpush1.bf16.msra.mxu0 %v7684
    %9033 = vmatprep.subr.bf16.mxu0 %v7692
    %9034 = vmatpush1.bf16.msra.mxu0 %v7691
    %9035 = vmatprep.subr.bf16.mxu0 %v7699
    %9036 = vmatpush1.bf16.msra.mxu0 %v7698
    %9037 = vmatprep.subr.bf16.mxu0 %v7706
    %9038 = vmatpush1.bf16.msra.mxu0 %v7705
    %9039 = vmatprep.subr.bf16.mxu0 %v7713
    %9040 = vmatpush1.bf16.msra.mxu0 %v7712
    %9041 = vmatprep.subr.bf16.mxu0 %v7720
    %9042 = vmatpush1.bf16.msra.mxu0 %v7719
    %9043 = vmatprep.subr.bf16.mxu0 %v7727
    %9044 = vmatpush1.bf16.msra.mxu0 %v7726
    %9045 = vmatprep.subr.bf16.mxu0 %v7734
    %9046 = vmatpush1.bf16.msra.mxu0 %v7733
    %9047 = vmatprep.subr.bf16.mxu0 %v7741
    %9048 = vmatpush1.bf16.msra.mxu0 %v7740
    %9049 = vmatprep.subr.bf16.mxu0 %v7748
    %9050 = vmatpush1.bf16.msra.mxu0 %v7747
    %9051 = vmatprep.subr.bf16.mxu0 %v7755
    %9052 = vmatpush1.bf16.msra.mxu0 %v7754
    %9053 = vmatprep.subr.bf16.mxu0 %v7762
    %9054 = vmatpush1.bf16.msra.mxu0 %v7761
    %9055 = vmatprep.subr.bf16.mxu0 %v7769
    %9056 = vmatpush1.bf16.msra.mxu0 %v7768
    %9057 = vmatprep.subr.bf16.mxu0 %v7776
    %9058 = vmatpush1.bf16.msra.mxu0 %v7775
    %9059 = vmatprep.subr.bf16.mxu0 %v7783
    %9060 = vmatpush1.bf16.msra.mxu0 %v7782
    %9061 = vmatprep.subr.bf16.mxu0 %v7790
    %9062 = vmatpush1.bf16.msra.mxu0 %v7789
    %9063 = vmatprep.mubr.bf16.mxu0 %v5552
    %9064 = vmatmul.mubr.bf16.gmra.mrb[0].mxu0 %v5551
    %v9065 = vpop.f32.mrb[0].mxu0
    %v9066 = vadd.f32 %v8953, %v9065
    %v9067 = vpop.f32.mrb[0].mxu0
    %v9068 = vadd.f32 %v8955, %v9067
    %v9069 = vpop.f32.mrb[0].mxu0
    %v9070 = vadd.f32 %v8957, %v9069
    %v9071 = vpop.f32.mrb[0].mxu0
    %v9072 = vadd.f32 %v8959, %v9071
    %9073 = vmatprep.mubr.bf16.mxu0 %v5560
    %9074 = vmatmul.mubr.bf16.gmra.mrb[0].mxu0 %v5559
    %v9075 = vpop.f32.mrb[0].mxu0
    %v9076 = vadd.f32 %v8963, %v9075
    %v9077 = vpop.f32.mrb[0].mxu0
    %v9078 = vadd.f32 %v8965, %v9077
    %v9079 = vpop.f32.mrb[0].mxu0
    %v9080 = vadd.f32 %v8967, %v9079
    %v9081 = vpop.f32.mrb[0].mxu0
    %v9082 = vadd.f32 %v8969, %v9081
    %9083 = vmatprep.mubr.bf16.mxu0 %v5568
    %9084 = vmatmul.mubr.bf16.gmra.mrb[0].mxu0 %v5567
    %v9085 = vpop.f32.mrb[0].mxu0
    %v9086 = vadd.f32 %v8973, %v9085
    %v9087 = vpop.f32.mrb[0].mxu0
    %v9088 = vadd.f32 %v8975, %v9087
    %v9089 = vpop.f32.mrb[0].mxu0
    %v9090 = vadd.f32 %v8977, %v9089
    %v9091 = vpop.f32.mrb[0].mxu0
    %v9092 = vadd.f32 %v8979, %v9091
    %9093 = vmatprep.mubr.bf16.mxu0 %v5576
    %9094 = vmatmul.mubr.bf16.gmra.mrb[0].mxu0 %v5575
    %v9095 = vpop.f32.mrb[0].mxu0
    %v9096 = vadd.f32 %v8983, %v9095
    %v9097 = vpop.f32.mrb[0].mxu0
    %v9098 = vadd.f32 %v8985, %v9097
    %v9099 = vpop.f32.mrb[0].mxu0
    %v9100 = vadd.f32 %v8987, %v9099
    %v9101 = vpop.f32.mrb[0].mxu0
    %v9102 = vadd.f32 %v8989, %v9101
    %9103 = vmatprep.mubr.bf16.mxu0 %v5584
    %9104 = vmatmul.mubr.bf16.gmra.mrb[0].mxu0 %v5583
    %v9105 = vpop.f32.mrb[0].mxu0
    %v9106 = vadd.f32 %v8993, %v9105
    %v9107 = vpop.f32.mrb[0].mxu0
    %v9108 = vadd.f32 %v8995, %v9107
    %v9109 = vpop.f32.mrb[0].mxu0
    %v9110 = vadd.f32 %v8997, %v9109
    %v9111 = vpop.f32.mrb[0].mxu0
    %v9112 = vadd.f32 %v8999, %v9111
    %9113 = vmatprep.mubr.bf16.mxu0 %v5592
    %9114 = vmatmul.mubr.bf16.gmra.mrb[0].mxu0 %v5591
    %v9115 = vpop.f32.mrb[0].mxu0
    %v9116 = vadd.f32 %v9003, %v9115
    %v9117 = vpop.f32.mrb[0].mxu0
    %v9118 = vadd.f32 %v9005, %v9117
    %v9119 = vpop.f32.mrb[0].mxu0
    %v9120 = vadd.f32 %v9007, %v9119
    %v9121 = vpop.f32.mrb[0].mxu0
    %v9122 = vadd.f32 %v9009, %v9121
    %9123 = vmatprep.mubr.bf16.mxu0 %v5600
    %9124 = vmatmul.mubr.bf16.gmra.mrb[0].mxu0 %v5599
    %v9125 = vpop.f32.mrb[0].mxu0
    %v9126 = vadd.f32 %v9013, %v9125
    %v9127 = vpop.f32.mrb[0].mxu0
    %v9128 = vadd.f32 %v9015, %v9127
    %v9129 = vpop.f32.mrb[0].mxu0
    %v9130 = vadd.f32 %v9017, %v9129
    %v9131 = vpop.f32.mrb[0].mxu0
    %v9132 = vadd.f32 %v9019, %v9131
    %9133 = vmatprep.mubr.bf16.mxu0 %v5608
    %9134 = vmatmul.mubr.bf16.gmra.mrb[0].mxu0 %v5607
    %v9135 = vpop.f32.mrb[0].mxu0
    %v9136 = vadd.f32 %v9023, %v9135
    %v9137 = vpop.f32.mrb[0].mxu0
    %v9138 = vadd.f32 %v9025, %v9137
    %v9139 = vpop.f32.mrb[0].mxu0
    %v9140 = vadd.f32 %v9027, %v9139
    %v9141 = vpop.f32.mrb[0].mxu0
    %v9142 = vadd.f32 %v9029, %v9141
    %9143 = vdwg.mxu0
    %9144 = vmatprep.subr.bf16.mxu0 %v7797
    %9145 = vmatpush1.bf16.msra.mxu0 %v7796
    %9146 = vmatprep.subr.bf16.mxu0 %v7804
    %9147 = vmatpush1.bf16.msra.mxu0 %v7803
    %9148 = vmatprep.subr.bf16.mxu0 %v7811
    %9149 = vmatpush1.bf16.msra.mxu0 %v7810
    %9150 = vmatprep.subr.bf16.mxu0 %v7818
    %9151 = vmatpush1.bf16.msra.mxu0 %v7817
    %9152 = vmatprep.subr.bf16.mxu0 %v7825
    %9153 = vmatpush1.bf16.msra.mxu0 %v7824
    %9154 = vmatprep.subr.bf16.mxu0 %v7832
    %9155 = vmatpush1.bf16.msra.mxu0 %v7831
    %9156 = vmatprep.subr.bf16.mxu0 %v7839
    %9157 = vmatpush1.bf16.msra.mxu0 %v7838
    %9158 = vmatprep.subr.bf16.mxu0 %v7846
    %9159 = vmatpush1.bf16.msra.mxu0 %v7845
    %9160 = vmatprep.subr.bf16.mxu0 %v7853
    %9161 = vmatpush1.bf16.msra.mxu0 %v7852
    %9162 = vmatprep.subr.bf16.mxu0 %v7860
    %9163 = vmatpush1.bf16.msra.mxu0 %v7859
    %9164 = vmatprep.subr.bf16.mxu0 %v7867
    %9165 = vmatpush1.bf16.msra.mxu0 %v7866
    %9166 = vmatprep.subr.bf16.mxu0 %v7874
    %9167 = vmatpush1.bf16.msra.mxu0 %v7873
    %9168 = vmatprep.subr.bf16.mxu0 %v7881
    %9169 = vmatpush1.bf16.msra.mxu0 %v7880
    %9170 = vmatprep.subr.bf16.mxu0 %v7888
    %9171 = vmatpush1.bf16.msra.mxu0 %v7887
    %9172 = vmatprep.subr.bf16.mxu0 %v7895
    %9173 = vmatpush1.bf16.msra.mxu0 %v7894
    %9174 = vmatprep.subr.bf16.mxu0 %v7902
    %9175 = vmatpush1.bf16.msra.mxu0 %v7901
    %9176 = vmatprep.mubr.bf16.mxu0 %v5554
    %9177 = vmatmul.mubr.bf16.gmra.mrb[0].mxu0 %v5553
    %v9178 = vpop.f32.mrb[0].mxu0
    %v9179 = vadd.f32 %v9066, %v9178
    %v9180 = vpop.f32.mrb[0].mxu0
    %v9181 = vadd.f32 %v9068, %v9180
    %v9182 = vpop.f32.mrb[0].mxu0
    %v9183 = vadd.f32 %v9070, %v9182
    %v9184 = vpop.f32.mrb[0].mxu0
    %v9185 = vadd.f32 %v9072, %v9184
    %9186 = vmatprep.mubr.bf16.mxu0 %v5562
    %9187 = vmatmul.mubr.bf16.gmra.mrb[0].mxu0 %v5561
    %v9188 = vpop.f32.mrb[0].mxu0
    %v9189 = vadd.f32 %v9076, %v9188
    %v9190 = vpop.f32.mrb[0].mxu0
    %v9191 = vadd.f32 %v9078, %v9190
    %v9192 = vpop.f32.mrb[0].mxu0
    %v9193 = vadd.f32 %v9080, %v9192
    %v9194 = vpop.f32.mrb[0].mxu0
    %v9195 = vadd.f32 %v9082, %v9194
    %9196 = vmatprep.mubr.bf16.mxu0 %v5570
    %9197 = vmatmul.mubr.bf16.gmra.mrb[0].mxu0 %v5569
    %v9198 = vpop.f32.mrb[0].mxu0
    %v9199 = vadd.f32 %v9086, %v9198
    %v9200 = vpop.f32.mrb[0].mxu0
    %v9201 = vadd.f32 %v9088, %v9200
    %v9202 = vpop.f32.mrb[0].mxu0
    %v9203 = vadd.f32 %v9090, %v9202
    %v9204 = vpop.f32.mrb[0].mxu0
    %v9205 = vadd.f32 %v9092, %v9204
    %9206 = vmatprep.mubr.bf16.mxu0 %v5578
    %9207 = vmatmul.mubr.bf16.gmra.mrb[0].mxu0 %v5577
    %v9208 = vpop.f32.mrb[0].mxu0
    %v9209 = vadd.f32 %v9096, %v9208
    %v9210 = vpop.f32.mrb[0].mxu0
    %v9211 = vadd.f32 %v9098, %v9210
    %v9212 = vpop.f32.mrb[0].mxu0
    %v9213 = vadd.f32 %v9100, %v9212
    %v9214 = vpop.f32.mrb[0].mxu0
    %v9215 = vadd.f32 %v9102, %v9214
    %9216 = vmatprep.mubr.bf16.mxu0 %v5586
    %9217 = vmatmul.mubr.bf16.gmra.mrb[0].mxu0 %v5585
    %v9218 = vpop.f32.mrb[0].mxu0
    %v9219 = vadd.f32 %v9106, %v9218
    %v9220 = vpop.f32.mrb[0].mxu0
    %v9221 = vadd.f32 %v9108, %v9220
    %v9222 = vpop.f32.mrb[0].mxu0
    %v9223 = vadd.f32 %v9110, %v9222
    %v9224 = vpop.f32.mrb[0].mxu0
    %v9225 = vadd.f32 %v9112, %v9224
    %9226 = vmatprep.mubr.bf16.mxu0 %v5594
    %9227 = vmatmul.mubr.bf16.gmra.mrb[0].mxu0 %v5593
    %v9228 = vpop.f32.mrb[0].mxu0
    %v9229 = vadd.f32 %v9116, %v9228
    %v9230 = vpop.f32.mrb[0].mxu0
    %v9231 = vadd.f32 %v9118, %v9230
    %v9232 = vpop.f32.mrb[0].mxu0
    %v9233 = vadd.f32 %v9120, %v9232
    %v9234 = vpop.f32.mrb[0].mxu0
    %v9235 = vadd.f32 %v9122, %v9234
    %9236 = vmatprep.mubr.bf16.mxu0 %v5602
    %9237 = vmatmul.mubr.bf16.gmra.mrb[0].mxu0 %v5601
    %v9238 = vpop.f32.mrb[0].mxu0
    %v9239 = vadd.f32 %v9126, %v9238
    %v9240 = vpop.f32.mrb[0].mxu0
    %v9241 = vadd.f32 %v9128, %v9240
    %v9242 = vpop.f32.mrb[0].mxu0
    %v9243 = vadd.f32 %v9130, %v9242
    %v9244 = vpop.f32.mrb[0].mxu0
    %v9245 = vadd.f32 %v9132, %v9244
    %9246 = vmatprep.mubr.bf16.mxu0 %v5610
    %9247 = vmatmul.mubr.bf16.gmra.mrb[0].mxu0 %v5609
    %v9248 = vpop.f32.mrb[0].mxu0
    %v9249 = vadd.f32 %v9136, %v9248
    %v9250 = vpop.f32.mrb[0].mxu0
    %v9251 = vadd.f32 %v9138, %v9250
    %v9252 = vpop.f32.mrb[0].mxu0
    %v9253 = vadd.f32 %v9140, %v9252
    %v9254 = vpop.f32.mrb[0].mxu0
    %v9255 = vadd.f32 %v9142, %v9254
    %9256 = vdwg.mxu0
    %9257 = vmatprep.subr.bf16.mxu0 %v7909
    %9258 = vmatpush1.bf16.msra.mxu0 %v7908
    %9259 = vmatprep.subr.bf16.mxu0 %v7916
    %9260 = vmatpush1.bf16.msra.mxu0 %v7915
    %9261 = vmatprep.subr.bf16.mxu0 %v7923
    %9262 = vmatpush1.bf16.msra.mxu0 %v7922
    %9263 = vmatprep.subr.bf16.mxu0 %v7930
    %9264 = vmatpush1.bf16.msra.mxu0 %v7929
    %9265 = vmatprep.subr.bf16.mxu0 %v7937
    %9266 = vmatpush1.bf16.msra.mxu0 %v7936
    %9267 = vmatprep.subr.bf16.mxu0 %v7944
    %9268 = vmatpush1.bf16.msra.mxu0 %v7943
    %9269 = vmatprep.subr.bf16.mxu0 %v7951
    %9270 = vmatpush1.bf16.msra.mxu0 %v7950
    %9271 = vmatprep.subr.bf16.mxu0 %v7958
    %9272 = vmatpush1.bf16.msra.mxu0 %v7957
    %9273 = vmatprep.subr.bf16.mxu0 %v7965
    %9274 = vmatpush1.bf16.msra.mxu0 %v7964
    %9275 = vmatprep.subr.bf16.mxu0 %v7972
    %9276 = vmatpush1.bf16.msra.mxu0 %v7971
    %9277 = vmatprep.subr.bf16.mxu0 %v7979
    %9278 = vmatpush1.bf16.msra.mxu0 %v7978
    %9279 = vmatprep.subr.bf16.mxu0 %v7986
    %9280 = vmatpush1.bf16.msra.mxu0 %v7985
    %9281 = vmatprep.subr.bf16.mxu0 %v7993
    %9282 = vmatpush1.bf16.msra.mxu0 %v7992
    %9283 = vmatprep.subr.bf16.mxu0 %v8000
    %9284 = vmatpush1.bf16.msra.mxu0 %v7999
    %9285 = vmatprep.subr.bf16.mxu0 %v8007
    %9286 = vmatpush1.bf16.msra.mxu0 %v8006
    %9287 = vmatprep.subr.bf16.mxu0 %v8014
    %9288 = vmatpush1.bf16.msra.mxu0 %v8013
    %9289 = vmatprep.mubr.bf16.mxu0 %v5556
    %9290 = vmatmul.mubr.bf16.gmra.mrb[0].mxu0 %v5555
    %v9291 = vpop.f32.mrb[0].mxu0
    %v9292 = vadd.f32 %v9179, %v9291
    %v9293 = vpop.f32.mrb[0].mxu0
    %v9294 = vadd.f32 %v9181, %v9293
    %v9295 = vpop.f32.mrb[0].mxu0
    %v9296 = vadd.f32 %v9183, %v9295
    %v9297 = vpop.f32.mrb[0].mxu0
    %v9298 = vadd.f32 %v9185, %v9297
    %9299 = vmatprep.mubr.bf16.mxu0 %v5564
    %9300 = vmatmul.mubr.bf16.gmra.mrb[0].mxu0 %v5563
    %v9301 = vpop.f32.mrb[0].mxu0
    %v9302 = vadd.f32 %v9189, %v9301
    %v9303 = vpop.f32.mrb[0].mxu0
    %v9304 = vadd.f32 %v9191, %v9303
    %v9305 = vpop.f32.mrb[0].mxu0
    %v9306 = vadd.f32 %v9193, %v9305
    %v9307 = vpop.f32.mrb[0].mxu0
    %v9308 = vadd.f32 %v9195, %v9307
    %9309 = vmatprep.mubr.bf16.mxu0 %v5572
    %9310 = vmatmul.mubr.bf16.gmra.mrb[0].mxu0 %v5571
    %v9311 = vpop.f32.mrb[0].mxu0
    %v9312 = vadd.f32 %v9199, %v9311
    %v9313 = vpop.f32.mrb[0].mxu0
    %v9314 = vadd.f32 %v9201, %v9313
    %v9315 = vpop.f32.mrb[0].mxu0
    %v9316 = vadd.f32 %v9203, %v9315
    %v9317 = vpop.f32.mrb[0].mxu0
    %v9318 = vadd.f32 %v9205, %v9317
    %9319 = vmatprep.mubr.bf16.mxu0 %v5580
    %9320 = vmatmul.mubr.bf16.gmra.mrb[0].mxu0 %v5579
    %v9321 = vpop.f32.mrb[0].mxu0
    %v9322 = vadd.f32 %v9209, %v9321
    %v9323 = vpop.f32.mrb[0].mxu0
    %v9324 = vadd.f32 %v9211, %v9323
    %v9325 = vpop.f32.mrb[0].mxu0
    %v9326 = vadd.f32 %v9213, %v9325
    %v9327 = vpop.f32.mrb[0].mxu0
    %v9328 = vadd.f32 %v9215, %v9327
    %9329 = vmatprep.mubr.bf16.mxu0 %v5588
    %9330 = vmatmul.mubr.bf16.gmra.mrb[0].mxu0 %v5587
    %v9331 = vpop.f32.mrb[0].mxu0
    %v9332 = vadd.f32 %v9219, %v9331
    %v9333 = vpop.f32.mrb[0].mxu0
    %v9334 = vadd.f32 %v9221, %v9333
    %v9335 = vpop.f32.mrb[0].mxu0
    %v9336 = vadd.f32 %v9223, %v9335
    %v9337 = vpop.f32.mrb[0].mxu0
    %v9338 = vadd.f32 %v9225, %v9337
    %9339 = vmatprep.mubr.bf16.mxu0 %v5596
    %9340 = vmatmul.mubr.bf16.gmra.mrb[0].mxu0 %v5595
    %v9341 = vpop.f32.mrb[0].mxu0
    %v9342 = vadd.f32 %v9229, %v9341
    %v9343 = vpop.f32.mrb[0].mxu0
    %v9344 = vadd.f32 %v9231, %v9343
    %v9345 = vpop.f32.mrb[0].mxu0
    %v9346 = vadd.f32 %v9233, %v9345
    %v9347 = vpop.f32.mrb[0].mxu0
    %v9348 = vadd.f32 %v9235, %v9347
    %9349 = vmatprep.mubr.bf16.mxu0 %v5604
    %9350 = vmatmul.mubr.bf16.gmra.mrb[0].mxu0 %v5603
    %v9351 = vpop.f32.mrb[0].mxu0
    %v9352 = vadd.f32 %v9239, %v9351
    %v9353 = vpop.f32.mrb[0].mxu0
    %v9354 = vadd.f32 %v9241, %v9353
    %v9355 = vpop.f32.mrb[0].mxu0
    %v9356 = vadd.f32 %v9243, %v9355
    %v9357 = vpop.f32.mrb[0].mxu0
    %v9358 = vadd.f32 %v9245, %v9357
    %9359 = vmatprep.mubr.bf16.mxu0 %v5612
    %9360 = vmatmul.mubr.bf16.gmra.mrb[0].mxu0 %v5611
    %v9361 = vpop.f32.mrb[0].mxu0
    %v9362 = vadd.f32 %v9249, %v9361
    %v9363 = vpop.f32.mrb[0].mxu0
    %v9364 = vadd.f32 %v9251, %v9363
    %v9365 = vpop.f32.mrb[0].mxu0
    %v9366 = vadd.f32 %v9253, %v9365
    %v9367 = vpop.f32.mrb[0].mxu0
    %v9368 = vadd.f32 %v9255, %v9367
    %9369 = vdwg.mxu0
    %9370 = vmatprep.subr.bf16.mxu0 %v7575
    %9371 = vmatpush1.bf16.msra.mxu0 %v7574
    %9372 = vmatprep.subr.bf16.mxu0 %v7582
    %9373 = vmatpush1.bf16.msra.mxu0 %v7581
    %9374 = vmatprep.subr.bf16.mxu0 %v7589
    %9375 = vmatpush1.bf16.msra.mxu0 %v7588
    %9376 = vmatprep.subr.bf16.mxu0 %v7596
    %9377 = vmatpush1.bf16.msra.mxu0 %v7595
    %9378 = vmatprep.subr.bf16.mxu0 %v7603
    %9379 = vmatpush1.bf16.msra.mxu0 %v7602
    %9380 = vmatprep.subr.bf16.mxu0 %v7610
    %9381 = vmatpush1.bf16.msra.mxu0 %v7609
    %9382 = vmatprep.subr.bf16.mxu0 %v7617
    %9383 = vmatpush1.bf16.msra.mxu0 %v7616
    %9384 = vmatprep.subr.bf16.mxu0 %v7624
    %9385 = vmatpush1.bf16.msra.mxu0 %v7623
    %9386 = vmatprep.subr.bf16.mxu0 %v7631
    %9387 = vmatpush1.bf16.msra.mxu0 %v7630
    %9388 = vmatprep.subr.bf16.mxu0 %v7638
    %9389 = vmatpush1.bf16.msra.mxu0 %v7637
    %9390 = vmatprep.subr.bf16.mxu0 %v7645
    %9391 = vmatpush1.bf16.msra.mxu0 %v7644
    %9392 = vmatprep.subr.bf16.mxu0 %v7652
    %9393 = vmatpush1.bf16.msra.mxu0 %v7651
    %9394 = vmatprep.subr.bf16.mxu0 %v7659
    %9395 = vmatpush1.bf16.msra.mxu0 %v7658
    %9396 = vmatprep.subr.bf16.mxu0 %v7666
    %9397 = vmatpush1.bf16.msra.mxu0 %v7665
    %9398 = vmatprep.subr.bf16.mxu0 %v7673
    %9399 = vmatpush1.bf16.msra.mxu0 %v7672
    %9400 = vmatprep.subr.bf16.mxu0 %v7680
    %9401 = vmatpush1.bf16.msra.mxu0 %v7679
    %9402 = vmatprep.mubr.bf16.mxu0 %v5550
    %9403 = vmatmul.mubr.bf16.gmra.mrb[0].mxu0 %v5549
    %v9404 = vpop.f32.mrb[0].mxu0
    %v9405 = vadd.f32 %v6146, %v9404
    %v9406 = vpop.f32.mrb[0].mxu0
    %v9407 = vadd.f32 %v6150, %v9406
    %v9408 = vpop.f32.mrb[0].mxu0
    %v9409 = vadd.f32 %v6146, %v9408
    %v9410 = vpop.f32.mrb[0].mxu0
    %v9411 = vadd.f32 %v6150, %v9410
    %9412 = vmatprep.mubr.bf16.mxu0 %v5558
    %9413 = vmatmul.mubr.bf16.gmra.mrb[0].mxu0 %v5557
    %v9414 = vpop.f32.mrb[0].mxu0
    %v9415 = vadd.f32 %v6146, %v9414
    %v9416 = vpop.f32.mrb[0].mxu0
    %v9417 = vadd.f32 %v6150, %v9416
    %v9418 = vpop.f32.mrb[0].mxu0
    %v9419 = vadd.f32 %v6146, %v9418
    %v9420 = vpop.f32.mrb[0].mxu0
    %v9421 = vadd.f32 %v6150, %v9420
    %9422 = vmatprep.mubr.bf16.mxu0 %v5566
    %9423 = vmatmul.mubr.bf16.gmra.mrb[0].mxu0 %v5565
    %v9424 = vpop.f32.mrb[0].mxu0
    %v9425 = vadd.f32 %v6146, %v9424
    %v9426 = vpop.f32.mrb[0].mxu0
    %v9427 = vadd.f32 %v6150, %v9426
    %v9428 = vpop.f32.mrb[0].mxu0
    %v9429 = vadd.f32 %v6146, %v9428
    %v9430 = vpop.f32.mrb[0].mxu0
    %v9431 = vadd.f32 %v6150, %v9430
    %9432 = vmatprep.mubr.bf16.mxu0 %v5574
    %9433 = vmatmul.mubr.bf16.gmra.mrb[0].mxu0 %v5573
    %v9434 = vpop.f32.mrb[0].mxu0
    %v9435 = vadd.f32 %v6146, %v9434
    %v9436 = vpop.f32.mrb[0].mxu0
    %v9437 = vadd.f32 %v6150, %v9436
    %v9438 = vpop.f32.mrb[0].mxu0
    %v9439 = vadd.f32 %v6146, %v9438
    %v9440 = vpop.f32.mrb[0].mxu0
    %v9441 = vadd.f32 %v6150, %v9440
    %9442 = vmatprep.mubr.bf16.mxu0 %v5582
    %9443 = vmatmul.mubr.bf16.gmra.mrb[0].mxu0 %v5581
    %v9444 = vpop.f32.mrb[0].mxu0
    %v9445 = vadd.f32 %v6146, %v9444
    %v9446 = vpop.f32.mrb[0].mxu0
    %v9447 = vadd.f32 %v6150, %v9446
    %v9448 = vpop.f32.mrb[0].mxu0
    %v9449 = vadd.f32 %v6146, %v9448
    %v9450 = vpop.f32.mrb[0].mxu0
    %v9451 = vadd.f32 %v6150, %v9450
    %9452 = vmatprep.mubr.bf16.mxu0 %v5590
    %9453 = vmatmul.mubr.bf16.gmra.mrb[0].mxu0 %v5589
    %v9454 = vpop.f32.mrb[0].mxu0
    %v9455 = vadd.f32 %v6146, %v9454
    %v9456 = vpop.f32.mrb[0].mxu0
    %v9457 = vadd.f32 %v6150, %v9456
    %v9458 = vpop.f32.mrb[0].mxu0
    %v9459 = vadd.f32 %v6146, %v9458
    %v9460 = vpop.f32.mrb[0].mxu0
    %v9461 = vadd.f32 %v6150, %v9460
    %9462 = vmatprep.mubr.bf16.mxu0 %v5598
    %9463 = vmatmul.mubr.bf16.gmra.mrb[0].mxu0 %v5597
    %v9464 = vpop.f32.mrb[0].mxu0
    %v9465 = vadd.f32 %v6146, %v9464
    %v9466 = vpop.f32.mrb[0].mxu0
    %v9467 = vadd.f32 %v6150, %v9466
    %v9468 = vpop.f32.mrb[0].mxu0
    %v9469 = vadd.f32 %v6146, %v9468
    %v9470 = vpop.f32.mrb[0].mxu0
    %v9471 = vadd.f32 %v6150, %v9470
    %9472 = vmatprep.mubr.bf16.mxu0 %v5606
    %9473 = vmatmul.mubr.bf16.gmra.mrb[0].mxu0 %v5605
    %v9474 = vpop.f32.mrb[0].mxu0
    %v9475 = vadd.f32 %v6146, %v9474
    %v9476 = vpop.f32.mrb[0].mxu0
    %v9477 = vadd.f32 %v6150, %v9476
    %v9478 = vpop.f32.mrb[0].mxu0
    %v9479 = vadd.f32 %v6146, %v9478
    %v9480 = vpop.f32.mrb[0].mxu0
    %v9481 = vadd.f32 %v6150, %v9480
    %9482 = vdwg.mxu0
    %9483 = vmatprep.subr.bf16.mxu0 %v7687
    %9484 = vmatpush1.bf16.msra.mxu0 %v7686
    %9485 = vmatprep.subr.bf16.mxu0 %v7694
    %9486 = vmatpush1.bf16.msra.mxu0 %v7693
    %9487 = vmatprep.subr.bf16.mxu0 %v7701
    %9488 = vmatpush1.bf16.msra.mxu0 %v7700
    %9489 = vmatprep.subr.bf16.mxu0 %v7708
    %9490 = vmatpush1.bf16.msra.mxu0 %v7707
    %9491 = vmatprep.subr.bf16.mxu0 %v7715
    %9492 = vmatpush1.bf16.msra.mxu0 %v7714
    %9493 = vmatprep.subr.bf16.mxu0 %v7722
    %9494 = vmatpush1.bf16.msra.mxu0 %v7721
    %9495 = vmatprep.subr.bf16.mxu0 %v7729
    %9496 = vmatpush1.bf16.msra.mxu0 %v7728
    %9497 = vmatprep.subr.bf16.mxu0 %v7736
    %9498 = vmatpush1.bf16.msra.mxu0 %v7735
    %9499 = vmatprep.subr.bf16.mxu0 %v7743
    %9500 = vmatpush1.bf16.msra.mxu0 %v7742
    %9501 = vmatprep.subr.bf16.mxu0 %v7750
    %9502 = vmatpush1.bf16.msra.mxu0 %v7749
    %9503 = vmatprep.subr.bf16.mxu0 %v7757
    %9504 = vmatpush1.bf16.msra.mxu0 %v7756
    %9505 = vmatprep.subr.bf16.mxu0 %v7764
    %9506 = vmatpush1.bf16.msra.mxu0 %v7763
    %9507 = vmatprep.subr.bf16.mxu0 %v7771
    %9508 = vmatpush1.bf16.msra.mxu0 %v7770
    %9509 = vmatprep.subr.bf16.mxu0 %v7778
    %9510 = vmatpush1.bf16.msra.mxu0 %v7777
    %9511 = vmatprep.subr.bf16.mxu0 %v7785
    %9512 = vmatpush1.bf16.msra.mxu0 %v7784
    %9513 = vmatprep.subr.bf16.mxu0 %v7792
    %9514 = vmatpush1.bf16.msra.mxu0 %v7791
    %9515 = vmatprep.mubr.bf16.mxu0 %v5552
    %9516 = vmatmul.mubr.bf16.gmra.mrb[0].mxu0 %v5551
    %v9517 = vpop.f32.mrb[0].mxu0
    %v9518 = vadd.f32 %v9405, %v9517
    %v9519 = vpop.f32.mrb[0].mxu0
    %v9520 = vadd.f32 %v9407, %v9519
    %v9521 = vpop.f32.mrb[0].mxu0
    %v9522 = vadd.f32 %v9409, %v9521
    %v9523 = vpop.f32.mrb[0].mxu0
    %v9524 = vadd.f32 %v9411, %v9523
    %9525 = vmatprep.mubr.bf16.mxu0 %v5560
    %9526 = vmatmul.mubr.bf16.gmra.mrb[0].mxu0 %v5559
    %v9527 = vpop.f32.mrb[0].mxu0
    %v9528 = vadd.f32 %v9415, %v9527
    %v9529 = vpop.f32.mrb[0].mxu0
    %v9530 = vadd.f32 %v9417, %v9529
    %v9531 = vpop.f32.mrb[0].mxu0
    %v9532 = vadd.f32 %v9419, %v9531
    %v9533 = vpop.f32.mrb[0].mxu0
    %v9534 = vadd.f32 %v9421, %v9533
    %9535 = vmatprep.mubr.bf16.mxu0 %v5568
    %9536 = vmatmul.mubr.bf16.gmra.mrb[0].mxu0 %v5567
    %v9537 = vpop.f32.mrb[0].mxu0
    %v9538 = vadd.f32 %v9425, %v9537
    %v9539 = vpop.f32.mrb[0].mxu0
    %v9540 = vadd.f32 %v9427, %v9539
    %v9541 = vpop.f32.mrb[0].mxu0
    %v9542 = vadd.f32 %v9429, %v9541
    %v9543 = vpop.f32.mrb[0].mxu0
    %v9544 = vadd.f32 %v9431, %v9543
    %9545 = vmatprep.mubr.bf16.mxu0 %v5576
    %9546 = vmatmul.mubr.bf16.gmra.mrb[0].mxu0 %v5575
    %v9547 = vpop.f32.mrb[0].mxu0
    %v9548 = vadd.f32 %v9435, %v9547
    %v9549 = vpop.f32.mrb[0].mxu0
    %v9550 = vadd.f32 %v9437, %v9549
    %v9551 = vpop.f32.mrb[0].mxu0
    %v9552 = vadd.f32 %v9439, %v9551
    %v9553 = vpop.f32.mrb[0].mxu0
    %v9554 = vadd.f32 %v9441, %v9553
    %9555 = vmatprep.mubr.bf16.mxu0 %v5584
    %9556 = vmatmul.mubr.bf16.gmra.mrb[0].mxu0 %v5583
    %v9557 = vpop.f32.mrb[0].mxu0
    %v9558 = vadd.f32 %v9445, %v9557
    %v9559 = vpop.f32.mrb[0].mxu0
    %v9560 = vadd.f32 %v9447, %v9559
    %v9561 = vpop.f32.mrb[0].mxu0
    %v9562 = vadd.f32 %v9449, %v9561
    %v9563 = vpop.f32.mrb[0].mxu0
    %v9564 = vadd.f32 %v9451, %v9563
    %9565 = vmatprep.mubr.bf16.mxu0 %v5592
    %9566 = vmatmul.mubr.bf16.gmra.mrb[0].mxu0 %v5591
    %v9567 = vpop.f32.mrb[0].mxu0
    %v9568 = vadd.f32 %v9455, %v9567
    %v9569 = vpop.f32.mrb[0].mxu0
    %v9570 = vadd.f32 %v9457, %v9569
    %v9571 = vpop.f32.mrb[0].mxu0
    %v9572 = vadd.f32 %v9459, %v9571
    %v9573 = vpop.f32.mrb[0].mxu0
    %v9574 = vadd.f32 %v9461, %v9573
    %9575 = vmatprep.mubr.bf16.mxu0 %v5600
    %9576 = vmatmul.mubr.bf16.gmra.mrb[0].mxu0 %v5599
    %v9577 = vpop.f32.mrb[0].mxu0
    %v9578 = vadd.f32 %v9465, %v9577
    %v9579 = vpop.f32.mrb[0].mxu0
    %v9580 = vadd.f32 %v9467, %v9579
    %v9581 = vpop.f32.mrb[0].mxu0
    %v9582 = vadd.f32 %v9469, %v9581
    %v9583 = vpop.f32.mrb[0].mxu0
    %v9584 = vadd.f32 %v9471, %v9583
    %9585 = vmatprep.mubr.bf16.mxu0 %v5608
    %9586 = vmatmul.mubr.bf16.gmra.mrb[0].mxu0 %v5607
    %v9587 = vpop.f32.mrb[0].mxu0
    %v9588 = vadd.f32 %v9475, %v9587
    %v9589 = vpop.f32.mrb[0].mxu0
    %v9590 = vadd.f32 %v9477, %v9589
    %v9591 = vpop.f32.mrb[0].mxu0
    %v9592 = vadd.f32 %v9479, %v9591
    %v9593 = vpop.f32.mrb[0].mxu0
    %v9594 = vadd.f32 %v9481, %v9593
    %9595 = vdwg.mxu0
    %9596 = vmatprep.subr.bf16.mxu0 %v7799
    %9597 = vmatpush1.bf16.msra.mxu0 %v7798
    %9598 = vmatprep.subr.bf16.mxu0 %v7806
    %9599 = vmatpush1.bf16.msra.mxu0 %v7805
    %9600 = vmatprep.subr.bf16.mxu0 %v7813
    %9601 = vmatpush1.bf16.msra.mxu0 %v7812
    %9602 = vmatprep.subr.bf16.mxu0 %v7820
    %9603 = vmatpush1.bf16.msra.mxu0 %v7819
    %9604 = vmatprep.subr.bf16.mxu0 %v7827
    %9605 = vmatpush1.bf16.msra.mxu0 %v7826
    %9606 = vmatprep.subr.bf16.mxu0 %v7834
    %9607 = vmatpush1.bf16.msra.mxu0 %v7833
    %9608 = vmatprep.subr.bf16.mxu0 %v7841
    %9609 = vmatpush1.bf16.msra.mxu0 %v7840
    %9610 = vmatprep.subr.bf16.mxu0 %v7848
    %9611 = vmatpush1.bf16.msra.mxu0 %v7847
    %9612 = vmatprep.subr.bf16.mxu0 %v7855
    %9613 = vmatpush1.bf16.msra.mxu0 %v7854
    %9614 = vmatprep.subr.bf16.mxu0 %v7862
    %9615 = vmatpush1.bf16.msra.mxu0 %v7861
    %9616 = vmatprep.subr.bf16.mxu0 %v7869
    %9617 = vmatpush1.bf16.msra.mxu0 %v7868
    %9618 = vmatprep.subr.bf16.mxu0 %v7876
    %9619 = vmatpush1.bf16.msra.mxu0 %v7875
    %9620 = vmatprep.subr.bf16.mxu0 %v7883
    %9621 = vmatpush1.bf16.msra.mxu0 %v7882
    %9622 = vmatprep.subr.bf16.mxu0 %v7890
    %9623 = vmatpush1.bf16.msra.mxu0 %v7889
    %9624 = vmatprep.subr.bf16.mxu0 %v7897
    %9625 = vmatpush1.bf16.msra.mxu0 %v7896
    %9626 = vmatprep.subr.bf16.mxu0 %v7904
    %9627 = vmatpush1.bf16.msra.mxu0 %v7903
    %9628 = vmatprep.mubr.bf16.mxu0 %v5554
    %9629 = vmatmul.mubr.bf16.gmra.mrb[0].mxu0 %v5553
    %v9630 = vpop.f32.mrb[0].mxu0
    %v9631 = vadd.f32 %v9518, %v9630
    %v9632 = vpop.f32.mrb[0].mxu0
    %v9633 = vadd.f32 %v9520, %v9632
    %v9634 = vpop.f32.mrb[0].mxu0
    %v9635 = vadd.f32 %v9522, %v9634
    %v9636 = vpop.f32.mrb[0].mxu0
    %v9637 = vadd.f32 %v9524, %v9636
    %9638 = vmatprep.mubr.bf16.mxu0 %v5562
    %9639 = vmatmul.mubr.bf16.gmra.mrb[0].mxu0 %v5561
    %v9640 = vpop.f32.mrb[0].mxu0
    %v9641 = vadd.f32 %v9528, %v9640
    %v9642 = vpop.f32.mrb[0].mxu0
    %v9643 = vadd.f32 %v9530, %v9642
    %v9644 = vpop.f32.mrb[0].mxu0
    %v9645 = vadd.f32 %v9532, %v9644
    %v9646 = vpop.f32.mrb[0].mxu0
    %v9647 = vadd.f32 %v9534, %v9646
    %9648 = vmatprep.mubr.bf16.mxu0 %v5570
    %9649 = vmatmul.mubr.bf16.gmra.mrb[0].mxu0 %v5569
    %v9650 = vpop.f32.mrb[0].mxu0
    %v9651 = vadd.f32 %v9538, %v9650
    %v9652 = vpop.f32.mrb[0].mxu0
    %v9653 = vadd.f32 %v9540, %v9652
    %v9654 = vpop.f32.mrb[0].mxu0
    %v9655 = vadd.f32 %v9542, %v9654
    %v9656 = vpop.f32.mrb[0].mxu0
    %v9657 = vadd.f32 %v9544, %v9656
    %9658 = vmatprep.mubr.bf16.mxu0 %v5578
    %9659 = vmatmul.mubr.bf16.gmra.mrb[0].mxu0 %v5577
    %v9660 = vpop.f32.mrb[0].mxu0
    %v9661 = vadd.f32 %v9548, %v9660
    %v9662 = vpop.f32.mrb[0].mxu0
    %v9663 = vadd.f32 %v9550, %v9662
    %v9664 = vpop.f32.mrb[0].mxu0
    %v9665 = vadd.f32 %v9552, %v9664
    %v9666 = vpop.f32.mrb[0].mxu0
    %v9667 = vadd.f32 %v9554, %v9666
    %9668 = vmatprep.mubr.bf16.mxu0 %v5586
    %9669 = vmatmul.mubr.bf16.gmra.mrb[0].mxu0 %v5585
    %v9670 = vpop.f32.mrb[0].mxu0
    %v9671 = vadd.f32 %v9558, %v9670
    %v9672 = vpop.f32.mrb[0].mxu0
    %v9673 = vadd.f32 %v9560, %v9672
    %v9674 = vpop.f32.mrb[0].mxu0
    %v9675 = vadd.f32 %v9562, %v9674
    %v9676 = vpop.f32.mrb[0].mxu0
    %v9677 = vadd.f32 %v9564, %v9676
    %9678 = vmatprep.mubr.bf16.mxu0 %v5594
    %9679 = vmatmul.mubr.bf16.gmra.mrb[0].mxu0 %v5593
    %v9680 = vpop.f32.mrb[0].mxu0
    %v9681 = vadd.f32 %v9568, %v9680
    %v9682 = vpop.f32.mrb[0].mxu0
    %v9683 = vadd.f32 %v9570, %v9682
    %v9684 = vpop.f32.mrb[0].mxu0
    %v9685 = vadd.f32 %v9572, %v9684
    %v9686 = vpop.f32.mrb[0].mxu0
    %v9687 = vadd.f32 %v9574, %v9686
    %9688 = vmatprep.mubr.bf16.mxu0 %v5602
    %9689 = vmatmul.mubr.bf16.gmra.mrb[0].mxu0 %v5601
    %v9690 = vpop.f32.mrb[0].mxu0
    %v9691 = vadd.f32 %v9578, %v9690
    %v9692 = vpop.f32.mrb[0].mxu0
    %v9693 = vadd.f32 %v9580, %v9692
    %v9694 = vpop.f32.mrb[0].mxu0
    %v9695 = vadd.f32 %v9582, %v9694
    %v9696 = vpop.f32.mrb[0].mxu0
    %v9697 = vadd.f32 %v9584, %v9696
    %9698 = vmatprep.mubr.bf16.mxu0 %v5610
    %9699 = vmatmul.mubr.bf16.gmra.mrb[0].mxu0 %v5609
    %v9700 = vpop.f32.mrb[0].mxu0
    %v9701 = vadd.f32 %v9588, %v9700
    %v9702 = vpop.f32.mrb[0].mxu0
    %v9703 = vadd.f32 %v9590, %v9702
    %v9704 = vpop.f32.mrb[0].mxu0
    %v9705 = vadd.f32 %v9592, %v9704
    %v9706 = vpop.f32.mrb[0].mxu0
    %v9707 = vadd.f32 %v9594, %v9706
    %9708 = vdwg.mxu0
    %9709 = vmatprep.subr.bf16.mxu0 %v7911
    %9710 = vmatpush1.bf16.msra.mxu0 %v7910
    %9711 = vmatprep.subr.bf16.mxu0 %v7918
    %9712 = vmatpush1.bf16.msra.mxu0 %v7917
    %9713 = vmatprep.subr.bf16.mxu0 %v7925
    %9714 = vmatpush1.bf16.msra.mxu0 %v7924
    %9715 = vmatprep.subr.bf16.mxu0 %v7932
    %9716 = vmatpush1.bf16.msra.mxu0 %v7931
    %9717 = vmatprep.subr.bf16.mxu0 %v7939
    %9718 = vmatpush1.bf16.msra.mxu0 %v7938
    %9719 = vmatprep.subr.bf16.mxu0 %v7946
    %9720 = vmatpush1.bf16.msra.mxu0 %v7945
    %9721 = vmatprep.subr.bf16.mxu0 %v7953
    %9722 = vmatpush1.bf16.msra.mxu0 %v7952
    %9723 = vmatprep.subr.bf16.mxu0 %v7960
    %9724 = vmatpush1.bf16.msra.mxu0 %v7959
    %9725 = vmatprep.subr.bf16.mxu0 %v7967
    %9726 = vmatpush1.bf16.msra.mxu0 %v7966
    %9727 = vmatprep.subr.bf16.mxu0 %v7974
    %9728 = vmatpush1.bf16.msra.mxu0 %v7973
    %9729 = vmatprep.subr.bf16.mxu0 %v7981
    %9730 = vmatpush1.bf16.msra.mxu0 %v7980
    %9731 = vmatprep.subr.bf16.mxu0 %v7988
    %9732 = vmatpush1.bf16.msra.mxu0 %v7987
    %9733 = vmatprep.subr.bf16.mxu0 %v7995
    %9734 = vmatpush1.bf16.msra.mxu0 %v7994
    %9735 = vmatprep.subr.bf16.mxu0 %v8002
    %9736 = vmatpush1.bf16.msra.mxu0 %v8001
    %9737 = vmatprep.subr.bf16.mxu0 %v8009
    %9738 = vmatpush1.bf16.msra.mxu0 %v8008
    %9739 = vmatprep.subr.bf16.mxu0 %v8016
    %9740 = vmatpush1.bf16.msra.mxu0 %v8015
    %9741 = vmatprep.mubr.bf16.mxu0 %v5556
    %9742 = vmatmul.mubr.bf16.gmra.mrb[0].mxu0 %v5555
    %v9743 = vpop.f32.mrb[0].mxu0
    %v9744 = vadd.f32 %v9631, %v9743
    %v9745 = vpop.f32.mrb[0].mxu0
    %v9746 = vadd.f32 %v9633, %v9745
    %v9747 = vpop.f32.mrb[0].mxu0
    %v9748 = vadd.f32 %v9635, %v9747
    %v9749 = vpop.f32.mrb[0].mxu0
    %v9750 = vadd.f32 %v9637, %v9749
    %9751 = vmatprep.mubr.bf16.mxu0 %v5564
    %9752 = vmatmul.mubr.bf16.gmra.mrb[0].mxu0 %v5563
    %v9753 = vpop.f32.mrb[0].mxu0
    %v9754 = vadd.f32 %v9641, %v9753
    %v9755 = vpop.f32.mrb[0].mxu0
    %v9756 = vadd.f32 %v9643, %v9755
    %v9757 = vpop.f32.mrb[0].mxu0
    %v9758 = vadd.f32 %v9645, %v9757
    %v9759 = vpop.f32.mrb[0].mxu0
    %v9760 = vadd.f32 %v9647, %v9759
    %9761 = vmatprep.mubr.bf16.mxu0 %v5572
    %9762 = vmatmul.mubr.bf16.gmra.mrb[0].mxu0 %v5571
    %v9763 = vpop.f32.mrb[0].mxu0
    %v9764 = vadd.f32 %v9651, %v9763
    %v9765 = vpop.f32.mrb[0].mxu0
    %v9766 = vadd.f32 %v9653, %v9765
    %v9767 = vpop.f32.mrb[0].mxu0
    %v9768 = vadd.f32 %v9655, %v9767
    %v9769 = vpop.f32.mrb[0].mxu0
    %v9770 = vadd.f32 %v9657, %v9769
    %9771 = vmatprep.mubr.bf16.mxu0 %v5580
    %9772 = vmatmul.mubr.bf16.gmra.mrb[0].mxu0 %v5579
    %v9773 = vpop.f32.mrb[0].mxu0
    %v9774 = vadd.f32 %v9661, %v9773
    %v9775 = vpop.f32.mrb[0].mxu0
    %v9776 = vadd.f32 %v9663, %v9775
    %v9777 = vpop.f32.mrb[0].mxu0
    %v9778 = vadd.f32 %v9665, %v9777
    %v9779 = vpop.f32.mrb[0].mxu0
    %v9780 = vadd.f32 %v9667, %v9779
    %9781 = vmatprep.mubr.bf16.mxu0 %v5588
    %9782 = vmatmul.mubr.bf16.gmra.mrb[0].mxu0 %v5587
    %v9783 = vpop.f32.mrb[0].mxu0
    %v9784 = vadd.f32 %v9671, %v9783
    %v9785 = vpop.f32.mrb[0].mxu0
    %v9786 = vadd.f32 %v9673, %v9785
    %v9787 = vpop.f32.mrb[0].mxu0
    %v9788 = vadd.f32 %v9675, %v9787
    %v9789 = vpop.f32.mrb[0].mxu0
    %v9790 = vadd.f32 %v9677, %v9789
    %9791 = vmatprep.mubr.bf16.mxu0 %v5596
    %9792 = vmatmul.mubr.bf16.gmra.mrb[0].mxu0 %v5595
    %v9793 = vpop.f32.mrb[0].mxu0
    %v9794 = vadd.f32 %v9681, %v9793
    %v9795 = vpop.f32.mrb[0].mxu0
    %v9796 = vadd.f32 %v9683, %v9795
    %v9797 = vpop.f32.mrb[0].mxu0
    %v9798 = vadd.f32 %v9685, %v9797
    %v9799 = vpop.f32.mrb[0].mxu0
    %v9800 = vadd.f32 %v9687, %v9799
    %9801 = vmatprep.mubr.bf16.mxu0 %v5604
    %9802 = vmatmul.mubr.bf16.gmra.mrb[0].mxu0 %v5603
    %v9803 = vpop.f32.mrb[0].mxu0
    %v9804 = vadd.f32 %v9691, %v9803
    %v9805 = vpop.f32.mrb[0].mxu0
    %v9806 = vadd.f32 %v9693, %v9805
    %v9807 = vpop.f32.mrb[0].mxu0
    %v9808 = vadd.f32 %v9695, %v9807
    %v9809 = vpop.f32.mrb[0].mxu0
    %v9810 = vadd.f32 %v9697, %v9809
    %9811 = vmatprep.mubr.bf16.mxu0 %v5612
    %9812 = vmatmul.mubr.bf16.gmra.mrb[0].mxu0 %v5611
    %v9813 = vpop.f32.mrb[0].mxu0
    %v9814 = vadd.f32 %v9701, %v9813
    %v9815 = vpop.f32.mrb[0].mxu0
    %v9816 = vadd.f32 %v9703, %v9815
    %v9817 = vpop.f32.mrb[0].mxu0
    %v9818 = vadd.f32 %v9705, %v9817
    %v9819 = vpop.f32.mrb[0].mxu0
    %v9820 = vadd.f32 %v9707, %v9819
    %9821 = vdwg.mxu0
    %9822 = vmatprep.subr.bf16.mxu0 0
    %9823 = vmatpush1.bf16.msra.mxu0 %v7576
    %9824 = vmatprep.subr.bf16.mxu0 0
    %9825 = vmatpush1.bf16.msra.mxu0 %v7583
    %9826 = vmatprep.subr.bf16.mxu0 0
    %9827 = vmatpush1.bf16.msra.mxu0 %v7590
    %9828 = vmatprep.subr.bf16.mxu0 0
    %9829 = vmatpush1.bf16.msra.mxu0 %v7597
    %9830 = vmatprep.subr.bf16.mxu0 0
    %9831 = vmatpush1.bf16.msra.mxu0 %v7604
    %9832 = vmatprep.subr.bf16.mxu0 0
    %9833 = vmatpush1.bf16.msra.mxu0 %v7611
    %9834 = vmatprep.subr.bf16.mxu0 0
    %9835 = vmatpush1.bf16.msra.mxu0 %v7618
    %9836 = vmatprep.subr.bf16.mxu0 0
    %9837 = vmatpush1.bf16.msra.mxu0 %v7625
    %9838 = vmatprep.subr.bf16.mxu0 0
    %9839 = vmatpush1.bf16.msra.mxu0 %v7632
    %9840 = vmatprep.subr.bf16.mxu0 0
    %9841 = vmatpush1.bf16.msra.mxu0 %v7639
    %9842 = vmatprep.subr.bf16.mxu0 0
    %9843 = vmatpush1.bf16.msra.mxu0 %v7646
    %9844 = vmatprep.subr.bf16.mxu0 0
    %9845 = vmatpush1.bf16.msra.mxu0 %v7653
    %9846 = vmatprep.subr.bf16.mxu0 0
    %9847 = vmatpush1.bf16.msra.mxu0 %v7660
    %9848 = vmatprep.subr.bf16.mxu0 0
    %9849 = vmatpush1.bf16.msra.mxu0 %v7667
    %9850 = vmatprep.subr.bf16.mxu0 0
    %9851 = vmatpush1.bf16.msra.mxu0 %v7674
    %9852 = vmatprep.subr.bf16.mxu0 0
    %9853 = vmatpush1.bf16.msra.mxu0 %v7681
    %9854 = vmatprep.mubr.bf16.mxu0 %v5550
    %9855 = vmatmul.mubr.bf16.gmra.mrb[0].mxu0 %v5549
    %v9856 = vpop.f32.mrb[0].mxu0
    %v9857 = vadd.f32 %v6154, %v9856
    %v9858 = vpop.f32.mrb[0].mxu0
    %v9859 = vpop.f32.mrb[0].mxu0
    %v9860 = vadd.f32 %v6154, %v9859
    %v9861 = vpop.f32.mrb[0].mxu0
    %9862 = vmatprep.mubr.bf16.mxu0 %v5558
    %9863 = vmatmul.mubr.bf16.gmra.mrb[0].mxu0 %v5557
    %v9864 = vpop.f32.mrb[0].mxu0
    %v9865 = vadd.f32 %v6154, %v9864
    %v9866 = vpop.f32.mrb[0].mxu0
    %v9867 = vpop.f32.mrb[0].mxu0
    %v9868 = vadd.f32 %v6154, %v9867
    %v9869 = vpop.f32.mrb[0].mxu0
    %9870 = vmatprep.mubr.bf16.mxu0 %v5566
    %9871 = vmatmul.mubr.bf16.gmra.mrb[0].mxu0 %v5565
    %v9872 = vpop.f32.mrb[0].mxu0
    %v9873 = vadd.f32 %v6154, %v9872
    %v9874 = vpop.f32.mrb[0].mxu0
    %v9875 = vpop.f32.mrb[0].mxu0
    %v9876 = vadd.f32 %v6154, %v9875
    %v9877 = vpop.f32.mrb[0].mxu0
    %9878 = vmatprep.mubr.bf16.mxu0 %v5574
    %9879 = vmatmul.mubr.bf16.gmra.mrb[0].mxu0 %v5573
    %v9880 = vpop.f32.mrb[0].mxu0
    %v9881 = vadd.f32 %v6154, %v9880
    %v9882 = vpop.f32.mrb[0].mxu0
    %v9883 = vpop.f32.mrb[0].mxu0
    %v9884 = vadd.f32 %v6154, %v9883
    %v9885 = vpop.f32.mrb[0].mxu0
    %9886 = vmatprep.mubr.bf16.mxu0 %v5582
    %9887 = vmatmul.mubr.bf16.gmra.mrb[0].mxu0 %v5581
    %v9888 = vpop.f32.mrb[0].mxu0
    %v9889 = vadd.f32 %v6154, %v9888
    %v9890 = vpop.f32.mrb[0].mxu0
    %v9891 = vpop.f32.mrb[0].mxu0
    %v9892 = vadd.f32 %v6154, %v9891
    %v9893 = vpop.f32.mrb[0].mxu0
    %9894 = vmatprep.mubr.bf16.mxu0 %v5590
    %9895 = vmatmul.mubr.bf16.gmra.mrb[0].mxu0 %v5589
    %v9896 = vpop.f32.mrb[0].mxu0
    %v9897 = vadd.f32 %v6154, %v9896
    %v9898 = vpop.f32.mrb[0].mxu0
    %v9899 = vpop.f32.mrb[0].mxu0
    %v9900 = vadd.f32 %v6154, %v9899
    %v9901 = vpop.f32.mrb[0].mxu0
    %9902 = vmatprep.mubr.bf16.mxu0 %v5598
    %9903 = vmatmul.mubr.bf16.gmra.mrb[0].mxu0 %v5597
    %v9904 = vpop.f32.mrb[0].mxu0
    %v9905 = vadd.f32 %v6154, %v9904
    %v9906 = vpop.f32.mrb[0].mxu0
    %v9907 = vpop.f32.mrb[0].mxu0
    %v9908 = vadd.f32 %v6154, %v9907
    %v9909 = vpop.f32.mrb[0].mxu0
    %9910 = vmatprep.mubr.bf16.mxu0 %v5606
    %9911 = vmatmul.mubr.bf16.gmra.mrb[0].mxu0 %v5605
    %v9912 = vpop.f32.mrb[0].mxu0
    %v9913 = vadd.f32 %v6154, %v9912
    %v9914 = vpop.f32.mrb[0].mxu0
    %v9915 = vpop.f32.mrb[0].mxu0
    %v9916 = vadd.f32 %v6154, %v9915
    %v9917 = vpop.f32.mrb[0].mxu0
    %9918 = vdwg.mxu0
    %9919 = vmatprep.subr.bf16.mxu0 0
    %9920 = vmatpush1.bf16.msra.mxu0 %v7688
    %9921 = vmatprep.subr.bf16.mxu0 0
    %9922 = vmatpush1.bf16.msra.mxu0 %v7695
    %9923 = vmatprep.subr.bf16.mxu0 0
    %9924 = vmatpush1.bf16.msra.mxu0 %v7702
    %9925 = vmatprep.subr.bf16.mxu0 0
    %9926 = vmatpush1.bf16.msra.mxu0 %v7709
    %9927 = vmatprep.subr.bf16.mxu0 0
    %9928 = vmatpush1.bf16.msra.mxu0 %v7716
    %9929 = vmatprep.subr.bf16.mxu0 0
    %9930 = vmatpush1.bf16.msra.mxu0 %v7723
    %9931 = vmatprep.subr.bf16.mxu0 0
    %9932 = vmatpush1.bf16.msra.mxu0 %v7730
    %9933 = vmatprep.subr.bf16.mxu0 0
    %9934 = vmatpush1.bf16.msra.mxu0 %v7737
    %9935 = vmatprep.subr.bf16.mxu0 0
    %9936 = vmatpush1.bf16.msra.mxu0 %v7744
    %9937 = vmatprep.subr.bf16.mxu0 0
    %9938 = vmatpush1.bf16.msra.mxu0 %v7751
    %9939 = vmatprep.subr.bf16.mxu0 0
    %9940 = vmatpush1.bf16.msra.mxu0 %v7758
    %9941 = vmatprep.subr.bf16.mxu0 0
    %9942 = vmatpush1.bf16.msra.mxu0 %v7765
    %9943 = vmatprep.subr.bf16.mxu0 0
    %9944 = vmatpush1.bf16.msra.mxu0 %v7772
    %9945 = vmatprep.subr.bf16.mxu0 0
    %9946 = vmatpush1.bf16.msra.mxu0 %v7779
    %9947 = vmatprep.subr.bf16.mxu0 0
    %9948 = vmatpush1.bf16.msra.mxu0 %v7786
    %9949 = vmatprep.subr.bf16.mxu0 0
    %9950 = vmatpush1.bf16.msra.mxu0 %v7793
    %9951 = vmatprep.mubr.bf16.mxu0 %v5552
    %9952 = vmatmul.mubr.bf16.gmra.mrb[0].mxu0 %v5551
    %v9953 = vpop.f32.mrb[0].mxu0
    %v9954 = vadd.f32 %v9857, %v9953
    %v9955 = vpop.f32.mrb[0].mxu0
    %v9956 = vpop.f32.mrb[0].mxu0
    %v9957 = vadd.f32 %v9860, %v9956
    %v9958 = vpop.f32.mrb[0].mxu0
    %9959 = vmatprep.mubr.bf16.mxu0 %v5560
    %9960 = vmatmul.mubr.bf16.gmra.mrb[0].mxu0 %v5559
    %v9961 = vpop.f32.mrb[0].mxu0
    %v9962 = vadd.f32 %v9865, %v9961
    %v9963 = vpop.f32.mrb[0].mxu0
    %v9964 = vpop.f32.mrb[0].mxu0
    %v9965 = vadd.f32 %v9868, %v9964
    %v9966 = vpop.f32.mrb[0].mxu0
    %9967 = vmatprep.mubr.bf16.mxu0 %v5568
    %9968 = vmatmul.mubr.bf16.gmra.mrb[0].mxu0 %v5567
    %v9969 = vpop.f32.mrb[0].mxu0
    %v9970 = vadd.f32 %v9873, %v9969
    %v9971 = vpop.f32.mrb[0].mxu0
    %v9972 = vpop.f32.mrb[0].mxu0
    %v9973 = vadd.f32 %v9876, %v9972
    %v9974 = vpop.f32.mrb[0].mxu0
    %9975 = vmatprep.mubr.bf16.mxu0 %v5576
    %9976 = vmatmul.mubr.bf16.gmra.mrb[0].mxu0 %v5575
    %v9977 = vpop.f32.mrb[0].mxu0
    %v9978 = vadd.f32 %v9881, %v9977
    %v9979 = vpop.f32.mrb[0].mxu0
    %v9980 = vpop.f32.mrb[0].mxu0
    %v9981 = vadd.f32 %v9884, %v9980
    %v9982 = vpop.f32.mrb[0].mxu0
    %9983 = vmatprep.mubr.bf16.mxu0 %v5584
    %9984 = vmatmul.mubr.bf16.gmra.mrb[0].mxu0 %v5583
    %v9985 = vpop.f32.mrb[0].mxu0
    %v9986 = vadd.f32 %v9889, %v9985
    %v9987 = vpop.f32.mrb[0].mxu0
    %v9988 = vpop.f32.mrb[0].mxu0
    %v9989 = vadd.f32 %v9892, %v9988
    %v9990 = vpop.f32.mrb[0].mxu0
    %9991 = vmatprep.mubr.bf16.mxu0 %v5592
    %9992 = vmatmul.mubr.bf16.gmra.mrb[0].mxu0 %v5591
    %v9993 = vpop.f32.mrb[0].mxu0
    %v9994 = vadd.f32 %v9897, %v9993
    %v9995 = vpop.f32.mrb[0].mxu0
    %v9996 = vpop.f32.mrb[0].mxu0
    %v9997 = vadd.f32 %v9900, %v9996
    %v9998 = vpop.f32.mrb[0].mxu0
    %9999 = vmatprep.mubr.bf16.mxu0 %v5600
    %10000 = vmatmul.mubr.bf16.gmra.mrb[0].mxu0 %v5599
    %v10001 = vpop.f32.mrb[0].mxu0
    %v10002 = vadd.f32 %v9905, %v10001
    %v10003 = vpop.f32.mrb[0].mxu0
    %v10004 = vpop.f32.mrb[0].mxu0
    %v10005 = vadd.f32 %v9908, %v10004
    %v10006 = vpop.f32.mrb[0].mxu0
    %10007 = vmatprep.mubr.bf16.mxu0 %v5608
    %10008 = vmatmul.mubr.bf16.gmra.mrb[0].mxu0 %v5607
    %v10009 = vpop.f32.mrb[0].mxu0
    %v10010 = vadd.f32 %v9913, %v10009
    %v10011 = vpop.f32.mrb[0].mxu0
    %v10012 = vpop.f32.mrb[0].mxu0
    %v10013 = vadd.f32 %v9916, %v10012
    %v10014 = vpop.f32.mrb[0].mxu0
    %10015 = vdwg.mxu0
    %10016 = vmatprep.subr.bf16.mxu0 0
    %10017 = vmatpush1.bf16.msra.mxu0 %v7800
    %10018 = vmatprep.subr.bf16.mxu0 0
    %10019 = vmatpush1.bf16.msra.mxu0 %v7807
    %10020 = vmatprep.subr.bf16.mxu0 0
    %10021 = vmatpush1.bf16.msra.mxu0 %v7814
    %10022 = vmatprep.subr.bf16.mxu0 0
    %10023 = vmatpush1.bf16.msra.mxu0 %v7821
    %10024 = vmatprep.subr.bf16.mxu0 0
    %10025 = vmatpush1.bf16.msra.mxu0 %v7828
    %10026 = vmatprep.subr.bf16.mxu0 0
    %10027 = vmatpush1.bf16.msra.mxu0 %v7835
    %10028 = vmatprep.subr.bf16.mxu0 0
    %10029 = vmatpush1.bf16.msra.mxu0 %v7842
    %10030 = vmatprep.subr.bf16.mxu0 0
    %10031 = vmatpush1.bf16.msra.mxu0 %v7849
    %10032 = vmatprep.subr.bf16.mxu0 0
    %10033 = vmatpush1.bf16.msra.mxu0 %v7856
    %10034 = vmatprep.subr.bf16.mxu0 0
    %10035 = vmatpush1.bf16.msra.mxu0 %v7863
    %10036 = vmatprep.subr.bf16.mxu0 0
    %10037 = vmatpush1.bf16.msra.mxu0 %v7870
    %10038 = vmatprep.subr.bf16.mxu0 0
    %10039 = vmatpush1.bf16.msra.mxu0 %v7877
    %10040 = vmatprep.subr.bf16.mxu0 0
    %10041 = vmatpush1.bf16.msra.mxu0 %v7884
    %10042 = vmatprep.subr.bf16.mxu0 0
    %10043 = vmatpush1.bf16.msra.mxu0 %v7891
    %10044 = vmatprep.subr.bf16.mxu0 0
    %10045 = vmatpush1.bf16.msra.mxu0 %v7898
    %10046 = vmatprep.subr.bf16.mxu0 0
    %10047 = vmatpush1.bf16.msra.mxu0 %v7905
    %10048 = vmatprep.mubr.bf16.mxu0 %v5554
    %10049 = vmatmul.mubr.bf16.gmra.mrb[0].mxu0 %v5553
    %v10050 = vpop.f32.mrb[0].mxu0
    %v10051 = vadd.f32 %v9954, %v10050
    %v10052 = vpop.f32.mrb[0].mxu0
    %v10053 = vpop.f32.mrb[0].mxu0
    %v10054 = vadd.f32 %v9957, %v10053
    %v10055 = vpop.f32.mrb[0].mxu0
    %10056 = vmatprep.mubr.bf16.mxu0 %v5562
    %10057 = vmatmul.mubr.bf16.gmra.mrb[0].mxu0 %v5561
    %v10058 = vpop.f32.mrb[0].mxu0
    %v10059 = vadd.f32 %v9962, %v10058
    %v10060 = vpop.f32.mrb[0].mxu0
    %v10061 = vpop.f32.mrb[0].mxu0
    %v10062 = vadd.f32 %v9965, %v10061
    %v10063 = vpop.f32.mrb[0].mxu0
    %10064 = vmatprep.mubr.bf16.mxu0 %v5570
    %10065 = vmatmul.mubr.bf16.gmra.mrb[0].mxu0 %v5569
    %v10066 = vpop.f32.mrb[0].mxu0
    %v10067 = vadd.f32 %v9970, %v10066
    %v10068 = vpop.f32.mrb[0].mxu0
    %v10069 = vpop.f32.mrb[0].mxu0
    %v10070 = vadd.f32 %v9973, %v10069
    %v10071 = vpop.f32.mrb[0].mxu0
    %10072 = vmatprep.mubr.bf16.mxu0 %v5578
    %10073 = vmatmul.mubr.bf16.gmra.mrb[0].mxu0 %v5577
    %v10074 = vpop.f32.mrb[0].mxu0
    %v10075 = vadd.f32 %v9978, %v10074
    %v10076 = vpop.f32.mrb[0].mxu0
    %v10077 = vpop.f32.mrb[0].mxu0
    %v10078 = vadd.f32 %v9981, %v10077
    %v10079 = vpop.f32.mrb[0].mxu0
    %10080 = vmatprep.mubr.bf16.mxu0 %v5586
    %10081 = vmatmul.mubr.bf16.gmra.mrb[0].mxu0 %v5585
    %v10082 = vpop.f32.mrb[0].mxu0
    %v10083 = vadd.f32 %v9986, %v10082
    %v10084 = vpop.f32.mrb[0].mxu0
    %v10085 = vpop.f32.mrb[0].mxu0
    %v10086 = vadd.f32 %v9989, %v10085
    %v10087 = vpop.f32.mrb[0].mxu0
    %10088 = vmatprep.mubr.bf16.mxu0 %v5594
    %10089 = vmatmul.mubr.bf16.gmra.mrb[0].mxu0 %v5593
    %v10090 = vpop.f32.mrb[0].mxu0
    %v10091 = vadd.f32 %v9994, %v10090
    %v10092 = vpop.f32.mrb[0].mxu0
    %v10093 = vpop.f32.mrb[0].mxu0
    %v10094 = vadd.f32 %v9997, %v10093
    %v10095 = vpop.f32.mrb[0].mxu0
    %10096 = vmatprep.mubr.bf16.mxu0 %v5602
    %10097 = vmatmul.mubr.bf16.gmra.mrb[0].mxu0 %v5601
    %v10098 = vpop.f32.mrb[0].mxu0
    %v10099 = vadd.f32 %v10002, %v10098
    %v10100 = vpop.f32.mrb[0].mxu0
    %v10101 = vpop.f32.mrb[0].mxu0
    %v10102 = vadd.f32 %v10005, %v10101
    %v10103 = vpop.f32.mrb[0].mxu0
    %10104 = vmatprep.mubr.bf16.mxu0 %v5610
    %10105 = vmatmul.mubr.bf16.gmra.mrb[0].mxu0 %v5609
    %v10106 = vpop.f32.mrb[0].mxu0
    %v10107 = vadd.f32 %v10010, %v10106
    %v10108 = vpop.f32.mrb[0].mxu0
    %v10109 = vpop.f32.mrb[0].mxu0
    %v10110 = vadd.f32 %v10013, %v10109
    %v10111 = vpop.f32.mrb[0].mxu0
    %10112 = vdwg.mxu0
    %10113 = vmatprep.subr.bf16.mxu0 0
    %10114 = vmatpush1.bf16.msra.mxu0 %v7912
    %10115 = vmatprep.subr.bf16.mxu0 0
    %10116 = vmatpush1.bf16.msra.mxu0 %v7919
    %10117 = vmatprep.subr.bf16.mxu0 0
    %10118 = vmatpush1.bf16.msra.mxu0 %v7926
    %10119 = vmatprep.subr.bf16.mxu0 0
    %10120 = vmatpush1.bf16.msra.mxu0 %v7933
    %10121 = vmatprep.subr.bf16.mxu0 0
    %10122 = vmatpush1.bf16.msra.mxu0 %v7940
    %10123 = vmatprep.subr.bf16.mxu0 0
    %10124 = vmatpush1.bf16.msra.mxu0 %v7947
    %10125 = vmatprep.subr.bf16.mxu0 0
    %10126 = vmatpush1.bf16.msra.mxu0 %v7954
    %10127 = vmatprep.subr.bf16.mxu0 0
    %10128 = vmatpush1.bf16.msra.mxu0 %v7961
    %10129 = vmatprep.subr.bf16.mxu0 0
    %10130 = vmatpush1.bf16.msra.mxu0 %v7968
    %10131 = vmatprep.subr.bf16.mxu0 0
    %10132 = vmatpush1.bf16.msra.mxu0 %v7975
    %10133 = vmatprep.subr.bf16.mxu0 0
    %10134 = vmatpush1.bf16.msra.mxu0 %v7982
    %10135 = vmatprep.subr.bf16.mxu0 0
    %10136 = vmatpush1.bf16.msra.mxu0 %v7989
    %10137 = vmatprep.subr.bf16.mxu0 0
    %10138 = vmatpush1.bf16.msra.mxu0 %v7996
    %10139 = vmatprep.subr.bf16.mxu0 0
    %10140 = vmatpush1.bf16.msra.mxu0 %v8003
    %10141 = vmatprep.subr.bf16.mxu0 0
    %10142 = vmatpush1.bf16.msra.mxu0 %v8010
    %10143 = vmatprep.subr.bf16.mxu0 0
    %10144 = vmatpush1.bf16.msra.mxu0 %v8017
    %10145 = vmatprep.mubr.bf16.mxu0 %v5556
    %10146 = vmatmul.mubr.bf16.gmra.mrb[0].mxu0 %v5555
    %v10147 = vpop.f32.mrb[0].mxu0
    %v10148 = vadd.f32 %v10051, %v10147
    %v10149 = vpop.f32.mrb[0].mxu0
    %v10150 = vpop.f32.mrb[0].mxu0
    %v10151 = vadd.f32 %v10054, %v10150
    %v10152 = vpop.f32.mrb[0].mxu0
    %10153 = vmatprep.mubr.bf16.mxu0 %v5564
    %10154 = vmatmul.mubr.bf16.gmra.mrb[0].mxu0 %v5563
    %v10155 = vpop.f32.mrb[0].mxu0
    %v10156 = vadd.f32 %v10059, %v10155
    %v10157 = vpop.f32.mrb[0].mxu0
    %v10158 = vpop.f32.mrb[0].mxu0
    %v10159 = vadd.f32 %v10062, %v10158
    %v10160 = vpop.f32.mrb[0].mxu0
    %10161 = vmatprep.mubr.bf16.mxu0 %v5572
    %10162 = vmatmul.mubr.bf16.gmra.mrb[0].mxu0 %v5571
    %v10163 = vpop.f32.mrb[0].mxu0
    %v10164 = vadd.f32 %v10067, %v10163
    %v10165 = vpop.f32.mrb[0].mxu0
    %v10166 = vpop.f32.mrb[0].mxu0
    %v10167 = vadd.f32 %v10070, %v10166
    %v10168 = vpop.f32.mrb[0].mxu0
    %10169 = vmatprep.mubr.bf16.mxu0 %v5580
    %10170 = vmatmul.mubr.bf16.gmra.mrb[0].mxu0 %v5579
    %v10171 = vpop.f32.mrb[0].mxu0
    %v10172 = vadd.f32 %v10075, %v10171
    %v10173 = vpop.f32.mrb[0].mxu0
    %v10174 = vpop.f32.mrb[0].mxu0
    %v10175 = vadd.f32 %v10078, %v10174
    %v10176 = vpop.f32.mrb[0].mxu0
    %10177 = vmatprep.mubr.bf16.mxu0 %v5588
    %10178 = vmatmul.mubr.bf16.gmra.mrb[0].mxu0 %v5587
    %v10179 = vpop.f32.mrb[0].mxu0
    %v10180 = vadd.f32 %v10083, %v10179
    %v10181 = vpop.f32.mrb[0].mxu0
    %v10182 = vpop.f32.mrb[0].mxu0
    %v10183 = vadd.f32 %v10086, %v10182
    %v10184 = vpop.f32.mrb[0].mxu0
    %10185 = vmatprep.mubr.bf16.mxu0 %v5596
    %10186 = vmatmul.mubr.bf16.gmra.mrb[0].mxu0 %v5595
    %v10187 = vpop.f32.mrb[0].mxu0
    %v10188 = vadd.f32 %v10091, %v10187
    %v10189 = vpop.f32.mrb[0].mxu0
    %v10190 = vpop.f32.mrb[0].mxu0
    %v10191 = vadd.f32 %v10094, %v10190
    %v10192 = vpop.f32.mrb[0].mxu0
    %10193 = vmatprep.mubr.bf16.mxu0 %v5604
    %10194 = vmatmul.mubr.bf16.gmra.mrb[0].mxu0 %v5603
    %v10195 = vpop.f32.mrb[0].mxu0
    %v10196 = vadd.f32 %v10099, %v10195
    %v10197 = vpop.f32.mrb[0].mxu0
    %v10198 = vpop.f32.mrb[0].mxu0
    %v10199 = vadd.f32 %v10102, %v10198
    %v10200 = vpop.f32.mrb[0].mxu0
    %10201 = vmatprep.mubr.bf16.mxu0 %v5612
    %10202 = vmatmul.mubr.bf16.gmra.mrb[0].mxu0 %v5611
    %v10203 = vpop.f32.mrb[0].mxu0
    %v10204 = vadd.f32 %v10107, %v10203
    %v10205 = vpop.f32.mrb[0].mxu0
    %v10206 = vpop.f32.mrb[0].mxu0
    %v10207 = vadd.f32 %v10110, %v10206
    %v10208 = vpop.f32.mrb[0].mxu0
    %10209 = vdwg.mxu0
    %v10210 = vtanh.pop %v8840
    %v10211 = vtanh.pop %v8842
    %v10212 = vtanh.pop %v9292
    %v10213 = vtanh.pop %v9294
    %v10214 = vtanh.pop %v9744
    %v10215 = vtanh.pop %v9746
    %v10216 = vtanh.pop %v10148
    %v10217 = vtanh.pop %v8844
    %v10218 = vtanh.pop %v8846
    %v10219 = vtanh.pop %v9296
    %v10220 = vtanh.pop %v9298
    %v10221 = vtanh.pop %v9748
    %v10222 = vtanh.pop %v9750
    %v10223 = vtanh.pop %v10151
    %v10224 = vtanh.pop %v8850
    %v10225 = vtanh.pop %v8852
    %v10226 = vtanh.pop %v9302
    %v10227 = vtanh.pop %v9304
    %v10228 = vtanh.pop %v9754
    %v10229 = vtanh.pop %v9756
    %v10230 = vtanh.pop %v10156
    %v10231 = vtanh.pop %v8854
    %v10232 = vtanh.pop %v8856
    %v10233 = vtanh.pop %v9306
    %v10234 = vtanh.pop %v9308
    %v10235 = vtanh.pop %v9758
    %v10236 = vtanh.pop %v9760
    %v10237 = vtanh.pop %v10159
    %v10238 = vtanh.pop %v8860
    %v10239 = vtanh.pop %v8862
    %v10240 = vtanh.pop %v9312
    %v10241 = vtanh.pop %v9314
    %v10242 = vtanh.pop %v9764
    %v10243 = vtanh.pop %v9766
    %v10244 = vtanh.pop %v10164
    %v10245 = vtanh.pop %v8864
    %v10246 = vtanh.pop %v8866
    %v10247 = vtanh.pop %v9316
    %v10248 = vtanh.pop %v9318
    %v10249 = vtanh.pop %v9768
    %v10250 = vtanh.pop %v9770
    %v10251 = vtanh.pop %v10167
    %v10252 = vtanh.pop %v8870
    %v10253 = vtanh.pop %v8872
    %v10254 = vtanh.pop %v9322
    %v10255 = vtanh.pop %v9324
    %v10256 = vtanh.pop %v9774
    %v10257 = vtanh.pop %v9776
    %v10258 = vtanh.pop %v10172
    %v10259 = vtanh.pop %v8874
    %v10260 = vtanh.pop %v8876
    %v10261 = vtanh.pop %v9326
    %v10262 = vtanh.pop %v9328
    %v10263 = vtanh.pop %v9778
    %v10264 = vtanh.pop %v9780
    %v10265 = vtanh.pop %v10175
    %v10266 = vtanh.pop %v8880
    %v10267 = vtanh.pop %v8882
    %v10268 = vtanh.pop %v9332
    %v10269 = vtanh.pop %v9334
    %v10270 = vtanh.pop %v9784
    %v10271 = vtanh.pop %v9786
    %v10272 = vtanh.pop %v10180
    %v10273 = vtanh.pop %v8884
    %v10274 = vtanh.pop %v8886
    %v10275 = vtanh.pop %v9336
    %v10276 = vtanh.pop %v9338
    %v10277 = vtanh.pop %v9788
    %v10278 = vtanh.pop %v9790
    %v10279 = vtanh.pop %v10183
    %v10280 = vtanh.pop %v8890
    %v10281 = vtanh.pop %v8892
    %v10282 = vtanh.pop %v9342
    %v10283 = vtanh.pop %v9344
    %v10284 = vtanh.pop %v9794
    %v10285 = vtanh.pop %v9796
    %v10286 = vtanh.pop %v10188
    %v10287 = vtanh.pop %v8894
    %v10288 = vtanh.pop %v8896
    %v10289 = vtanh.pop %v9346
    %v10290 = vtanh.pop %v9348
    %v10291 = vtanh.pop %v9798
    %v10292 = vtanh.pop %v9800
    %v10293 = vtanh.pop %v10191
    %v10294 = vtanh.pop %v8900
    %v10295 = vtanh.pop %v8902
    %v10296 = vtanh.pop %v9352
    %v10297 = vtanh.pop %v9354
    %v10298 = vtanh.pop %v9804
    %v10299 = vtanh.pop %v9806
    %v10300 = vtanh.pop %v10196
    %v10301 = vtanh.pop %v8904
    %v10302 = vtanh.pop %v8906
    %v10303 = vtanh.pop %v9356
    %v10304 = vtanh.pop %v9358
    %v10305 = vtanh.pop %v9808
    %v10306 = vtanh.pop %v9810
    %v10307 = vtanh.pop %v10199
    %v10308 = vtanh.pop %v8910
    %v10309 = vtanh.pop %v8912
    %v10310 = vtanh.pop %v9362
    %v10311 = vtanh.pop %v9364
    %v10312 = vtanh.pop %v9814
    %v10313 = vtanh.pop %v9816
    %v10314 = vtanh.pop %v10204
    %v10315 = vtanh.pop %v8914
    %v10316 = vtanh.pop %v8916
    %v10317 = vtanh.pop %v9366
    %v10318 = vtanh.pop %v9368
    %v10319 = vtanh.pop %v9818
    %v10320 = vtanh.pop %v9820
    %v10321 = vtanh.pop %v10207
    %10322 = vst [vmem:[#allocation16] sm:$0xff] %v10210
    %10323 = vst [vmem:[#allocation16 + $0x8] sm:$0xff] %v10211
    %10324 = vst [vmem:[#allocation16 + $0x10] sm:$0xff] %v10212
    %10325 = vst [vmem:[#allocation16 + $0x18] sm:$0xff] %v10213
    %10326 = vst [vmem:[#allocation16 + $0x20] sm:$0xff] %v10214
    %10327 = vst [vmem:[#allocation16 + $0x28] sm:$0xff] %v10215
    %10328 = vst [vmem:[#allocation16 + $0x30] sm:$0xff] %v10216
    %10329 = vst [vmem:[#allocation16 + $0x38] sm:$0xff] %v10217
    %10330 = vst [vmem:[#allocation16 + $0x40] sm:$0xff] %v10218
    %10331 = vst [vmem:[#allocation16 + $0x48] sm:$0xff] %v10219
    %10332 = vst [vmem:[#allocation16 + $0x50] sm:$0xff] %v10220
    %10333 = vst [vmem:[#allocation16 + $0x58] sm:$0xff] %v10221
    %10334 = vst [vmem:[#allocation16 + $0x60] sm:$0xff] %v10222
    %10335 = vst [vmem:[#allocation16 + $0x68] sm:$0xff] %v10223
    %10336 = vst [vmem:[#allocation16 + $0x70] sm:$0xff] %v10224
    %10337 = vst [vmem:[#allocation16 + $0x78] sm:$0xff] %v10225
    %10338 = vst [vmem:[#allocation16 + $0x80] sm:$0xff] %v10226
    %10339 = vst [vmem:[#allocation16 + $0x88] sm:$0xff] %v10227
    %10340 = vst [vmem:[#allocation16 + $0x90] sm:$0xff] %v10228
    %10341 = vst [vmem:[#allocation16 + $0x98] sm:$0xff] %v10229
    %10342 = vst [vmem:[#allocation16 + $0xa0] sm:$0xff] %v10230
    %10343 = vst [vmem:[#allocation16 + $0xa8] sm:$0xff] %v10231
    %10344 = vst [vmem:[#allocation16 + $0xb0] sm:$0xff] %v10232
    %10345 = vst [vmem:[#allocation16 + $0xb8] sm:$0xff] %v10233
    %10346 = vst [vmem:[#allocation16 + $0xc0] sm:$0xff] %v10234
    %10347 = vst [vmem:[#allocation16 + $0xc8] sm:$0xff] %v10235
    %10348 = vst [vmem:[#allocation16 + $0xd0] sm:$0xff] %v10236
    %10349 = vst [vmem:[#allocation16 + $0xd8] sm:$0xff] %v10237
    %10350 = vst [vmem:[#allocation16 + $0xe0] sm:$0xff] %v10238
    %10351 = vst [vmem:[#allocation16 + $0xe8] sm:$0xff] %v10239
    %10352 = vst [vmem:[#allocation16 + $0xf0] sm:$0xff] %v10240
    %10353 = vst [vmem:[#allocation16 + $0xf8] sm:$0xff] %v10241
    %10354 = vst [vmem:[#allocation16 + $0x100] sm:$0xff] %v10242
    %10355 = vst [vmem:[#allocation16 + $0x108] sm:$0xff] %v10243
    %10356 = vst [vmem:[#allocation16 + $0x110] sm:$0xff] %v10244
    %10357 = vst [vmem:[#allocation16 + $0x118] sm:$0xff] %v10245
    %10358 = vst [vmem:[#allocation16 + $0x120] sm:$0xff] %v10246
    %10359 = vst [vmem:[#allocation16 + $0x128] sm:$0xff] %v10247
    %10360 = vst [vmem:[#allocation16 + $0x130] sm:$0xff] %v10248
    %10361 = vst [vmem:[#allocation16 + $0x138] sm:$0xff] %v10249
    %10362 = vst [vmem:[#allocation16 + $0x140] sm:$0xff] %v10250
    %10363 = vst [vmem:[#allocation16 + $0x148] sm:$0xff] %v10251
    %10364 = vst [vmem:[#allocation16 + $0x150] sm:$0xff] %v10252
    %10365 = vst [vmem:[#allocation16 + $0x158] sm:$0xff] %v10253
    %10366 = vst [vmem:[#allocation16 + $0x160] sm:$0xff] %v10254
    %10367 = vst [vmem:[#allocation16 + $0x168] sm:$0xff] %v10255
    %10368 = vst [vmem:[#allocation16 + $0x170] sm:$0xff] %v10256
    %10369 = vst [vmem:[#allocation16 + $0x178] sm:$0xff] %v10257
    %10370 = vst [vmem:[#allocation16 + $0x180] sm:$0xff] %v10258
    %10371 = vst [vmem:[#allocation16 + $0x188] sm:$0xff] %v10259
    %10372 = vst [vmem:[#allocation16 + $0x190] sm:$0xff] %v10260
    %10373 = vst [vmem:[#allocation16 + $0x198] sm:$0xff] %v10261
    %10374 = vst [vmem:[#allocation16 + $0x1a0] sm:$0xff] %v10262
    %10375 = vst [vmem:[#allocation16 + $0x1a8] sm:$0xff] %v10263
    %10376 = vst [vmem:[#allocation16 + $0x1b0] sm:$0xff] %v10264
    %10377 = vst [vmem:[#allocation16 + $0x1b8] sm:$0xff] %v10265
    %10378 = vst [vmem:[#allocation16 + $0x1c0] sm:$0xff] %v10266
    %10379 = vst [vmem:[#allocation16 + $0x1c8] sm:$0xff] %v10267
    %10380 = vst [vmem:[#allocation16 + $0x1d0] sm:$0xff] %v10268
    %10381 = vst [vmem:[#allocation16 + $0x1d8] sm:$0xff] %v10269
    %10382 = vst [vmem:[#allocation16 + $0x1e0] sm:$0xff] %v10270
    %10383 = vst [vmem:[#allocation16 + $0x1e8] sm:$0xff] %v10271
    %10384 = vst [vmem:[#allocation16 + $0x1f0] sm:$0xff] %v10272
    %10385 = vst [vmem:[#allocation16 + $0x1f8] sm:$0xff] %v10273
    %10386 = vst [vmem:[#allocation16 + $0x200] sm:$0xff] %v10274
    %10387 = vst [vmem:[#allocation16 + $0x208] sm:$0xff] %v10275
    %10388 = vst [vmem:[#allocation16 + $0x210] sm:$0xff] %v10276
    %10389 = vst [vmem:[#allocation16 + $0x218] sm:$0xff] %v10277
    %10390 = vst [vmem:[#allocation16 + $0x220] sm:$0xff] %v10278
    %10391 = vst [vmem:[#allocation16 + $0x228] sm:$0xff] %v10279
    %10392 = vst [vmem:[#allocation16 + $0x230] sm:$0xff] %v10280
    %10393 = vst [vmem:[#allocation16 + $0x238] sm:$0xff] %v10281
    %10394 = vst [vmem:[#allocation16 + $0x240] sm:$0xff] %v10282
    %10395 = vst [vmem:[#allocation16 + $0x248] sm:$0xff] %v10283
    %10396 = vst [vmem:[#allocation16 + $0x250] sm:$0xff] %v10284
    %10397 = vst [vmem:[#allocation16 + $0x258] sm:$0xff] %v10285
    %10398 = vst [vmem:[#allocation16 + $0x260] sm:$0xff] %v10286
    %10399 = vst [vmem:[#allocation16 + $0x268] sm:$0xff] %v10287
    %10400 = vst [vmem:[#allocation16 + $0x270] sm:$0xff] %v10288
    %10401 = vst [vmem:[#allocation16 + $0x278] sm:$0xff] %v10289
    %10402 = vst [vmem:[#allocation16 + $0x280] sm:$0xff] %v10290
    %10403 = vst [vmem:[#allocation16 + $0x288] sm:$0xff] %v10291
    %10404 = vst [vmem:[#allocation16 + $0x290] sm:$0xff] %v10292
    %10405 = vst [vmem:[#allocation16 + $0x298] sm:$0xff] %v10293
    %10406 = vst [vmem:[#allocation16 + $0x2a0] sm:$0xff] %v10294
    %10407 = vst [vmem:[#allocation16 + $0x2a8] sm:$0xff] %v10295
    %10408 = vst [vmem:[#allocation16 + $0x2b0] sm:$0xff] %v10296
    %10409 = vst [vmem:[#allocation16 + $0x2b8] sm:$0xff] %v10297
    %10410 = vst [vmem:[#allocation16 + $0x2c0] sm:$0xff] %v10298
    %10411 = vst [vmem:[#allocation16 + $0x2c8] sm:$0xff] %v10299
    %10412 = vst [vmem:[#allocation16 + $0x2d0] sm:$0xff] %v10300
    %10413 = vst [vmem:[#allocation16 + $0x2d8] sm:$0xff] %v10301
    %10414 = vst [vmem:[#allocation16 + $0x2e0] sm:$0xff] %v10302
    %10415 = vst [vmem:[#allocation16 + $0x2e8] sm:$0xff] %v10303
    %10416 = vst [vmem:[#allocation16 + $0x2f0] sm:$0xff] %v10304
    %10417 = vst [vmem:[#allocation16 + $0x2f8] sm:$0xff] %v10305
    %10418 = vst [vmem:[#allocation16 + $0x300] sm:$0xff] %v10306
    %10419 = vst [vmem:[#allocation16 + $0x308] sm:$0xff] %v10307
    %10420 = vst [vmem:[#allocation16 + $0x310] sm:$0xff] %v10308
    %10421 = vst [vmem:[#allocation16 + $0x318] sm:$0xff] %v10309
    %10422 = vst [vmem:[#allocation16 + $0x320] sm:$0xff] %v10310
    %10423 = vst [vmem:[#allocation16 + $0x328] sm:$0xff] %v10311
    %10424 = vst [vmem:[#allocation16 + $0x330] sm:$0xff] %v10312
    %10425 = vst [vmem:[#allocation16 + $0x338] sm:$0xff] %v10313
    %10426 = vst [vmem:[#allocation16 + $0x340] sm:$0xff] %v10314
    %10427 = vst [vmem:[#allocation16 + $0x348] sm:$0xff] %v10315
    %10428 = vst [vmem:[#allocation16 + $0x350] sm:$0xff] %v10316
    %10429 = vst [vmem:[#allocation16 + $0x358] sm:$0xff] %v10317
    %10430 = vst [vmem:[#allocation16 + $0x360] sm:$0xff] %v10318
    %10431 = vst [vmem:[#allocation16 + $0x368] sm:$0xff] %v10319
    %10432 = vst [vmem:[#allocation16 + $0x370] sm:$0xff] %v10320
    %10433 = vst [vmem:[#allocation16 + $0x378] sm:$0xff] %v10321
    // Predicated region
    $region70: #{tpu_custom_call.1} parent=1 // pred_check
      _
    $region71: #{tpu_custom_call.1} parent=1 // pred_check_branch
      %10435 = sbr.rel (0) target = $region73
    $region72: #{tpu_custom_call.1} parent=1 // pred_region
      %s10437 = ssub.s32 14336, 14336
      %10438 = vsyncadd [#allocation4], %s10437
      %s10439 = sshll.u32 [#allocation16], 4
      %s10440 = int_to_ptr.vmem [resolvable:$true] %s10439
      %10445 = dma.vmem_to_hbm [thread:$0]  %s10440, 14336, %s9, [#allocation4], 896, 896, 56
    $region73: #{tpu_custom_call.1} parent=1 // pred_fallthru
      _
    // Predicated region
    $region74: #{tpu_custom_call.1} parent=1 // pred_check
      _
    $region75: #{tpu_custom_call.1} parent=1 // pred_check_branch
      %10447 = sbr.rel (0) target = $region77
    $region76: #{tpu_custom_call.1} parent=1 // pred_region
      %10448 = dma.done [#allocation4], 14336
    $region77: #{tpu_custom_call.1} parent=1 // pred_fallthru
      _
    %10449 = vsyncpa [#allocation3], 1
    %10450 = vsyncpa [#allocation6], 1
    %10451 = vsyncpa [#allocation9], 1
    %10452 = vsyncpa [#allocation12], 1
    %10453 = vsyncpa [#allocation15], 1
    %10454 = vsyncpa [#allocation4], 1

</llo_original>
